<compile_context>
chip_gen: v7x
topology: tpu7x:2x2x1
jax: 0.10.0
libtpu: 0.0.40
codegen_flags: <defaults>
</compile_context>

<pallas_src>
import numpy as np

import jax
import jax.numpy as jnp
from jax.experimental import pallas as pl
from jax.experimental.pallas import tpu as pltpu

EPS = 1e-5

# 128-lane-aligned segments inside the merged aux buffer (rows: bias/gamma/beta/alpha).
_AUX_OFF = dict(c1=0, c2=512, c3=1024, fc1=1664, fc2=1920, fc3=2048)
_AUX_W = dict(c1=400, c2=512, c3=576, fc1=256, fc2=64, fc3=128)
_AUX_TOTAL = 2176


# ------------------------------ the fused kernel ------------------------------

def _pairsets_kernel(x_ref, cw1_ref, cw2_ref, cw3_ref, p1_ref, p2_ref, p3_ref,
                     w1_ref, w2_ref, w3_ref, aux_ref, out_ref):
    """DigitNet forward for ONE image batch (one grid step)."""

    def mm(a, b):
        return jnp.dot(a, b, preferred_element_type=jnp.float32)

    def bn_prelu(y_lin, aux, p_ref=None):
        # aux rows: [bias, bn_gamma, bn_beta, prelu_alpha], broadcast over columns.
        y = y_lin + aux[0:1, :]
        mu = jnp.mean(y, axis=0, keepdims=True)            # batch mean, (1, N)
        if p_ref is not None:                              # + spatial mean per channel,
            mu = mm(mu, p_ref[...])                        #   broadcast back to (1, N)
        yc = y - mu
        var = jnp.mean(yc * yc, axis=0, keepdims=True)     # biased var (training mode)
        if p_ref is not None:
            var = mm(var, p_ref[...])
        z = aux[1:2, :] * yc * jax.lax.rsqrt(var + EPS) + aux[2:3, :]
        return jnp.where(z >= 0.0, z, aux[3:4, :] * z)     # PReLU

    x = x_ref[0]                                           # (B, 196), (c,h,w) flat

    # conv stack: each VALID conv is one dense matmul (weights packed host-side).
    a1 = bn_prelu(mm(x, cw1_ref[...]), aux_ref[:, 0:400], p1_ref)       # (B, 400)
    a2 = bn_prelu(mm(a1, cw2_ref[...]), aux_ref[:, 512:1024], p2_ref)   # (B, 512)
    a3 = bn_prelu(mm(a2, cw3_ref[...]), aux_ref[:, 1024:1600], p3_ref)  # (B, 576)

    # fc stack; a3 columns are already in PyTorch .view(-1, 576) order -> no relayout.
    h1 = bn_prelu(mm(a3, w1_ref[...]), aux_ref[:, 1664:1920])           # (B, 256)
    h2 = bn_prelu(mm(h1, w2_ref[...]), aux_ref[:, 1920:1984])           # (B, 64)

    # fc3 + softmax, lane-padded to 128 columns (pad bias = -1e30 -> exp underflows to 0).
    logits = mm(h2, w3_ref[...]) + aux_ref[0:1, 2048:2176]              # (B, 128)
    e = jnp.exp(logits - jnp.max(logits, axis=1, keepdims=True))
    out_ref[0] = e / jnp.sum(e, axis=1, keepdims=True)


# ---------------------- one-time, host-side weight packing ----------------------

def _conv_as_matrix(w, h_in, w_in):
    """Dense-matrix form of a VALID conv; activations flat per sample in (c,h,w) order."""
    w = np.asarray(w, np.float32)
    cout, cin, kh, kw = w.shape
    h_out, w_out = h_in - kh + 1, w_in - kw + 1
    m = np.zeros((cin, h_in, w_in, cout, h_out, w_out), np.float32)
    for dy in range(kh):
        for dx in range(kw):
            wt = w[:, :, dy, dx].T                         # (cin, cout)
            for ho in range(h_out):
                for wo in range(w_out):
                    m[:, ho + dy, wo + dx, :, ho, wo] = wt
    return jnp.asarray(m.reshape(cin * h_in * w_in, cout * h_out * w_out))


def _channel_mean_matrix(cout, hw):
    """(N, N) operator: average over the hw positions of each channel, broadcast back."""
    return jnp.asarray(np.kron(np.eye(cout, dtype=np.float32),
                               np.full((hw, hw), 1.0 / hw, np.float32)))


def prepare_kernel_params(p):
    """Pack PyTorch-layout parameters into kernel-ready layouts (call once)."""
    kp = {}
    kp["cw1"] = _conv_as_matrix(p["conv1_w"], 14, 14)      # (196, 400)
    kp["cw2"] = _conv_as_matrix(p["conv2_w"], 10, 10)      # (400, 512)
    kp["cw3"] = _conv_as_matrix(p["conv3_w"], 8, 8)        # (512, 576)
    kp["p1"] = _channel_mean_matrix(4, 100)
    kp["p2"] = _channel_mean_matrix(8, 64)
    kp["p3"] = _channel_mean_matrix(16, 36)

    # PyTorch flatten of the NCHW conv3 output is (c, h, w) order == kernel column order.
    kp["fc1_w"] = jnp.asarray(p["fc1_w"]).T                # (576, 256)
    kp["fc2_w"] = jnp.asarray(p["fc2_w"]).T                # (256, 64)
    w3 = np.zeros((64, 128), np.float32)                   # lane-pad fc3 to 128 cols
    w3[:, :10] = np.asarray(p["fc3_w"], np.float32).T
    kp["fc3_w"] = jnp.asarray(w3)

    aux = np.zeros((4, _AUX_TOTAL), np.float32)

    def put(name, b, g, bt, alpha, reps=1):
        o, w = _AUX_OFF[name], _AUX_W[name]
        aux[0, o:o + w] = np.repeat(np.asarray(b, np.float32), reps)
        aux[1, o:o + w] = np.repeat(np.asarray(g, np.float32), reps)
        aux[2, o:o + w] = np.repeat(np.asarray(bt, np.float32), reps)
        aux[3, o:o + w] = float(alpha)

    put("c1", p["conv1_b"], p["bn1_g"], p["bn1_b"], p["alpha1"], 100)
    put("c2", p["conv2_b"], p["bn2_g"], p["bn2_b"], p["alpha2"], 64)
    put("c3", p["conv3_b"], p["bn3_g"], p["bn3_b"], p["alpha3"], 36)
    put("fc1", p["fc1_b"], p["bn4_g"], p["bn4_b"], p["alpha4"])
    put("fc2", p["fc2_b"], p["bn5_g"], p["bn5_b"], p["alpha5"])
    # fc3 segment, row 0: real bias in cols 0:10, -1e30 in the padding columns so the
    # 128-wide softmax ignores them.
    o = _AUX_OFF["fc3"]
    aux[0, o:o + 128] = -1e30
    aux[0, o:o + 10] = np.asarray(p["fc3_b"], np.float32)
    kp["aux"] = jnp.asarray(aux)

    kp["pair_w"] = jnp.asarray(p["pair_w"]).reshape(10, 10)   # W[i, j] = pair_w[0, i*10+j]
    kp["pair_b"] = jnp.asarray(p["pair_b"])
    return kp


# ------------------------------ jitted forward ------------------------------

def pairsets_forward(kp, image1, image2):
    b = image1.shape[0]
    # (image, sample, c*h*w) — pure metadata reshape/stack.
    x = jnp.stack([image1.reshape(b, 196), image2.reshape(b, 196)], axis=0)

    weights = (kp["cw1"], kp["cw2"], kp["cw3"], kp["p1"], kp["p2"], kp["p3"],
               kp["fc1_w"], kp["fc2_w"], kp["fc3_w"], kp["aux"])

    matmul_cols = 196 * 400 + 400 * 512 + 512 * 576 + 576 * 256 + 256 * 64 + 64 * 128
    stat_cols = 400 * 400 + 512 * 512 + 576 * 576
    flops = 4 * b * matmul_cols + 8 * stat_cols
    bytes_accessed = 4 * int(x.size + sum(w.size for w in weights) + 2 * b * 128)

    d = pl.pallas_call(
        _pairsets_kernel,
        out_shape=jax.ShapeDtypeStruct((2, b, 128), jnp.float32),
        grid=(2,),  # one grid step per image batch -> both TensorCores on v7x
        in_specs=[pl.BlockSpec((1, b, 196), lambda i: (i, 0, 0))]
                 + [pl.BlockSpec(memory_space=pltpu.MemorySpace.VMEM)] * len(weights),
        out_specs=pl.BlockSpec((1, b, 128), lambda i: (i, 0, 0)),
        compiler_params=pltpu.CompilerParams(
            dimension_semantics=("parallel",),
            vmem_limit_bytes=32 * 1024 * 1024),
        cost_estimate=pl.CostEstimate(
            flops=flops, transcendentals=2 * b * 140, bytes_accessed=bytes_accessed),
    )(x, *weights)

    d1 = d[0, :, :10]
    d2 = d[1, :, :10]
    # Pair head (B x 10 outer product + Linear(100, 1)): needs both image batches,
    # which come from different grid steps, so it stays as a few tiny XLA ops.
    pred = jnp.sum(jnp.dot(d1, kp["pair_w"]) * d2, axis=1) + kp["pair_b"][0]
    return pred, d1, d2


# ------------------------- parameters & plain-JAX reference -------------------------

def init_params(key):
    def nrm(k, shape, scale=0.1):
        return scale * jax.random.normal(k, shape, dtype=jnp.float32)

    ks = jax.random.split(key, 24)
    p = {
        "conv1_w": nrm(ks[0], (4, 1, 5, 5)),   "conv1_b": nrm(ks[1], (4,)),
        "conv2_w": nrm(ks[2], (8, 4, 3, 3)),   "conv2_b": nrm(ks[3], (8,)),
        "conv3_w": nrm(ks[4], (16, 8, 3, 3)),  "conv3_b": nrm(ks[5], (16,)),
        "fc1_w":   nrm(ks[6], (256, 576)),     "fc1_b":   nrm(ks[7], (256,)),
        "fc2_w":   nrm(ks[8], (64, 256)),      "fc2_b":   nrm(ks[9], (64,)),
        "fc3_w":   nrm(ks[10], (10, 64)),      "fc3_b":   nrm(ks[11], (10,)),
        "pair_w":  nrm(ks[12], (1, 100)),      "pair_b":  nrm(ks[13], (1,)),
    }
    for i, (name, c) in enumerate([("bn1", 4), ("bn2", 8), ("bn3", 16),
                                   ("bn4", 256), ("bn5", 64)]):
        p[name + "_g"] = 1.0 + nrm(ks[14 + 2 * i], (c,))
        p[name + "_b"] = nrm(ks[15 + 2 * i], (c,))
    for i, a in enumerate([0.25, 0.2, 0.3, 0.15, 0.35]):
        p[f"alpha{i + 1}"] = jnp.float32(a)
    return p


def _reference_forward(p, image1, image2):
    """Plain-JAX re-implementation of the PyTorch forward (for cross-checking)."""
    hi = jax.lax.Precision.HIGHEST

    def bn2d(y, g, b):
        mu = jnp.mean(y, axis=(0, 2, 3), keepdims=True)
        var = jnp.mean((y - mu) ** 2, axis=(0, 2, 3), keepdims=True)
        return (g.reshape(1, -1, 1, 1) * (y - mu) * jax.lax.rsqrt(var + EPS)
                + b.reshape(1, -1, 1, 1))

    def bn1d(y, g, b):
        mu = jnp.mean(y, axis=0, keepdims=True)
        var = jnp.mean((y - mu) ** 2, axis=0, keepdims=True)
        return g * (y - mu) * jax.lax.rsqrt(var + EPS) + b

    def prelu(y, a):
        return jnp.where(y >= 0, y, a * y)

    def conv(x, w, b):
        y = jax.lax.conv_general_dilated(
            x, w, (1, 1), "VALID", dimension_numbers=("NCHW", "OIHW", "NCHW"),
            precision=hi)
        return y + b.reshape(1, -1, 1, 1)

    def digitnet(x):
        h = prelu(bn2d(conv(x, p["conv1_w"], p["conv1_b"]), p["bn1_g"], p["bn1_b"]), p["alpha1"])
        h = prelu(bn2d(conv(h, p["conv2_w"], p["conv2_b"]), p["bn2_g"], p["bn2_b"]), p["alpha2"])
        h = prelu(bn2d(conv(h, p["conv3_w"], p["conv3_b"]), p["bn3_g"], p["bn3_b"]), p["alpha3"])
        f = h.reshape(h.shape[0], -1)
        h = prelu(bn1d(jnp.dot(f, p["fc1_w"].T, precision=hi) + p["fc1_b"],
                       p["bn4_g"], p["bn4_b"]), p["alpha4"])
        h = prelu(bn1d(jnp.dot(h, p["fc2_w"].T, precision=hi) + p["fc2_b"],
                       p["bn5_g"], p["bn5_b"]), p["alpha5"])
        logits = jnp.dot(h, p["fc3_w"].T, precision=hi) + p["fc3_b"]
        e = jnp.exp(logits - jnp.max(logits, axis=1, keepdims=True))
        return e / jnp.sum(e, axis=1, keepdims=True)

    d1 = digitnet(image1)
    d2 = digitnet(image2)
    outer = (d1[:, :, None] * d2[:, None, :]).reshape(d1.shape[0], 100)
    pred = jnp.dot(outer, p["pair_w"].T, precision=hi) + p["pair_b"]
    return pred.reshape(-1), d1, d2


# ------------------------------------ main ------------------------------------

if __name__ == "__main__":
    key = jax.random.PRNGKey(0)
    kp_key, k1, k2 = jax.random.split(key, 3)
    params = init_params(kp_key)
    image1 = jax.random.normal(k1, (2, 1, 14, 14), dtype=jnp.float32)
    image2 = jax.random.normal(k2, (2, 1, 14, 14), dtype=jnp.float32)

    kernel_params = prepare_kernel_params(params)      # one-time, outside the hot path
    fwd = jax.jit(pairsets_forward)
    pred, d1, d2 = fwd(kernel_params, image1, image2)
    jax.block_until_ready((pred, d1, d2))

    assert pred.shape == (2,) and d1.shape == (2, 10) and d2.shape == (2, 10)
    assert bool(jnp.all(jnp.isfinite(pred)))
    assert bool(jnp.allclose(jnp.sum(d1, axis=1), 1.0, atol=1e-5))
    assert bool(jnp.allclose(jnp.sum(d2, axis=1), 1.0, atol=1e-5))

    # cross-check against a plain-JAX re-implementation of the PyTorch module
    pred_r, d1_r, d2_r = _reference_forward(params, image1, image2)
    assert bool(jnp.allclose(d1, d1_r, atol=5e-3, rtol=5e-3))
    assert bool(jnp.allclose(d2, d2_r, atol=5e-3, rtol=5e-3))
    assert bool(jnp.allclose(pred, pred_r, atol=5e-3, rtol=5e-3))

    print("KERNEL_OK")
</pallas_src>

<mosaic_0001>
module attributes {stable_mosaic.version = 11 : i64} {
  func.func @_pairsets_kernel(%arg0: i32, %arg1: memref<1x2x196xf32, #tpu.memory_space<vmem>>, %arg2: memref<196x400xf32, #tpu.memory_space<vmem>>, %arg3: memref<400x512xf32, #tpu.memory_space<vmem>>, %arg4: memref<512x576xf32, #tpu.memory_space<vmem>>, %arg5: memref<400x400xf32, #tpu.memory_space<vmem>>, %arg6: memref<512x512xf32, #tpu.memory_space<vmem>>, %arg7: memref<576x576xf32, #tpu.memory_space<vmem>>, %arg8: memref<576x256xf32, #tpu.memory_space<vmem>>, %arg9: memref<256x64xf32, #tpu.memory_space<vmem>>, %arg10: memref<64x128xf32, #tpu.memory_space<vmem>>, %arg11: memref<4x2176xf32, #tpu.memory_space<vmem>>, %arg12: memref<1x2x128xf32, #tpu.memory_space<vmem>>) attributes {dimension_semantics = [#tpu.dimension_semantics<parallel>], iteration_bounds = array<i64: 2>, scalar_prefetch = 0 : i64, scratch_operands = 0 : i64, tpu.core_type = #tpu.core_type<tc>, window_params = [{transform_indices = @transform_0, window_bounds = array<i64: 1, 2, 196>}, {pipeline_mode = #tpu.pipeline_mode<synchronous>, transform_indices = @transform_1, window_bounds = array<i64: 196, 400>}, {pipeline_mode = #tpu.pipeline_mode<synchronous>, transform_indices = @transform_2, window_bounds = array<i64: 400, 512>}, {pipeline_mode = #tpu.pipeline_mode<synchronous>, transform_indices = @transform_3, window_bounds = array<i64: 512, 576>}, {pipeline_mode = #tpu.pipeline_mode<synchronous>, transform_indices = @transform_4, window_bounds = array<i64: 400, 400>}, {pipeline_mode = #tpu.pipeline_mode<synchronous>, transform_indices = @transform_5, window_bounds = array<i64: 512, 512>}, {pipeline_mode = #tpu.pipeline_mode<synchronous>, transform_indices = @transform_6, window_bounds = array<i64: 576, 576>}, {pipeline_mode = #tpu.pipeline_mode<synchronous>, transform_indices = @transform_7, window_bounds = array<i64: 576, 256>}, {pipeline_mode = #tpu.pipeline_mode<synchronous>, transform_indices = @transform_8, window_bounds = array<i64: 256, 64>}, {pipeline_mode = #tpu.pipeline_mode<synchronous>, transform_indices = @transform_9, window_bounds = array<i64: 64, 128>}, {pipeline_mode = #tpu.pipeline_mode<synchronous>, transform_indices = @transform_10, window_bounds = array<i64: 4, 2176>}, {transform_indices = @transform_11, window_bounds = array<i64: 1, 2, 128>}]} {
    %c0 = arith.constant 0 : index
    %c0_0 = arith.constant 0 : index
    %c0_1 = arith.constant 0 : index
    %0 = vector.load %arg1[%c0, %c0_0, %c0_1] : memref<1x2x196xf32, #tpu.memory_space<vmem>>, vector<1x2x196xf32>
    %1 = vector.shape_cast %0 : vector<1x2x196xf32> to vector<2x196xf32>
    %c0_2 = arith.constant 0 : index
    %c0_3 = arith.constant 0 : index
    %2 = vector.load %arg2[%c0_2, %c0_3] : memref<196x400xf32, #tpu.memory_space<vmem>>, vector<196x400xf32>
    %cst = arith.constant dense<0.000000e+00> : vector<2x400xf32>
    %3 = tpu.matmul %1, %2, %cst {dimension_numbers = #tpu.dot_dimension_numbers<[1], [0], [0], [1], [0, 0, 1, 1], [], []>} : vector<2x196xf32>, vector<196x400xf32>, vector<2x400xf32> -> vector<2x400xf32>
    %c0_4 = arith.constant 0 : index
    %c0_5 = arith.constant 0 : index
    %4 = vector.load %arg11[%c0_4, %c0_5] : memref<4x2176xf32, #tpu.memory_space<vmem>>, vector<4x400xf32>
    %5 = vector.extract_strided_slice %4 {offsets = [0, 0], sizes = [1, 400], strides = [1, 1]} : vector<4x400xf32> to vector<1x400xf32>
    %6 = vector.broadcast %5 : vector<1x400xf32> to vector<2x400xf32>
    %7 = arith.addf %3, %6 : vector<2x400xf32>
    %cst_6 = arith.constant dense<0.000000e+00> : vector<400xf32>
    %8 = vector.multi_reduction <add>, %7, %cst_6 [0] : vector<2x400xf32> to vector<400xf32>
    %9 = vector.shape_cast %8 : vector<400xf32> to vector<1x400xf32>
    %cst_7 = arith.constant 2.000000e+00 : f32
    %10 = vector.broadcast %cst_7 : f32 to vector<1x400xf32>
    %11 = arith.divf %9, %10 : vector<1x400xf32>
    %c0_8 = arith.constant 0 : index
    %c0_9 = arith.constant 0 : index
    %12 = vector.load %arg5[%c0_8, %c0_9] : memref<400x400xf32, #tpu.memory_space<vmem>>, vector<400x400xf32>
    %cst_10 = arith.constant dense<0.000000e+00> : vector<1x400xf32>
    %13 = tpu.matmul %11, %12, %cst_10 {dimension_numbers = #tpu.dot_dimension_numbers<[1], [0], [0], [1], [0, 0, 1, 1], [], []>} : vector<1x400xf32>, vector<400x400xf32>, vector<1x400xf32> -> vector<1x400xf32>
    %14 = vector.broadcast %13 : vector<1x400xf32> to vector<2x400xf32>
    %15 = arith.subf %7, %14 : vector<2x400xf32>
    %16 = arith.mulf %15, %15 : vector<2x400xf32>
    %cst_11 = arith.constant dense<0.000000e+00> : vector<400xf32>
    %17 = vector.multi_reduction <add>, %16, %cst_11 [0] : vector<2x400xf32> to vector<400xf32>
    %18 = vector.shape_cast %17 : vector<400xf32> to vector<1x400xf32>
    %cst_12 = arith.constant 2.000000e+00 : f32
    %19 = vector.broadcast %cst_12 : f32 to vector<1x400xf32>
    %20 = arith.divf %18, %19 : vector<1x400xf32>
    %c0_13 = arith.constant 0 : index
    %c0_14 = arith.constant 0 : index
    %21 = vector.load %arg5[%c0_13, %c0_14] : memref<400x400xf32, #tpu.memory_space<vmem>>, vector<400x400xf32>
    %cst_15 = arith.constant dense<0.000000e+00> : vector<1x400xf32>
    %22 = tpu.matmul %20, %21, %cst_15 {dimension_numbers = #tpu.dot_dimension_numbers<[1], [0], [0], [1], [0, 0, 1, 1], [], []>} : vector<1x400xf32>, vector<400x400xf32>, vector<1x400xf32> -> vector<1x400xf32>
    %23 = vector.extract_strided_slice %4 {offsets = [1, 0], sizes = [1, 400], strides = [1, 1]} : vector<4x400xf32> to vector<1x400xf32>
    %24 = vector.broadcast %23 : vector<1x400xf32> to vector<2x400xf32>
    %25 = arith.mulf %24, %15 : vector<2x400xf32>
    %cst_16 = arith.constant 9.99999974E-6 : f32
    %26 = vector.broadcast %cst_16 : f32 to vector<1x400xf32>
    %27 = arith.addf %22, %26 : vector<1x400xf32>
    %28 = math.rsqrt %27 : vector<1x400xf32>
    %29 = vector.broadcast %28 : vector<1x400xf32> to vector<2x400xf32>
    %30 = arith.mulf %25, %29 : vector<2x400xf32>
    %31 = vector.extract_strided_slice %4 {offsets = [2, 0], sizes = [1, 400], strides = [1, 1]} : vector<4x400xf32> to vector<1x400xf32>
    %32 = vector.broadcast %31 : vector<1x400xf32> to vector<2x400xf32>
    %33 = arith.addf %30, %32 : vector<2x400xf32>
    %cst_17 = arith.constant 0.000000e+00 : f32
    %34 = vector.broadcast %cst_17 : f32 to vector<2x400xf32>
    %35 = arith.cmpf oge, %33, %34 : vector<2x400xf32>
    %36 = vector.extract_strided_slice %4 {offsets = [3, 0], sizes = [1, 400], strides = [1, 1]} : vector<4x400xf32> to vector<1x400xf32>
    %37 = vector.broadcast %36 : vector<1x400xf32> to vector<2x400xf32>
    %38 = arith.mulf %37, %33 : vector<2x400xf32>
    %39 = arith.select %35, %33, %38 : vector<2x400xi1>, vector<2x400xf32>
    %c0_18 = arith.constant 0 : index
    %c0_19 = arith.constant 0 : index
    %40 = vector.load %arg3[%c0_18, %c0_19] : memref<400x512xf32, #tpu.memory_space<vmem>>, vector<400x512xf32>
    %cst_20 = arith.constant dense<0.000000e+00> : vector<2x512xf32>
    %41 = tpu.matmul %39, %40, %cst_20 {dimension_numbers = #tpu.dot_dimension_numbers<[1], [0], [0], [1], [0, 0, 1, 1], [], []>} : vector<2x400xf32>, vector<400x512xf32>, vector<2x512xf32> -> vector<2x512xf32>
    %c0_21 = arith.constant 0 : index
    %c512 = arith.constant 512 : index
    %42 = vector.load %arg11[%c0_21, %c512] : memref<4x2176xf32, #tpu.memory_space<vmem>>, vector<4x512xf32>
    %43 = vector.extract_strided_slice %42 {offsets = [0, 0], sizes = [1, 512], strides = [1, 1]} : vector<4x512xf32> to vector<1x512xf32>
    %44 = vector.broadcast %43 : vector<1x512xf32> to vector<2x512xf32>
    %45 = arith.addf %41, %44 : vector<2x512xf32>
    %cst_22 = arith.constant dense<0.000000e+00> : vector<512xf32>
    %46 = vector.multi_reduction <add>, %45, %cst_22 [0] : vector<2x512xf32> to vector<512xf32>
    %47 = vector.shape_cast %46 : vector<512xf32> to vector<1x512xf32>
    %cst_23 = arith.constant 2.000000e+00 : f32
    %48 = vector.broadcast %cst_23 : f32 to vector<1x512xf32>
    %49 = arith.divf %47, %48 : vector<1x512xf32>
    %c0_24 = arith.constant 0 : index
    %c0_25 = arith.constant 0 : index
    %50 = vector.load %arg6[%c0_24, %c0_25] : memref<512x512xf32, #tpu.memory_space<vmem>>, vector<512x512xf32>
    %cst_26 = arith.constant dense<0.000000e+00> : vector<1x512xf32>
    %51 = tpu.matmul %49, %50, %cst_26 {dimension_numbers = #tpu.dot_dimension_numbers<[1], [0], [0], [1], [0, 0, 1, 1], [], []>} : vector<1x512xf32>, vector<512x512xf32>, vector<1x512xf32> -> vector<1x512xf32>
    %52 = vector.broadcast %51 : vector<1x512xf32> to vector<2x512xf32>
    %53 = arith.subf %45, %52 : vector<2x512xf32>
    %54 = arith.mulf %53, %53 : vector<2x512xf32>
    %cst_27 = arith.constant dense<0.000000e+00> : vector<512xf32>
    %55 = vector.multi_reduction <add>, %54, %cst_27 [0] : vector<2x512xf32> to vector<512xf32>
    %56 = vector.shape_cast %55 : vector<512xf32> to vector<1x512xf32>
    %cst_28 = arith.constant 2.000000e+00 : f32
    %57 = vector.broadcast %cst_28 : f32 to vector<1x512xf32>
    %58 = arith.divf %56, %57 : vector<1x512xf32>
    %c0_29 = arith.constant 0 : index
    %c0_30 = arith.constant 0 : index
    %59 = vector.load %arg6[%c0_29, %c0_30] : memref<512x512xf32, #tpu.memory_space<vmem>>, vector<512x512xf32>
    %cst_31 = arith.constant dense<0.000000e+00> : vector<1x512xf32>
    %60 = tpu.matmul %58, %59, %cst_31 {dimension_numbers = #tpu.dot_dimension_numbers<[1], [0], [0], [1], [0, 0, 1, 1], [], []>} : vector<1x512xf32>, vector<512x512xf32>, vector<1x512xf32> -> vector<1x512xf32>
    %61 = vector.extract_strided_slice %42 {offsets = [1, 0], sizes = [1, 512], strides = [1, 1]} : vector<4x512xf32> to vector<1x512xf32>
    %62 = vector.broadcast %61 : vector<1x512xf32> to vector<2x512xf32>
    %63 = arith.mulf %62, %53 : vector<2x512xf32>
    %cst_32 = arith.constant 9.99999974E-6 : f32
    %64 = vector.broadcast %cst_32 : f32 to vector<1x512xf32>
    %65 = arith.addf %60, %64 : vector<1x512xf32>
    %66 = math.rsqrt %65 : vector<1x512xf32>
    %67 = vector.broadcast %66 : vector<1x512xf32> to vector<2x512xf32>
    %68 = arith.mulf %63, %67 : vector<2x512xf32>
    %69 = vector.extract_strided_slice %42 {offsets = [2, 0], sizes = [1, 512], strides = [1, 1]} : vector<4x512xf32> to vector<1x512xf32>
    %70 = vector.broadcast %69 : vector<1x512xf32> to vector<2x512xf32>
    %71 = arith.addf %68, %70 : vector<2x512xf32>
    %cst_33 = arith.constant 0.000000e+00 : f32
    %72 = vector.broadcast %cst_33 : f32 to vector<2x512xf32>
    %73 = arith.cmpf oge, %71, %72 : vector<2x512xf32>
    %74 = vector.extract_strided_slice %42 {offsets = [3, 0], sizes = [1, 512], strides = [1, 1]} : vector<4x512xf32> to vector<1x512xf32>
    %75 = vector.broadcast %74 : vector<1x512xf32> to vector<2x512xf32>
    %76 = arith.mulf %75, %71 : vector<2x512xf32>
    %77 = arith.select %73, %71, %76 : vector<2x512xi1>, vector<2x512xf32>
    %c0_34 = arith.constant 0 : index
    %c0_35 = arith.constant 0 : index
    %78 = vector.load %arg4[%c0_34, %c0_35] : memref<512x576xf32, #tpu.memory_space<vmem>>, vector<512x576xf32>
    %cst_36 = arith.constant dense<0.000000e+00> : vector<2x576xf32>
    %79 = tpu.matmul %77, %78, %cst_36 {dimension_numbers = #tpu.dot_dimension_numbers<[1], [0], [0], [1], [0, 0, 1, 1], [], []>} : vector<2x512xf32>, vector<512x576xf32>, vector<2x576xf32> -> vector<2x576xf32>
    %c0_37 = arith.constant 0 : index
    %c1024 = arith.constant 1024 : index
    %80 = vector.load %arg11[%c0_37, %c1024] : memref<4x2176xf32, #tpu.memory_space<vmem>>, vector<4x576xf32>
    %81 = vector.extract_strided_slice %80 {offsets = [0, 0], sizes = [1, 576], strides = [1, 1]} : vector<4x576xf32> to vector<1x576xf32>
    %82 = vector.broadcast %81 : vector<1x576xf32> to vector<2x576xf32>
    %83 = arith.addf %79, %82 : vector<2x576xf32>
    %cst_38 = arith.constant dense<0.000000e+00> : vector<576xf32>
    %84 = vector.multi_reduction <add>, %83, %cst_38 [0] : vector<2x576xf32> to vector<576xf32>
    %85 = vector.shape_cast %84 : vector<576xf32> to vector<1x576xf32>
    %cst_39 = arith.constant 2.000000e+00 : f32
    %86 = vector.broadcast %cst_39 : f32 to vector<1x576xf32>
    %87 = arith.divf %85, %86 : vector<1x576xf32>
    %c0_40 = arith.constant 0 : index
    %c0_41 = arith.constant 0 : index
    %88 = vector.load %arg7[%c0_40, %c0_41] : memref<576x576xf32, #tpu.memory_space<vmem>>, vector<576x576xf32>
    %cst_42 = arith.constant dense<0.000000e+00> : vector<1x576xf32>
    %89 = tpu.matmul %87, %88, %cst_42 {dimension_numbers = #tpu.dot_dimension_numbers<[1], [0], [0], [1], [0, 0, 1, 1], [], []>} : vector<1x576xf32>, vector<576x576xf32>, vector<1x576xf32> -> vector<1x576xf32>
    %90 = vector.broadcast %89 : vector<1x576xf32> to vector<2x576xf32>
    %91 = arith.subf %83, %90 : vector<2x576xf32>
    %92 = arith.mulf %91, %91 : vector<2x576xf32>
    %cst_43 = arith.constant dense<0.000000e+00> : vector<576xf32>
    %93 = vector.multi_reduction <add>, %92, %cst_43 [0] : vector<2x576xf32> to vector<576xf32>
    %94 = vector.shape_cast %93 : vector<576xf32> to vector<1x576xf32>
    %cst_44 = arith.constant 2.000000e+00 : f32
    %95 = vector.broadcast %cst_44 : f32 to vector<1x576xf32>
    %96 = arith.divf %94, %95 : vector<1x576xf32>
    %c0_45 = arith.constant 0 : index
    %c0_46 = arith.constant 0 : index
    %97 = vector.load %arg7[%c0_45, %c0_46] : memref<576x576xf32, #tpu.memory_space<vmem>>, vector<576x576xf32>
    %cst_47 = arith.constant dense<0.000000e+00> : vector<1x576xf32>
    %98 = tpu.matmul %96, %97, %cst_47 {dimension_numbers = #tpu.dot_dimension_numbers<[1], [0], [0], [1], [0, 0, 1, 1], [], []>} : vector<1x576xf32>, vector<576x576xf32>, vector<1x576xf32> -> vector<1x576xf32>
    %99 = vector.extract_strided_slice %80 {offsets = [1, 0], sizes = [1, 576], strides = [1, 1]} : vector<4x576xf32> to vector<1x576xf32>
    %100 = vector.broadcast %99 : vector<1x576xf32> to vector<2x576xf32>
    %101 = arith.mulf %100, %91 : vector<2x576xf32>
    %cst_48 = arith.constant 9.99999974E-6 : f32
    %102 = vector.broadcast %cst_48 : f32 to vector<1x576xf32>
    %103 = arith.addf %98, %102 : vector<1x576xf32>
    %104 = math.rsqrt %103 : vector<1x576xf32>
    %105 = vector.broadcast %104 : vector<1x576xf32> to vector<2x576xf32>
    %106 = arith.mulf %101, %105 : vector<2x576xf32>
    %107 = vector.extract_strided_slice %80 {offsets = [2, 0], sizes = [1, 576], strides = [1, 1]} : vector<4x576xf32> to vector<1x576xf32>
    %108 = vector.broadcast %107 : vector<1x576xf32> to vector<2x576xf32>
    %109 = arith.addf %106, %108 : vector<2x576xf32>
    %cst_49 = arith.constant 0.000000e+00 : f32
    %110 = vector.broadcast %cst_49 : f32 to vector<2x576xf32>
    %111 = arith.cmpf oge, %109, %110 : vector<2x576xf32>
    %112 = vector.extract_strided_slice %80 {offsets = [3, 0], sizes = [1, 576], strides = [1, 1]} : vector<4x576xf32> to vector<1x576xf32>
    %113 = vector.broadcast %112 : vector<1x576xf32> to vector<2x576xf32>
    %114 = arith.mulf %113, %109 : vector<2x576xf32>
    %115 = arith.select %111, %109, %114 : vector<2x576xi1>, vector<2x576xf32>
    %c0_50 = arith.constant 0 : index
    %c0_51 = arith.constant 0 : index
    %116 = vector.load %arg8[%c0_50, %c0_51] : memref<576x256xf32, #tpu.memory_space<vmem>>, vector<576x256xf32>
    %cst_52 = arith.constant dense<0.000000e+00> : vector<2x256xf32>
    %117 = tpu.matmul %115, %116, %cst_52 {dimension_numbers = #tpu.dot_dimension_numbers<[1], [0], [0], [1], [0, 0, 1, 1], [], []>} : vector<2x576xf32>, vector<576x256xf32>, vector<2x256xf32> -> vector<2x256xf32>
    %c0_53 = arith.constant 0 : index
    %c1664 = arith.constant 1664 : index
    %118 = vector.load %arg11[%c0_53, %c1664] : memref<4x2176xf32, #tpu.memory_space<vmem>>, vector<4x256xf32>
    %119 = vector.extract_strided_slice %118 {offsets = [0, 0], sizes = [1, 256], strides = [1, 1]} : vector<4x256xf32> to vector<1x256xf32>
    %120 = vector.broadcast %119 : vector<1x256xf32> to vector<2x256xf32>
    %121 = arith.addf %117, %120 : vector<2x256xf32>
    %cst_54 = arith.constant dense<0.000000e+00> : vector<256xf32>
    %122 = vector.multi_reduction <add>, %121, %cst_54 [0] : vector<2x256xf32> to vector<256xf32>
    %123 = vector.shape_cast %122 : vector<256xf32> to vector<1x256xf32>
    %cst_55 = arith.constant 2.000000e+00 : f32
    %124 = vector.broadcast %cst_55 : f32 to vector<1x256xf32>
    %125 = arith.divf %123, %124 : vector<1x256xf32>
    %126 = vector.broadcast %125 : vector<1x256xf32> to vector<2x256xf32>
    %127 = arith.subf %121, %126 : vector<2x256xf32>
    %128 = arith.mulf %127, %127 : vector<2x256xf32>
    %cst_56 = arith.constant dense<0.000000e+00> : vector<256xf32>
    %129 = vector.multi_reduction <add>, %128, %cst_56 [0] : vector<2x256xf32> to vector<256xf32>
    %130 = vector.shape_cast %129 : vector<256xf32> to vector<1x256xf32>
    %cst_57 = arith.constant 2.000000e+00 : f32
    %131 = vector.broadcast %cst_57 : f32 to vector<1x256xf32>
    %132 = arith.divf %130, %131 : vector<1x256xf32>
    %133 = vector.extract_strided_slice %118 {offsets = [1, 0], sizes = [1, 256], strides = [1, 1]} : vector<4x256xf32> to vector<1x256xf32>
    %134 = vector.broadcast %133 : vector<1x256xf32> to vector<2x256xf32>
    %135 = arith.mulf %134, %127 : vector<2x256xf32>
    %cst_58 = arith.constant 9.99999974E-6 : f32
    %136 = vector.broadcast %cst_58 : f32 to vector<1x256xf32>
    %137 = arith.addf %132, %136 : vector<1x256xf32>
    %138 = math.rsqrt %137 : vector<1x256xf32>
    %139 = vector.broadcast %138 : vector<1x256xf32> to vector<2x256xf32>
    %140 = arith.mulf %135, %139 : vector<2x256xf32>
    %141 = vector.extract_strided_slice %118 {offsets = [2, 0], sizes = [1, 256], strides = [1, 1]} : vector<4x256xf32> to vector<1x256xf32>
    %142 = vector.broadcast %141 : vector<1x256xf32> to vector<2x256xf32>
    %143 = arith.addf %140, %142 : vector<2x256xf32>
    %cst_59 = arith.constant 0.000000e+00 : f32
    %144 = vector.broadcast %cst_59 : f32 to vector<2x256xf32>
    %145 = arith.cmpf oge, %143, %144 : vector<2x256xf32>
    %146 = vector.extract_strided_slice %118 {offsets = [3, 0], sizes = [1, 256], strides = [1, 1]} : vector<4x256xf32> to vector<1x256xf32>
    %147 = vector.broadcast %146 : vector<1x256xf32> to vector<2x256xf32>
    %148 = arith.mulf %147, %143 : vector<2x256xf32>
    %149 = arith.select %145, %143, %148 : vector<2x256xi1>, vector<2x256xf32>
    %c0_60 = arith.constant 0 : index
    %c0_61 = arith.constant 0 : index
    %150 = vector.load %arg9[%c0_60, %c0_61] : memref<256x64xf32, #tpu.memory_space<vmem>>, vector<256x64xf32>
    %cst_62 = arith.constant dense<0.000000e+00> : vector<2x64xf32>
    %151 = tpu.matmul %149, %150, %cst_62 {dimension_numbers = #tpu.dot_dimension_numbers<[1], [0], [0], [1], [0, 0, 1, 1], [], []>} : vector<2x256xf32>, vector<256x64xf32>, vector<2x64xf32> -> vector<2x64xf32>
    %c0_63 = arith.constant 0 : index
    %c1920 = arith.constant 1920 : index
    %152 = vector.load %arg11[%c0_63, %c1920] : memref<4x2176xf32, #tpu.memory_space<vmem>>, vector<4x64xf32>
    %153 = vector.extract_strided_slice %152 {offsets = [0, 0], sizes = [1, 64], strides = [1, 1]} : vector<4x64xf32> to vector<1x64xf32>
    %154 = vector.broadcast %153 : vector<1x64xf32> to vector<2x64xf32>
    %155 = arith.addf %151, %154 : vector<2x64xf32>
    %cst_64 = arith.constant dense<0.000000e+00> : vector<64xf32>
    %156 = vector.multi_reduction <add>, %155, %cst_64 [0] : vector<2x64xf32> to vector<64xf32>
    %157 = vector.shape_cast %156 : vector<64xf32> to vector<1x64xf32>
    %cst_65 = arith.constant 2.000000e+00 : f32
    %158 = vector.broadcast %cst_65 : f32 to vector<1x64xf32>
    %159 = arith.divf %157, %158 : vector<1x64xf32>
    %160 = vector.broadcast %159 : vector<1x64xf32> to vector<2x64xf32>
    %161 = arith.subf %155, %160 : vector<2x64xf32>
    %162 = arith.mulf %161, %161 : vector<2x64xf32>
    %cst_66 = arith.constant dense<0.000000e+00> : vector<64xf32>
    %163 = vector.multi_reduction <add>, %162, %cst_66 [0] : vector<2x64xf32> to vector<64xf32>
    %164 = vector.shape_cast %163 : vector<64xf32> to vector<1x64xf32>
    %cst_67 = arith.constant 2.000000e+00 : f32
    %165 = vector.broadcast %cst_67 : f32 to vector<1x64xf32>
    %166 = arith.divf %164, %165 : vector<1x64xf32>
    %167 = vector.extract_strided_slice %152 {offsets = [1, 0], sizes = [1, 64], strides = [1, 1]} : vector<4x64xf32> to vector<1x64xf32>
    %168 = vector.broadcast %167 : vector<1x64xf32> to vector<2x64xf32>
    %169 = arith.mulf %168, %161 : vector<2x64xf32>
    %cst_68 = arith.constant 9.99999974E-6 : f32
    %170 = vector.broadcast %cst_68 : f32 to vector<1x64xf32>
    %171 = arith.addf %166, %170 : vector<1x64xf32>
    %172 = math.rsqrt %171 : vector<1x64xf32>
    %173 = vector.broadcast %172 : vector<1x64xf32> to vector<2x64xf32>
    %174 = arith.mulf %169, %173 : vector<2x64xf32>
    %175 = vector.extract_strided_slice %152 {offsets = [2, 0], sizes = [1, 64], strides = [1, 1]} : vector<4x64xf32> to vector<1x64xf32>
    %176 = vector.broadcast %175 : vector<1x64xf32> to vector<2x64xf32>
    %177 = arith.addf %174, %176 : vector<2x64xf32>
    %cst_69 = arith.constant 0.000000e+00 : f32
    %178 = vector.broadcast %cst_69 : f32 to vector<2x64xf32>
    %179 = arith.cmpf oge, %177, %178 : vector<2x64xf32>
    %180 = vector.extract_strided_slice %152 {offsets = [3, 0], sizes = [1, 64], strides = [1, 1]} : vector<4x64xf32> to vector<1x64xf32>
    %181 = vector.broadcast %180 : vector<1x64xf32> to vector<2x64xf32>
    %182 = arith.mulf %181, %177 : vector<2x64xf32>
    %183 = arith.select %179, %177, %182 : vector<2x64xi1>, vector<2x64xf32>
    %c0_70 = arith.constant 0 : index
    %c0_71 = arith.constant 0 : index
    %184 = vector.load %arg10[%c0_70, %c0_71] : memref<64x128xf32, #tpu.memory_space<vmem>>, vector<64x128xf32>
    %cst_72 = arith.constant dense<0.000000e+00> : vector<2x128xf32>
    %185 = tpu.matmul %183, %184, %cst_72 {dimension_numbers = #tpu.dot_dimension_numbers<[1], [0], [0], [1], [0, 0, 1, 1], [], []>} : vector<2x64xf32>, vector<64x128xf32>, vector<2x128xf32> -> vector<2x128xf32>
    %c0_73 = arith.constant 0 : index
    %c2048 = arith.constant 2048 : index
    %186 = vector.load %arg11[%c0_73, %c2048] : memref<4x2176xf32, #tpu.memory_space<vmem>>, vector<1x128xf32>
    %187 = vector.broadcast %186 : vector<1x128xf32> to vector<2x128xf32>
    %188 = arith.addf %185, %187 : vector<2x128xf32>
    %cst_74 = arith.constant dense<0xFF800000> : vector<2xf32>
    %189 = vector.multi_reduction <maximumf>, %188, %cst_74 [1] : vector<2x128xf32> to vector<2xf32>
    %190 = vector.shape_cast %189 : vector<2xf32> to vector<2x1xf32>
    %191 = vector.broadcast %190 : vector<2x1xf32> to vector<2x128xf32>
    %192 = arith.subf %188, %191 : vector<2x128xf32>
    %193 = math.exp %192 : vector<2x128xf32>
    %cst_75 = arith.constant dense<0.000000e+00> : vector<2xf32>
    %194 = vector.multi_reduction <add>, %193, %cst_75 [1] : vector<2x128xf32> to vector<2xf32>
    %195 = vector.shape_cast %194 : vector<2xf32> to vector<2x1xf32>
    %196 = vector.broadcast %195 : vector<2x1xf32> to vector<2x128xf32>
    %197 = arith.divf %193, %196 : vector<2x128xf32>
    %c0_76 = arith.constant 0 : index
    %c0_77 = arith.constant 0 : index
    %c0_78 = arith.constant 0 : index
    %198 = vector.load %arg12[%c0_76, %c0_77, %c0_78] : memref<1x2x128xf32, #tpu.memory_space<vmem>>, vector<1x2x128xf32>
    %199 = vector.shape_cast %198 : vector<1x2x128xf32> to vector<2x128xf32>
    %200 = vector.shape_cast %197 : vector<2x128xf32> to vector<1x2x128xf32>
    tpu.vector_store %arg12[%c0_76, %c0_77, %c0_78], %200 {strides = array<i32>} : memref<1x2x128xf32, #tpu.memory_space<vmem>>, vector<1x2x128xf32>,
    return
  }
  func.func @transform_0(%arg0: i32) -> (i32, i32, i32) {
    %c0_i32 = arith.constant 0 : i32
    %c0_i32_0 = arith.constant 0 : i32
    %c0_i32_1 = arith.constant 0 : i32
    return %arg0, %c0_i32, %c0_i32_0 : i32, i32, i32
  }
  func.func @transform_1(%arg0: i32) -> (i32, i32) {
    %c0_i32 = arith.constant 0 : i32
    %c0_i32_0 = arith.constant 0 : i32
    %c0_i32_1 = arith.constant 0 : i32
    return %c0_i32, %c0_i32_0 : i32, i32
  }
  func.func @transform_2(%arg0: i32) -> (i32, i32) {
    %c0_i32 = arith.constant 0 : i32
    %c0_i32_0 = arith.constant 0 : i32
    %c0_i32_1 = arith.constant 0 : i32
    return %c0_i32, %c0_i32_0 : i32, i32
  }
  func.func @transform_3(%arg0: i32) -> (i32, i32) {
    %c0_i32 = arith.constant 0 : i32
    %c0_i32_0 = arith.constant 0 : i32
    %c0_i32_1 = arith.constant 0 : i32
    return %c0_i32, %c0_i32_0 : i32, i32
  }
  func.func @transform_4(%arg0: i32) -> (i32, i32) {
    %c0_i32 = arith.constant 0 : i32
    %c0_i32_0 = arith.constant 0 : i32
    %c0_i32_1 = arith.constant 0 : i32
    return %c0_i32, %c0_i32_0 : i32, i32
  }
  func.func @transform_5(%arg0: i32) -> (i32, i32) {
    %c0_i32 = arith.constant 0 : i32
    %c0_i32_0 = arith.constant 0 : i32
    %c0_i32_1 = arith.constant 0 : i32
    return %c0_i32, %c0_i32_0 : i32, i32
  }
  func.func @transform_6(%arg0: i32) -> (i32, i32) {
    %c0_i32 = arith.constant 0 : i32
    %c0_i32_0 = arith.constant 0 : i32
    %c0_i32_1 = arith.constant 0 : i32
    return %c0_i32, %c0_i32_0 : i32, i32
  }
  func.func @transform_7(%arg0: i32) -> (i32, i32) {
    %c0_i32 = arith.constant 0 : i32
    %c0_i32_0 = arith.constant 0 : i32
    %c0_i32_1 = arith.constant 0 : i32
    return %c0_i32, %c0_i32_0 : i32, i32
  }
  func.func @transform_8(%arg0: i32) -> (i32, i32) {
    %c0_i32 = arith.constant 0 : i32
    %c0_i32_0 = arith.constant 0 : i32
    %c0_i32_1 = arith.constant 0 : i32
    return %c0_i32, %c0_i32_0 : i32, i32
  }
  func.func @transform_9(%arg0: i32) -> (i32, i32) {
    %c0_i32 = arith.constant 0 : i32
    %c0_i32_0 = arith.constant 0 : i32
    %c0_i32_1 = arith.constant 0 : i32
    return %c0_i32, %c0_i32_0 : i32, i32
  }
  func.func @transform_10(%arg0: i32) -> (i32, i32) {
    %c0_i32 = arith.constant 0 : i32
    %c0_i32_0 = arith.constant 0 : i32
    %c0_i32_1 = arith.constant 0 : i32
    return %c0_i32, %c0_i32_0 : i32, i32
  }
  func.func @transform_11(%arg0: i32) -> (i32, i32, i32) {
    %c0_i32 = arith.constant 0 : i32
    %c0_i32_0 = arith.constant 0 : i32
    %c0_i32_1 = arith.constant 0 : i32
    return %arg0, %c0_i32, %c0_i32_0 : i32, i32, i32
  }
}

</mosaic_0001>

<llo_original>
// kernel: pairsets_forward.1
$region0: #{pairsets_forward.1}
  #allocation0 [shape = 'u32[]', space=smem, size = 0x4, offset = 0x4, fixed_abs, tag = 'smem constant byte address 0x4 - core index']
  #allocation1 [shape = 'u32[144,128]{1,0:T(1,128)}', space=vmem, size = 0x12000, scoped, tag = 'internal scratch']
  %s0 = inlined_call_operand.vmem [shape: f32[2,2,196], index: 0, kind: input, shape index: {}]
  %s1 = inlined_call_operand.hbm [shape: f32[196,400], index: 1, kind: input, shape index: {}]
  %s2 = inlined_call_operand.hbm [shape: f32[400,512], index: 2, kind: input, shape index: {}]
  %s3 = inlined_call_operand.vmem [shape: f32[512,576], index: 3, kind: input, shape index: {}]
  %s4 = inlined_call_operand.hbm [shape: f32[400,400], index: 4, kind: input, shape index: {}]
  %s5 = inlined_call_operand.vmem [shape: f32[512,512], index: 5, kind: input, shape index: {}]
  %s6 = inlined_call_operand.vmem [shape: f32[576,576], index: 6, kind: input, shape index: {}]
  %s7 = inlined_call_operand.hbm [shape: f32[576,256], index: 7, kind: input, shape index: {}]
  %s8 = inlined_call_operand.vmem [shape: f32[256,64], index: 8, kind: input, shape index: {}]
  %s9 = inlined_call_operand.vmem [shape: f32[64,128], index: 9, kind: input, shape index: {}]
  %s10 = inlined_call_operand.vmem [shape: f32[4,2176], index: 10, kind: input, shape index: {}]
  %s11 = inlined_call_operand.vmem [shape: f32[2,2,128], index: 11, kind: output, shape index: {}]
  %s12 = sld [smem:[#allocation0]]
  $region93: #{pairsets_forward.1} parent=0
    _
  %s14 = ssub.s32 1, %s12
  %s15 = scalar_select 0, %s14, %s12
  $region1: #{pairsets_forward.1} parent=0
    #allocation2 [shape = 'u8[409600]{0}', space=vmem, size = 0x64000, scoped, tag = 'input window, operand 1, single buffered']
    #allocation3 [shape = 's32[2]{0}', space=sflag, size = 0x8, scoped, tag = 'scoped memory for pairsets_forward.1']
    #allocation4 [shape = 'u8[819200]{0}', space=vmem, size = 0xc8000, scoped, tag = 'input window, operand 2, single buffered']
    #allocation5 [shape = 's32[1]{0}', space=sflag, size = 0x4, scoped, tag = 'scoped memory for pairsets_forward.1']
    #allocation6 [shape = 'u8[819200]{0}', space=vmem, size = 0xc8000, scoped, tag = 'input window, operand 4, single buffered']
    #allocation7 [shape = 'u8[589824]{0}', space=vmem, size = 0x90000, scoped, tag = 'input window, operand 7, single buffered']
    #allocation8 [shape = 's32[1]{0}', space=sflag, size = 0x4, scoped, tag = 'scoped memory for pairsets_forward.1']
    %16 = vsyncpa [#allocation3], 0
    %17 = vsyncpa [#allocation5], 0
    %18 = vsyncpa [#allocation8], 0
    loop: start=0, step=1, limit=4
    $region2: #{pairsets_forward.1} parent=1 // loop_pre_header
      _
    $region3: #{pairsets_forward.1} parent=1 // loop_header
      %s20 = sphi 0, %s24
      %p21 = scmp.ge.s32.totalorder %s20, 4
      %s30 = sphi 0, %s32
      %s33 = sphi 0, %s30
      %s34 = sphi 0, %s33
      %s50 = sphi 0, %s34
      %s54 = sphi 0, %s54
      %s56 = sphi 0, %s54
      %s57 = sphi 0, %s56
      %s71 = sphi 0, %s57
      %s75 = sphi 0, %s75
      %s77 = sphi 0, %s75
      %s78 = sphi 0, %s77
      %s92 = sphi 0, %s78
      %s96 = sphi 0, %s96
      %s98 = sphi 0, %s96
      %s99 = sphi 0, %s98
      %s113 = sphi 0, %s99
      %s117 = sphi 0, %s117
      %s119 = sphi 0, %s117
      %s120 = sphi 0, %s119
      %s134 = sphi 0, %s120
      %s138 = sphi 0, %s138
      %s140 = sphi 0, %s138
      %s141 = sphi 0, %s140
      %s155 = sphi 0, %s141
      %s159 = sphi 0, %s159
      %s161 = sphi 0, %s159
      %s162 = sphi 0, %s161
      %s176 = sphi 0, %s162
      %s180 = sphi 0, %s180
      %s182 = sphi 0, %s180
      %s183 = sphi 0, %s182
      %s197 = sphi 0, %s183
      %s201 = sphi 0, %s201
      %s203 = sphi 0, %s201
      %s204 = sphi 0, %s203
      %s218 = sphi 0, %s204
      %s222 = sphi 0, %s222
      %s224 = sphi 0, %s222
      %s225 = sphi 0, %s224
      %s239 = sphi 0, %s225
      %s243 = sphi 0, %s243
      %s245 = sphi 0, %s243
      %s246 = sphi 0, %s245
      %s260 = sphi 0, %s246
      %s266 = sphi 0, %s268
      %s269 = sphi 0, %s266
      %s270 = sphi 0, %s269
      %s286 = sphi 0, %s270
    $region4: #{pairsets_forward.1} parent=1 // loop_header_branch
      %23 = sbr.rel (%p21) target = $region8
    $region5: #{pairsets_forward.1} parent=1 // loop_body
      %s25 = ssub.s32 %s20, 1
      %s26 = ssub.s32 %s20, 2
      %s27 = sadd.s32 %s20, 1
      %s28 = ssub.s32 %s20, %s27
      %p29 = scmp.eq.s32.totalorder %s28, 0
      %s31 = sadd.s32 %s30, 1
      %s32 = scalar_select %p29, %s30, %s31
      %p35 = pneg %p29
      %p36 = scmp.eq.s32.totalorder %s20, 1
      %p37 = por %p35, %p36
      %p38 = scmp.ne.s32.totalorder %s30, %s33
      %p39 = scmp.eq.s32.totalorder %s20, 0
      %p40 = por %p38, %p39
      %p41 = scmp.ne.s32.totalorder %s30, %s33
      %p42 = scmp.eq.s32.totalorder %s25, 1
      %p43 = por %p41, %p42
      %p44 = scmp.ne.s32.totalorder %s33, %s34
      %p45 = scmp.eq.s32.totalorder %s25, 0
      %p46 = por %p44, %p45
      %p47 = scmp.ne.s32.totalorder %s33, %s34
      %p48 = scmp.eq.s32.totalorder %s26, 1
      %p49 = por %p47, %p48
      %p51 = scmp.ne.s32.totalorder %s34, %s50
      %p52 = scmp.eq.s32.totalorder %s26, 0
      %p53 = por %p51, %p52
      %s55 = sadd.s32 %s54, 1
      %p58 = scmp.eq.s32.totalorder %s20, 1
      %p59 = scmp.ne.s32.totalorder %s54, %s56
      %p60 = scmp.eq.s32.totalorder %s20, 0
      %p61 = por %p59, %p60
      %p62 = scmp.ne.s32.totalorder %s54, %s56
      %p63 = scmp.eq.s32.totalorder %s25, 1
      %p64 = por %p62, %p63
      %p65 = scmp.ne.s32.totalorder %s56, %s57
      %p66 = scmp.eq.s32.totalorder %s25, 0
      %p67 = por %p65, %p66
      %p68 = scmp.ne.s32.totalorder %s56, %s57
      %p69 = scmp.eq.s32.totalorder %s26, 1
      %p70 = por %p68, %p69
      %p72 = scmp.ne.s32.totalorder %s57, %s71
      %p73 = scmp.eq.s32.totalorder %s26, 0
      %p74 = por %p72, %p73
      %s76 = sadd.s32 %s75, 1
      %p79 = scmp.eq.s32.totalorder %s20, 1
      %p80 = scmp.ne.s32.totalorder %s75, %s77
      %p81 = scmp.eq.s32.totalorder %s20, 0
      %p82 = por %p80, %p81
      %p83 = scmp.ne.s32.totalorder %s75, %s77
      %p84 = scmp.eq.s32.totalorder %s25, 1
      %p85 = por %p83, %p84
      %p86 = scmp.ne.s32.totalorder %s77, %s78
      %p87 = scmp.eq.s32.totalorder %s25, 0
      %p88 = por %p86, %p87
      %p89 = scmp.ne.s32.totalorder %s77, %s78
      %p90 = scmp.eq.s32.totalorder %s26, 1
      %p91 = por %p89, %p90
      %p93 = scmp.ne.s32.totalorder %s78, %s92
      %p94 = scmp.eq.s32.totalorder %s26, 0
      %p95 = por %p93, %p94
      %s97 = sadd.s32 %s96, 1
      %p100 = scmp.eq.s32.totalorder %s20, 1
      %p101 = scmp.ne.s32.totalorder %s96, %s98
      %p102 = scmp.eq.s32.totalorder %s20, 0
      %p103 = por %p101, %p102
      %p104 = scmp.ne.s32.totalorder %s96, %s98
      %p105 = scmp.eq.s32.totalorder %s25, 1
      %p106 = por %p104, %p105
      %p107 = scmp.ne.s32.totalorder %s98, %s99
      %p108 = scmp.eq.s32.totalorder %s25, 0
      %p109 = por %p107, %p108
      %p110 = scmp.ne.s32.totalorder %s98, %s99
      %p111 = scmp.eq.s32.totalorder %s26, 1
      %p112 = por %p110, %p111
      %p114 = scmp.ne.s32.totalorder %s99, %s113
      %p115 = scmp.eq.s32.totalorder %s26, 0
      %p116 = por %p114, %p115
      %s118 = sadd.s32 %s117, 1
      %p121 = scmp.eq.s32.totalorder %s20, 1
      %p122 = scmp.ne.s32.totalorder %s117, %s119
      %p123 = scmp.eq.s32.totalorder %s20, 0
      %p124 = por %p122, %p123
      %p125 = scmp.ne.s32.totalorder %s117, %s119
      %p126 = scmp.eq.s32.totalorder %s25, 1
      %p127 = por %p125, %p126
      %p128 = scmp.ne.s32.totalorder %s119, %s120
      %p129 = scmp.eq.s32.totalorder %s25, 0
      %p130 = por %p128, %p129
      %p131 = scmp.ne.s32.totalorder %s119, %s120
      %p132 = scmp.eq.s32.totalorder %s26, 1
      %p133 = por %p131, %p132
      %p135 = scmp.ne.s32.totalorder %s120, %s134
      %p136 = scmp.eq.s32.totalorder %s26, 0
      %p137 = por %p135, %p136
      %s139 = sadd.s32 %s138, 1
      %p142 = scmp.eq.s32.totalorder %s20, 1
      %p143 = scmp.ne.s32.totalorder %s138, %s140
      %p144 = scmp.eq.s32.totalorder %s20, 0
      %p145 = por %p143, %p144
      %p146 = scmp.ne.s32.totalorder %s138, %s140
      %p147 = scmp.eq.s32.totalorder %s25, 1
      %p148 = por %p146, %p147
      %p149 = scmp.ne.s32.totalorder %s140, %s141
      %p150 = scmp.eq.s32.totalorder %s25, 0
      %p151 = por %p149, %p150
      %p152 = scmp.ne.s32.totalorder %s140, %s141
      %p153 = scmp.eq.s32.totalorder %s26, 1
      %p154 = por %p152, %p153
      %p156 = scmp.ne.s32.totalorder %s141, %s155
      %p157 = scmp.eq.s32.totalorder %s26, 0
      %p158 = por %p156, %p157
      %s160 = sadd.s32 %s159, 1
      %p163 = scmp.eq.s32.totalorder %s20, 1
      %p164 = scmp.ne.s32.totalorder %s159, %s161
      %p165 = scmp.eq.s32.totalorder %s20, 0
      %p166 = por %p164, %p165
      %p167 = scmp.ne.s32.totalorder %s159, %s161
      %p168 = scmp.eq.s32.totalorder %s25, 1
      %p169 = por %p167, %p168
      %p170 = scmp.ne.s32.totalorder %s161, %s162
      %p171 = scmp.eq.s32.totalorder %s25, 0
      %p172 = por %p170, %p171
      %p173 = scmp.ne.s32.totalorder %s161, %s162
      %p174 = scmp.eq.s32.totalorder %s26, 1
      %p175 = por %p173, %p174
      %p177 = scmp.ne.s32.totalorder %s162, %s176
      %p178 = scmp.eq.s32.totalorder %s26, 0
      %p179 = por %p177, %p178
      %s181 = sadd.s32 %s180, 1
      %p184 = scmp.eq.s32.totalorder %s20, 1
      %p185 = scmp.ne.s32.totalorder %s180, %s182
      %p186 = scmp.eq.s32.totalorder %s20, 0
      %p187 = por %p185, %p186
      %p188 = scmp.ne.s32.totalorder %s180, %s182
      %p189 = scmp.eq.s32.totalorder %s25, 1
      %p190 = por %p188, %p189
      %p191 = scmp.ne.s32.totalorder %s182, %s183
      %p192 = scmp.eq.s32.totalorder %s25, 0
      %p193 = por %p191, %p192
      %p194 = scmp.ne.s32.totalorder %s182, %s183
      %p195 = scmp.eq.s32.totalorder %s26, 1
      %p196 = por %p194, %p195
      %p198 = scmp.ne.s32.totalorder %s183, %s197
      %p199 = scmp.eq.s32.totalorder %s26, 0
      %p200 = por %p198, %p199
      %s202 = sadd.s32 %s201, 1
      %p205 = scmp.eq.s32.totalorder %s20, 1
      %p206 = scmp.ne.s32.totalorder %s201, %s203
      %p207 = scmp.eq.s32.totalorder %s20, 0
      %p208 = por %p206, %p207
      %p209 = scmp.ne.s32.totalorder %s201, %s203
      %p210 = scmp.eq.s32.totalorder %s25, 1
      %p211 = por %p209, %p210
      %p212 = scmp.ne.s32.totalorder %s203, %s204
      %p213 = scmp.eq.s32.totalorder %s25, 0
      %p214 = por %p212, %p213
      %p215 = scmp.ne.s32.totalorder %s203, %s204
      %p216 = scmp.eq.s32.totalorder %s26, 1
      %p217 = por %p215, %p216
      %p219 = scmp.ne.s32.totalorder %s204, %s218
      %p220 = scmp.eq.s32.totalorder %s26, 0
      %p221 = por %p219, %p220
      %s223 = sadd.s32 %s222, 1
      %p226 = scmp.eq.s32.totalorder %s20, 1
      %p227 = scmp.ne.s32.totalorder %s222, %s224
      %p228 = scmp.eq.s32.totalorder %s20, 0
      %p229 = por %p227, %p228
      %p230 = scmp.ne.s32.totalorder %s222, %s224
      %p231 = scmp.eq.s32.totalorder %s25, 1
      %p232 = por %p230, %p231
      %p233 = scmp.ne.s32.totalorder %s224, %s225
      %p234 = scmp.eq.s32.totalorder %s25, 0
      %p235 = por %p233, %p234
      %p236 = scmp.ne.s32.totalorder %s224, %s225
      %p237 = scmp.eq.s32.totalorder %s26, 1
      %p238 = por %p236, %p237
      %p240 = scmp.ne.s32.totalorder %s225, %s239
      %p241 = scmp.eq.s32.totalorder %s26, 0
      %p242 = por %p240, %p241
      %s244 = sadd.s32 %s243, 1
      %p247 = scmp.eq.s32.totalorder %s20, 1
      %p248 = scmp.ne.s32.totalorder %s243, %s245
      %p249 = scmp.eq.s32.totalorder %s20, 0
      %p250 = por %p248, %p249
      %p251 = scmp.ne.s32.totalorder %s243, %s245
      %p252 = scmp.eq.s32.totalorder %s25, 1
      %p253 = por %p251, %p252
      %p254 = scmp.ne.s32.totalorder %s245, %s246
      %p255 = scmp.eq.s32.totalorder %s25, 0
      %p256 = por %p254, %p255
      %p257 = scmp.ne.s32.totalorder %s245, %s246
      %p258 = scmp.eq.s32.totalorder %s26, 1
      %p259 = por %p257, %p258
      %p261 = scmp.ne.s32.totalorder %s246, %s260
      %p262 = scmp.eq.s32.totalorder %s26, 0
      %p263 = por %p261, %p262
      %s264 = ssub.s32 %s20, %s27
      %p265 = scmp.eq.s32.totalorder %s264, 0
      %s267 = sadd.s32 %s266, 1
      %s268 = scalar_select %p265, %s266, %s267
      %p271 = pneg %p265
      %p272 = scmp.eq.s32.totalorder %s20, 1
      %p273 = por %p271, %p272
      %p274 = scmp.ne.s32.totalorder %s266, %s269
      %p275 = scmp.eq.s32.totalorder %s20, 0
      %p276 = por %p274, %p275
      %p277 = scmp.ne.s32.totalorder %s266, %s269
      %p278 = scmp.eq.s32.totalorder %s25, 1
      %p279 = por %p277, %p278
      %p280 = scmp.ne.s32.totalorder %s269, %s270
      %p281 = scmp.eq.s32.totalorder %s25, 0
      %p282 = por %p280, %p281
      %p283 = scmp.ne.s32.totalorder %s269, %s270
      %p284 = scmp.eq.s32.totalorder %s26, 1
      %p285 = por %p283, %p284
      %p287 = scmp.ne.s32.totalorder %s270, %s286
      %p288 = scmp.eq.s32.totalorder %s26, 0
      %p289 = por %p287, %p288
      %p290 = scmp.le.s32.totalorder 1, %s20
      %p291 = scmp.lt.s32.totalorder %s20, 3
      %p292 = pnand %p290, %p291
      %p293 = pneg %p292
      // Predicated region
      $region9: #{pairsets_forward.1} parent=5 // pred_check
        _
      $region10: #{pairsets_forward.1} parent=5 // pred_check_branch
        %295 = sbr.rel (%p292) target = $region12
      $region11: #{pairsets_forward.1} parent=5 // pred_region
        %s296 = ssub.s32 %s20, 1
        // Predicated region
        $region13: #{pairsets_forward.1} parent=11 // pred_check
          %p297 = pneg %p67
        $region14: #{pairsets_forward.1} parent=11 // pred_check_branch
          %299 = sbr.rel (%p297) target = $region16
        $region15: #{pairsets_forward.1} parent=11 // pred_region
          %s301 = ssub.s32 12800, 12800
          %302 = vsyncadd [#allocation3], %s301
          %s303 = sshll.u32 [#allocation2], 4
          %s304 = int_to_ptr.vmem [resolvable:$true] %s303
          %309 = dma.hbm_to_vmem [thread:$0]  %s1, 12800, %s304, [#allocation3], 512, 512, 32
        $region16: #{pairsets_forward.1} parent=11 // pred_fallthru
          _
        // Predicated region
        $region17: #{pairsets_forward.1} parent=11 // pred_check
          %p310 = pneg %p88
        $region18: #{pairsets_forward.1} parent=11 // pred_check_branch
          %312 = sbr.rel (%p310) target = $region20
        $region19: #{pairsets_forward.1} parent=11 // pred_region
          %s314 = ssub.s32 25600, 25600
          %315 = vsyncadd [#allocation5], %s314
          %s316 = sshll.u32 [#allocation4], 4
          %s317 = int_to_ptr.vmem [resolvable:$true] %s316
          %322 = dma.hbm_to_vmem [thread:$0]  %s2, 25600, %s317, [#allocation5], 512, 512, 32
        $region20: #{pairsets_forward.1} parent=11 // pred_fallthru
          _
        // Predicated region
        $region21: #{pairsets_forward.1} parent=11 // pred_check
          %p323 = pneg %p109
        $region22: #{pairsets_forward.1} parent=11 // pred_check_branch
          %325 = sbr.rel (%p323) target = $region24
        $region23: #{pairsets_forward.1} parent=11 // pred_region
          _
        $region24: #{pairsets_forward.1} parent=11 // pred_fallthru
          _
        // Predicated region
        $region25: #{pairsets_forward.1} parent=11 // pred_check
          %p326 = pneg %p130
        $region26: #{pairsets_forward.1} parent=11 // pred_check_branch
          %328 = sbr.rel (%p326) target = $region28
        $region27: #{pairsets_forward.1} parent=11 // pred_region
          %s330 = ssub.s32 25600, 25600
          %331 = vsyncadd [#allocation5], %s330
          %s332 = sshll.u32 [#allocation6], 4
          %s333 = int_to_ptr.vmem [resolvable:$true] %s332
          %338 = dma.hbm_to_vmem [thread:$0]  %s4, 25600, %s333, [#allocation5], 512, 512, 32
        $region28: #{pairsets_forward.1} parent=11 // pred_fallthru
          _
        // Predicated region
        $region29: #{pairsets_forward.1} parent=11 // pred_check
          %p339 = pneg %p151
        $region30: #{pairsets_forward.1} parent=11 // pred_check_branch
          %341 = sbr.rel (%p339) target = $region32
        $region31: #{pairsets_forward.1} parent=11 // pred_region
          _
        $region32: #{pairsets_forward.1} parent=11 // pred_fallthru
          _
        // Predicated region
        $region33: #{pairsets_forward.1} parent=11 // pred_check
          %p342 = pneg %p172
        $region34: #{pairsets_forward.1} parent=11 // pred_check_branch
          %344 = sbr.rel (%p342) target = $region36
        $region35: #{pairsets_forward.1} parent=11 // pred_region
          _
        $region36: #{pairsets_forward.1} parent=11 // pred_fallthru
          _
        // Predicated region
        $region37: #{pairsets_forward.1} parent=11 // pred_check
          %p345 = pneg %p193
        $region38: #{pairsets_forward.1} parent=11 // pred_check_branch
          %347 = sbr.rel (%p345) target = $region40
        $region39: #{pairsets_forward.1} parent=11 // pred_region
          %s349 = ssub.s32 18432, 18432
          %350 = vsyncadd [#allocation8], %s349
          %s351 = sshll.u32 [#allocation7], 4
          %s352 = int_to_ptr.vmem [resolvable:$true] %s351
          %357 = dma.hbm_to_vmem [thread:$0]  %s7, 18432, %s352, [#allocation8], 256, 256, 16
        $region40: #{pairsets_forward.1} parent=11 // pred_fallthru
          _
        // Predicated region
        $region41: #{pairsets_forward.1} parent=11 // pred_check
          %p358 = pneg %p214
        $region42: #{pairsets_forward.1} parent=11 // pred_check_branch
          %360 = sbr.rel (%p358) target = $region44
        $region43: #{pairsets_forward.1} parent=11 // pred_region
          _
        $region44: #{pairsets_forward.1} parent=11 // pred_fallthru
          _
        // Predicated region
        $region45: #{pairsets_forward.1} parent=11 // pred_check
          %p361 = pneg %p235
        $region46: #{pairsets_forward.1} parent=11 // pred_check_branch
          %363 = sbr.rel (%p361) target = $region48
        $region47: #{pairsets_forward.1} parent=11 // pred_region
          _
        $region48: #{pairsets_forward.1} parent=11 // pred_fallthru
          _
        // Predicated region
        $region49: #{pairsets_forward.1} parent=11 // pred_check
          %p364 = pneg %p256
        $region50: #{pairsets_forward.1} parent=11 // pred_check_branch
          %366 = sbr.rel (%p364) target = $region52
        $region51: #{pairsets_forward.1} parent=11 // pred_region
          _
        $region52: #{pairsets_forward.1} parent=11 // pred_fallthru
          _
      $region12: #{pairsets_forward.1} parent=5 // pred_fallthru
        _
      %p367 = scmp.lt.s32.totalorder %s20, 2
      // Predicated region
      $region53: #{pairsets_forward.1} parent=5 // pred_check
        %p368 = pneg %p367
      $region54: #{pairsets_forward.1} parent=5 // pred_check_branch
        %370 = sbr.rel (%p368) target = $region56
      $region55: #{pairsets_forward.1} parent=5 // pred_region
        // Predicated region
        $region57: #{pairsets_forward.1} parent=55 // pred_check
          %p371 = pneg %p40
        $region58: #{pairsets_forward.1} parent=55 // pred_check_branch
          %373 = sbr.rel (%p371) target = $region60
        $region59: #{pairsets_forward.1} parent=55 // pred_region
          %p374 = scmp.lt.s32.totalorder %s20, 1
          %s375 = scalar_select %p374, %s20, 1
          %s376 = smul.addr %s375, 2
          %s377 = smul.addr %s376, 2
          %s378 = scalar_lea.vmem %s0, %s377
        $region60: #{pairsets_forward.1} parent=55 // pred_fallthru
          _
      $region56: #{pairsets_forward.1} parent=5 // pred_fallthru
        _
      %p379 = scmp.le.s32.totalorder 1, %s20
      %p380 = scmp.lt.s32.totalorder %s20, 3
      %p381 = pnand %p379, %p380
      %p382 = pneg %p381
      // Predicated region
      $region61: #{pairsets_forward.1} parent=5 // pred_check
        _
      $region62: #{pairsets_forward.1} parent=5 // pred_check_branch
        %384 = sbr.rel (%p381) target = $region64
      $region63: #{pairsets_forward.1} parent=5 // pred_region
        %s385 = ssub.s32 %s20, 1
        // Predicated region
        $region65: #{pairsets_forward.1} parent=63 // pred_check
          %p386 = pneg %p67
        $region66: #{pairsets_forward.1} parent=63 // pred_check_branch
          %388 = sbr.rel (%p386) target = $region68
        $region67: #{pairsets_forward.1} parent=63 // pred_region
          %389 = dma.done [#allocation3], 12800
        $region68: #{pairsets_forward.1} parent=63 // pred_fallthru
          _
        // Predicated region
        $region69: #{pairsets_forward.1} parent=63 // pred_check
          %p390 = pneg %p88
        $region70: #{pairsets_forward.1} parent=63 // pred_check_branch
          %392 = sbr.rel (%p390) target = $region72
        $region71: #{pairsets_forward.1} parent=63 // pred_region
          %393 = dma.done [#allocation5], 25600
        $region72: #{pairsets_forward.1} parent=63 // pred_fallthru
          _
        // Predicated region
        $region73: #{pairsets_forward.1} parent=63 // pred_check
          %p394 = pneg %p130
        $region74: #{pairsets_forward.1} parent=63 // pred_check_branch
          %396 = sbr.rel (%p394) target = $region76
        $region75: #{pairsets_forward.1} parent=63 // pred_region
          %397 = dma.done [#allocation5], 25600
        $region76: #{pairsets_forward.1} parent=63 // pred_fallthru
          _
        // Predicated region
        $region77: #{pairsets_forward.1} parent=63 // pred_check
          %p398 = pneg %p193
        $region78: #{pairsets_forward.1} parent=63 // pred_check_branch
          %400 = sbr.rel (%p398) target = $region80
        $region79: #{pairsets_forward.1} parent=63 // pred_region
          %401 = dma.done [#allocation8], 18432
        $region80: #{pairsets_forward.1} parent=63 // pred_fallthru
          _
        %p402 = scmp.lt.s32.totalorder %s25, 1
        %s403 = scalar_select %p402, %s25, 1
        %s404 = smul.addr %s403, 2
        %s405 = smul.addr %s404, 2
        %s406 = scalar_lea.vmem %s0, %s405
        %p407 = pneg %p46
        %p408 = pneg %p43
        %p409 = pneg %p67
        %p410 = pneg %p64
        %p411 = pneg %p88
        %p412 = pneg %p85
        %p413 = pneg %p109
        %p414 = pneg %p106
        %p415 = pneg %p130
        %p416 = pneg %p127
        %p417 = pneg %p151
        %p418 = pneg %p148
        %p419 = pneg %p172
        %p420 = pneg %p169
        %p421 = pneg %p193
        %p422 = pneg %p190
        %p423 = pneg %p214
        %p424 = pneg %p211
        %p425 = pneg %p235
        %p426 = pneg %p232
        %p427 = pneg %p256
        %p428 = pneg %p253
        %p429 = pneg %p282
        %p430 = pneg %p279
        %p431 = scmp.lt.s32.totalorder %s25, 1
        %s432 = scalar_select %p431, %s25, 1
        %s433 = smul.addr %s432, 2
        %s434 = scalar_lea.vmem %s11, %s433
        %p435 = scmp.lt.s32.totalorder %s25, 1
        %s436 = scalar_select %p435, %s25, 1
        %s437 = smul.addr %s436, 2
        %s438 = smul.addr %s437, 2
        %s439 = scalar_lea.vmem %s0, %s438
        %p440 = scmp.lt.s32.totalorder %s25, 1
        %s441 = scalar_select %p440, %s25, 1
        %s442 = smul.addr %s441, 2
        %s443 = scalar_lea.vmem %s11, %s442
        %v444 = vld [vmem:[%s439] sm:$0xf]
        %v445 = vld [vmem:[#allocation2] sm:$0xff]
        %v446 = vld [vmem:[#allocation2 + $0x8] sm:$0xff]
        %v447 = vld [vmem:[#allocation2 + $0x10] sm:$0xff]
        %v448 = vld [vmem:[#allocation2 + $0x18] sm:$0xff]
        %v449 = vld [vmem:[#allocation2 + $0x20] sm:$0xff]
        %v450 = vld [vmem:[#allocation2 + $0x28] sm:$0xff]
        %v451 = vld [vmem:[#allocation2 + $0x30] sm:$0xff]
        %v452 = vld [vmem:[#allocation2 + $0x38] sm:$0xff]
        %v453 = vld [vmem:[#allocation2 + $0x40] sm:$0xff]
        %v454 = vld [vmem:[#allocation2 + $0x48] sm:$0xff]
        %v455 = vld [vmem:[#allocation2 + $0x50] sm:$0xff]
        %v456 = vld [vmem:[#allocation2 + $0x58] sm:$0xff]
        %v457 = vld [vmem:[#allocation2 + $0x60] sm:$0xff]
        %v458 = vld [vmem:[#allocation2 + $0x68] sm:$0xff]
        %v459 = vld [vmem:[#allocation2 + $0x70] sm:$0xff]
        %v460 = vld [vmem:[#allocation2 + $0x78] sm:$0xff]
        %v461 = vld [vmem:[#allocation2 + $0x80] sm:$0xff]
        %v462 = vld [vmem:[#allocation2 + $0x88] sm:$0xff]
        %v463 = vld [vmem:[#allocation2 + $0x90] sm:$0xff]
        %v464 = vld [vmem:[#allocation2 + $0x98] sm:$0xff]
        %v465 = vld [vmem:[#allocation2 + $0xa0] sm:$0xff]
        %v466 = vld [vmem:[#allocation2 + $0xa8] sm:$0xff]
        %v467 = vld [vmem:[#allocation2 + $0xb0] sm:$0xff]
        %v468 = vld [vmem:[#allocation2 + $0xb8] sm:$0xff]
        %v469 = vld [vmem:[#allocation2 + $0xc0] sm:$0xff]
        %v470 = vld [vmem:[#allocation2 + $0xc8] sm:$0xff]
        %v471 = vld [vmem:[#allocation2 + $0xd0] sm:$0xff]
        %v472 = vld [vmem:[#allocation2 + $0xd8] sm:$0xff]
        %v473 = vld [vmem:[#allocation2 + $0xe0] sm:$0xff]
        %v474 = vld [vmem:[#allocation2 + $0xe8] sm:$0xff]
        %v475 = vld [vmem:[#allocation2 + $0xf0] sm:$0xff]
        %v476 = vld [vmem:[#allocation2 + $0xf8] sm:$0xff]
        %v477 = vld [vmem:[#allocation2 + $0x100] sm:$0xff]
        %v478 = vld [vmem:[#allocation2 + $0x108] sm:$0xff]
        %v479 = vld [vmem:[#allocation2 + $0x110] sm:$0xff]
        %v480 = vld [vmem:[#allocation2 + $0x118] sm:$0xff]
        %v481 = vld [vmem:[#allocation2 + $0x120] sm:$0xff]
        %v482 = vld [vmem:[#allocation2 + $0x128] sm:$0xff]
        %v483 = vld [vmem:[#allocation2 + $0x130] sm:$0xff]
        %v484 = vld [vmem:[#allocation2 + $0x138] sm:$0xff]
        %v485 = vld [vmem:[#allocation2 + $0x140] sm:$0xff]
        %v486 = vld [vmem:[#allocation2 + $0x148] sm:$0xff]
        %v487 = vld [vmem:[#allocation2 + $0x150] sm:$0xff]
        %v488 = vld [vmem:[#allocation2 + $0x158] sm:$0xff]
        %v489 = vld [vmem:[#allocation2 + $0x160] sm:$0xff]
        %v490 = vld [vmem:[#allocation2 + $0x168] sm:$0xff]
        %v491 = vld [vmem:[#allocation2 + $0x170] sm:$0xff]
        %v492 = vld [vmem:[#allocation2 + $0x178] sm:$0xff]
        %v493 = vld [vmem:[#allocation2 + $0x180] sm:$0xff]
        %v494 = vld [vmem:[#allocation2 + $0x188] sm:$0xff]
        %v495 = vld [vmem:[#allocation2 + $0x190] sm:$0xff]
        %v496 = vld [vmem:[#allocation2 + $0x198] sm:$0xff]
        %v497 = vld [vmem:[#allocation2 + $0x1a0] sm:$0xff]
        %v498 = vld [vmem:[#allocation2 + $0x1a8] sm:$0xff]
        %v499 = vld [vmem:[#allocation2 + $0x1b0] sm:$0xff]
        %v500 = vld [vmem:[#allocation2 + $0x1b8] sm:$0xff]
        %v501 = vld [vmem:[#allocation2 + $0x1c0] sm:$0xff]
        %v502 = vld [vmem:[#allocation2 + $0x1c8] sm:$0xff]
        %v503 = vld [vmem:[#allocation2 + $0x1d0] sm:$0xff]
        %v504 = vld [vmem:[#allocation2 + $0x1d8] sm:$0xff]
        %v505 = vld [vmem:[#allocation2 + $0x1e0] sm:$0xff]
        %v506 = vld [vmem:[#allocation2 + $0x1e8] sm:$0xff]
        %v507 = vld [vmem:[#allocation2 + $0x1f0] sm:$0xff]
        %v508 = vld [vmem:[#allocation2 + $0x1f8] sm:$0xff]
        %v509 = vld [vmem:[#allocation2 + $0x200] sm:$0xff]
        %v510 = vld [vmem:[#allocation2 + $0x208] sm:$0xff]
        %v511 = vld [vmem:[#allocation2 + $0x210] sm:$0xff]
        %v512 = vld [vmem:[#allocation2 + $0x218] sm:$0xff]
        %v513 = vld [vmem:[#allocation2 + $0x220] sm:$0xff]
        %v514 = vld [vmem:[#allocation2 + $0x228] sm:$0xff]
        %v515 = vld [vmem:[#allocation2 + $0x230] sm:$0xff]
        %v516 = vld [vmem:[#allocation2 + $0x238] sm:$0xff]
        %v517 = vld [vmem:[#allocation2 + $0x240] sm:$0xff]
        %v518 = vld [vmem:[#allocation2 + $0x248] sm:$0xff]
        %v519 = vld [vmem:[#allocation2 + $0x250] sm:$0xff]
        %v520 = vld [vmem:[#allocation2 + $0x258] sm:$0xff]
        %v521 = vld [vmem:[#allocation2 + $0x260] sm:$0xff]
        %v522 = vld [vmem:[#allocation2 + $0x268] sm:$0xff]
        %v523 = vld [vmem:[#allocation2 + $0x270] sm:$0xff]
        %v524 = vld [vmem:[#allocation2 + $0x278] sm:$0xff]
        %v525 = vld [vmem:[#allocation2 + $0x280] sm:$0xff]
        %v526 = vld [vmem:[#allocation2 + $0x288] sm:$0xff]
        %v527 = vld [vmem:[#allocation2 + $0x290] sm:$0xff]
        %v528 = vld [vmem:[#allocation2 + $0x298] sm:$0xff]
        %v529 = vld [vmem:[#allocation2 + $0x2a0] sm:$0xff]
        %v530 = vld [vmem:[#allocation2 + $0x2a8] sm:$0xff]
        %v531 = vld [vmem:[#allocation2 + $0x2b0] sm:$0xff]
        %v532 = vld [vmem:[#allocation2 + $0x2b8] sm:$0xff]
        %v533 = vld [vmem:[#allocation2 + $0x2c0] sm:$0xff]
        %v534 = vld [vmem:[#allocation2 + $0x2c8] sm:$0xff]
        %v535 = vld [vmem:[#allocation2 + $0x2d0] sm:$0xff]
        %v536 = vld [vmem:[#allocation2 + $0x2d8] sm:$0xff]
        %v537 = vld [vmem:[#allocation2 + $0x2e0] sm:$0xff]
        %v538 = vld [vmem:[#allocation2 + $0x2e8] sm:$0xff]
        %v539 = vld [vmem:[#allocation2 + $0x2f0] sm:$0xff]
        %v540 = vld [vmem:[#allocation2 + $0x2f8] sm:$0xff]
        %v541 = vld [vmem:[#allocation2 + $0x300] sm:$0xf]
        %v542 = vld [vmem:[#allocation2 + $0x308] sm:$0xf]
        %v543 = vld [vmem:[#allocation2 + $0x310] sm:$0xf]
        %v544 = vld [vmem:[#allocation2 + $0x318] sm:$0xf]
        %v545 = vld [vmem:[%s10] sm:$0xff]
        %v546 = vld [vmem:[%s10 + $0x8] sm:$0xff]
        %v549 = vlaneseq
        %v550 = vshrl.u32 %v549, 7
        %v551 = vsub.s32 0, %v550
        %v552 = vrot.slane %v545, %v551
        %v553 = vlaneseq
        %v554 = vshrl.u32 %v553, 7
        %v555 = vsub.s32 4, %v554
        %v556 = vrot.slane %v545, %v555
        %v557 = vlaneseq
        %v558 = vshrl.u32 %v557, 7
        %v559 = vsub.s32 0, %v558
        %v560 = vrot.slane %v546, %v559
        %v561 = vlaneseq
        %v562 = vshrl.u32 %v561, 7
        %v563 = vsub.s32 4, %v562
        %v564 = vrot.slane %v546, %v563
        %v569 = vlaneseq
        %v570 = vshrl.u32 %v569, 7
        %v571 = vsub.s32 0, %v570
        %v572 = vrot.slane %v552, %v571
        %v573 = vlaneseq
        %v574 = vshrl.u32 %v573, 7
        %v575 = vsub.s32 0, %v574
        %v576 = vrot.slane %v556, %v575
        %v577 = vlaneseq
        %v578 = vshrl.u32 %v577, 7
        %v579 = vsub.s32 0, %v578
        %v580 = vrot.slane %v560, %v579
        %v581 = vlaneseq
        %v582 = vshrl.u32 %v581, 7
        %v583 = vsub.s32 0, %v582
        %v584 = vrot.slane %v564, %v583
        %v587 = vunpack.c.l.s4 1983009808
        %v588 = vunpack.c.0.s8 %v587
        %v589 = vlaneseq
        %v590 = vshrl.u32 %v589, 7
        %v591 = vsub.s32 %v588, %v590
        %v592 = vrot.slane %v444, %v591
        %v593 = vcombine.high %v592, %v592
        %vm595 = vcmask 556032
        %v596 = vsel %vm595, %v593, 0
        %vm598 = vcmask 1043456
        %v600 = vsel %vm598, %v541, 0
        %v603 = vsel %vm598, %v542, 0
        %v606 = vsel %vm598, %v543, 0
        %v609 = vsel %vm598, %v544, 0
        %611 = vmatprep.subr.mxu0 %v446
        %612 = vmatpush1.msra.mxu0 %v445
        %613 = vmatprep.subr.mxu0 %v450
        %614 = vmatpush1.msra.mxu0 %v449
        %615 = vmatprep.subr.mxu0 %v454
        %616 = vmatpush1.msra.mxu0 %v453
        %617 = vmatprep.subr.mxu0 %v458
        %618 = vmatpush1.msra.mxu0 %v457
        %619 = vmatprep.subr.mxu0 %v462
        %620 = vmatpush1.msra.mxu0 %v461
        %621 = vmatprep.subr.mxu0 %v466
        %622 = vmatpush1.msra.mxu0 %v465
        %623 = vmatprep.subr.mxu0 %v470
        %624 = vmatpush1.msra.mxu0 %v469
        %625 = vmatprep.subr.mxu0 %v474
        %626 = vmatpush1.msra.mxu0 %v473
        %627 = vmatprep.subr.mxu0 %v478
        %628 = vmatpush1.msra.mxu0 %v477
        %629 = vmatprep.subr.mxu0 %v482
        %630 = vmatpush1.msra.mxu0 %v481
        %631 = vmatprep.subr.mxu0 %v486
        %632 = vmatpush1.msra.mxu0 %v485
        %633 = vmatprep.subr.mxu0 %v490
        %634 = vmatpush1.msra.mxu0 %v489
        %635 = vmatprep.subr.mxu0 %v494
        %636 = vmatpush1.msra.mxu0 %v493
        %637 = vmatprep.subr.mxu0 %v498
        %638 = vmatpush1.msra.mxu0 %v497
        %639 = vmatprep.subr.mxu0 %v502
        %640 = vmatpush1.msra.mxu0 %v501
        %641 = vmatprep.subr.mxu0 %v506
        %642 = vmatpush1.msra.mxu0 %v505
        %643 = vmatprep.subr.mxu0 %v510
        %644 = vmatpush1.msra.mxu0 %v509
        %645 = vmatprep.subr.mxu0 %v514
        %646 = vmatpush1.msra.mxu0 %v513
        %647 = vmatprep.subr.mxu0 %v518
        %648 = vmatpush1.msra.mxu0 %v517
        %649 = vmatprep.subr.mxu0 %v522
        %650 = vmatpush1.msra.mxu0 %v521
        %651 = vmatprep.subr.mxu0 %v526
        %652 = vmatpush1.msra.mxu0 %v525
        %653 = vmatprep.subr.mxu0 %v530
        %654 = vmatpush1.msra.mxu0 %v529
        %655 = vmatprep.subr.mxu0 %v534
        %656 = vmatpush1.msra.mxu0 %v533
        %657 = vmatprep.subr.mxu0 %v538
        %658 = vmatpush1.msra.mxu0 %v537
        %659 = vmatprep.subr.mxu0 %v603
        %660 = vmatpush1.msra.mxu0 %v600
        %661 = vmatprep.subr.mxu0 0.0
        %662 = vmatpush1.msra.mxu0 0.0
        %663 = vmatprep.subr.mxu0 0.0
        %664 = vmatpush1.msra.mxu0 0.0
        %665 = vmatprep.subr.mxu0 0.0
        %666 = vmatpush1.msra.mxu0 0.0
        %667 = vmatprep.subr.mxu0 0.0
        %668 = vmatpush1.msra.mxu0 0.0
        %669 = vmatprep.subr.mxu0 0.0
        %670 = vmatpush1.msra.mxu0 0.0
        %671 = vmatprep.subr.mxu0 0.0
        %672 = vmatpush1.msra.mxu0 0.0
        %673 = vmatprep.subr.mxu0 0.0
        %674 = vmatpush1.msra.mxu0 0.0
        %675 = vmatprep.mubr.f32.mxu0 %v596
        %676 = vmatmul.mubr.f32.gmra.mrb[0].mxu0 %v592
        %v677 = vpop.f32.mrb[0].mxu0
        %v678 = vadd.f32 %v572, %v677
        %v679 = vpop.f32.mrb[0].mxu0
        %v680 = vadd.f32 %v576, %v679
        %681 = vdwg.mxu0
        %682 = vmatprep.subr.mxu0 %v448
        %683 = vmatpush1.msra.mxu0 %v447
        %684 = vmatprep.subr.mxu0 %v452
        %685 = vmatpush1.msra.mxu0 %v451
        %686 = vmatprep.subr.mxu0 %v456
        %687 = vmatpush1.msra.mxu0 %v455
        %688 = vmatprep.subr.mxu0 %v460
        %689 = vmatpush1.msra.mxu0 %v459
        %690 = vmatprep.subr.mxu0 %v464
        %691 = vmatpush1.msra.mxu0 %v463
        %692 = vmatprep.subr.mxu0 %v468
        %693 = vmatpush1.msra.mxu0 %v467
        %694 = vmatprep.subr.mxu0 %v472
        %695 = vmatpush1.msra.mxu0 %v471
        %696 = vmatprep.subr.mxu0 %v476
        %697 = vmatpush1.msra.mxu0 %v475
        %698 = vmatprep.subr.mxu0 %v480
        %699 = vmatpush1.msra.mxu0 %v479
        %700 = vmatprep.subr.mxu0 %v484
        %701 = vmatpush1.msra.mxu0 %v483
        %702 = vmatprep.subr.mxu0 %v488
        %703 = vmatpush1.msra.mxu0 %v487
        %704 = vmatprep.subr.mxu0 %v492
        %705 = vmatpush1.msra.mxu0 %v491
        %706 = vmatprep.subr.mxu0 %v496
        %707 = vmatpush1.msra.mxu0 %v495
        %708 = vmatprep.subr.mxu0 %v500
        %709 = vmatpush1.msra.mxu0 %v499
        %710 = vmatprep.subr.mxu0 %v504
        %711 = vmatpush1.msra.mxu0 %v503
        %712 = vmatprep.subr.mxu0 %v508
        %713 = vmatpush1.msra.mxu0 %v507
        %714 = vmatprep.subr.mxu0 %v512
        %715 = vmatpush1.msra.mxu0 %v511
        %716 = vmatprep.subr.mxu0 %v516
        %717 = vmatpush1.msra.mxu0 %v515
        %718 = vmatprep.subr.mxu0 %v520
        %719 = vmatpush1.msra.mxu0 %v519
        %720 = vmatprep.subr.mxu0 %v524
        %721 = vmatpush1.msra.mxu0 %v523
        %722 = vmatprep.subr.mxu0 %v528
        %723 = vmatpush1.msra.mxu0 %v527
        %724 = vmatprep.subr.mxu0 %v532
        %725 = vmatpush1.msra.mxu0 %v531
        %726 = vmatprep.subr.mxu0 %v536
        %727 = vmatpush1.msra.mxu0 %v535
        %728 = vmatprep.subr.mxu0 %v540
        %729 = vmatpush1.msra.mxu0 %v539
        %730 = vmatprep.subr.mxu0 %v609
        %731 = vmatpush1.msra.mxu0 %v606
        %732 = vmatprep.subr.mxu0 0.0
        %733 = vmatpush1.msra.mxu0 0.0
        %734 = vmatprep.subr.mxu0 0.0
        %735 = vmatpush1.msra.mxu0 0.0
        %736 = vmatprep.subr.mxu0 0.0
        %737 = vmatpush1.msra.mxu0 0.0
        %738 = vmatprep.subr.mxu0 0.0
        %739 = vmatpush1.msra.mxu0 0.0
        %740 = vmatprep.subr.mxu0 0.0
        %741 = vmatpush1.msra.mxu0 0.0
        %742 = vmatprep.subr.mxu0 0.0
        %743 = vmatpush1.msra.mxu0 0.0
        %744 = vmatprep.subr.mxu0 0.0
        %745 = vmatpush1.msra.mxu0 0.0
        %746 = vmatprep.mubr.f32.mxu0 %v596
        %747 = vmatmul.mubr.f32.gmra.mrb[0].mxu0 %v592
        %v748 = vpop.f32.mrb[0].mxu0
        %v749 = vadd.f32 %v580, %v748
        %v750 = vpop.f32.mrb[0].mxu0
        %v751 = vadd.f32 %v584, %v750
        %752 = vdwg.mxu0
        %vm753 = vcmask 1041408
        %v754 = vsel %vm753, %v678, 0.0
        %v755 = vrot.slane %v754, 4
        %v756 = vadd.f32 %v754, %v755
        %v757 = vrot.slane %v756, 2
        %v758 = vadd.f32 %v756, %v757
        %v759 = vrot.slane %v758, 1
        %v760 = vadd.f32 %v758, %v759
        %v761 = vsel %vm753, %v680, 0.0
        %v762 = vrot.slane %v761, 4
        %v763 = vadd.f32 %v761, %v762
        %v764 = vrot.slane %v763, 2
        %v765 = vadd.f32 %v763, %v764
        %v766 = vrot.slane %v765, 1
        %v767 = vadd.f32 %v765, %v766
        %v768 = vsel %vm753, %v749, 0.0
        %v769 = vrot.slane %v768, 4
        %v770 = vadd.f32 %v768, %v769
        %v771 = vrot.slane %v770, 2
        %v772 = vadd.f32 %v770, %v771
        %v773 = vrot.slane %v772, 1
        %v774 = vadd.f32 %v772, %v773
        %vm775 = vcmask 123904
        %v776 = vsel %vm775, %v751, 0.0
        %v777 = vrot.slane %v776, 4
        %v778 = vadd.f32 %v776, %v777
        %v779 = vrot.slane %v778, 2
        %v780 = vadd.f32 %v778, %v779
        %v781 = vrot.slane %v780, 1
        %v782 = vadd.f32 %v780, %v781
        %v783 = vrcp.pop 2.0
        %v784 = vmul.f32 %v760, %v783
        %v785 = vmul.f32 %v767, %v783
        %v786 = vmul.f32 %v774, %v783
        %v787 = vmul.f32 %v782, %v783
        %v788 = vld [vmem:[#allocation6] sm:$0xff]
        %v789 = vld [vmem:[#allocation6 + $0x8] sm:$0xff]
        %v790 = vld [vmem:[#allocation6 + $0x10] sm:$0xff]
        %v791 = vld [vmem:[#allocation6 + $0x18] sm:$0xff]
        %v792 = vld [vmem:[#allocation6 + $0x20] sm:$0xff]
        %v793 = vld [vmem:[#allocation6 + $0x28] sm:$0xff]
        %v794 = vld [vmem:[#allocation6 + $0x30] sm:$0xff]
        %v795 = vld [vmem:[#allocation6 + $0x38] sm:$0xff]
        %v796 = vld [vmem:[#allocation6 + $0x40] sm:$0xff]
        %v797 = vld [vmem:[#allocation6 + $0x48] sm:$0xff]
        %v798 = vld [vmem:[#allocation6 + $0x50] sm:$0xff]
        %v799 = vld [vmem:[#allocation6 + $0x58] sm:$0xff]
        %v800 = vld [vmem:[#allocation6 + $0x60] sm:$0xff]
        %v801 = vld [vmem:[#allocation6 + $0x68] sm:$0xff]
        %v802 = vld [vmem:[#allocation6 + $0x70] sm:$0xff]
        %v803 = vld [vmem:[#allocation6 + $0x78] sm:$0xff]
        %v804 = vld [vmem:[#allocation6 + $0x80] sm:$0xff]
        %v805 = vld [vmem:[#allocation6 + $0x88] sm:$0xff]
        %v806 = vld [vmem:[#allocation6 + $0x90] sm:$0xff]
        %v807 = vld [vmem:[#allocation6 + $0x98] sm:$0xff]
        %v808 = vld [vmem:[#allocation6 + $0xa0] sm:$0xff]
        %v809 = vld [vmem:[#allocation6 + $0xa8] sm:$0xff]
        %v810 = vld [vmem:[#allocation6 + $0xb0] sm:$0xff]
        %v811 = vld [vmem:[#allocation6 + $0xb8] sm:$0xff]
        %v812 = vld [vmem:[#allocation6 + $0xc0] sm:$0xff]
        %v813 = vld [vmem:[#allocation6 + $0xc8] sm:$0xff]
        %v814 = vld [vmem:[#allocation6 + $0xd0] sm:$0xff]
        %v815 = vld [vmem:[#allocation6 + $0xd8] sm:$0xff]
        %v816 = vld [vmem:[#allocation6 + $0xe0] sm:$0xff]
        %v817 = vld [vmem:[#allocation6 + $0xe8] sm:$0xff]
        %v818 = vld [vmem:[#allocation6 + $0xf0] sm:$0xff]
        %v819 = vld [vmem:[#allocation6 + $0xf8] sm:$0xff]
        %v820 = vld [vmem:[#allocation6 + $0x100] sm:$0xff]
        %v821 = vld [vmem:[#allocation6 + $0x108] sm:$0xff]
        %v822 = vld [vmem:[#allocation6 + $0x110] sm:$0xff]
        %v823 = vld [vmem:[#allocation6 + $0x118] sm:$0xff]
        %v824 = vld [vmem:[#allocation6 + $0x120] sm:$0xff]
        %v825 = vld [vmem:[#allocation6 + $0x128] sm:$0xff]
        %v826 = vld [vmem:[#allocation6 + $0x130] sm:$0xff]
        %v827 = vld [vmem:[#allocation6 + $0x138] sm:$0xff]
        %v828 = vld [vmem:[#allocation6 + $0x140] sm:$0xff]
        %v829 = vld [vmem:[#allocation6 + $0x148] sm:$0xff]
        %v830 = vld [vmem:[#allocation6 + $0x150] sm:$0xff]
        %v831 = vld [vmem:[#allocation6 + $0x158] sm:$0xff]
        %v832 = vld [vmem:[#allocation6 + $0x160] sm:$0xff]
        %v833 = vld [vmem:[#allocation6 + $0x168] sm:$0xff]
        %v834 = vld [vmem:[#allocation6 + $0x170] sm:$0xff]
        %v835 = vld [vmem:[#allocation6 + $0x178] sm:$0xff]
        %v836 = vld [vmem:[#allocation6 + $0x180] sm:$0xff]
        %v837 = vld [vmem:[#allocation6 + $0x188] sm:$0xff]
        %v838 = vld [vmem:[#allocation6 + $0x190] sm:$0xff]
        %v839 = vld [vmem:[#allocation6 + $0x198] sm:$0xff]
        %v840 = vld [vmem:[#allocation6 + $0x1a0] sm:$0xff]
        %v841 = vld [vmem:[#allocation6 + $0x1a8] sm:$0xff]
        %v842 = vld [vmem:[#allocation6 + $0x1b0] sm:$0xff]
        %v843 = vld [vmem:[#allocation6 + $0x1b8] sm:$0xff]
        %v844 = vld [vmem:[#allocation6 + $0x1c0] sm:$0xff]
        %v845 = vld [vmem:[#allocation6 + $0x1c8] sm:$0xff]
        %v846 = vld [vmem:[#allocation6 + $0x1d0] sm:$0xff]
        %v847 = vld [vmem:[#allocation6 + $0x1d8] sm:$0xff]
        %v848 = vld [vmem:[#allocation6 + $0x1e0] sm:$0xff]
        %v849 = vld [vmem:[#allocation6 + $0x1e8] sm:$0xff]
        %v850 = vld [vmem:[#allocation6 + $0x1f0] sm:$0xff]
        %v851 = vld [vmem:[#allocation6 + $0x1f8] sm:$0xff]
        %v852 = vld [vmem:[#allocation6 + $0x200] sm:$0xff]
        %v853 = vld [vmem:[#allocation6 + $0x208] sm:$0xff]
        %v854 = vld [vmem:[#allocation6 + $0x210] sm:$0xff]
        %v855 = vld [vmem:[#allocation6 + $0x218] sm:$0xff]
        %v856 = vld [vmem:[#allocation6 + $0x220] sm:$0xff]
        %v857 = vld [vmem:[#allocation6 + $0x228] sm:$0xff]
        %v858 = vld [vmem:[#allocation6 + $0x230] sm:$0xff]
        %v859 = vld [vmem:[#allocation6 + $0x238] sm:$0xff]
        %v860 = vld [vmem:[#allocation6 + $0x240] sm:$0xff]
        %v861 = vld [vmem:[#allocation6 + $0x248] sm:$0xff]
        %v862 = vld [vmem:[#allocation6 + $0x250] sm:$0xff]
        %v863 = vld [vmem:[#allocation6 + $0x258] sm:$0xff]
        %v864 = vld [vmem:[#allocation6 + $0x260] sm:$0xff]
        %v865 = vld [vmem:[#allocation6 + $0x268] sm:$0xff]
        %v866 = vld [vmem:[#allocation6 + $0x270] sm:$0xff]
        %v867 = vld [vmem:[#allocation6 + $0x278] sm:$0xff]
        %v868 = vld [vmem:[#allocation6 + $0x280] sm:$0xff]
        %v869 = vld [vmem:[#allocation6 + $0x288] sm:$0xff]
        %v870 = vld [vmem:[#allocation6 + $0x290] sm:$0xff]
        %v871 = vld [vmem:[#allocation6 + $0x298] sm:$0xff]
        %v872 = vld [vmem:[#allocation6 + $0x2a0] sm:$0xff]
        %v873 = vld [vmem:[#allocation6 + $0x2a8] sm:$0xff]
        %v874 = vld [vmem:[#allocation6 + $0x2b0] sm:$0xff]
        %v875 = vld [vmem:[#allocation6 + $0x2b8] sm:$0xff]
        %v876 = vld [vmem:[#allocation6 + $0x2c0] sm:$0xff]
        %v877 = vld [vmem:[#allocation6 + $0x2c8] sm:$0xff]
        %v878 = vld [vmem:[#allocation6 + $0x2d0] sm:$0xff]
        %v879 = vld [vmem:[#allocation6 + $0x2d8] sm:$0xff]
        %v880 = vld [vmem:[#allocation6 + $0x2e0] sm:$0xff]
        %v881 = vld [vmem:[#allocation6 + $0x2e8] sm:$0xff]
        %v882 = vld [vmem:[#allocation6 + $0x2f0] sm:$0xff]
        %v883 = vld [vmem:[#allocation6 + $0x2f8] sm:$0xff]
        %v884 = vld [vmem:[#allocation6 + $0x300] sm:$0xff]
        %v885 = vld [vmem:[#allocation6 + $0x308] sm:$0xff]
        %v886 = vld [vmem:[#allocation6 + $0x310] sm:$0xff]
        %v887 = vld [vmem:[#allocation6 + $0x318] sm:$0xff]
        %v888 = vld [vmem:[#allocation6 + $0x320] sm:$0xff]
        %v889 = vld [vmem:[#allocation6 + $0x328] sm:$0xff]
        %v890 = vld [vmem:[#allocation6 + $0x330] sm:$0xff]
        %v891 = vld [vmem:[#allocation6 + $0x338] sm:$0xff]
        %v892 = vld [vmem:[#allocation6 + $0x340] sm:$0xff]
        %v893 = vld [vmem:[#allocation6 + $0x348] sm:$0xff]
        %v894 = vld [vmem:[#allocation6 + $0x350] sm:$0xff]
        %v895 = vld [vmem:[#allocation6 + $0x358] sm:$0xff]
        %v896 = vld [vmem:[#allocation6 + $0x360] sm:$0xff]
        %v897 = vld [vmem:[#allocation6 + $0x368] sm:$0xff]
        %v898 = vld [vmem:[#allocation6 + $0x370] sm:$0xff]
        %v899 = vld [vmem:[#allocation6 + $0x378] sm:$0xff]
        %v900 = vld [vmem:[#allocation6 + $0x380] sm:$0xff]
        %v901 = vld [vmem:[#allocation6 + $0x388] sm:$0xff]
        %v902 = vld [vmem:[#allocation6 + $0x390] sm:$0xff]
        %v903 = vld [vmem:[#allocation6 + $0x398] sm:$0xff]
        %v904 = vld [vmem:[#allocation6 + $0x3a0] sm:$0xff]
        %v905 = vld [vmem:[#allocation6 + $0x3a8] sm:$0xff]
        %v906 = vld [vmem:[#allocation6 + $0x3b0] sm:$0xff]
        %v907 = vld [vmem:[#allocation6 + $0x3b8] sm:$0xff]
        %v908 = vld [vmem:[#allocation6 + $0x3c0] sm:$0xff]
        %v909 = vld [vmem:[#allocation6 + $0x3c8] sm:$0xff]
        %v910 = vld [vmem:[#allocation6 + $0x3d0] sm:$0xff]
        %v911 = vld [vmem:[#allocation6 + $0x3d8] sm:$0xff]
        %v912 = vld [vmem:[#allocation6 + $0x3e0] sm:$0xff]
        %v913 = vld [vmem:[#allocation6 + $0x3e8] sm:$0xff]
        %v914 = vld [vmem:[#allocation6 + $0x3f0] sm:$0xff]
        %v915 = vld [vmem:[#allocation6 + $0x3f8] sm:$0xff]
        %v916 = vld [vmem:[#allocation6 + $0x400] sm:$0xff]
        %v917 = vld [vmem:[#allocation6 + $0x408] sm:$0xff]
        %v918 = vld [vmem:[#allocation6 + $0x410] sm:$0xff]
        %v919 = vld [vmem:[#allocation6 + $0x418] sm:$0xff]
        %v920 = vld [vmem:[#allocation6 + $0x420] sm:$0xff]
        %v921 = vld [vmem:[#allocation6 + $0x428] sm:$0xff]
        %v922 = vld [vmem:[#allocation6 + $0x430] sm:$0xff]
        %v923 = vld [vmem:[#allocation6 + $0x438] sm:$0xff]
        %v924 = vld [vmem:[#allocation6 + $0x440] sm:$0xff]
        %v925 = vld [vmem:[#allocation6 + $0x448] sm:$0xff]
        %v926 = vld [vmem:[#allocation6 + $0x450] sm:$0xff]
        %v927 = vld [vmem:[#allocation6 + $0x458] sm:$0xff]
        %v928 = vld [vmem:[#allocation6 + $0x460] sm:$0xff]
        %v929 = vld [vmem:[#allocation6 + $0x468] sm:$0xff]
        %v930 = vld [vmem:[#allocation6 + $0x470] sm:$0xff]
        %v931 = vld [vmem:[#allocation6 + $0x478] sm:$0xff]
        %v932 = vld [vmem:[#allocation6 + $0x480] sm:$0xff]
        %v933 = vld [vmem:[#allocation6 + $0x488] sm:$0xff]
        %v934 = vld [vmem:[#allocation6 + $0x490] sm:$0xff]
        %v935 = vld [vmem:[#allocation6 + $0x498] sm:$0xff]
        %v936 = vld [vmem:[#allocation6 + $0x4a0] sm:$0xff]
        %v937 = vld [vmem:[#allocation6 + $0x4a8] sm:$0xff]
        %v938 = vld [vmem:[#allocation6 + $0x4b0] sm:$0xff]
        %v939 = vld [vmem:[#allocation6 + $0x4b8] sm:$0xff]
        %v940 = vld [vmem:[#allocation6 + $0x4c0] sm:$0xff]
        %v941 = vld [vmem:[#allocation6 + $0x4c8] sm:$0xff]
        %v942 = vld [vmem:[#allocation6 + $0x4d0] sm:$0xff]
        %v943 = vld [vmem:[#allocation6 + $0x4d8] sm:$0xff]
        %v944 = vld [vmem:[#allocation6 + $0x4e0] sm:$0xff]
        %v945 = vld [vmem:[#allocation6 + $0x4e8] sm:$0xff]
        %v946 = vld [vmem:[#allocation6 + $0x4f0] sm:$0xff]
        %v947 = vld [vmem:[#allocation6 + $0x4f8] sm:$0xff]
        %v948 = vld [vmem:[#allocation6 + $0x500] sm:$0xff]
        %v949 = vld [vmem:[#allocation6 + $0x508] sm:$0xff]
        %v950 = vld [vmem:[#allocation6 + $0x510] sm:$0xff]
        %v951 = vld [vmem:[#allocation6 + $0x518] sm:$0xff]
        %v952 = vld [vmem:[#allocation6 + $0x520] sm:$0xff]
        %v953 = vld [vmem:[#allocation6 + $0x528] sm:$0xff]
        %v954 = vld [vmem:[#allocation6 + $0x530] sm:$0xff]
        %v955 = vld [vmem:[#allocation6 + $0x538] sm:$0xff]
        %v956 = vld [vmem:[#allocation6 + $0x540] sm:$0xff]
        %v957 = vld [vmem:[#allocation6 + $0x548] sm:$0xff]
        %v958 = vld [vmem:[#allocation6 + $0x550] sm:$0xff]
        %v959 = vld [vmem:[#allocation6 + $0x558] sm:$0xff]
        %v960 = vld [vmem:[#allocation6 + $0x560] sm:$0xff]
        %v961 = vld [vmem:[#allocation6 + $0x568] sm:$0xff]
        %v962 = vld [vmem:[#allocation6 + $0x570] sm:$0xff]
        %v963 = vld [vmem:[#allocation6 + $0x578] sm:$0xff]
        %v964 = vld [vmem:[#allocation6 + $0x580] sm:$0xff]
        %v965 = vld [vmem:[#allocation6 + $0x588] sm:$0xff]
        %v966 = vld [vmem:[#allocation6 + $0x590] sm:$0xff]
        %v967 = vld [vmem:[#allocation6 + $0x598] sm:$0xff]
        %v968 = vld [vmem:[#allocation6 + $0x5a0] sm:$0xff]
        %v969 = vld [vmem:[#allocation6 + $0x5a8] sm:$0xff]
        %v970 = vld [vmem:[#allocation6 + $0x5b0] sm:$0xff]
        %v971 = vld [vmem:[#allocation6 + $0x5b8] sm:$0xff]
        %v972 = vld [vmem:[#allocation6 + $0x5c0] sm:$0xff]
        %v973 = vld [vmem:[#allocation6 + $0x5c8] sm:$0xff]
        %v974 = vld [vmem:[#allocation6 + $0x5d0] sm:$0xff]
        %v975 = vld [vmem:[#allocation6 + $0x5d8] sm:$0xff]
        %v976 = vld [vmem:[#allocation6 + $0x5e0] sm:$0xff]
        %v977 = vld [vmem:[#allocation6 + $0x5e8] sm:$0xff]
        %v978 = vld [vmem:[#allocation6 + $0x5f0] sm:$0xff]
        %v979 = vld [vmem:[#allocation6 + $0x5f8] sm:$0xff]
        %v980 = vld [vmem:[#allocation6 + $0x600] sm:$0xff]
        %v981 = vld [vmem:[#allocation6 + $0x608] sm:$0xff]
        %v982 = vld [vmem:[#allocation6 + $0x610] sm:$0xff]
        %v983 = vld [vmem:[#allocation6 + $0x618] sm:$0xff]
        %v984 = vld [vmem:[#allocation6 + $0x620] sm:$0xff]
        %v985 = vld [vmem:[#allocation6 + $0x628] sm:$0xff]
        %v986 = vld [vmem:[#allocation6 + $0x630] sm:$0xff]
        %v987 = vld [vmem:[#allocation6 + $0x638] sm:$0xff]
        %vm988 = vcmask 130048
        %v990 = vsel %vm988, %v787, 0
        %992 = vmatprep.subr.mxu0 %v789
        %993 = vmatpush1.msra.mxu0 %v788
        %994 = vmatprep.subr.mxu0 %v793
        %995 = vmatpush1.msra.mxu0 %v792
        %996 = vmatprep.subr.mxu0 %v797
        %997 = vmatpush1.msra.mxu0 %v796
        %998 = vmatprep.subr.mxu0 %v801
        %999 = vmatpush1.msra.mxu0 %v800
        %1000 = vmatprep.subr.mxu0 %v805
        %1001 = vmatpush1.msra.mxu0 %v804
        %1002 = vmatprep.subr.mxu0 %v809
        %1003 = vmatpush1.msra.mxu0 %v808
        %1004 = vmatprep.subr.mxu0 %v813
        %1005 = vmatpush1.msra.mxu0 %v812
        %1006 = vmatprep.subr.mxu0 %v817
        %1007 = vmatpush1.msra.mxu0 %v816
        %1008 = vmatprep.subr.mxu0 %v821
        %1009 = vmatpush1.msra.mxu0 %v820
        %1010 = vmatprep.subr.mxu0 %v825
        %1011 = vmatpush1.msra.mxu0 %v824
        %1012 = vmatprep.subr.mxu0 %v829
        %1013 = vmatpush1.msra.mxu0 %v828
        %1014 = vmatprep.subr.mxu0 %v833
        %1015 = vmatpush1.msra.mxu0 %v832
        %1016 = vmatprep.subr.mxu0 %v837
        %1017 = vmatpush1.msra.mxu0 %v836
        %1018 = vmatprep.subr.mxu0 %v841
        %1019 = vmatpush1.msra.mxu0 %v840
        %1020 = vmatprep.subr.mxu0 %v845
        %1021 = vmatpush1.msra.mxu0 %v844
        %1022 = vmatprep.subr.mxu0 %v849
        %1023 = vmatpush1.msra.mxu0 %v848
        %1024 = vmatprep.subr.mxu0 %v853
        %1025 = vmatpush1.msra.mxu0 %v852
        %1026 = vmatprep.subr.mxu0 %v857
        %1027 = vmatpush1.msra.mxu0 %v856
        %1028 = vmatprep.subr.mxu0 %v861
        %1029 = vmatpush1.msra.mxu0 %v860
        %1030 = vmatprep.subr.mxu0 %v865
        %1031 = vmatpush1.msra.mxu0 %v864
        %1032 = vmatprep.subr.mxu0 %v869
        %1033 = vmatpush1.msra.mxu0 %v868
        %1034 = vmatprep.subr.mxu0 %v873
        %1035 = vmatpush1.msra.mxu0 %v872
        %1036 = vmatprep.subr.mxu0 %v877
        %1037 = vmatpush1.msra.mxu0 %v876
        %1038 = vmatprep.subr.mxu0 %v881
        %1039 = vmatpush1.msra.mxu0 %v880
        %1040 = vmatprep.subr.mxu0 %v885
        %1041 = vmatpush1.msra.mxu0 %v884
        %1042 = vmatprep.subr.mxu0 %v889
        %1043 = vmatpush1.msra.mxu0 %v888
        %1044 = vmatprep.subr.mxu0 %v893
        %1045 = vmatpush1.msra.mxu0 %v892
        %1046 = vmatprep.subr.mxu0 %v897
        %1047 = vmatpush1.msra.mxu0 %v896
        %1048 = vmatprep.subr.mxu0 %v901
        %1049 = vmatpush1.msra.mxu0 %v900
        %1050 = vmatprep.subr.mxu0 %v905
        %1051 = vmatpush1.msra.mxu0 %v904
        %1052 = vmatprep.subr.mxu0 %v909
        %1053 = vmatpush1.msra.mxu0 %v908
        %1054 = vmatprep.subr.mxu0 %v913
        %1055 = vmatpush1.msra.mxu0 %v912
        %1056 = vmatprep.mubr.f32.mxu0 %v785
        %1057 = vmatmul.mubr.f32.gmra.mrb[0].mxu0 %v784
        %v1058 = vpop.f32.mrb[0].mxu0
        %v1059 = vadd.f32 0.0, %v1058
        %v1060 = vpop.f32.mrb[0].mxu0
        %v1061 = vadd.f32 0.0, %v1060
        %1062 = vdwg.mxu0
        %1063 = vmatprep.subr.mxu0 %v917
        %1064 = vmatpush1.msra.mxu0 %v916
        %1065 = vmatprep.subr.mxu0 %v921
        %1066 = vmatpush1.msra.mxu0 %v920
        %1067 = vmatprep.subr.mxu0 %v925
        %1068 = vmatpush1.msra.mxu0 %v924
        %1069 = vmatprep.subr.mxu0 %v929
        %1070 = vmatpush1.msra.mxu0 %v928
        %1071 = vmatprep.subr.mxu0 %v933
        %1072 = vmatpush1.msra.mxu0 %v932
        %1073 = vmatprep.subr.mxu0 %v937
        %1074 = vmatpush1.msra.mxu0 %v936
        %1075 = vmatprep.subr.mxu0 %v941
        %1076 = vmatpush1.msra.mxu0 %v940
        %1077 = vmatprep.subr.mxu0 %v945
        %1078 = vmatpush1.msra.mxu0 %v944
        %1079 = vmatprep.subr.mxu0 %v949
        %1080 = vmatpush1.msra.mxu0 %v948
        %1081 = vmatprep.subr.mxu0 %v953
        %1082 = vmatpush1.msra.mxu0 %v952
        %1083 = vmatprep.subr.mxu0 %v957
        %1084 = vmatpush1.msra.mxu0 %v956
        %1085 = vmatprep.subr.mxu0 %v961
        %1086 = vmatpush1.msra.mxu0 %v960
        %1087 = vmatprep.subr.mxu0 %v965
        %1088 = vmatpush1.msra.mxu0 %v964
        %1089 = vmatprep.subr.mxu0 %v969
        %1090 = vmatpush1.msra.mxu0 %v968
        %1091 = vmatprep.subr.mxu0 %v973
        %1092 = vmatpush1.msra.mxu0 %v972
        %1093 = vmatprep.subr.mxu0 %v977
        %1094 = vmatpush1.msra.mxu0 %v976
        %1095 = vmatprep.subr.mxu0 %v981
        %1096 = vmatpush1.msra.mxu0 %v980
        %1097 = vmatprep.subr.mxu0 %v985
        %1098 = vmatpush1.msra.mxu0 %v984
        %1099 = vmatprep.subr.mxu0 0.0
        %1100 = vmatpush1.msra.mxu0 0.0
        %1101 = vmatprep.subr.mxu0 0.0
        %1102 = vmatpush1.msra.mxu0 0.0
        %1103 = vmatprep.subr.mxu0 0.0
        %1104 = vmatpush1.msra.mxu0 0.0
        %1105 = vmatprep.subr.mxu0 0.0
        %1106 = vmatpush1.msra.mxu0 0.0
        %1107 = vmatprep.subr.mxu0 0.0
        %1108 = vmatpush1.msra.mxu0 0.0
        %1109 = vmatprep.subr.mxu0 0.0
        %1110 = vmatpush1.msra.mxu0 0.0
        %1111 = vmatprep.subr.mxu0 0.0
        %1112 = vmatpush1.msra.mxu0 0.0
        %1113 = vmatprep.subr.mxu0 0.0
        %1114 = vmatpush1.msra.mxu0 0.0
        %1115 = vmatprep.subr.mxu0 0.0
        %1116 = vmatpush1.msra.mxu0 0.0
        %1117 = vmatprep.subr.mxu0 0.0
        %1118 = vmatpush1.msra.mxu0 0.0
        %1119 = vmatprep.subr.mxu0 0.0
        %1120 = vmatpush1.msra.mxu0 0.0
        %1121 = vmatprep.subr.mxu0 0.0
        %1122 = vmatpush1.msra.mxu0 0.0
        %1123 = vmatprep.subr.mxu0 0.0
        %1124 = vmatpush1.msra.mxu0 0.0
        %1125 = vmatprep.subr.mxu0 0.0
        %1126 = vmatpush1.msra.mxu0 0.0
        %1127 = vmatprep.mubr.f32.mxu0 %v990
        %1128 = vmatmul.mubr.f32.gmra.mrb[0].mxu0 %v786
        %v1129 = vpop.f32.mrb[0].mxu0
        %v1130 = vadd.f32 %v1059, %v1129
        %v1131 = vpop.f32.mrb[0].mxu0
        %v1132 = vadd.f32 %v1061, %v1131
        %1133 = vdwg.mxu0
        %1134 = vmatprep.subr.mxu0 %v791
        %1135 = vmatpush1.msra.mxu0 %v790
        %1136 = vmatprep.subr.mxu0 %v795
        %1137 = vmatpush1.msra.mxu0 %v794
        %1138 = vmatprep.subr.mxu0 %v799
        %1139 = vmatpush1.msra.mxu0 %v798
        %1140 = vmatprep.subr.mxu0 %v803
        %1141 = vmatpush1.msra.mxu0 %v802
        %1142 = vmatprep.subr.mxu0 %v807
        %1143 = vmatpush1.msra.mxu0 %v806
        %1144 = vmatprep.subr.mxu0 %v811
        %1145 = vmatpush1.msra.mxu0 %v810
        %1146 = vmatprep.subr.mxu0 %v815
        %1147 = vmatpush1.msra.mxu0 %v814
        %1148 = vmatprep.subr.mxu0 %v819
        %1149 = vmatpush1.msra.mxu0 %v818
        %1150 = vmatprep.subr.mxu0 %v823
        %1151 = vmatpush1.msra.mxu0 %v822
        %1152 = vmatprep.subr.mxu0 %v827
        %1153 = vmatpush1.msra.mxu0 %v826
        %1154 = vmatprep.subr.mxu0 %v831
        %1155 = vmatpush1.msra.mxu0 %v830
        %1156 = vmatprep.subr.mxu0 %v835
        %1157 = vmatpush1.msra.mxu0 %v834
        %1158 = vmatprep.subr.mxu0 %v839
        %1159 = vmatpush1.msra.mxu0 %v838
        %1160 = vmatprep.subr.mxu0 %v843
        %1161 = vmatpush1.msra.mxu0 %v842
        %1162 = vmatprep.subr.mxu0 %v847
        %1163 = vmatpush1.msra.mxu0 %v846
        %1164 = vmatprep.subr.mxu0 %v851
        %1165 = vmatpush1.msra.mxu0 %v850
        %1166 = vmatprep.subr.mxu0 %v855
        %1167 = vmatpush1.msra.mxu0 %v854
        %1168 = vmatprep.subr.mxu0 %v859
        %1169 = vmatpush1.msra.mxu0 %v858
        %1170 = vmatprep.subr.mxu0 %v863
        %1171 = vmatpush1.msra.mxu0 %v862
        %1172 = vmatprep.subr.mxu0 %v867
        %1173 = vmatpush1.msra.mxu0 %v866
        %1174 = vmatprep.subr.mxu0 %v871
        %1175 = vmatpush1.msra.mxu0 %v870
        %1176 = vmatprep.subr.mxu0 %v875
        %1177 = vmatpush1.msra.mxu0 %v874
        %1178 = vmatprep.subr.mxu0 %v879
        %1179 = vmatpush1.msra.mxu0 %v878
        %1180 = vmatprep.subr.mxu0 %v883
        %1181 = vmatpush1.msra.mxu0 %v882
        %1182 = vmatprep.subr.mxu0 %v887
        %1183 = vmatpush1.msra.mxu0 %v886
        %1184 = vmatprep.subr.mxu0 %v891
        %1185 = vmatpush1.msra.mxu0 %v890
        %1186 = vmatprep.subr.mxu0 %v895
        %1187 = vmatpush1.msra.mxu0 %v894
        %1188 = vmatprep.subr.mxu0 %v899
        %1189 = vmatpush1.msra.mxu0 %v898
        %1190 = vmatprep.subr.mxu0 %v903
        %1191 = vmatpush1.msra.mxu0 %v902
        %1192 = vmatprep.subr.mxu0 %v907
        %1193 = vmatpush1.msra.mxu0 %v906
        %1194 = vmatprep.subr.mxu0 %v911
        %1195 = vmatpush1.msra.mxu0 %v910
        %1196 = vmatprep.subr.mxu0 %v915
        %1197 = vmatpush1.msra.mxu0 %v914
        %1198 = vmatprep.mubr.f32.mxu0 %v785
        %1199 = vmatmul.mubr.f32.gmra.mrb[0].mxu0 %v784
        %v1200 = vpop.f32.mrb[0].mxu0
        %v1201 = vadd.f32 0.0, %v1200
        %v1202 = vpop.f32.mrb[0].mxu0
        %v1203 = vadd.f32 0.0, %v1202
        %1204 = vdwg.mxu0
        %1205 = vmatprep.subr.mxu0 %v919
        %1206 = vmatpush1.msra.mxu0 %v918
        %1207 = vmatprep.subr.mxu0 %v923
        %1208 = vmatpush1.msra.mxu0 %v922
        %1209 = vmatprep.subr.mxu0 %v927
        %1210 = vmatpush1.msra.mxu0 %v926
        %1211 = vmatprep.subr.mxu0 %v931
        %1212 = vmatpush1.msra.mxu0 %v930
        %1213 = vmatprep.subr.mxu0 %v935
        %1214 = vmatpush1.msra.mxu0 %v934
        %1215 = vmatprep.subr.mxu0 %v939
        %1216 = vmatpush1.msra.mxu0 %v938
        %1217 = vmatprep.subr.mxu0 %v943
        %1218 = vmatpush1.msra.mxu0 %v942
        %1219 = vmatprep.subr.mxu0 %v947
        %1220 = vmatpush1.msra.mxu0 %v946
        %1221 = vmatprep.subr.mxu0 %v951
        %1222 = vmatpush1.msra.mxu0 %v950
        %1223 = vmatprep.subr.mxu0 %v955
        %1224 = vmatpush1.msra.mxu0 %v954
        %1225 = vmatprep.subr.mxu0 %v959
        %1226 = vmatpush1.msra.mxu0 %v958
        %1227 = vmatprep.subr.mxu0 %v963
        %1228 = vmatpush1.msra.mxu0 %v962
        %1229 = vmatprep.subr.mxu0 %v967
        %1230 = vmatpush1.msra.mxu0 %v966
        %1231 = vmatprep.subr.mxu0 %v971
        %1232 = vmatpush1.msra.mxu0 %v970
        %1233 = vmatprep.subr.mxu0 %v975
        %1234 = vmatpush1.msra.mxu0 %v974
        %1235 = vmatprep.subr.mxu0 %v979
        %1236 = vmatpush1.msra.mxu0 %v978
        %1237 = vmatprep.subr.mxu0 %v983
        %1238 = vmatpush1.msra.mxu0 %v982
        %1239 = vmatprep.subr.mxu0 %v987
        %1240 = vmatpush1.msra.mxu0 %v986
        %1241 = vmatprep.subr.mxu0 0.0
        %1242 = vmatpush1.msra.mxu0 0.0
        %1243 = vmatprep.subr.mxu0 0.0
        %1244 = vmatpush1.msra.mxu0 0.0
        %1245 = vmatprep.subr.mxu0 0.0
        %1246 = vmatpush1.msra.mxu0 0.0
        %1247 = vmatprep.subr.mxu0 0.0
        %1248 = vmatpush1.msra.mxu0 0.0
        %1249 = vmatprep.subr.mxu0 0.0
        %1250 = vmatpush1.msra.mxu0 0.0
        %1251 = vmatprep.subr.mxu0 0.0
        %1252 = vmatpush1.msra.mxu0 0.0
        %1253 = vmatprep.subr.mxu0 0.0
        %1254 = vmatpush1.msra.mxu0 0.0
        %1255 = vmatprep.subr.mxu0 0.0
        %1256 = vmatpush1.msra.mxu0 0.0
        %1257 = vmatprep.subr.mxu0 0.0
        %1258 = vmatpush1.msra.mxu0 0.0
        %1259 = vmatprep.subr.mxu0 0.0
        %1260 = vmatpush1.msra.mxu0 0.0
        %1261 = vmatprep.subr.mxu0 0.0
        %1262 = vmatpush1.msra.mxu0 0.0
        %1263 = vmatprep.subr.mxu0 0.0
        %1264 = vmatpush1.msra.mxu0 0.0
        %1265 = vmatprep.subr.mxu0 0.0
        %1266 = vmatpush1.msra.mxu0 0.0
        %1267 = vmatprep.subr.mxu0 0.0
        %1268 = vmatpush1.msra.mxu0 0.0
        %1269 = vmatprep.mubr.f32.mxu0 %v990
        %1270 = vmatmul.mubr.f32.gmra.mrb[0].mxu0 %v786
        %v1271 = vpop.f32.mrb[0].mxu0
        %v1272 = vadd.f32 %v1201, %v1271
        %v1273 = vpop.f32.mrb[0].mxu0
        %v1274 = vadd.f32 %v1203, %v1273
        %1275 = vdwg.mxu0
        %v1276 = vlaneseq
        %v1277 = vshrl.u32 %v1276, 7
        %v1278 = vsub.s32 0, %v1277
        %v1279 = vrot.slane %v1130, %v1278
        %v1280 = vlaneseq
        %v1281 = vshrl.u32 %v1280, 7
        %v1282 = vsub.s32 0, %v1281
        %v1283 = vrot.slane %v1132, %v1282
        %v1284 = vlaneseq
        %v1285 = vshrl.u32 %v1284, 7
        %v1286 = vsub.s32 0, %v1285
        %v1287 = vrot.slane %v1272, %v1286
        %v1288 = vlaneseq
        %v1289 = vshrl.u32 %v1288, 7
        %v1290 = vsub.s32 0, %v1289
        %v1291 = vrot.slane %v1274, %v1290
        %v1292 = vsub.f32 %v678, %v1279
        %v1293 = vsub.f32 %v680, %v1283
        %v1294 = vsub.f32 %v749, %v1287
        %v1295 = vsub.f32 %v751, %v1291
        %v1296 = vmul.f32 %v1292, %v1292
        %v1297 = vmul.f32 %v1293, %v1293
        %v1298 = vmul.f32 %v1294, %v1294
        %v1299 = vmul.f32 %v1295, %v1295
        %v1300 = vsel %vm753, %v1296, 0.0
        %v1301 = vrot.slane %v1300, 4
        %v1302 = vadd.f32 %v1300, %v1301
        %v1303 = vrot.slane %v1302, 2
        %v1304 = vadd.f32 %v1302, %v1303
        %v1305 = vrot.slane %v1304, 1
        %v1306 = vadd.f32 %v1304, %v1305
        %v1307 = vsel %vm753, %v1297, 0.0
        %v1308 = vrot.slane %v1307, 4
        %v1309 = vadd.f32 %v1307, %v1308
        %v1310 = vrot.slane %v1309, 2
        %v1311 = vadd.f32 %v1309, %v1310
        %v1312 = vrot.slane %v1311, 1
        %v1313 = vadd.f32 %v1311, %v1312
        %v1314 = vsel %vm753, %v1298, 0.0
        %v1315 = vrot.slane %v1314, 4
        %v1316 = vadd.f32 %v1314, %v1315
        %v1317 = vrot.slane %v1316, 2
        %v1318 = vadd.f32 %v1316, %v1317
        %v1319 = vrot.slane %v1318, 1
        %v1320 = vadd.f32 %v1318, %v1319
        %v1321 = vsel %vm775, %v1299, 0.0
        %v1322 = vrot.slane %v1321, 4
        %v1323 = vadd.f32 %v1321, %v1322
        %v1324 = vrot.slane %v1323, 2
        %v1325 = vadd.f32 %v1323, %v1324
        %v1326 = vrot.slane %v1325, 1
        %v1327 = vadd.f32 %v1325, %v1326
        %v1328 = vmul.f32 %v1306, %v783
        %v1329 = vmul.f32 %v1313, %v783
        %v1330 = vmul.f32 %v1320, %v783
        %v1331 = vmul.f32 %v1327, %v783
        %v1332 = vlaneseq
        %v1333 = vshrl.u32 %v1332, 7
        %v1334 = vsub.s32 1, %v1333
        %v1335 = vrot.slane %v545, %v1334
        %v1336 = vlaneseq
        %v1337 = vshrl.u32 %v1336, 7
        %v1338 = vsub.s32 5, %v1337
        %v1339 = vrot.slane %v545, %v1338
        %v1340 = vlaneseq
        %v1341 = vshrl.u32 %v1340, 7
        %v1342 = vsub.s32 1, %v1341
        %v1343 = vrot.slane %v546, %v1342
        %v1344 = vlaneseq
        %v1345 = vshrl.u32 %v1344, 7
        %v1346 = vsub.s32 5, %v1345
        %v1347 = vrot.slane %v546, %v1346
        %v1352 = vlaneseq
        %v1353 = vshrl.u32 %v1352, 7
        %v1354 = vsub.s32 1, %v1353
        %v1355 = vrot.slane %v1335, %v1354
        %v1356 = vlaneseq
        %v1357 = vshrl.u32 %v1356, 7
        %v1358 = vsub.s32 1, %v1357
        %v1359 = vrot.slane %v1339, %v1358
        %v1360 = vlaneseq
        %v1361 = vshrl.u32 %v1360, 7
        %v1362 = vsub.s32 1, %v1361
        %v1363 = vrot.slane %v1343, %v1362
        %v1364 = vlaneseq
        %v1365 = vshrl.u32 %v1364, 7
        %v1366 = vsub.s32 1, %v1365
        %v1367 = vrot.slane %v1347, %v1366
        %v1368 = vmul.f32 %v1355, %v1292
        %v1369 = vmul.f32 %v1359, %v1293
        %v1370 = vmul.f32 %v1363, %v1294
        %v1371 = vmul.f32 %v1367, %v1295
        %v1373 = vsel %vm988, %v1331, 0
        %1375 = vmatprep.subr.mxu0 %v789
        %1376 = vmatpush1.msra.mxu0 %v788
        %1377 = vmatprep.subr.mxu0 %v793
        %1378 = vmatpush1.msra.mxu0 %v792
        %1379 = vmatprep.subr.mxu0 %v797
        %1380 = vmatpush1.msra.mxu0 %v796
        %1381 = vmatprep.subr.mxu0 %v801
        %1382 = vmatpush1.msra.mxu0 %v800
        %1383 = vmatprep.subr.mxu0 %v805
        %1384 = vmatpush1.msra.mxu0 %v804
        %1385 = vmatprep.subr.mxu0 %v809
        %1386 = vmatpush1.msra.mxu0 %v808
        %1387 = vmatprep.subr.mxu0 %v813
        %1388 = vmatpush1.msra.mxu0 %v812
        %1389 = vmatprep.subr.mxu0 %v817
        %1390 = vmatpush1.msra.mxu0 %v816
        %1391 = vmatprep.subr.mxu0 %v821
        %1392 = vmatpush1.msra.mxu0 %v820
        %1393 = vmatprep.subr.mxu0 %v825
        %1394 = vmatpush1.msra.mxu0 %v824
        %1395 = vmatprep.subr.mxu0 %v829
        %1396 = vmatpush1.msra.mxu0 %v828
        %1397 = vmatprep.subr.mxu0 %v833
        %1398 = vmatpush1.msra.mxu0 %v832
        %1399 = vmatprep.subr.mxu0 %v837
        %1400 = vmatpush1.msra.mxu0 %v836
        %1401 = vmatprep.subr.mxu0 %v841
        %1402 = vmatpush1.msra.mxu0 %v840
        %1403 = vmatprep.subr.mxu0 %v845
        %1404 = vmatpush1.msra.mxu0 %v844
        %1405 = vmatprep.subr.mxu0 %v849
        %1406 = vmatpush1.msra.mxu0 %v848
        %1407 = vmatprep.subr.mxu0 %v853
        %1408 = vmatpush1.msra.mxu0 %v852
        %1409 = vmatprep.subr.mxu0 %v857
        %1410 = vmatpush1.msra.mxu0 %v856
        %1411 = vmatprep.subr.mxu0 %v861
        %1412 = vmatpush1.msra.mxu0 %v860
        %1413 = vmatprep.subr.mxu0 %v865
        %1414 = vmatpush1.msra.mxu0 %v864
        %1415 = vmatprep.subr.mxu0 %v869
        %1416 = vmatpush1.msra.mxu0 %v868
        %1417 = vmatprep.subr.mxu0 %v873
        %1418 = vmatpush1.msra.mxu0 %v872
        %1419 = vmatprep.subr.mxu0 %v877
        %1420 = vmatpush1.msra.mxu0 %v876
        %1421 = vmatprep.subr.mxu0 %v881
        %1422 = vmatpush1.msra.mxu0 %v880
        %1423 = vmatprep.subr.mxu0 %v885
        %1424 = vmatpush1.msra.mxu0 %v884
        %1425 = vmatprep.subr.mxu0 %v889
        %1426 = vmatpush1.msra.mxu0 %v888
        %1427 = vmatprep.subr.mxu0 %v893
        %1428 = vmatpush1.msra.mxu0 %v892
        %1429 = vmatprep.subr.mxu0 %v897
        %1430 = vmatpush1.msra.mxu0 %v896
        %1431 = vmatprep.subr.mxu0 %v901
        %1432 = vmatpush1.msra.mxu0 %v900
        %1433 = vmatprep.subr.mxu0 %v905
        %1434 = vmatpush1.msra.mxu0 %v904
        %1435 = vmatprep.subr.mxu0 %v909
        %1436 = vmatpush1.msra.mxu0 %v908
        %1437 = vmatprep.subr.mxu0 %v913
        %1438 = vmatpush1.msra.mxu0 %v912
        %1439 = vmatprep.mubr.f32.mxu0 %v1329
        %1440 = vmatmul.mubr.f32.gmra.mrb[0].mxu0 %v1328
        %v1441 = vpop.f32.mrb[0].mxu0
        %v1442 = vadd.f32 1e-05, %v1441
        %v1443 = vpop.f32.mrb[0].mxu0
        %v1444 = vadd.f32 1e-05, %v1443
        %1445 = vdwg.mxu0
        %1446 = vmatprep.subr.mxu0 %v917
        %1447 = vmatpush1.msra.mxu0 %v916
        %1448 = vmatprep.subr.mxu0 %v921
        %1449 = vmatpush1.msra.mxu0 %v920
        %1450 = vmatprep.subr.mxu0 %v925
        %1451 = vmatpush1.msra.mxu0 %v924
        %1452 = vmatprep.subr.mxu0 %v929
        %1453 = vmatpush1.msra.mxu0 %v928
        %1454 = vmatprep.subr.mxu0 %v933
        %1455 = vmatpush1.msra.mxu0 %v932
        %1456 = vmatprep.subr.mxu0 %v937
        %1457 = vmatpush1.msra.mxu0 %v936
        %1458 = vmatprep.subr.mxu0 %v941
        %1459 = vmatpush1.msra.mxu0 %v940
        %1460 = vmatprep.subr.mxu0 %v945
        %1461 = vmatpush1.msra.mxu0 %v944
        %1462 = vmatprep.subr.mxu0 %v949
        %1463 = vmatpush1.msra.mxu0 %v948
        %1464 = vmatprep.subr.mxu0 %v953
        %1465 = vmatpush1.msra.mxu0 %v952
        %1466 = vmatprep.subr.mxu0 %v957
        %1467 = vmatpush1.msra.mxu0 %v956
        %1468 = vmatprep.subr.mxu0 %v961
        %1469 = vmatpush1.msra.mxu0 %v960
        %1470 = vmatprep.subr.mxu0 %v965
        %1471 = vmatpush1.msra.mxu0 %v964
        %1472 = vmatprep.subr.mxu0 %v969
        %1473 = vmatpush1.msra.mxu0 %v968
        %1474 = vmatprep.subr.mxu0 %v973
        %1475 = vmatpush1.msra.mxu0 %v972
        %1476 = vmatprep.subr.mxu0 %v977
        %1477 = vmatpush1.msra.mxu0 %v976
        %1478 = vmatprep.subr.mxu0 %v981
        %1479 = vmatpush1.msra.mxu0 %v980
        %1480 = vmatprep.subr.mxu0 %v985
        %1481 = vmatpush1.msra.mxu0 %v984
        %1482 = vmatprep.subr.mxu0 0.0
        %1483 = vmatpush1.msra.mxu0 0.0
        %1484 = vmatprep.subr.mxu0 0.0
        %1485 = vmatpush1.msra.mxu0 0.0
        %1486 = vmatprep.subr.mxu0 0.0
        %1487 = vmatpush1.msra.mxu0 0.0
        %1488 = vmatprep.subr.mxu0 0.0
        %1489 = vmatpush1.msra.mxu0 0.0
        %1490 = vmatprep.subr.mxu0 0.0
        %1491 = vmatpush1.msra.mxu0 0.0
        %1492 = vmatprep.subr.mxu0 0.0
        %1493 = vmatpush1.msra.mxu0 0.0
        %1494 = vmatprep.subr.mxu0 0.0
        %1495 = vmatpush1.msra.mxu0 0.0
        %1496 = vmatprep.subr.mxu0 0.0
        %1497 = vmatpush1.msra.mxu0 0.0
        %1498 = vmatprep.subr.mxu0 0.0
        %1499 = vmatpush1.msra.mxu0 0.0
        %1500 = vmatprep.subr.mxu0 0.0
        %1501 = vmatpush1.msra.mxu0 0.0
        %1502 = vmatprep.subr.mxu0 0.0
        %1503 = vmatpush1.msra.mxu0 0.0
        %1504 = vmatprep.subr.mxu0 0.0
        %1505 = vmatpush1.msra.mxu0 0.0
        %1506 = vmatprep.subr.mxu0 0.0
        %1507 = vmatpush1.msra.mxu0 0.0
        %1508 = vmatprep.subr.mxu0 0.0
        %1509 = vmatpush1.msra.mxu0 0.0
        %1510 = vmatprep.mubr.f32.mxu0 %v1373
        %1511 = vmatmul.mubr.f32.gmra.mrb[0].mxu0 %v1330
        %v1512 = vpop.f32.mrb[0].mxu0
        %v1513 = vadd.f32 %v1442, %v1512
        %v1514 = vpop.f32.mrb[0].mxu0
        %v1515 = vadd.f32 %v1444, %v1514
        %1516 = vdwg.mxu0
        %1517 = vmatprep.subr.mxu0 %v791
        %1518 = vmatpush1.msra.mxu0 %v790
        %1519 = vmatprep.subr.mxu0 %v795
        %1520 = vmatpush1.msra.mxu0 %v794
        %1521 = vmatprep.subr.mxu0 %v799
        %1522 = vmatpush1.msra.mxu0 %v798
        %1523 = vmatprep.subr.mxu0 %v803
        %1524 = vmatpush1.msra.mxu0 %v802
        %1525 = vmatprep.subr.mxu0 %v807
        %1526 = vmatpush1.msra.mxu0 %v806
        %1527 = vmatprep.subr.mxu0 %v811
        %1528 = vmatpush1.msra.mxu0 %v810
        %1529 = vmatprep.subr.mxu0 %v815
        %1530 = vmatpush1.msra.mxu0 %v814
        %1531 = vmatprep.subr.mxu0 %v819
        %1532 = vmatpush1.msra.mxu0 %v818
        %1533 = vmatprep.subr.mxu0 %v823
        %1534 = vmatpush1.msra.mxu0 %v822
        %1535 = vmatprep.subr.mxu0 %v827
        %1536 = vmatpush1.msra.mxu0 %v826
        %1537 = vmatprep.subr.mxu0 %v831
        %1538 = vmatpush1.msra.mxu0 %v830
        %1539 = vmatprep.subr.mxu0 %v835
        %1540 = vmatpush1.msra.mxu0 %v834
        %1541 = vmatprep.subr.mxu0 %v839
        %1542 = vmatpush1.msra.mxu0 %v838
        %1543 = vmatprep.subr.mxu0 %v843
        %1544 = vmatpush1.msra.mxu0 %v842
        %1545 = vmatprep.subr.mxu0 %v847
        %1546 = vmatpush1.msra.mxu0 %v846
        %1547 = vmatprep.subr.mxu0 %v851
        %1548 = vmatpush1.msra.mxu0 %v850
        %1549 = vmatprep.subr.mxu0 %v855
        %1550 = vmatpush1.msra.mxu0 %v854
        %1551 = vmatprep.subr.mxu0 %v859
        %1552 = vmatpush1.msra.mxu0 %v858
        %1553 = vmatprep.subr.mxu0 %v863
        %1554 = vmatpush1.msra.mxu0 %v862
        %1555 = vmatprep.subr.mxu0 %v867
        %1556 = vmatpush1.msra.mxu0 %v866
        %1557 = vmatprep.subr.mxu0 %v871
        %1558 = vmatpush1.msra.mxu0 %v870
        %1559 = vmatprep.subr.mxu0 %v875
        %1560 = vmatpush1.msra.mxu0 %v874
        %1561 = vmatprep.subr.mxu0 %v879
        %1562 = vmatpush1.msra.mxu0 %v878
        %1563 = vmatprep.subr.mxu0 %v883
        %1564 = vmatpush1.msra.mxu0 %v882
        %1565 = vmatprep.subr.mxu0 %v887
        %1566 = vmatpush1.msra.mxu0 %v886
        %1567 = vmatprep.subr.mxu0 %v891
        %1568 = vmatpush1.msra.mxu0 %v890
        %1569 = vmatprep.subr.mxu0 %v895
        %1570 = vmatpush1.msra.mxu0 %v894
        %1571 = vmatprep.subr.mxu0 %v899
        %1572 = vmatpush1.msra.mxu0 %v898
        %1573 = vmatprep.subr.mxu0 %v903
        %1574 = vmatpush1.msra.mxu0 %v902
        %1575 = vmatprep.subr.mxu0 %v907
        %1576 = vmatpush1.msra.mxu0 %v906
        %1577 = vmatprep.subr.mxu0 %v911
        %1578 = vmatpush1.msra.mxu0 %v910
        %1579 = vmatprep.subr.mxu0 %v915
        %1580 = vmatpush1.msra.mxu0 %v914
        %1581 = vmatprep.mubr.f32.mxu0 %v1329
        %1582 = vmatmul.mubr.f32.gmra.mrb[0].mxu0 %v1328
        %v1583 = vpop.f32.mrb[0].mxu0
        %v1584 = vadd.f32 1e-05, %v1583
        %v1585 = vpop.f32.mrb[0].mxu0
        %v1586 = vadd.f32 1e-05, %v1585
        %1587 = vdwg.mxu0
        %1588 = vmatprep.subr.mxu0 %v919
        %1589 = vmatpush1.msra.mxu0 %v918
        %1590 = vmatprep.subr.mxu0 %v923
        %1591 = vmatpush1.msra.mxu0 %v922
        %1592 = vmatprep.subr.mxu0 %v927
        %1593 = vmatpush1.msra.mxu0 %v926
        %1594 = vmatprep.subr.mxu0 %v931
        %1595 = vmatpush1.msra.mxu0 %v930
        %1596 = vmatprep.subr.mxu0 %v935
        %1597 = vmatpush1.msra.mxu0 %v934
        %1598 = vmatprep.subr.mxu0 %v939
        %1599 = vmatpush1.msra.mxu0 %v938
        %1600 = vmatprep.subr.mxu0 %v943
        %1601 = vmatpush1.msra.mxu0 %v942
        %1602 = vmatprep.subr.mxu0 %v947
        %1603 = vmatpush1.msra.mxu0 %v946
        %1604 = vmatprep.subr.mxu0 %v951
        %1605 = vmatpush1.msra.mxu0 %v950
        %1606 = vmatprep.subr.mxu0 %v955
        %1607 = vmatpush1.msra.mxu0 %v954
        %1608 = vmatprep.subr.mxu0 %v959
        %1609 = vmatpush1.msra.mxu0 %v958
        %1610 = vmatprep.subr.mxu0 %v963
        %1611 = vmatpush1.msra.mxu0 %v962
        %1612 = vmatprep.subr.mxu0 %v967
        %1613 = vmatpush1.msra.mxu0 %v966
        %1614 = vmatprep.subr.mxu0 %v971
        %1615 = vmatpush1.msra.mxu0 %v970
        %1616 = vmatprep.subr.mxu0 %v975
        %1617 = vmatpush1.msra.mxu0 %v974
        %1618 = vmatprep.subr.mxu0 %v979
        %1619 = vmatpush1.msra.mxu0 %v978
        %1620 = vmatprep.subr.mxu0 %v983
        %1621 = vmatpush1.msra.mxu0 %v982
        %1622 = vmatprep.subr.mxu0 %v987
        %1623 = vmatpush1.msra.mxu0 %v986
        %1624 = vmatprep.subr.mxu0 0.0
        %1625 = vmatpush1.msra.mxu0 0.0
        %1626 = vmatprep.subr.mxu0 0.0
        %1627 = vmatpush1.msra.mxu0 0.0
        %1628 = vmatprep.subr.mxu0 0.0
        %1629 = vmatpush1.msra.mxu0 0.0
        %1630 = vmatprep.subr.mxu0 0.0
        %1631 = vmatpush1.msra.mxu0 0.0
        %1632 = vmatprep.subr.mxu0 0.0
        %1633 = vmatpush1.msra.mxu0 0.0
        %1634 = vmatprep.subr.mxu0 0.0
        %1635 = vmatpush1.msra.mxu0 0.0
        %1636 = vmatprep.subr.mxu0 0.0
        %1637 = vmatpush1.msra.mxu0 0.0
        %1638 = vmatprep.subr.mxu0 0.0
        %1639 = vmatpush1.msra.mxu0 0.0
        %1640 = vmatprep.subr.mxu0 0.0
        %1641 = vmatpush1.msra.mxu0 0.0
        %1642 = vmatprep.subr.mxu0 0.0
        %1643 = vmatpush1.msra.mxu0 0.0
        %1644 = vmatprep.subr.mxu0 0.0
        %1645 = vmatpush1.msra.mxu0 0.0
        %1646 = vmatprep.subr.mxu0 0.0
        %1647 = vmatpush1.msra.mxu0 0.0
        %1648 = vmatprep.subr.mxu0 0.0
        %1649 = vmatpush1.msra.mxu0 0.0
        %1650 = vmatprep.subr.mxu0 0.0
        %1651 = vmatpush1.msra.mxu0 0.0
        %1652 = vmatprep.mubr.f32.mxu0 %v1373
        %1653 = vmatmul.mubr.f32.gmra.mrb[0].mxu0 %v1330
        %v1654 = vpop.f32.mrb[0].mxu0
        %v1655 = vadd.f32 %v1584, %v1654
        %v1656 = vpop.f32.mrb[0].mxu0
        %v1657 = vadd.f32 %v1586, %v1656
        %1658 = vdwg.mxu0
        %v1659 = vrsqrt.pop %v1513
        %v1660 = vrsqrt.pop %v1515
        %v1661 = vrsqrt.pop %v1655
        %v1662 = vrsqrt.pop %v1657
        %v1663 = vlaneseq
        %v1664 = vshrl.u32 %v1663, 7
        %v1665 = vsub.s32 0, %v1664
        %v1666 = vrot.slane %v1659, %v1665
        %v1667 = vlaneseq
        %v1668 = vshrl.u32 %v1667, 7
        %v1669 = vsub.s32 0, %v1668
        %v1670 = vrot.slane %v1660, %v1669
        %v1671 = vlaneseq
        %v1672 = vshrl.u32 %v1671, 7
        %v1673 = vsub.s32 0, %v1672
        %v1674 = vrot.slane %v1661, %v1673
        %v1675 = vlaneseq
        %v1676 = vshrl.u32 %v1675, 7
        %v1677 = vsub.s32 0, %v1676
        %v1678 = vrot.slane %v1662, %v1677
        %v1679 = vmul.f32 %v1368, %v1666
        %v1680 = vmul.f32 %v1369, %v1670
        %v1681 = vmul.f32 %v1370, %v1674
        %v1682 = vmul.f32 %v1371, %v1678
        %v1683 = vlaneseq
        %v1684 = vshrl.u32 %v1683, 7
        %v1685 = vsub.s32 2, %v1684
        %v1686 = vrot.slane %v545, %v1685
        %v1687 = vlaneseq
        %v1688 = vshrl.u32 %v1687, 7
        %v1689 = vsub.s32 6, %v1688
        %v1690 = vrot.slane %v545, %v1689
        %v1691 = vlaneseq
        %v1692 = vshrl.u32 %v1691, 7
        %v1693 = vsub.s32 2, %v1692
        %v1694 = vrot.slane %v546, %v1693
        %v1695 = vlaneseq
        %v1696 = vshrl.u32 %v1695, 7
        %v1697 = vsub.s32 6, %v1696
        %v1698 = vrot.slane %v546, %v1697
        %v1703 = vlaneseq
        %v1704 = vshrl.u32 %v1703, 7
        %v1705 = vsub.s32 2, %v1704
        %v1706 = vrot.slane %v1686, %v1705
        %v1707 = vlaneseq
        %v1708 = vshrl.u32 %v1707, 7
        %v1709 = vsub.s32 2, %v1708
        %v1710 = vrot.slane %v1690, %v1709
        %v1711 = vlaneseq
        %v1712 = vshrl.u32 %v1711, 7
        %v1713 = vsub.s32 2, %v1712
        %v1714 = vrot.slane %v1694, %v1713
        %v1715 = vlaneseq
        %v1716 = vshrl.u32 %v1715, 7
        %v1717 = vsub.s32 2, %v1716
        %v1718 = vrot.slane %v1698, %v1717
        %v1719 = vadd.f32 %v1679, %v1706
        %v1720 = vadd.f32 %v1680, %v1710
        %v1721 = vadd.f32 %v1681, %v1714
        %v1722 = vadd.f32 %v1682, %v1718
        %vm1723 = vcmp.ge.f32.partialorder %v1719, 0.0
        %vm1724 = vcmp.ge.f32.partialorder %v1720, 0.0
        %vm1725 = vcmp.ge.f32.partialorder %v1721, 0.0
        %vm1726 = vcmp.ge.f32.partialorder %v1722, 0.0
        %v1727 = vlaneseq
        %v1728 = vshrl.u32 %v1727, 7
        %v1729 = vsub.s32 3, %v1728
        %v1730 = vrot.slane %v545, %v1729
        %v1731 = vlaneseq
        %v1732 = vshrl.u32 %v1731, 7
        %v1733 = vsub.s32 7, %v1732
        %v1734 = vrot.slane %v545, %v1733
        %v1735 = vlaneseq
        %v1736 = vshrl.u32 %v1735, 7
        %v1737 = vsub.s32 3, %v1736
        %v1738 = vrot.slane %v546, %v1737
        %v1739 = vlaneseq
        %v1740 = vshrl.u32 %v1739, 7
        %v1741 = vsub.s32 7, %v1740
        %v1742 = vrot.slane %v546, %v1741
        %v1747 = vlaneseq
        %v1748 = vshrl.u32 %v1747, 7
        %v1749 = vsub.s32 3, %v1748
        %v1750 = vrot.slane %v1730, %v1749
        %v1751 = vlaneseq
        %v1752 = vshrl.u32 %v1751, 7
        %v1753 = vsub.s32 3, %v1752
        %v1754 = vrot.slane %v1734, %v1753
        %v1755 = vlaneseq
        %v1756 = vshrl.u32 %v1755, 7
        %v1757 = vsub.s32 3, %v1756
        %v1758 = vrot.slane %v1738, %v1757
        %v1759 = vlaneseq
        %v1760 = vshrl.u32 %v1759, 7
        %v1761 = vsub.s32 3, %v1760
        %v1762 = vrot.slane %v1742, %v1761
        %v1763 = vmul.f32 %v1750, %v1719
        %v1764 = vmul.f32 %v1754, %v1720
        %v1765 = vmul.f32 %v1758, %v1721
        %v1766 = vmul.f32 %v1762, %v1722
        %v1767 = vsel %vm1723, %v1719, %v1763
        %v1768 = vsel %vm1724, %v1720, %v1764
        %v1769 = vsel %vm1725, %v1721, %v1765
        %v1770 = vsel %vm1726, %v1722, %v1766
        %v1771 = vld [vmem:[#allocation4] sm:$0xff]
        %v1772 = vld [vmem:[#allocation4 + $0x8] sm:$0xff]
        %v1773 = vld [vmem:[#allocation4 + $0x10] sm:$0xff]
        %v1774 = vld [vmem:[#allocation4 + $0x18] sm:$0xff]
        %v1775 = vld [vmem:[#allocation4 + $0x20] sm:$0xff]
        %v1776 = vld [vmem:[#allocation4 + $0x28] sm:$0xff]
        %v1777 = vld [vmem:[#allocation4 + $0x30] sm:$0xff]
        %v1778 = vld [vmem:[#allocation4 + $0x38] sm:$0xff]
        %v1779 = vld [vmem:[#allocation4 + $0x40] sm:$0xff]
        %v1780 = vld [vmem:[#allocation4 + $0x48] sm:$0xff]
        %v1781 = vld [vmem:[#allocation4 + $0x50] sm:$0xff]
        %v1782 = vld [vmem:[#allocation4 + $0x58] sm:$0xff]
        %v1783 = vld [vmem:[#allocation4 + $0x60] sm:$0xff]
        %v1784 = vld [vmem:[#allocation4 + $0x68] sm:$0xff]
        %v1785 = vld [vmem:[#allocation4 + $0x70] sm:$0xff]
        %v1786 = vld [vmem:[#allocation4 + $0x78] sm:$0xff]
        %v1787 = vld [vmem:[#allocation4 + $0x80] sm:$0xff]
        %v1788 = vld [vmem:[#allocation4 + $0x88] sm:$0xff]
        %v1789 = vld [vmem:[#allocation4 + $0x90] sm:$0xff]
        %v1790 = vld [vmem:[#allocation4 + $0x98] sm:$0xff]
        %v1791 = vld [vmem:[#allocation4 + $0xa0] sm:$0xff]
        %v1792 = vld [vmem:[#allocation4 + $0xa8] sm:$0xff]
        %v1793 = vld [vmem:[#allocation4 + $0xb0] sm:$0xff]
        %v1794 = vld [vmem:[#allocation4 + $0xb8] sm:$0xff]
        %v1795 = vld [vmem:[#allocation4 + $0xc0] sm:$0xff]
        %v1796 = vld [vmem:[#allocation4 + $0xc8] sm:$0xff]
        %v1797 = vld [vmem:[#allocation4 + $0xd0] sm:$0xff]
        %v1798 = vld [vmem:[#allocation4 + $0xd8] sm:$0xff]
        %v1799 = vld [vmem:[#allocation4 + $0xe0] sm:$0xff]
        %v1800 = vld [vmem:[#allocation4 + $0xe8] sm:$0xff]
        %v1801 = vld [vmem:[#allocation4 + $0xf0] sm:$0xff]
        %v1802 = vld [vmem:[#allocation4 + $0xf8] sm:$0xff]
        %v1803 = vld [vmem:[#allocation4 + $0x100] sm:$0xff]
        %v1804 = vld [vmem:[#allocation4 + $0x108] sm:$0xff]
        %v1805 = vld [vmem:[#allocation4 + $0x110] sm:$0xff]
        %v1806 = vld [vmem:[#allocation4 + $0x118] sm:$0xff]
        %v1807 = vld [vmem:[#allocation4 + $0x120] sm:$0xff]
        %v1808 = vld [vmem:[#allocation4 + $0x128] sm:$0xff]
        %v1809 = vld [vmem:[#allocation4 + $0x130] sm:$0xff]
        %v1810 = vld [vmem:[#allocation4 + $0x138] sm:$0xff]
        %v1811 = vld [vmem:[#allocation4 + $0x140] sm:$0xff]
        %v1812 = vld [vmem:[#allocation4 + $0x148] sm:$0xff]
        %v1813 = vld [vmem:[#allocation4 + $0x150] sm:$0xff]
        %v1814 = vld [vmem:[#allocation4 + $0x158] sm:$0xff]
        %v1815 = vld [vmem:[#allocation4 + $0x160] sm:$0xff]
        %v1816 = vld [vmem:[#allocation4 + $0x168] sm:$0xff]
        %v1817 = vld [vmem:[#allocation4 + $0x170] sm:$0xff]
        %v1818 = vld [vmem:[#allocation4 + $0x178] sm:$0xff]
        %v1819 = vld [vmem:[#allocation4 + $0x180] sm:$0xff]
        %v1820 = vld [vmem:[#allocation4 + $0x188] sm:$0xff]
        %v1821 = vld [vmem:[#allocation4 + $0x190] sm:$0xff]
        %v1822 = vld [vmem:[#allocation4 + $0x198] sm:$0xff]
        %v1823 = vld [vmem:[#allocation4 + $0x1a0] sm:$0xff]
        %v1824 = vld [vmem:[#allocation4 + $0x1a8] sm:$0xff]
        %v1825 = vld [vmem:[#allocation4 + $0x1b0] sm:$0xff]
        %v1826 = vld [vmem:[#allocation4 + $0x1b8] sm:$0xff]
        %v1827 = vld [vmem:[#allocation4 + $0x1c0] sm:$0xff]
        %v1828 = vld [vmem:[#allocation4 + $0x1c8] sm:$0xff]
        %v1829 = vld [vmem:[#allocation4 + $0x1d0] sm:$0xff]
        %v1830 = vld [vmem:[#allocation4 + $0x1d8] sm:$0xff]
        %v1831 = vld [vmem:[#allocation4 + $0x1e0] sm:$0xff]
        %v1832 = vld [vmem:[#allocation4 + $0x1e8] sm:$0xff]
        %v1833 = vld [vmem:[#allocation4 + $0x1f0] sm:$0xff]
        %v1834 = vld [vmem:[#allocation4 + $0x1f8] sm:$0xff]
        %v1835 = vld [vmem:[#allocation4 + $0x200] sm:$0xff]
        %v1836 = vld [vmem:[#allocation4 + $0x208] sm:$0xff]
        %v1837 = vld [vmem:[#allocation4 + $0x210] sm:$0xff]
        %v1838 = vld [vmem:[#allocation4 + $0x218] sm:$0xff]
        %v1839 = vld [vmem:[#allocation4 + $0x220] sm:$0xff]
        %v1840 = vld [vmem:[#allocation4 + $0x228] sm:$0xff]
        %v1841 = vld [vmem:[#allocation4 + $0x230] sm:$0xff]
        %v1842 = vld [vmem:[#allocation4 + $0x238] sm:$0xff]
        %v1843 = vld [vmem:[#allocation4 + $0x240] sm:$0xff]
        %v1844 = vld [vmem:[#allocation4 + $0x248] sm:$0xff]
        %v1845 = vld [vmem:[#allocation4 + $0x250] sm:$0xff]
        %v1846 = vld [vmem:[#allocation4 + $0x258] sm:$0xff]
        %v1847 = vld [vmem:[#allocation4 + $0x260] sm:$0xff]
        %v1848 = vld [vmem:[#allocation4 + $0x268] sm:$0xff]
        %v1849 = vld [vmem:[#allocation4 + $0x270] sm:$0xff]
        %v1850 = vld [vmem:[#allocation4 + $0x278] sm:$0xff]
        %v1851 = vld [vmem:[#allocation4 + $0x280] sm:$0xff]
        %v1852 = vld [vmem:[#allocation4 + $0x288] sm:$0xff]
        %v1853 = vld [vmem:[#allocation4 + $0x290] sm:$0xff]
        %v1854 = vld [vmem:[#allocation4 + $0x298] sm:$0xff]
        %v1855 = vld [vmem:[#allocation4 + $0x2a0] sm:$0xff]
        %v1856 = vld [vmem:[#allocation4 + $0x2a8] sm:$0xff]
        %v1857 = vld [vmem:[#allocation4 + $0x2b0] sm:$0xff]
        %v1858 = vld [vmem:[#allocation4 + $0x2b8] sm:$0xff]
        %v1859 = vld [vmem:[#allocation4 + $0x2c0] sm:$0xff]
        %v1860 = vld [vmem:[#allocation4 + $0x2c8] sm:$0xff]
        %v1861 = vld [vmem:[#allocation4 + $0x2d0] sm:$0xff]
        %v1862 = vld [vmem:[#allocation4 + $0x2d8] sm:$0xff]
        %v1863 = vld [vmem:[#allocation4 + $0x2e0] sm:$0xff]
        %v1864 = vld [vmem:[#allocation4 + $0x2e8] sm:$0xff]
        %v1865 = vld [vmem:[#allocation4 + $0x2f0] sm:$0xff]
        %v1866 = vld [vmem:[#allocation4 + $0x2f8] sm:$0xff]
        %v1867 = vld [vmem:[#allocation4 + $0x300] sm:$0xff]
        %v1868 = vld [vmem:[#allocation4 + $0x308] sm:$0xff]
        %v1869 = vld [vmem:[#allocation4 + $0x310] sm:$0xff]
        %v1870 = vld [vmem:[#allocation4 + $0x318] sm:$0xff]
        %v1871 = vld [vmem:[#allocation4 + $0x320] sm:$0xff]
        %v1872 = vld [vmem:[#allocation4 + $0x328] sm:$0xff]
        %v1873 = vld [vmem:[#allocation4 + $0x330] sm:$0xff]
        %v1874 = vld [vmem:[#allocation4 + $0x338] sm:$0xff]
        %v1875 = vld [vmem:[#allocation4 + $0x340] sm:$0xff]
        %v1876 = vld [vmem:[#allocation4 + $0x348] sm:$0xff]
        %v1877 = vld [vmem:[#allocation4 + $0x350] sm:$0xff]
        %v1878 = vld [vmem:[#allocation4 + $0x358] sm:$0xff]
        %v1879 = vld [vmem:[#allocation4 + $0x360] sm:$0xff]
        %v1880 = vld [vmem:[#allocation4 + $0x368] sm:$0xff]
        %v1881 = vld [vmem:[#allocation4 + $0x370] sm:$0xff]
        %v1882 = vld [vmem:[#allocation4 + $0x378] sm:$0xff]
        %v1883 = vld [vmem:[#allocation4 + $0x380] sm:$0xff]
        %v1884 = vld [vmem:[#allocation4 + $0x388] sm:$0xff]
        %v1885 = vld [vmem:[#allocation4 + $0x390] sm:$0xff]
        %v1886 = vld [vmem:[#allocation4 + $0x398] sm:$0xff]
        %v1887 = vld [vmem:[#allocation4 + $0x3a0] sm:$0xff]
        %v1888 = vld [vmem:[#allocation4 + $0x3a8] sm:$0xff]
        %v1889 = vld [vmem:[#allocation4 + $0x3b0] sm:$0xff]
        %v1890 = vld [vmem:[#allocation4 + $0x3b8] sm:$0xff]
        %v1891 = vld [vmem:[#allocation4 + $0x3c0] sm:$0xff]
        %v1892 = vld [vmem:[#allocation4 + $0x3c8] sm:$0xff]
        %v1893 = vld [vmem:[#allocation4 + $0x3d0] sm:$0xff]
        %v1894 = vld [vmem:[#allocation4 + $0x3d8] sm:$0xff]
        %v1895 = vld [vmem:[#allocation4 + $0x3e0] sm:$0xff]
        %v1896 = vld [vmem:[#allocation4 + $0x3e8] sm:$0xff]
        %v1897 = vld [vmem:[#allocation4 + $0x3f0] sm:$0xff]
        %v1898 = vld [vmem:[#allocation4 + $0x3f8] sm:$0xff]
        %v1899 = vld [vmem:[#allocation4 + $0x400] sm:$0xff]
        %v1900 = vld [vmem:[#allocation4 + $0x408] sm:$0xff]
        %v1901 = vld [vmem:[#allocation4 + $0x410] sm:$0xff]
        %v1902 = vld [vmem:[#allocation4 + $0x418] sm:$0xff]
        %v1903 = vld [vmem:[#allocation4 + $0x420] sm:$0xff]
        %v1904 = vld [vmem:[#allocation4 + $0x428] sm:$0xff]
        %v1905 = vld [vmem:[#allocation4 + $0x430] sm:$0xff]
        %v1906 = vld [vmem:[#allocation4 + $0x438] sm:$0xff]
        %v1907 = vld [vmem:[#allocation4 + $0x440] sm:$0xff]
        %v1908 = vld [vmem:[#allocation4 + $0x448] sm:$0xff]
        %v1909 = vld [vmem:[#allocation4 + $0x450] sm:$0xff]
        %v1910 = vld [vmem:[#allocation4 + $0x458] sm:$0xff]
        %v1911 = vld [vmem:[#allocation4 + $0x460] sm:$0xff]
        %v1912 = vld [vmem:[#allocation4 + $0x468] sm:$0xff]
        %v1913 = vld [vmem:[#allocation4 + $0x470] sm:$0xff]
        %v1914 = vld [vmem:[#allocation4 + $0x478] sm:$0xff]
        %v1915 = vld [vmem:[#allocation4 + $0x480] sm:$0xff]
        %v1916 = vld [vmem:[#allocation4 + $0x488] sm:$0xff]
        %v1917 = vld [vmem:[#allocation4 + $0x490] sm:$0xff]
        %v1918 = vld [vmem:[#allocation4 + $0x498] sm:$0xff]
        %v1919 = vld [vmem:[#allocation4 + $0x4a0] sm:$0xff]
        %v1920 = vld [vmem:[#allocation4 + $0x4a8] sm:$0xff]
        %v1921 = vld [vmem:[#allocation4 + $0x4b0] sm:$0xff]
        %v1922 = vld [vmem:[#allocation4 + $0x4b8] sm:$0xff]
        %v1923 = vld [vmem:[#allocation4 + $0x4c0] sm:$0xff]
        %v1924 = vld [vmem:[#allocation4 + $0x4c8] sm:$0xff]
        %v1925 = vld [vmem:[#allocation4 + $0x4d0] sm:$0xff]
        %v1926 = vld [vmem:[#allocation4 + $0x4d8] sm:$0xff]
        %v1927 = vld [vmem:[#allocation4 + $0x4e0] sm:$0xff]
        %v1928 = vld [vmem:[#allocation4 + $0x4e8] sm:$0xff]
        %v1929 = vld [vmem:[#allocation4 + $0x4f0] sm:$0xff]
        %v1930 = vld [vmem:[#allocation4 + $0x4f8] sm:$0xff]
        %v1931 = vld [vmem:[#allocation4 + $0x500] sm:$0xff]
        %v1932 = vld [vmem:[#allocation4 + $0x508] sm:$0xff]
        %v1933 = vld [vmem:[#allocation4 + $0x510] sm:$0xff]
        %v1934 = vld [vmem:[#allocation4 + $0x518] sm:$0xff]
        %v1935 = vld [vmem:[#allocation4 + $0x520] sm:$0xff]
        %v1936 = vld [vmem:[#allocation4 + $0x528] sm:$0xff]
        %v1937 = vld [vmem:[#allocation4 + $0x530] sm:$0xff]
        %v1938 = vld [vmem:[#allocation4 + $0x538] sm:$0xff]
        %v1939 = vld [vmem:[#allocation4 + $0x540] sm:$0xff]
        %v1940 = vld [vmem:[#allocation4 + $0x548] sm:$0xff]
        %v1941 = vld [vmem:[#allocation4 + $0x550] sm:$0xff]
        %v1942 = vld [vmem:[#allocation4 + $0x558] sm:$0xff]
        %v1943 = vld [vmem:[#allocation4 + $0x560] sm:$0xff]
        %v1944 = vld [vmem:[#allocation4 + $0x568] sm:$0xff]
        %v1945 = vld [vmem:[#allocation4 + $0x570] sm:$0xff]
        %v1946 = vld [vmem:[#allocation4 + $0x578] sm:$0xff]
        %v1947 = vld [vmem:[#allocation4 + $0x580] sm:$0xff]
        %v1948 = vld [vmem:[#allocation4 + $0x588] sm:$0xff]
        %v1949 = vld [vmem:[#allocation4 + $0x590] sm:$0xff]
        %v1950 = vld [vmem:[#allocation4 + $0x598] sm:$0xff]
        %v1951 = vld [vmem:[#allocation4 + $0x5a0] sm:$0xff]
        %v1952 = vld [vmem:[#allocation4 + $0x5a8] sm:$0xff]
        %v1953 = vld [vmem:[#allocation4 + $0x5b0] sm:$0xff]
        %v1954 = vld [vmem:[#allocation4 + $0x5b8] sm:$0xff]
        %v1955 = vld [vmem:[#allocation4 + $0x5c0] sm:$0xff]
        %v1956 = vld [vmem:[#allocation4 + $0x5c8] sm:$0xff]
        %v1957 = vld [vmem:[#allocation4 + $0x5d0] sm:$0xff]
        %v1958 = vld [vmem:[#allocation4 + $0x5d8] sm:$0xff]
        %v1959 = vld [vmem:[#allocation4 + $0x5e0] sm:$0xff]
        %v1960 = vld [vmem:[#allocation4 + $0x5e8] sm:$0xff]
        %v1961 = vld [vmem:[#allocation4 + $0x5f0] sm:$0xff]
        %v1962 = vld [vmem:[#allocation4 + $0x5f8] sm:$0xff]
        %v1963 = vld [vmem:[#allocation4 + $0x600] sm:$0xff]
        %v1964 = vld [vmem:[#allocation4 + $0x608] sm:$0xff]
        %v1965 = vld [vmem:[#allocation4 + $0x610] sm:$0xff]
        %v1966 = vld [vmem:[#allocation4 + $0x618] sm:$0xff]
        %v1967 = vld [vmem:[#allocation4 + $0x620] sm:$0xff]
        %v1968 = vld [vmem:[#allocation4 + $0x628] sm:$0xff]
        %v1969 = vld [vmem:[#allocation4 + $0x630] sm:$0xff]
        %v1970 = vld [vmem:[#allocation4 + $0x638] sm:$0xff]
        %v1971 = vld [vmem:[%s10 + $0x10] sm:$0xff]
        %v1972 = vld [vmem:[%s10 + $0x18] sm:$0xff]
        %v1975 = vlaneseq
        %v1976 = vshrl.u32 %v1975, 7
        %v1977 = vsub.s32 0, %v1976
        %v1978 = vrot.slane %v1971, %v1977
        %v1979 = vlaneseq
        %v1980 = vshrl.u32 %v1979, 7
        %v1981 = vsub.s32 4, %v1980
        %v1982 = vrot.slane %v1971, %v1981
        %v1983 = vlaneseq
        %v1984 = vshrl.u32 %v1983, 7
        %v1985 = vsub.s32 0, %v1984
        %v1986 = vrot.slane %v1972, %v1985
        %v1987 = vlaneseq
        %v1988 = vshrl.u32 %v1987, 7
        %v1989 = vsub.s32 4, %v1988
        %v1990 = vrot.slane %v1972, %v1989
        %v1995 = vlaneseq
        %v1996 = vshrl.u32 %v1995, 7
        %v1997 = vsub.s32 0, %v1996
        %v1998 = vrot.slane %v1978, %v1997
        %v1999 = vlaneseq
        %v2000 = vshrl.u32 %v1999, 7
        %v2001 = vsub.s32 0, %v2000
        %v2002 = vrot.slane %v1982, %v2001
        %v2003 = vlaneseq
        %v2004 = vshrl.u32 %v2003, 7
        %v2005 = vsub.s32 0, %v2004
        %v2006 = vrot.slane %v1986, %v2005
        %v2007 = vlaneseq
        %v2008 = vshrl.u32 %v2007, 7
        %v2009 = vsub.s32 0, %v2008
        %v2010 = vrot.slane %v1990, %v2009
        %v2012 = vsel %vm988, %v1770, 0
        %2014 = vmatprep.subr.mxu0 %v1772
        %2015 = vmatpush1.msra.mxu0 %v1771
        %2016 = vmatprep.subr.mxu0 %v1776
        %2017 = vmatpush1.msra.mxu0 %v1775
        %2018 = vmatprep.subr.mxu0 %v1780
        %2019 = vmatpush1.msra.mxu0 %v1779
        %2020 = vmatprep.subr.mxu0 %v1784
        %2021 = vmatpush1.msra.mxu0 %v1783
        %2022 = vmatprep.subr.mxu0 %v1788
        %2023 = vmatpush1.msra.mxu0 %v1787
        %2024 = vmatprep.subr.mxu0 %v1792
        %2025 = vmatpush1.msra.mxu0 %v1791
        %2026 = vmatprep.subr.mxu0 %v1796
        %2027 = vmatpush1.msra.mxu0 %v1795
        %2028 = vmatprep.subr.mxu0 %v1800
        %2029 = vmatpush1.msra.mxu0 %v1799
        %2030 = vmatprep.subr.mxu0 %v1804
        %2031 = vmatpush1.msra.mxu0 %v1803
        %2032 = vmatprep.subr.mxu0 %v1808
        %2033 = vmatpush1.msra.mxu0 %v1807
        %2034 = vmatprep.subr.mxu0 %v1812
        %2035 = vmatpush1.msra.mxu0 %v1811
        %2036 = vmatprep.subr.mxu0 %v1816
        %2037 = vmatpush1.msra.mxu0 %v1815
        %2038 = vmatprep.subr.mxu0 %v1820
        %2039 = vmatpush1.msra.mxu0 %v1819
        %2040 = vmatprep.subr.mxu0 %v1824
        %2041 = vmatpush1.msra.mxu0 %v1823
        %2042 = vmatprep.subr.mxu0 %v1828
        %2043 = vmatpush1.msra.mxu0 %v1827
        %2044 = vmatprep.subr.mxu0 %v1832
        %2045 = vmatpush1.msra.mxu0 %v1831
        %2046 = vmatprep.subr.mxu0 %v1836
        %2047 = vmatpush1.msra.mxu0 %v1835
        %2048 = vmatprep.subr.mxu0 %v1840
        %2049 = vmatpush1.msra.mxu0 %v1839
        %2050 = vmatprep.subr.mxu0 %v1844
        %2051 = vmatpush1.msra.mxu0 %v1843
        %2052 = vmatprep.subr.mxu0 %v1848
        %2053 = vmatpush1.msra.mxu0 %v1847
        %2054 = vmatprep.subr.mxu0 %v1852
        %2055 = vmatpush1.msra.mxu0 %v1851
        %2056 = vmatprep.subr.mxu0 %v1856
        %2057 = vmatpush1.msra.mxu0 %v1855
        %2058 = vmatprep.subr.mxu0 %v1860
        %2059 = vmatpush1.msra.mxu0 %v1859
        %2060 = vmatprep.subr.mxu0 %v1864
        %2061 = vmatpush1.msra.mxu0 %v1863
        %2062 = vmatprep.subr.mxu0 %v1868
        %2063 = vmatpush1.msra.mxu0 %v1867
        %2064 = vmatprep.subr.mxu0 %v1872
        %2065 = vmatpush1.msra.mxu0 %v1871
        %2066 = vmatprep.subr.mxu0 %v1876
        %2067 = vmatpush1.msra.mxu0 %v1875
        %2068 = vmatprep.subr.mxu0 %v1880
        %2069 = vmatpush1.msra.mxu0 %v1879
        %2070 = vmatprep.subr.mxu0 %v1884
        %2071 = vmatpush1.msra.mxu0 %v1883
        %2072 = vmatprep.subr.mxu0 %v1888
        %2073 = vmatpush1.msra.mxu0 %v1887
        %2074 = vmatprep.subr.mxu0 %v1892
        %2075 = vmatpush1.msra.mxu0 %v1891
        %2076 = vmatprep.subr.mxu0 %v1896
        %2077 = vmatpush1.msra.mxu0 %v1895
        %2078 = vmatprep.mubr.f32.mxu0 %v1768
        %2079 = vmatmul.mubr.f32.gmra.mrb[0].mxu0 %v1767
        %v2080 = vpop.f32.mrb[0].mxu0
        %v2081 = vadd.f32 %v1998, %v2080
        %v2082 = vpop.f32.mrb[0].mxu0
        %v2083 = vadd.f32 %v2002, %v2082
        %2084 = vdwg.mxu0
        %2085 = vmatprep.subr.mxu0 %v1900
        %2086 = vmatpush1.msra.mxu0 %v1899
        %2087 = vmatprep.subr.mxu0 %v1904
        %2088 = vmatpush1.msra.mxu0 %v1903
        %2089 = vmatprep.subr.mxu0 %v1908
        %2090 = vmatpush1.msra.mxu0 %v1907
        %2091 = vmatprep.subr.mxu0 %v1912
        %2092 = vmatpush1.msra.mxu0 %v1911
        %2093 = vmatprep.subr.mxu0 %v1916
        %2094 = vmatpush1.msra.mxu0 %v1915
        %2095 = vmatprep.subr.mxu0 %v1920
        %2096 = vmatpush1.msra.mxu0 %v1919
        %2097 = vmatprep.subr.mxu0 %v1924
        %2098 = vmatpush1.msra.mxu0 %v1923
        %2099 = vmatprep.subr.mxu0 %v1928
        %2100 = vmatpush1.msra.mxu0 %v1927
        %2101 = vmatprep.subr.mxu0 %v1932
        %2102 = vmatpush1.msra.mxu0 %v1931
        %2103 = vmatprep.subr.mxu0 %v1936
        %2104 = vmatpush1.msra.mxu0 %v1935
        %2105 = vmatprep.subr.mxu0 %v1940
        %2106 = vmatpush1.msra.mxu0 %v1939
        %2107 = vmatprep.subr.mxu0 %v1944
        %2108 = vmatpush1.msra.mxu0 %v1943
        %2109 = vmatprep.subr.mxu0 %v1948
        %2110 = vmatpush1.msra.mxu0 %v1947
        %2111 = vmatprep.subr.mxu0 %v1952
        %2112 = vmatpush1.msra.mxu0 %v1951
        %2113 = vmatprep.subr.mxu0 %v1956
        %2114 = vmatpush1.msra.mxu0 %v1955
        %2115 = vmatprep.subr.mxu0 %v1960
        %2116 = vmatpush1.msra.mxu0 %v1959
        %2117 = vmatprep.subr.mxu0 %v1964
        %2118 = vmatpush1.msra.mxu0 %v1963
        %2119 = vmatprep.subr.mxu0 %v1968
        %2120 = vmatpush1.msra.mxu0 %v1967
        %2121 = vmatprep.subr.mxu0 0.0
        %2122 = vmatpush1.msra.mxu0 0.0
        %2123 = vmatprep.subr.mxu0 0.0
        %2124 = vmatpush1.msra.mxu0 0.0
        %2125 = vmatprep.subr.mxu0 0.0
        %2126 = vmatpush1.msra.mxu0 0.0
        %2127 = vmatprep.subr.mxu0 0.0
        %2128 = vmatpush1.msra.mxu0 0.0
        %2129 = vmatprep.subr.mxu0 0.0
        %2130 = vmatpush1.msra.mxu0 0.0
        %2131 = vmatprep.subr.mxu0 0.0
        %2132 = vmatpush1.msra.mxu0 0.0
        %2133 = vmatprep.subr.mxu0 0.0
        %2134 = vmatpush1.msra.mxu0 0.0
        %2135 = vmatprep.subr.mxu0 0.0
        %2136 = vmatpush1.msra.mxu0 0.0
        %2137 = vmatprep.subr.mxu0 0.0
        %2138 = vmatpush1.msra.mxu0 0.0
        %2139 = vmatprep.subr.mxu0 0.0
        %2140 = vmatpush1.msra.mxu0 0.0
        %2141 = vmatprep.subr.mxu0 0.0
        %2142 = vmatpush1.msra.mxu0 0.0
        %2143 = vmatprep.subr.mxu0 0.0
        %2144 = vmatpush1.msra.mxu0 0.0
        %2145 = vmatprep.subr.mxu0 0.0
        %2146 = vmatpush1.msra.mxu0 0.0
        %2147 = vmatprep.subr.mxu0 0.0
        %2148 = vmatpush1.msra.mxu0 0.0
        %2149 = vmatprep.mubr.f32.mxu0 %v2012
        %2150 = vmatmul.mubr.f32.gmra.mrb[0].mxu0 %v1769
        %v2151 = vpop.f32.mrb[0].mxu0
        %v2152 = vadd.f32 %v2081, %v2151
        %v2153 = vpop.f32.mrb[0].mxu0
        %v2154 = vadd.f32 %v2083, %v2153
        %2155 = vdwg.mxu0
        %2156 = vmatprep.subr.mxu0 %v1774
        %2157 = vmatpush1.msra.mxu0 %v1773
        %2158 = vmatprep.subr.mxu0 %v1778
        %2159 = vmatpush1.msra.mxu0 %v1777
        %2160 = vmatprep.subr.mxu0 %v1782
        %2161 = vmatpush1.msra.mxu0 %v1781
        %2162 = vmatprep.subr.mxu0 %v1786
        %2163 = vmatpush1.msra.mxu0 %v1785
        %2164 = vmatprep.subr.mxu0 %v1790
        %2165 = vmatpush1.msra.mxu0 %v1789
        %2166 = vmatprep.subr.mxu0 %v1794
        %2167 = vmatpush1.msra.mxu0 %v1793
        %2168 = vmatprep.subr.mxu0 %v1798
        %2169 = vmatpush1.msra.mxu0 %v1797
        %2170 = vmatprep.subr.mxu0 %v1802
        %2171 = vmatpush1.msra.mxu0 %v1801
        %2172 = vmatprep.subr.mxu0 %v1806
        %2173 = vmatpush1.msra.mxu0 %v1805
        %2174 = vmatprep.subr.mxu0 %v1810
        %2175 = vmatpush1.msra.mxu0 %v1809
        %2176 = vmatprep.subr.mxu0 %v1814
        %2177 = vmatpush1.msra.mxu0 %v1813
        %2178 = vmatprep.subr.mxu0 %v1818
        %2179 = vmatpush1.msra.mxu0 %v1817
        %2180 = vmatprep.subr.mxu0 %v1822
        %2181 = vmatpush1.msra.mxu0 %v1821
        %2182 = vmatprep.subr.mxu0 %v1826
        %2183 = vmatpush1.msra.mxu0 %v1825
        %2184 = vmatprep.subr.mxu0 %v1830
        %2185 = vmatpush1.msra.mxu0 %v1829
        %2186 = vmatprep.subr.mxu0 %v1834
        %2187 = vmatpush1.msra.mxu0 %v1833
        %2188 = vmatprep.subr.mxu0 %v1838
        %2189 = vmatpush1.msra.mxu0 %v1837
        %2190 = vmatprep.subr.mxu0 %v1842
        %2191 = vmatpush1.msra.mxu0 %v1841
        %2192 = vmatprep.subr.mxu0 %v1846
        %2193 = vmatpush1.msra.mxu0 %v1845
        %2194 = vmatprep.subr.mxu0 %v1850
        %2195 = vmatpush1.msra.mxu0 %v1849
        %2196 = vmatprep.subr.mxu0 %v1854
        %2197 = vmatpush1.msra.mxu0 %v1853
        %2198 = vmatprep.subr.mxu0 %v1858
        %2199 = vmatpush1.msra.mxu0 %v1857
        %2200 = vmatprep.subr.mxu0 %v1862
        %2201 = vmatpush1.msra.mxu0 %v1861
        %2202 = vmatprep.subr.mxu0 %v1866
        %2203 = vmatpush1.msra.mxu0 %v1865
        %2204 = vmatprep.subr.mxu0 %v1870
        %2205 = vmatpush1.msra.mxu0 %v1869
        %2206 = vmatprep.subr.mxu0 %v1874
        %2207 = vmatpush1.msra.mxu0 %v1873
        %2208 = vmatprep.subr.mxu0 %v1878
        %2209 = vmatpush1.msra.mxu0 %v1877
        %2210 = vmatprep.subr.mxu0 %v1882
        %2211 = vmatpush1.msra.mxu0 %v1881
        %2212 = vmatprep.subr.mxu0 %v1886
        %2213 = vmatpush1.msra.mxu0 %v1885
        %2214 = vmatprep.subr.mxu0 %v1890
        %2215 = vmatpush1.msra.mxu0 %v1889
        %2216 = vmatprep.subr.mxu0 %v1894
        %2217 = vmatpush1.msra.mxu0 %v1893
        %2218 = vmatprep.subr.mxu0 %v1898
        %2219 = vmatpush1.msra.mxu0 %v1897
        %2220 = vmatprep.mubr.f32.mxu0 %v1768
        %2221 = vmatmul.mubr.f32.gmra.mrb[0].mxu0 %v1767
        %v2222 = vpop.f32.mrb[0].mxu0
        %v2223 = vadd.f32 %v2006, %v2222
        %v2224 = vpop.f32.mrb[0].mxu0
        %v2225 = vadd.f32 %v2010, %v2224
        %2226 = vdwg.mxu0
        %2227 = vmatprep.subr.mxu0 %v1902
        %2228 = vmatpush1.msra.mxu0 %v1901
        %2229 = vmatprep.subr.mxu0 %v1906
        %2230 = vmatpush1.msra.mxu0 %v1905
        %2231 = vmatprep.subr.mxu0 %v1910
        %2232 = vmatpush1.msra.mxu0 %v1909
        %2233 = vmatprep.subr.mxu0 %v1914
        %2234 = vmatpush1.msra.mxu0 %v1913
        %2235 = vmatprep.subr.mxu0 %v1918
        %2236 = vmatpush1.msra.mxu0 %v1917
        %2237 = vmatprep.subr.mxu0 %v1922
        %2238 = vmatpush1.msra.mxu0 %v1921
        %2239 = vmatprep.subr.mxu0 %v1926
        %2240 = vmatpush1.msra.mxu0 %v1925
        %2241 = vmatprep.subr.mxu0 %v1930
        %2242 = vmatpush1.msra.mxu0 %v1929
        %2243 = vmatprep.subr.mxu0 %v1934
        %2244 = vmatpush1.msra.mxu0 %v1933
        %2245 = vmatprep.subr.mxu0 %v1938
        %2246 = vmatpush1.msra.mxu0 %v1937
        %2247 = vmatprep.subr.mxu0 %v1942
        %2248 = vmatpush1.msra.mxu0 %v1941
        %2249 = vmatprep.subr.mxu0 %v1946
        %2250 = vmatpush1.msra.mxu0 %v1945
        %2251 = vmatprep.subr.mxu0 %v1950
        %2252 = vmatpush1.msra.mxu0 %v1949
        %2253 = vmatprep.subr.mxu0 %v1954
        %2254 = vmatpush1.msra.mxu0 %v1953
        %2255 = vmatprep.subr.mxu0 %v1958
        %2256 = vmatpush1.msra.mxu0 %v1957
        %2257 = vmatprep.subr.mxu0 %v1962
        %2258 = vmatpush1.msra.mxu0 %v1961
        %2259 = vmatprep.subr.mxu0 %v1966
        %2260 = vmatpush1.msra.mxu0 %v1965
        %2261 = vmatprep.subr.mxu0 %v1970
        %2262 = vmatpush1.msra.mxu0 %v1969
        %2263 = vmatprep.subr.mxu0 0.0
        %2264 = vmatpush1.msra.mxu0 0.0
        %2265 = vmatprep.subr.mxu0 0.0
        %2266 = vmatpush1.msra.mxu0 0.0
        %2267 = vmatprep.subr.mxu0 0.0
        %2268 = vmatpush1.msra.mxu0 0.0
        %2269 = vmatprep.subr.mxu0 0.0
        %2270 = vmatpush1.msra.mxu0 0.0
        %2271 = vmatprep.subr.mxu0 0.0
        %2272 = vmatpush1.msra.mxu0 0.0
        %2273 = vmatprep.subr.mxu0 0.0
        %2274 = vmatpush1.msra.mxu0 0.0
        %2275 = vmatprep.subr.mxu0 0.0
        %2276 = vmatpush1.msra.mxu0 0.0
        %2277 = vmatprep.subr.mxu0 0.0
        %2278 = vmatpush1.msra.mxu0 0.0
        %2279 = vmatprep.subr.mxu0 0.0
        %2280 = vmatpush1.msra.mxu0 0.0
        %2281 = vmatprep.subr.mxu0 0.0
        %2282 = vmatpush1.msra.mxu0 0.0
        %2283 = vmatprep.subr.mxu0 0.0
        %2284 = vmatpush1.msra.mxu0 0.0
        %2285 = vmatprep.subr.mxu0 0.0
        %2286 = vmatpush1.msra.mxu0 0.0
        %2287 = vmatprep.subr.mxu0 0.0
        %2288 = vmatpush1.msra.mxu0 0.0
        %2289 = vmatprep.subr.mxu0 0.0
        %2290 = vmatpush1.msra.mxu0 0.0
        %2291 = vmatprep.mubr.f32.mxu0 %v2012
        %2292 = vmatmul.mubr.f32.gmra.mrb[0].mxu0 %v1769
        %v2293 = vpop.f32.mrb[0].mxu0
        %v2294 = vadd.f32 %v2223, %v2293
        %v2295 = vpop.f32.mrb[0].mxu0
        %v2296 = vadd.f32 %v2225, %v2295
        %2297 = vdwg.mxu0
        %v2298 = vsel %vm753, %v2152, 0.0
        %v2299 = vrot.slane %v2298, 4
        %v2300 = vadd.f32 %v2298, %v2299
        %v2301 = vrot.slane %v2300, 2
        %v2302 = vadd.f32 %v2300, %v2301
        %v2303 = vrot.slane %v2302, 1
        %v2304 = vadd.f32 %v2302, %v2303
        %v2305 = vsel %vm753, %v2154, 0.0
        %v2306 = vrot.slane %v2305, 4
        %v2307 = vadd.f32 %v2305, %v2306
        %v2308 = vrot.slane %v2307, 2
        %v2309 = vadd.f32 %v2307, %v2308
        %v2310 = vrot.slane %v2309, 1
        %v2311 = vadd.f32 %v2309, %v2310
        %v2312 = vsel %vm753, %v2294, 0.0
        %v2313 = vrot.slane %v2312, 4
        %v2314 = vadd.f32 %v2312, %v2313
        %v2315 = vrot.slane %v2314, 2
        %v2316 = vadd.f32 %v2314, %v2315
        %v2317 = vrot.slane %v2316, 1
        %v2318 = vadd.f32 %v2316, %v2317
        %v2319 = vsel %vm753, %v2296, 0.0
        %v2320 = vrot.slane %v2319, 4
        %v2321 = vadd.f32 %v2319, %v2320
        %v2322 = vrot.slane %v2321, 2
        %v2323 = vadd.f32 %v2321, %v2322
        %v2324 = vrot.slane %v2323, 1
        %v2325 = vadd.f32 %v2323, %v2324
        %v2326 = vmul.f32 %v2304, %v783
        %v2327 = vmul.f32 %v2311, %v783
        %v2328 = vmul.f32 %v2318, %v783
        %v2329 = vmul.f32 %v2325, %v783
        %v2330 = vld [vmem:[%s5] sm:$0xff]
        %v2331 = vld [vmem:[%s5 + $0x8] sm:$0xff]
        %v2332 = vld [vmem:[%s5 + $0x10] sm:$0xff]
        %v2333 = vld [vmem:[%s5 + $0x18] sm:$0xff]
        %v2334 = vld [vmem:[%s5 + $0x20] sm:$0xff]
        %v2335 = vld [vmem:[%s5 + $0x28] sm:$0xff]
        %v2336 = vld [vmem:[%s5 + $0x30] sm:$0xff]
        %v2337 = vld [vmem:[%s5 + $0x38] sm:$0xff]
        %v2338 = vld [vmem:[%s5 + $0x40] sm:$0xff]
        %v2339 = vld [vmem:[%s5 + $0x48] sm:$0xff]
        %v2340 = vld [vmem:[%s5 + $0x50] sm:$0xff]
        %v2341 = vld [vmem:[%s5 + $0x58] sm:$0xff]
        %v2342 = vld [vmem:[%s5 + $0x60] sm:$0xff]
        %v2343 = vld [vmem:[%s5 + $0x68] sm:$0xff]
        %v2344 = vld [vmem:[%s5 + $0x70] sm:$0xff]
        %v2345 = vld [vmem:[%s5 + $0x78] sm:$0xff]
        %v2346 = vld [vmem:[%s5 + $0x80] sm:$0xff]
        %v2347 = vld [vmem:[%s5 + $0x88] sm:$0xff]
        %v2348 = vld [vmem:[%s5 + $0x90] sm:$0xff]
        %v2349 = vld [vmem:[%s5 + $0x98] sm:$0xff]
        %v2350 = vld [vmem:[%s5 + $0xa0] sm:$0xff]
        %v2351 = vld [vmem:[%s5 + $0xa8] sm:$0xff]
        %v2352 = vld [vmem:[%s5 + $0xb0] sm:$0xff]
        %v2353 = vld [vmem:[%s5 + $0xb8] sm:$0xff]
        %v2354 = vld [vmem:[%s5 + $0xc0] sm:$0xff]
        %v2355 = vld [vmem:[%s5 + $0xc8] sm:$0xff]
        %v2356 = vld [vmem:[%s5 + $0xd0] sm:$0xff]
        %v2357 = vld [vmem:[%s5 + $0xd8] sm:$0xff]
        %v2358 = vld [vmem:[%s5 + $0xe0] sm:$0xff]
        %v2359 = vld [vmem:[%s5 + $0xe8] sm:$0xff]
        %v2360 = vld [vmem:[%s5 + $0xf0] sm:$0xff]
        %v2361 = vld [vmem:[%s5 + $0xf8] sm:$0xff]
        %v2362 = vld [vmem:[%s5 + $0x100] sm:$0xff]
        %v2363 = vld [vmem:[%s5 + $0x108] sm:$0xff]
        %v2364 = vld [vmem:[%s5 + $0x110] sm:$0xff]
        %v2365 = vld [vmem:[%s5 + $0x118] sm:$0xff]
        %v2366 = vld [vmem:[%s5 + $0x120] sm:$0xff]
        %v2367 = vld [vmem:[%s5 + $0x128] sm:$0xff]
        %v2368 = vld [vmem:[%s5 + $0x130] sm:$0xff]
        %v2369 = vld [vmem:[%s5 + $0x138] sm:$0xff]
        %v2370 = vld [vmem:[%s5 + $0x140] sm:$0xff]
        %v2371 = vld [vmem:[%s5 + $0x148] sm:$0xff]
        %v2372 = vld [vmem:[%s5 + $0x150] sm:$0xff]
        %v2373 = vld [vmem:[%s5 + $0x158] sm:$0xff]
        %v2374 = vld [vmem:[%s5 + $0x160] sm:$0xff]
        %v2375 = vld [vmem:[%s5 + $0x168] sm:$0xff]
        %v2376 = vld [vmem:[%s5 + $0x170] sm:$0xff]
        %v2377 = vld [vmem:[%s5 + $0x178] sm:$0xff]
        %v2378 = vld [vmem:[%s5 + $0x180] sm:$0xff]
        %v2379 = vld [vmem:[%s5 + $0x188] sm:$0xff]
        %v2380 = vld [vmem:[%s5 + $0x190] sm:$0xff]
        %v2381 = vld [vmem:[%s5 + $0x198] sm:$0xff]
        %v2382 = vld [vmem:[%s5 + $0x1a0] sm:$0xff]
        %v2383 = vld [vmem:[%s5 + $0x1a8] sm:$0xff]
        %v2384 = vld [vmem:[%s5 + $0x1b0] sm:$0xff]
        %v2385 = vld [vmem:[%s5 + $0x1b8] sm:$0xff]
        %v2386 = vld [vmem:[%s5 + $0x1c0] sm:$0xff]
        %v2387 = vld [vmem:[%s5 + $0x1c8] sm:$0xff]
        %v2388 = vld [vmem:[%s5 + $0x1d0] sm:$0xff]
        %v2389 = vld [vmem:[%s5 + $0x1d8] sm:$0xff]
        %v2390 = vld [vmem:[%s5 + $0x1e0] sm:$0xff]
        %v2391 = vld [vmem:[%s5 + $0x1e8] sm:$0xff]
        %v2392 = vld [vmem:[%s5 + $0x1f0] sm:$0xff]
        %v2393 = vld [vmem:[%s5 + $0x1f8] sm:$0xff]
        %v2394 = vld [vmem:[%s5 + $0x200] sm:$0xff]
        %v2395 = vld [vmem:[%s5 + $0x208] sm:$0xff]
        %v2396 = vld [vmem:[%s5 + $0x210] sm:$0xff]
        %v2397 = vld [vmem:[%s5 + $0x218] sm:$0xff]
        %v2398 = vld [vmem:[%s5 + $0x220] sm:$0xff]
        %v2399 = vld [vmem:[%s5 + $0x228] sm:$0xff]
        %v2400 = vld [vmem:[%s5 + $0x230] sm:$0xff]
        %v2401 = vld [vmem:[%s5 + $0x238] sm:$0xff]
        %v2402 = vld [vmem:[%s5 + $0x240] sm:$0xff]
        %v2403 = vld [vmem:[%s5 + $0x248] sm:$0xff]
        %v2404 = vld [vmem:[%s5 + $0x250] sm:$0xff]
        %v2405 = vld [vmem:[%s5 + $0x258] sm:$0xff]
        %v2406 = vld [vmem:[%s5 + $0x260] sm:$0xff]
        %v2407 = vld [vmem:[%s5 + $0x268] sm:$0xff]
        %v2408 = vld [vmem:[%s5 + $0x270] sm:$0xff]
        %v2409 = vld [vmem:[%s5 + $0x278] sm:$0xff]
        %v2410 = vld [vmem:[%s5 + $0x280] sm:$0xff]
        %v2411 = vld [vmem:[%s5 + $0x288] sm:$0xff]
        %v2412 = vld [vmem:[%s5 + $0x290] sm:$0xff]
        %v2413 = vld [vmem:[%s5 + $0x298] sm:$0xff]
        %v2414 = vld [vmem:[%s5 + $0x2a0] sm:$0xff]
        %v2415 = vld [vmem:[%s5 + $0x2a8] sm:$0xff]
        %v2416 = vld [vmem:[%s5 + $0x2b0] sm:$0xff]
        %v2417 = vld [vmem:[%s5 + $0x2b8] sm:$0xff]
        %v2418 = vld [vmem:[%s5 + $0x2c0] sm:$0xff]
        %v2419 = vld [vmem:[%s5 + $0x2c8] sm:$0xff]
        %v2420 = vld [vmem:[%s5 + $0x2d0] sm:$0xff]
        %v2421 = vld [vmem:[%s5 + $0x2d8] sm:$0xff]
        %v2422 = vld [vmem:[%s5 + $0x2e0] sm:$0xff]
        %v2423 = vld [vmem:[%s5 + $0x2e8] sm:$0xff]
        %v2424 = vld [vmem:[%s5 + $0x2f0] sm:$0xff]
        %v2425 = vld [vmem:[%s5 + $0x2f8] sm:$0xff]
        %v2426 = vld [vmem:[%s5 + $0x300] sm:$0xff]
        %v2427 = vld [vmem:[%s5 + $0x308] sm:$0xff]
        %v2428 = vld [vmem:[%s5 + $0x310] sm:$0xff]
        %v2429 = vld [vmem:[%s5 + $0x318] sm:$0xff]
        %v2430 = vld [vmem:[%s5 + $0x320] sm:$0xff]
        %v2431 = vld [vmem:[%s5 + $0x328] sm:$0xff]
        %v2432 = vld [vmem:[%s5 + $0x330] sm:$0xff]
        %v2433 = vld [vmem:[%s5 + $0x338] sm:$0xff]
        %v2434 = vld [vmem:[%s5 + $0x340] sm:$0xff]
        %v2435 = vld [vmem:[%s5 + $0x348] sm:$0xff]
        %v2436 = vld [vmem:[%s5 + $0x350] sm:$0xff]
        %v2437 = vld [vmem:[%s5 + $0x358] sm:$0xff]
        %v2438 = vld [vmem:[%s5 + $0x360] sm:$0xff]
        %v2439 = vld [vmem:[%s5 + $0x368] sm:$0xff]
        %v2440 = vld [vmem:[%s5 + $0x370] sm:$0xff]
        %v2441 = vld [vmem:[%s5 + $0x378] sm:$0xff]
        %v2442 = vld [vmem:[%s5 + $0x380] sm:$0xff]
        %v2443 = vld [vmem:[%s5 + $0x388] sm:$0xff]
        %v2444 = vld [vmem:[%s5 + $0x390] sm:$0xff]
        %v2445 = vld [vmem:[%s5 + $0x398] sm:$0xff]
        %v2446 = vld [vmem:[%s5 + $0x3a0] sm:$0xff]
        %v2447 = vld [vmem:[%s5 + $0x3a8] sm:$0xff]
        %v2448 = vld [vmem:[%s5 + $0x3b0] sm:$0xff]
        %v2449 = vld [vmem:[%s5 + $0x3b8] sm:$0xff]
        %v2450 = vld [vmem:[%s5 + $0x3c0] sm:$0xff]
        %v2451 = vld [vmem:[%s5 + $0x3c8] sm:$0xff]
        %v2452 = vld [vmem:[%s5 + $0x3d0] sm:$0xff]
        %v2453 = vld [vmem:[%s5 + $0x3d8] sm:$0xff]
        %v2454 = vld [vmem:[%s5 + $0x3e0] sm:$0xff]
        %v2455 = vld [vmem:[%s5 + $0x3e8] sm:$0xff]
        %v2456 = vld [vmem:[%s5 + $0x3f0] sm:$0xff]
        %v2457 = vld [vmem:[%s5 + $0x3f8] sm:$0xff]
        %v2458 = vld [vmem:[%s5 + $0x400] sm:$0xff]
        %v2459 = vld [vmem:[%s5 + $0x408] sm:$0xff]
        %v2460 = vld [vmem:[%s5 + $0x410] sm:$0xff]
        %v2461 = vld [vmem:[%s5 + $0x418] sm:$0xff]
        %v2462 = vld [vmem:[%s5 + $0x420] sm:$0xff]
        %v2463 = vld [vmem:[%s5 + $0x428] sm:$0xff]
        %v2464 = vld [vmem:[%s5 + $0x430] sm:$0xff]
        %v2465 = vld [vmem:[%s5 + $0x438] sm:$0xff]
        %v2466 = vld [vmem:[%s5 + $0x440] sm:$0xff]
        %v2467 = vld [vmem:[%s5 + $0x448] sm:$0xff]
        %v2468 = vld [vmem:[%s5 + $0x450] sm:$0xff]
        %v2469 = vld [vmem:[%s5 + $0x458] sm:$0xff]
        %v2470 = vld [vmem:[%s5 + $0x460] sm:$0xff]
        %v2471 = vld [vmem:[%s5 + $0x468] sm:$0xff]
        %v2472 = vld [vmem:[%s5 + $0x470] sm:$0xff]
        %v2473 = vld [vmem:[%s5 + $0x478] sm:$0xff]
        %v2474 = vld [vmem:[%s5 + $0x480] sm:$0xff]
        %v2475 = vld [vmem:[%s5 + $0x488] sm:$0xff]
        %v2476 = vld [vmem:[%s5 + $0x490] sm:$0xff]
        %v2477 = vld [vmem:[%s5 + $0x498] sm:$0xff]
        %v2478 = vld [vmem:[%s5 + $0x4a0] sm:$0xff]
        %v2479 = vld [vmem:[%s5 + $0x4a8] sm:$0xff]
        %v2480 = vld [vmem:[%s5 + $0x4b0] sm:$0xff]
        %v2481 = vld [vmem:[%s5 + $0x4b8] sm:$0xff]
        %v2482 = vld [vmem:[%s5 + $0x4c0] sm:$0xff]
        %v2483 = vld [vmem:[%s5 + $0x4c8] sm:$0xff]
        %v2484 = vld [vmem:[%s5 + $0x4d0] sm:$0xff]
        %v2485 = vld [vmem:[%s5 + $0x4d8] sm:$0xff]
        %v2486 = vld [vmem:[%s5 + $0x4e0] sm:$0xff]
        %v2487 = vld [vmem:[%s5 + $0x4e8] sm:$0xff]
        %v2488 = vld [vmem:[%s5 + $0x4f0] sm:$0xff]
        %v2489 = vld [vmem:[%s5 + $0x4f8] sm:$0xff]
        %v2490 = vld [vmem:[%s5 + $0x500] sm:$0xff]
        %v2491 = vld [vmem:[%s5 + $0x508] sm:$0xff]
        %v2492 = vld [vmem:[%s5 + $0x510] sm:$0xff]
        %v2493 = vld [vmem:[%s5 + $0x518] sm:$0xff]
        %v2494 = vld [vmem:[%s5 + $0x520] sm:$0xff]
        %v2495 = vld [vmem:[%s5 + $0x528] sm:$0xff]
        %v2496 = vld [vmem:[%s5 + $0x530] sm:$0xff]
        %v2497 = vld [vmem:[%s5 + $0x538] sm:$0xff]
        %v2498 = vld [vmem:[%s5 + $0x540] sm:$0xff]
        %v2499 = vld [vmem:[%s5 + $0x548] sm:$0xff]
        %v2500 = vld [vmem:[%s5 + $0x550] sm:$0xff]
        %v2501 = vld [vmem:[%s5 + $0x558] sm:$0xff]
        %v2502 = vld [vmem:[%s5 + $0x560] sm:$0xff]
        %v2503 = vld [vmem:[%s5 + $0x568] sm:$0xff]
        %v2504 = vld [vmem:[%s5 + $0x570] sm:$0xff]
        %v2505 = vld [vmem:[%s5 + $0x578] sm:$0xff]
        %v2506 = vld [vmem:[%s5 + $0x580] sm:$0xff]
        %v2507 = vld [vmem:[%s5 + $0x588] sm:$0xff]
        %v2508 = vld [vmem:[%s5 + $0x590] sm:$0xff]
        %v2509 = vld [vmem:[%s5 + $0x598] sm:$0xff]
        %v2510 = vld [vmem:[%s5 + $0x5a0] sm:$0xff]
        %v2511 = vld [vmem:[%s5 + $0x5a8] sm:$0xff]
        %v2512 = vld [vmem:[%s5 + $0x5b0] sm:$0xff]
        %v2513 = vld [vmem:[%s5 + $0x5b8] sm:$0xff]
        %v2514 = vld [vmem:[%s5 + $0x5c0] sm:$0xff]
        %v2515 = vld [vmem:[%s5 + $0x5c8] sm:$0xff]
        %v2516 = vld [vmem:[%s5 + $0x5d0] sm:$0xff]
        %v2517 = vld [vmem:[%s5 + $0x5d8] sm:$0xff]
        %v2518 = vld [vmem:[%s5 + $0x5e0] sm:$0xff]
        %v2519 = vld [vmem:[%s5 + $0x5e8] sm:$0xff]
        %v2520 = vld [vmem:[%s5 + $0x5f0] sm:$0xff]
        %v2521 = vld [vmem:[%s5 + $0x5f8] sm:$0xff]
        %v2522 = vld [vmem:[%s5 + $0x600] sm:$0xff]
        %v2523 = vld [vmem:[%s5 + $0x608] sm:$0xff]
        %v2524 = vld [vmem:[%s5 + $0x610] sm:$0xff]
        %v2525 = vld [vmem:[%s5 + $0x618] sm:$0xff]
        %v2526 = vld [vmem:[%s5 + $0x620] sm:$0xff]
        %v2527 = vld [vmem:[%s5 + $0x628] sm:$0xff]
        %v2528 = vld [vmem:[%s5 + $0x630] sm:$0xff]
        %v2529 = vld [vmem:[%s5 + $0x638] sm:$0xff]
        %v2530 = vld [vmem:[%s5 + $0x640] sm:$0xff]
        %v2531 = vld [vmem:[%s5 + $0x648] sm:$0xff]
        %v2532 = vld [vmem:[%s5 + $0x650] sm:$0xff]
        %v2533 = vld [vmem:[%s5 + $0x658] sm:$0xff]
        %v2534 = vld [vmem:[%s5 + $0x660] sm:$0xff]
        %v2535 = vld [vmem:[%s5 + $0x668] sm:$0xff]
        %v2536 = vld [vmem:[%s5 + $0x670] sm:$0xff]
        %v2537 = vld [vmem:[%s5 + $0x678] sm:$0xff]
        %v2538 = vld [vmem:[%s5 + $0x680] sm:$0xff]
        %v2539 = vld [vmem:[%s5 + $0x688] sm:$0xff]
        %v2540 = vld [vmem:[%s5 + $0x690] sm:$0xff]
        %v2541 = vld [vmem:[%s5 + $0x698] sm:$0xff]
        %v2542 = vld [vmem:[%s5 + $0x6a0] sm:$0xff]
        %v2543 = vld [vmem:[%s5 + $0x6a8] sm:$0xff]
        %v2544 = vld [vmem:[%s5 + $0x6b0] sm:$0xff]
        %v2545 = vld [vmem:[%s5 + $0x6b8] sm:$0xff]
        %v2546 = vld [vmem:[%s5 + $0x6c0] sm:$0xff]
        %v2547 = vld [vmem:[%s5 + $0x6c8] sm:$0xff]
        %v2548 = vld [vmem:[%s5 + $0x6d0] sm:$0xff]
        %v2549 = vld [vmem:[%s5 + $0x6d8] sm:$0xff]
        %v2550 = vld [vmem:[%s5 + $0x6e0] sm:$0xff]
        %v2551 = vld [vmem:[%s5 + $0x6e8] sm:$0xff]
        %v2552 = vld [vmem:[%s5 + $0x6f0] sm:$0xff]
        %v2553 = vld [vmem:[%s5 + $0x6f8] sm:$0xff]
        %v2554 = vld [vmem:[%s5 + $0x700] sm:$0xff]
        %v2555 = vld [vmem:[%s5 + $0x708] sm:$0xff]
        %v2556 = vld [vmem:[%s5 + $0x710] sm:$0xff]
        %v2557 = vld [vmem:[%s5 + $0x718] sm:$0xff]
        %v2558 = vld [vmem:[%s5 + $0x720] sm:$0xff]
        %v2559 = vld [vmem:[%s5 + $0x728] sm:$0xff]
        %v2560 = vld [vmem:[%s5 + $0x730] sm:$0xff]
        %v2561 = vld [vmem:[%s5 + $0x738] sm:$0xff]
        %v2562 = vld [vmem:[%s5 + $0x740] sm:$0xff]
        %v2563 = vld [vmem:[%s5 + $0x748] sm:$0xff]
        %v2564 = vld [vmem:[%s5 + $0x750] sm:$0xff]
        %v2565 = vld [vmem:[%s5 + $0x758] sm:$0xff]
        %v2566 = vld [vmem:[%s5 + $0x760] sm:$0xff]
        %v2567 = vld [vmem:[%s5 + $0x768] sm:$0xff]
        %v2568 = vld [vmem:[%s5 + $0x770] sm:$0xff]
        %v2569 = vld [vmem:[%s5 + $0x778] sm:$0xff]
        %v2570 = vld [vmem:[%s5 + $0x780] sm:$0xff]
        %v2571 = vld [vmem:[%s5 + $0x788] sm:$0xff]
        %v2572 = vld [vmem:[%s5 + $0x790] sm:$0xff]
        %v2573 = vld [vmem:[%s5 + $0x798] sm:$0xff]
        %v2574 = vld [vmem:[%s5 + $0x7a0] sm:$0xff]
        %v2575 = vld [vmem:[%s5 + $0x7a8] sm:$0xff]
        %v2576 = vld [vmem:[%s5 + $0x7b0] sm:$0xff]
        %v2577 = vld [vmem:[%s5 + $0x7b8] sm:$0xff]
        %v2578 = vld [vmem:[%s5 + $0x7c0] sm:$0xff]
        %v2579 = vld [vmem:[%s5 + $0x7c8] sm:$0xff]
        %v2580 = vld [vmem:[%s5 + $0x7d0] sm:$0xff]
        %v2581 = vld [vmem:[%s5 + $0x7d8] sm:$0xff]
        %v2582 = vld [vmem:[%s5 + $0x7e0] sm:$0xff]
        %v2583 = vld [vmem:[%s5 + $0x7e8] sm:$0xff]
        %v2584 = vld [vmem:[%s5 + $0x7f0] sm:$0xff]
        %v2585 = vld [vmem:[%s5 + $0x7f8] sm:$0xff]
        %2586 = vmatprep.subr.mxu0 %v2331
        %2587 = vmatpush1.msra.mxu0 %v2330
        %2588 = vmatprep.subr.mxu0 %v2335
        %2589 = vmatpush1.msra.mxu0 %v2334
        %2590 = vmatprep.subr.mxu0 %v2339
        %2591 = vmatpush1.msra.mxu0 %v2338
        %2592 = vmatprep.subr.mxu0 %v2343
        %2593 = vmatpush1.msra.mxu0 %v2342
        %2594 = vmatprep.subr.mxu0 %v2347
        %2595 = vmatpush1.msra.mxu0 %v2346
        %2596 = vmatprep.subr.mxu0 %v2351
        %2597 = vmatpush1.msra.mxu0 %v2350
        %2598 = vmatprep.subr.mxu0 %v2355
        %2599 = vmatpush1.msra.mxu0 %v2354
        %2600 = vmatprep.subr.mxu0 %v2359
        %2601 = vmatpush1.msra.mxu0 %v2358
        %2602 = vmatprep.subr.mxu0 %v2363
        %2603 = vmatpush1.msra.mxu0 %v2362
        %2604 = vmatprep.subr.mxu0 %v2367
        %2605 = vmatpush1.msra.mxu0 %v2366
        %2606 = vmatprep.subr.mxu0 %v2371
        %2607 = vmatpush1.msra.mxu0 %v2370
        %2608 = vmatprep.subr.mxu0 %v2375
        %2609 = vmatpush1.msra.mxu0 %v2374
        %2610 = vmatprep.subr.mxu0 %v2379
        %2611 = vmatpush1.msra.mxu0 %v2378
        %2612 = vmatprep.subr.mxu0 %v2383
        %2613 = vmatpush1.msra.mxu0 %v2382
        %2614 = vmatprep.subr.mxu0 %v2387
        %2615 = vmatpush1.msra.mxu0 %v2386
        %2616 = vmatprep.subr.mxu0 %v2391
        %2617 = vmatpush1.msra.mxu0 %v2390
        %2618 = vmatprep.subr.mxu0 %v2395
        %2619 = vmatpush1.msra.mxu0 %v2394
        %2620 = vmatprep.subr.mxu0 %v2399
        %2621 = vmatpush1.msra.mxu0 %v2398
        %2622 = vmatprep.subr.mxu0 %v2403
        %2623 = vmatpush1.msra.mxu0 %v2402
        %2624 = vmatprep.subr.mxu0 %v2407
        %2625 = vmatpush1.msra.mxu0 %v2406
        %2626 = vmatprep.subr.mxu0 %v2411
        %2627 = vmatpush1.msra.mxu0 %v2410
        %2628 = vmatprep.subr.mxu0 %v2415
        %2629 = vmatpush1.msra.mxu0 %v2414
        %2630 = vmatprep.subr.mxu0 %v2419
        %2631 = vmatpush1.msra.mxu0 %v2418
        %2632 = vmatprep.subr.mxu0 %v2423
        %2633 = vmatpush1.msra.mxu0 %v2422
        %2634 = vmatprep.subr.mxu0 %v2427
        %2635 = vmatpush1.msra.mxu0 %v2426
        %2636 = vmatprep.subr.mxu0 %v2431
        %2637 = vmatpush1.msra.mxu0 %v2430
        %2638 = vmatprep.subr.mxu0 %v2435
        %2639 = vmatpush1.msra.mxu0 %v2434
        %2640 = vmatprep.subr.mxu0 %v2439
        %2641 = vmatpush1.msra.mxu0 %v2438
        %2642 = vmatprep.subr.mxu0 %v2443
        %2643 = vmatpush1.msra.mxu0 %v2442
        %2644 = vmatprep.subr.mxu0 %v2447
        %2645 = vmatpush1.msra.mxu0 %v2446
        %2646 = vmatprep.subr.mxu0 %v2451
        %2647 = vmatpush1.msra.mxu0 %v2450
        %2648 = vmatprep.subr.mxu0 %v2455
        %2649 = vmatpush1.msra.mxu0 %v2454
        %2650 = vmatprep.mubr.f32.mxu0 %v2327
        %2651 = vmatmul.mubr.f32.gmra.mrb[0].mxu0 %v2326
        %v2652 = vpop.f32.mrb[0].mxu0
        %v2653 = vadd.f32 0.0, %v2652
        %v2654 = vpop.f32.mrb[0].mxu0
        %v2655 = vadd.f32 0.0, %v2654
        %2656 = vdwg.mxu0
        %2657 = vmatprep.subr.mxu0 %v2459
        %2658 = vmatpush1.msra.mxu0 %v2458
        %2659 = vmatprep.subr.mxu0 %v2463
        %2660 = vmatpush1.msra.mxu0 %v2462
        %2661 = vmatprep.subr.mxu0 %v2467
        %2662 = vmatpush1.msra.mxu0 %v2466
        %2663 = vmatprep.subr.mxu0 %v2471
        %2664 = vmatpush1.msra.mxu0 %v2470
        %2665 = vmatprep.subr.mxu0 %v2475
        %2666 = vmatpush1.msra.mxu0 %v2474
        %2667 = vmatprep.subr.mxu0 %v2479
        %2668 = vmatpush1.msra.mxu0 %v2478
        %2669 = vmatprep.subr.mxu0 %v2483
        %2670 = vmatpush1.msra.mxu0 %v2482
        %2671 = vmatprep.subr.mxu0 %v2487
        %2672 = vmatpush1.msra.mxu0 %v2486
        %2673 = vmatprep.subr.mxu0 %v2491
        %2674 = vmatpush1.msra.mxu0 %v2490
        %2675 = vmatprep.subr.mxu0 %v2495
        %2676 = vmatpush1.msra.mxu0 %v2494
        %2677 = vmatprep.subr.mxu0 %v2499
        %2678 = vmatpush1.msra.mxu0 %v2498
        %2679 = vmatprep.subr.mxu0 %v2503
        %2680 = vmatpush1.msra.mxu0 %v2502
        %2681 = vmatprep.subr.mxu0 %v2507
        %2682 = vmatpush1.msra.mxu0 %v2506
        %2683 = vmatprep.subr.mxu0 %v2511
        %2684 = vmatpush1.msra.mxu0 %v2510
        %2685 = vmatprep.subr.mxu0 %v2515
        %2686 = vmatpush1.msra.mxu0 %v2514
        %2687 = vmatprep.subr.mxu0 %v2519
        %2688 = vmatpush1.msra.mxu0 %v2518
        %2689 = vmatprep.subr.mxu0 %v2523
        %2690 = vmatpush1.msra.mxu0 %v2522
        %2691 = vmatprep.subr.mxu0 %v2527
        %2692 = vmatpush1.msra.mxu0 %v2526
        %2693 = vmatprep.subr.mxu0 %v2531
        %2694 = vmatpush1.msra.mxu0 %v2530
        %2695 = vmatprep.subr.mxu0 %v2535
        %2696 = vmatpush1.msra.mxu0 %v2534
        %2697 = vmatprep.subr.mxu0 %v2539
        %2698 = vmatpush1.msra.mxu0 %v2538
        %2699 = vmatprep.subr.mxu0 %v2543
        %2700 = vmatpush1.msra.mxu0 %v2542
        %2701 = vmatprep.subr.mxu0 %v2547
        %2702 = vmatpush1.msra.mxu0 %v2546
        %2703 = vmatprep.subr.mxu0 %v2551
        %2704 = vmatpush1.msra.mxu0 %v2550
        %2705 = vmatprep.subr.mxu0 %v2555
        %2706 = vmatpush1.msra.mxu0 %v2554
        %2707 = vmatprep.subr.mxu0 %v2559
        %2708 = vmatpush1.msra.mxu0 %v2558
        %2709 = vmatprep.subr.mxu0 %v2563
        %2710 = vmatpush1.msra.mxu0 %v2562
        %2711 = vmatprep.subr.mxu0 %v2567
        %2712 = vmatpush1.msra.mxu0 %v2566
        %2713 = vmatprep.subr.mxu0 %v2571
        %2714 = vmatpush1.msra.mxu0 %v2570
        %2715 = vmatprep.subr.mxu0 %v2575
        %2716 = vmatpush1.msra.mxu0 %v2574
        %2717 = vmatprep.subr.mxu0 %v2579
        %2718 = vmatpush1.msra.mxu0 %v2578
        %2719 = vmatprep.subr.mxu0 %v2583
        %2720 = vmatpush1.msra.mxu0 %v2582
        %2721 = vmatprep.mubr.f32.mxu0 %v2329
        %2722 = vmatmul.mubr.f32.gmra.mrb[0].mxu0 %v2328
        %v2723 = vpop.f32.mrb[0].mxu0
        %v2724 = vadd.f32 %v2653, %v2723
        %v2725 = vpop.f32.mrb[0].mxu0
        %v2726 = vadd.f32 %v2655, %v2725
        %2727 = vdwg.mxu0
        %2728 = vmatprep.subr.mxu0 %v2333
        %2729 = vmatpush1.msra.mxu0 %v2332
        %2730 = vmatprep.subr.mxu0 %v2337
        %2731 = vmatpush1.msra.mxu0 %v2336
        %2732 = vmatprep.subr.mxu0 %v2341
        %2733 = vmatpush1.msra.mxu0 %v2340
        %2734 = vmatprep.subr.mxu0 %v2345
        %2735 = vmatpush1.msra.mxu0 %v2344
        %2736 = vmatprep.subr.mxu0 %v2349
        %2737 = vmatpush1.msra.mxu0 %v2348
        %2738 = vmatprep.subr.mxu0 %v2353
        %2739 = vmatpush1.msra.mxu0 %v2352
        %2740 = vmatprep.subr.mxu0 %v2357
        %2741 = vmatpush1.msra.mxu0 %v2356
        %2742 = vmatprep.subr.mxu0 %v2361
        %2743 = vmatpush1.msra.mxu0 %v2360
        %2744 = vmatprep.subr.mxu0 %v2365
        %2745 = vmatpush1.msra.mxu0 %v2364
        %2746 = vmatprep.subr.mxu0 %v2369
        %2747 = vmatpush1.msra.mxu0 %v2368
        %2748 = vmatprep.subr.mxu0 %v2373
        %2749 = vmatpush1.msra.mxu0 %v2372
        %2750 = vmatprep.subr.mxu0 %v2377
        %2751 = vmatpush1.msra.mxu0 %v2376
        %2752 = vmatprep.subr.mxu0 %v2381
        %2753 = vmatpush1.msra.mxu0 %v2380
        %2754 = vmatprep.subr.mxu0 %v2385
        %2755 = vmatpush1.msra.mxu0 %v2384
        %2756 = vmatprep.subr.mxu0 %v2389
        %2757 = vmatpush1.msra.mxu0 %v2388
        %2758 = vmatprep.subr.mxu0 %v2393
        %2759 = vmatpush1.msra.mxu0 %v2392
        %2760 = vmatprep.subr.mxu0 %v2397
        %2761 = vmatpush1.msra.mxu0 %v2396
        %2762 = vmatprep.subr.mxu0 %v2401
        %2763 = vmatpush1.msra.mxu0 %v2400
        %2764 = vmatprep.subr.mxu0 %v2405
        %2765 = vmatpush1.msra.mxu0 %v2404
        %2766 = vmatprep.subr.mxu0 %v2409
        %2767 = vmatpush1.msra.mxu0 %v2408
        %2768 = vmatprep.subr.mxu0 %v2413
        %2769 = vmatpush1.msra.mxu0 %v2412
        %2770 = vmatprep.subr.mxu0 %v2417
        %2771 = vmatpush1.msra.mxu0 %v2416
        %2772 = vmatprep.subr.mxu0 %v2421
        %2773 = vmatpush1.msra.mxu0 %v2420
        %2774 = vmatprep.subr.mxu0 %v2425
        %2775 = vmatpush1.msra.mxu0 %v2424
        %2776 = vmatprep.subr.mxu0 %v2429
        %2777 = vmatpush1.msra.mxu0 %v2428
        %2778 = vmatprep.subr.mxu0 %v2433
        %2779 = vmatpush1.msra.mxu0 %v2432
        %2780 = vmatprep.subr.mxu0 %v2437
        %2781 = vmatpush1.msra.mxu0 %v2436
        %2782 = vmatprep.subr.mxu0 %v2441
        %2783 = vmatpush1.msra.mxu0 %v2440
        %2784 = vmatprep.subr.mxu0 %v2445
        %2785 = vmatpush1.msra.mxu0 %v2444
        %2786 = vmatprep.subr.mxu0 %v2449
        %2787 = vmatpush1.msra.mxu0 %v2448
        %2788 = vmatprep.subr.mxu0 %v2453
        %2789 = vmatpush1.msra.mxu0 %v2452
        %2790 = vmatprep.subr.mxu0 %v2457
        %2791 = vmatpush1.msra.mxu0 %v2456
        %2792 = vmatprep.mubr.f32.mxu0 %v2327
        %2793 = vmatmul.mubr.f32.gmra.mrb[0].mxu0 %v2326
        %v2794 = vpop.f32.mrb[0].mxu0
        %v2795 = vadd.f32 0.0, %v2794
        %v2796 = vpop.f32.mrb[0].mxu0
        %v2797 = vadd.f32 0.0, %v2796
        %2798 = vdwg.mxu0
        %2799 = vmatprep.subr.mxu0 %v2461
        %2800 = vmatpush1.msra.mxu0 %v2460
        %2801 = vmatprep.subr.mxu0 %v2465
        %2802 = vmatpush1.msra.mxu0 %v2464
        %2803 = vmatprep.subr.mxu0 %v2469
        %2804 = vmatpush1.msra.mxu0 %v2468
        %2805 = vmatprep.subr.mxu0 %v2473
        %2806 = vmatpush1.msra.mxu0 %v2472
        %2807 = vmatprep.subr.mxu0 %v2477
        %2808 = vmatpush1.msra.mxu0 %v2476
        %2809 = vmatprep.subr.mxu0 %v2481
        %2810 = vmatpush1.msra.mxu0 %v2480
        %2811 = vmatprep.subr.mxu0 %v2485
        %2812 = vmatpush1.msra.mxu0 %v2484
        %2813 = vmatprep.subr.mxu0 %v2489
        %2814 = vmatpush1.msra.mxu0 %v2488
        %2815 = vmatprep.subr.mxu0 %v2493
        %2816 = vmatpush1.msra.mxu0 %v2492
        %2817 = vmatprep.subr.mxu0 %v2497
        %2818 = vmatpush1.msra.mxu0 %v2496
        %2819 = vmatprep.subr.mxu0 %v2501
        %2820 = vmatpush1.msra.mxu0 %v2500
        %2821 = vmatprep.subr.mxu0 %v2505
        %2822 = vmatpush1.msra.mxu0 %v2504
        %2823 = vmatprep.subr.mxu0 %v2509
        %2824 = vmatpush1.msra.mxu0 %v2508
        %2825 = vmatprep.subr.mxu0 %v2513
        %2826 = vmatpush1.msra.mxu0 %v2512
        %2827 = vmatprep.subr.mxu0 %v2517
        %2828 = vmatpush1.msra.mxu0 %v2516
        %2829 = vmatprep.subr.mxu0 %v2521
        %2830 = vmatpush1.msra.mxu0 %v2520
        %2831 = vmatprep.subr.mxu0 %v2525
        %2832 = vmatpush1.msra.mxu0 %v2524
        %2833 = vmatprep.subr.mxu0 %v2529
        %2834 = vmatpush1.msra.mxu0 %v2528
        %2835 = vmatprep.subr.mxu0 %v2533
        %2836 = vmatpush1.msra.mxu0 %v2532
        %2837 = vmatprep.subr.mxu0 %v2537
        %2838 = vmatpush1.msra.mxu0 %v2536
        %2839 = vmatprep.subr.mxu0 %v2541
        %2840 = vmatpush1.msra.mxu0 %v2540
        %2841 = vmatprep.subr.mxu0 %v2545
        %2842 = vmatpush1.msra.mxu0 %v2544
        %2843 = vmatprep.subr.mxu0 %v2549
        %2844 = vmatpush1.msra.mxu0 %v2548
        %2845 = vmatprep.subr.mxu0 %v2553
        %2846 = vmatpush1.msra.mxu0 %v2552
        %2847 = vmatprep.subr.mxu0 %v2557
        %2848 = vmatpush1.msra.mxu0 %v2556
        %2849 = vmatprep.subr.mxu0 %v2561
        %2850 = vmatpush1.msra.mxu0 %v2560
        %2851 = vmatprep.subr.mxu0 %v2565
        %2852 = vmatpush1.msra.mxu0 %v2564
        %2853 = vmatprep.subr.mxu0 %v2569
        %2854 = vmatpush1.msra.mxu0 %v2568
        %2855 = vmatprep.subr.mxu0 %v2573
        %2856 = vmatpush1.msra.mxu0 %v2572
        %2857 = vmatprep.subr.mxu0 %v2577
        %2858 = vmatpush1.msra.mxu0 %v2576
        %2859 = vmatprep.subr.mxu0 %v2581
        %2860 = vmatpush1.msra.mxu0 %v2580
        %2861 = vmatprep.subr.mxu0 %v2585
        %2862 = vmatpush1.msra.mxu0 %v2584
        %2863 = vmatprep.mubr.f32.mxu0 %v2329
        %2864 = vmatmul.mubr.f32.gmra.mrb[0].mxu0 %v2328
        %v2865 = vpop.f32.mrb[0].mxu0
        %v2866 = vadd.f32 %v2795, %v2865
        %v2867 = vpop.f32.mrb[0].mxu0
        %v2868 = vadd.f32 %v2797, %v2867
        %2869 = vdwg.mxu0
        %v2870 = vlaneseq
        %v2871 = vshrl.u32 %v2870, 7
        %v2872 = vsub.s32 0, %v2871
        %v2873 = vrot.slane %v2724, %v2872
        %v2874 = vlaneseq
        %v2875 = vshrl.u32 %v2874, 7
        %v2876 = vsub.s32 0, %v2875
        %v2877 = vrot.slane %v2726, %v2876
        %v2878 = vlaneseq
        %v2879 = vshrl.u32 %v2878, 7
        %v2880 = vsub.s32 0, %v2879
        %v2881 = vrot.slane %v2866, %v2880
        %v2882 = vlaneseq
        %v2883 = vshrl.u32 %v2882, 7
        %v2884 = vsub.s32 0, %v2883
        %v2885 = vrot.slane %v2868, %v2884
        %v2886 = vsub.f32 %v2152, %v2873
        %v2887 = vsub.f32 %v2154, %v2877
        %v2888 = vsub.f32 %v2294, %v2881
        %v2889 = vsub.f32 %v2296, %v2885
        %v2890 = vmul.f32 %v2886, %v2886
        %v2891 = vmul.f32 %v2887, %v2887
        %v2892 = vmul.f32 %v2888, %v2888
        %v2893 = vmul.f32 %v2889, %v2889
        %v2894 = vsel %vm753, %v2890, 0.0
        %v2895 = vrot.slane %v2894, 4
        %v2896 = vadd.f32 %v2894, %v2895
        %v2897 = vrot.slane %v2896, 2
        %v2898 = vadd.f32 %v2896, %v2897
        %v2899 = vrot.slane %v2898, 1
        %v2900 = vadd.f32 %v2898, %v2899
        %v2901 = vsel %vm753, %v2891, 0.0
        %v2902 = vrot.slane %v2901, 4
        %v2903 = vadd.f32 %v2901, %v2902
        %v2904 = vrot.slane %v2903, 2
        %v2905 = vadd.f32 %v2903, %v2904
        %v2906 = vrot.slane %v2905, 1
        %v2907 = vadd.f32 %v2905, %v2906
        %v2908 = vsel %vm753, %v2892, 0.0
        %v2909 = vrot.slane %v2908, 4
        %v2910 = vadd.f32 %v2908, %v2909
        %v2911 = vrot.slane %v2910, 2
        %v2912 = vadd.f32 %v2910, %v2911
        %v2913 = vrot.slane %v2912, 1
        %v2914 = vadd.f32 %v2912, %v2913
        %v2915 = vsel %vm753, %v2893, 0.0
        %v2916 = vrot.slane %v2915, 4
        %v2917 = vadd.f32 %v2915, %v2916
        %v2918 = vrot.slane %v2917, 2
        %v2919 = vadd.f32 %v2917, %v2918
        %v2920 = vrot.slane %v2919, 1
        %v2921 = vadd.f32 %v2919, %v2920
        %v2922 = vmul.f32 %v2900, %v783
        %v2923 = vmul.f32 %v2907, %v783
        %v2924 = vmul.f32 %v2914, %v783
        %v2925 = vmul.f32 %v2921, %v783
        %v2926 = vlaneseq
        %v2927 = vshrl.u32 %v2926, 7
        %v2928 = vsub.s32 1, %v2927
        %v2929 = vrot.slane %v1971, %v2928
        %v2930 = vlaneseq
        %v2931 = vshrl.u32 %v2930, 7
        %v2932 = vsub.s32 5, %v2931
        %v2933 = vrot.slane %v1971, %v2932
        %v2934 = vlaneseq
        %v2935 = vshrl.u32 %v2934, 7
        %v2936 = vsub.s32 1, %v2935
        %v2937 = vrot.slane %v1972, %v2936
        %v2938 = vlaneseq
        %v2939 = vshrl.u32 %v2938, 7
        %v2940 = vsub.s32 5, %v2939
        %v2941 = vrot.slane %v1972, %v2940
        %v2946 = vlaneseq
        %v2947 = vshrl.u32 %v2946, 7
        %v2948 = vsub.s32 1, %v2947
        %v2949 = vrot.slane %v2929, %v2948
        %v2950 = vlaneseq
        %v2951 = vshrl.u32 %v2950, 7
        %v2952 = vsub.s32 1, %v2951
        %v2953 = vrot.slane %v2933, %v2952
        %v2954 = vlaneseq
        %v2955 = vshrl.u32 %v2954, 7
        %v2956 = vsub.s32 1, %v2955
        %v2957 = vrot.slane %v2937, %v2956
        %v2958 = vlaneseq
        %v2959 = vshrl.u32 %v2958, 7
        %v2960 = vsub.s32 1, %v2959
        %v2961 = vrot.slane %v2941, %v2960
        %v2962 = vmul.f32 %v2949, %v2886
        %v2963 = vmul.f32 %v2953, %v2887
        %v2964 = vmul.f32 %v2957, %v2888
        %v2965 = vmul.f32 %v2961, %v2889
        %2966 = vmatprep.subr.mxu0 %v2331
        %2967 = vmatpush1.msra.mxu0 %v2330
        %2968 = vmatprep.subr.mxu0 %v2335
        %2969 = vmatpush1.msra.mxu0 %v2334
        %2970 = vmatprep.subr.mxu0 %v2339
        %2971 = vmatpush1.msra.mxu0 %v2338
        %2972 = vmatprep.subr.mxu0 %v2343
        %2973 = vmatpush1.msra.mxu0 %v2342
        %2974 = vmatprep.subr.mxu0 %v2347
        %2975 = vmatpush1.msra.mxu0 %v2346
        %2976 = vmatprep.subr.mxu0 %v2351
        %2977 = vmatpush1.msra.mxu0 %v2350
        %2978 = vmatprep.subr.mxu0 %v2355
        %2979 = vmatpush1.msra.mxu0 %v2354
        %2980 = vmatprep.subr.mxu0 %v2359
        %2981 = vmatpush1.msra.mxu0 %v2358
        %2982 = vmatprep.subr.mxu0 %v2363
        %2983 = vmatpush1.msra.mxu0 %v2362
        %2984 = vmatprep.subr.mxu0 %v2367
        %2985 = vmatpush1.msra.mxu0 %v2366
        %2986 = vmatprep.subr.mxu0 %v2371
        %2987 = vmatpush1.msra.mxu0 %v2370
        %2988 = vmatprep.subr.mxu0 %v2375
        %2989 = vmatpush1.msra.mxu0 %v2374
        %2990 = vmatprep.subr.mxu0 %v2379
        %2991 = vmatpush1.msra.mxu0 %v2378
        %2992 = vmatprep.subr.mxu0 %v2383
        %2993 = vmatpush1.msra.mxu0 %v2382
        %2994 = vmatprep.subr.mxu0 %v2387
        %2995 = vmatpush1.msra.mxu0 %v2386
        %2996 = vmatprep.subr.mxu0 %v2391
        %2997 = vmatpush1.msra.mxu0 %v2390
        %2998 = vmatprep.subr.mxu0 %v2395
        %2999 = vmatpush1.msra.mxu0 %v2394
        %3000 = vmatprep.subr.mxu0 %v2399
        %3001 = vmatpush1.msra.mxu0 %v2398
        %3002 = vmatprep.subr.mxu0 %v2403
        %3003 = vmatpush1.msra.mxu0 %v2402
        %3004 = vmatprep.subr.mxu0 %v2407
        %3005 = vmatpush1.msra.mxu0 %v2406
        %3006 = vmatprep.subr.mxu0 %v2411
        %3007 = vmatpush1.msra.mxu0 %v2410
        %3008 = vmatprep.subr.mxu0 %v2415
        %3009 = vmatpush1.msra.mxu0 %v2414
        %3010 = vmatprep.subr.mxu0 %v2419
        %3011 = vmatpush1.msra.mxu0 %v2418
        %3012 = vmatprep.subr.mxu0 %v2423
        %3013 = vmatpush1.msra.mxu0 %v2422
        %3014 = vmatprep.subr.mxu0 %v2427
        %3015 = vmatpush1.msra.mxu0 %v2426
        %3016 = vmatprep.subr.mxu0 %v2431
        %3017 = vmatpush1.msra.mxu0 %v2430
        %3018 = vmatprep.subr.mxu0 %v2435
        %3019 = vmatpush1.msra.mxu0 %v2434
        %3020 = vmatprep.subr.mxu0 %v2439
        %3021 = vmatpush1.msra.mxu0 %v2438
        %3022 = vmatprep.subr.mxu0 %v2443
        %3023 = vmatpush1.msra.mxu0 %v2442
        %3024 = vmatprep.subr.mxu0 %v2447
        %3025 = vmatpush1.msra.mxu0 %v2446
        %3026 = vmatprep.subr.mxu0 %v2451
        %3027 = vmatpush1.msra.mxu0 %v2450
        %3028 = vmatprep.subr.mxu0 %v2455
        %3029 = vmatpush1.msra.mxu0 %v2454
        %3030 = vmatprep.mubr.f32.mxu0 %v2923
        %3031 = vmatmul.mubr.f32.gmra.mrb[0].mxu0 %v2922
        %v3032 = vpop.f32.mrb[0].mxu0
        %v3033 = vadd.f32 1e-05, %v3032
        %v3034 = vpop.f32.mrb[0].mxu0
        %v3035 = vadd.f32 1e-05, %v3034
        %3036 = vdwg.mxu0
        %3037 = vmatprep.subr.mxu0 %v2459
        %3038 = vmatpush1.msra.mxu0 %v2458
        %3039 = vmatprep.subr.mxu0 %v2463
        %3040 = vmatpush1.msra.mxu0 %v2462
        %3041 = vmatprep.subr.mxu0 %v2467
        %3042 = vmatpush1.msra.mxu0 %v2466
        %3043 = vmatprep.subr.mxu0 %v2471
        %3044 = vmatpush1.msra.mxu0 %v2470
        %3045 = vmatprep.subr.mxu0 %v2475
        %3046 = vmatpush1.msra.mxu0 %v2474
        %3047 = vmatprep.subr.mxu0 %v2479
        %3048 = vmatpush1.msra.mxu0 %v2478
        %3049 = vmatprep.subr.mxu0 %v2483
        %3050 = vmatpush1.msra.mxu0 %v2482
        %3051 = vmatprep.subr.mxu0 %v2487
        %3052 = vmatpush1.msra.mxu0 %v2486
        %3053 = vmatprep.subr.mxu0 %v2491
        %3054 = vmatpush1.msra.mxu0 %v2490
        %3055 = vmatprep.subr.mxu0 %v2495
        %3056 = vmatpush1.msra.mxu0 %v2494
        %3057 = vmatprep.subr.mxu0 %v2499
        %3058 = vmatpush1.msra.mxu0 %v2498
        %3059 = vmatprep.subr.mxu0 %v2503
        %3060 = vmatpush1.msra.mxu0 %v2502
        %3061 = vmatprep.subr.mxu0 %v2507
        %3062 = vmatpush1.msra.mxu0 %v2506
        %3063 = vmatprep.subr.mxu0 %v2511
        %3064 = vmatpush1.msra.mxu0 %v2510
        %3065 = vmatprep.subr.mxu0 %v2515
        %3066 = vmatpush1.msra.mxu0 %v2514
        %3067 = vmatprep.subr.mxu0 %v2519
        %3068 = vmatpush1.msra.mxu0 %v2518
        %3069 = vmatprep.subr.mxu0 %v2523
        %3070 = vmatpush1.msra.mxu0 %v2522
        %3071 = vmatprep.subr.mxu0 %v2527
        %3072 = vmatpush1.msra.mxu0 %v2526
        %3073 = vmatprep.subr.mxu0 %v2531
        %3074 = vmatpush1.msra.mxu0 %v2530
        %3075 = vmatprep.subr.mxu0 %v2535
        %3076 = vmatpush1.msra.mxu0 %v2534
        %3077 = vmatprep.subr.mxu0 %v2539
        %3078 = vmatpush1.msra.mxu0 %v2538
        %3079 = vmatprep.subr.mxu0 %v2543
        %3080 = vmatpush1.msra.mxu0 %v2542
        %3081 = vmatprep.subr.mxu0 %v2547
        %3082 = vmatpush1.msra.mxu0 %v2546
        %3083 = vmatprep.subr.mxu0 %v2551
        %3084 = vmatpush1.msra.mxu0 %v2550
        %3085 = vmatprep.subr.mxu0 %v2555
        %3086 = vmatpush1.msra.mxu0 %v2554
        %3087 = vmatprep.subr.mxu0 %v2559
        %3088 = vmatpush1.msra.mxu0 %v2558
        %3089 = vmatprep.subr.mxu0 %v2563
        %3090 = vmatpush1.msra.mxu0 %v2562
        %3091 = vmatprep.subr.mxu0 %v2567
        %3092 = vmatpush1.msra.mxu0 %v2566
        %3093 = vmatprep.subr.mxu0 %v2571
        %3094 = vmatpush1.msra.mxu0 %v2570
        %3095 = vmatprep.subr.mxu0 %v2575
        %3096 = vmatpush1.msra.mxu0 %v2574
        %3097 = vmatprep.subr.mxu0 %v2579
        %3098 = vmatpush1.msra.mxu0 %v2578
        %3099 = vmatprep.subr.mxu0 %v2583
        %3100 = vmatpush1.msra.mxu0 %v2582
        %3101 = vmatprep.mubr.f32.mxu0 %v2925
        %3102 = vmatmul.mubr.f32.gmra.mrb[0].mxu0 %v2924
        %v3103 = vpop.f32.mrb[0].mxu0
        %v3104 = vadd.f32 %v3033, %v3103
        %v3105 = vpop.f32.mrb[0].mxu0
        %v3106 = vadd.f32 %v3035, %v3105
        %3107 = vdwg.mxu0
        %3108 = vmatprep.subr.mxu0 %v2333
        %3109 = vmatpush1.msra.mxu0 %v2332
        %3110 = vmatprep.subr.mxu0 %v2337
        %3111 = vmatpush1.msra.mxu0 %v2336
        %3112 = vmatprep.subr.mxu0 %v2341
        %3113 = vmatpush1.msra.mxu0 %v2340
        %3114 = vmatprep.subr.mxu0 %v2345
        %3115 = vmatpush1.msra.mxu0 %v2344
        %3116 = vmatprep.subr.mxu0 %v2349
        %3117 = vmatpush1.msra.mxu0 %v2348
        %3118 = vmatprep.subr.mxu0 %v2353
        %3119 = vmatpush1.msra.mxu0 %v2352
        %3120 = vmatprep.subr.mxu0 %v2357
        %3121 = vmatpush1.msra.mxu0 %v2356
        %3122 = vmatprep.subr.mxu0 %v2361
        %3123 = vmatpush1.msra.mxu0 %v2360
        %3124 = vmatprep.subr.mxu0 %v2365
        %3125 = vmatpush1.msra.mxu0 %v2364
        %3126 = vmatprep.subr.mxu0 %v2369
        %3127 = vmatpush1.msra.mxu0 %v2368
        %3128 = vmatprep.subr.mxu0 %v2373
        %3129 = vmatpush1.msra.mxu0 %v2372
        %3130 = vmatprep.subr.mxu0 %v2377
        %3131 = vmatpush1.msra.mxu0 %v2376
        %3132 = vmatprep.subr.mxu0 %v2381
        %3133 = vmatpush1.msra.mxu0 %v2380
        %3134 = vmatprep.subr.mxu0 %v2385
        %3135 = vmatpush1.msra.mxu0 %v2384
        %3136 = vmatprep.subr.mxu0 %v2389
        %3137 = vmatpush1.msra.mxu0 %v2388
        %3138 = vmatprep.subr.mxu0 %v2393
        %3139 = vmatpush1.msra.mxu0 %v2392
        %3140 = vmatprep.subr.mxu0 %v2397
        %3141 = vmatpush1.msra.mxu0 %v2396
        %3142 = vmatprep.subr.mxu0 %v2401
        %3143 = vmatpush1.msra.mxu0 %v2400
        %3144 = vmatprep.subr.mxu0 %v2405
        %3145 = vmatpush1.msra.mxu0 %v2404
        %3146 = vmatprep.subr.mxu0 %v2409
        %3147 = vmatpush1.msra.mxu0 %v2408
        %3148 = vmatprep.subr.mxu0 %v2413
        %3149 = vmatpush1.msra.mxu0 %v2412
        %3150 = vmatprep.subr.mxu0 %v2417
        %3151 = vmatpush1.msra.mxu0 %v2416
        %3152 = vmatprep.subr.mxu0 %v2421
        %3153 = vmatpush1.msra.mxu0 %v2420
        %3154 = vmatprep.subr.mxu0 %v2425
        %3155 = vmatpush1.msra.mxu0 %v2424
        %3156 = vmatprep.subr.mxu0 %v2429
        %3157 = vmatpush1.msra.mxu0 %v2428
        %3158 = vmatprep.subr.mxu0 %v2433
        %3159 = vmatpush1.msra.mxu0 %v2432
        %3160 = vmatprep.subr.mxu0 %v2437
        %3161 = vmatpush1.msra.mxu0 %v2436
        %3162 = vmatprep.subr.mxu0 %v2441
        %3163 = vmatpush1.msra.mxu0 %v2440
        %3164 = vmatprep.subr.mxu0 %v2445
        %3165 = vmatpush1.msra.mxu0 %v2444
        %3166 = vmatprep.subr.mxu0 %v2449
        %3167 = vmatpush1.msra.mxu0 %v2448
        %3168 = vmatprep.subr.mxu0 %v2453
        %3169 = vmatpush1.msra.mxu0 %v2452
        %3170 = vmatprep.subr.mxu0 %v2457
        %3171 = vmatpush1.msra.mxu0 %v2456
        %3172 = vmatprep.mubr.f32.mxu0 %v2923
        %3173 = vmatmul.mubr.f32.gmra.mrb[0].mxu0 %v2922
        %v3174 = vpop.f32.mrb[0].mxu0
        %v3175 = vadd.f32 1e-05, %v3174
        %v3176 = vpop.f32.mrb[0].mxu0
        %v3177 = vadd.f32 1e-05, %v3176
        %3178 = vdwg.mxu0
        %3179 = vmatprep.subr.mxu0 %v2461
        %3180 = vmatpush1.msra.mxu0 %v2460
        %3181 = vmatprep.subr.mxu0 %v2465
        %3182 = vmatpush1.msra.mxu0 %v2464
        %3183 = vmatprep.subr.mxu0 %v2469
        %3184 = vmatpush1.msra.mxu0 %v2468
        %3185 = vmatprep.subr.mxu0 %v2473
        %3186 = vmatpush1.msra.mxu0 %v2472
        %3187 = vmatprep.subr.mxu0 %v2477
        %3188 = vmatpush1.msra.mxu0 %v2476
        %3189 = vmatprep.subr.mxu0 %v2481
        %3190 = vmatpush1.msra.mxu0 %v2480
        %3191 = vmatprep.subr.mxu0 %v2485
        %3192 = vmatpush1.msra.mxu0 %v2484
        %3193 = vmatprep.subr.mxu0 %v2489
        %3194 = vmatpush1.msra.mxu0 %v2488
        %3195 = vmatprep.subr.mxu0 %v2493
        %3196 = vmatpush1.msra.mxu0 %v2492
        %3197 = vmatprep.subr.mxu0 %v2497
        %3198 = vmatpush1.msra.mxu0 %v2496
        %3199 = vmatprep.subr.mxu0 %v2501
        %3200 = vmatpush1.msra.mxu0 %v2500
        %3201 = vmatprep.subr.mxu0 %v2505
        %3202 = vmatpush1.msra.mxu0 %v2504
        %3203 = vmatprep.subr.mxu0 %v2509
        %3204 = vmatpush1.msra.mxu0 %v2508
        %3205 = vmatprep.subr.mxu0 %v2513
        %3206 = vmatpush1.msra.mxu0 %v2512
        %3207 = vmatprep.subr.mxu0 %v2517
        %3208 = vmatpush1.msra.mxu0 %v2516
        %3209 = vmatprep.subr.mxu0 %v2521
        %3210 = vmatpush1.msra.mxu0 %v2520
        %3211 = vmatprep.subr.mxu0 %v2525
        %3212 = vmatpush1.msra.mxu0 %v2524
        %3213 = vmatprep.subr.mxu0 %v2529
        %3214 = vmatpush1.msra.mxu0 %v2528
        %3215 = vmatprep.subr.mxu0 %v2533
        %3216 = vmatpush1.msra.mxu0 %v2532
        %3217 = vmatprep.subr.mxu0 %v2537
        %3218 = vmatpush1.msra.mxu0 %v2536
        %3219 = vmatprep.subr.mxu0 %v2541
        %3220 = vmatpush1.msra.mxu0 %v2540
        %3221 = vmatprep.subr.mxu0 %v2545
        %3222 = vmatpush1.msra.mxu0 %v2544
        %3223 = vmatprep.subr.mxu0 %v2549
        %3224 = vmatpush1.msra.mxu0 %v2548
        %3225 = vmatprep.subr.mxu0 %v2553
        %3226 = vmatpush1.msra.mxu0 %v2552
        %3227 = vmatprep.subr.mxu0 %v2557
        %3228 = vmatpush1.msra.mxu0 %v2556
        %3229 = vmatprep.subr.mxu0 %v2561
        %3230 = vmatpush1.msra.mxu0 %v2560
        %3231 = vmatprep.subr.mxu0 %v2565
        %3232 = vmatpush1.msra.mxu0 %v2564
        %3233 = vmatprep.subr.mxu0 %v2569
        %3234 = vmatpush1.msra.mxu0 %v2568
        %3235 = vmatprep.subr.mxu0 %v2573
        %3236 = vmatpush1.msra.mxu0 %v2572
        %3237 = vmatprep.subr.mxu0 %v2577
        %3238 = vmatpush1.msra.mxu0 %v2576
        %3239 = vmatprep.subr.mxu0 %v2581
        %3240 = vmatpush1.msra.mxu0 %v2580
        %3241 = vmatprep.subr.mxu0 %v2585
        %3242 = vmatpush1.msra.mxu0 %v2584
        %3243 = vmatprep.mubr.f32.mxu0 %v2925
        %3244 = vmatmul.mubr.f32.gmra.mrb[0].mxu0 %v2924
        %v3245 = vpop.f32.mrb[0].mxu0
        %v3246 = vadd.f32 %v3175, %v3245
        %v3247 = vpop.f32.mrb[0].mxu0
        %v3248 = vadd.f32 %v3177, %v3247
        %3249 = vdwg.mxu0
        %v3250 = vrsqrt.pop %v3104
        %v3251 = vrsqrt.pop %v3106
        %v3252 = vrsqrt.pop %v3246
        %v3253 = vrsqrt.pop %v3248
        %v3254 = vlaneseq
        %v3255 = vshrl.u32 %v3254, 7
        %v3256 = vsub.s32 0, %v3255
        %v3257 = vrot.slane %v3250, %v3256
        %v3258 = vlaneseq
        %v3259 = vshrl.u32 %v3258, 7
        %v3260 = vsub.s32 0, %v3259
        %v3261 = vrot.slane %v3251, %v3260
        %v3262 = vlaneseq
        %v3263 = vshrl.u32 %v3262, 7
        %v3264 = vsub.s32 0, %v3263
        %v3265 = vrot.slane %v3252, %v3264
        %v3266 = vlaneseq
        %v3267 = vshrl.u32 %v3266, 7
        %v3268 = vsub.s32 0, %v3267
        %v3269 = vrot.slane %v3253, %v3268
        %v3270 = vmul.f32 %v2962, %v3257
        %v3271 = vmul.f32 %v2963, %v3261
        %v3272 = vmul.f32 %v2964, %v3265
        %v3273 = vmul.f32 %v2965, %v3269
        %v3274 = vlaneseq
        %v3275 = vshrl.u32 %v3274, 7
        %v3276 = vsub.s32 2, %v3275
        %v3277 = vrot.slane %v1971, %v3276
        %v3278 = vlaneseq
        %v3279 = vshrl.u32 %v3278, 7
        %v3280 = vsub.s32 6, %v3279
        %v3281 = vrot.slane %v1971, %v3280
        %v3282 = vlaneseq
        %v3283 = vshrl.u32 %v3282, 7
        %v3284 = vsub.s32 2, %v3283
        %v3285 = vrot.slane %v1972, %v3284
        %v3286 = vlaneseq
        %v3287 = vshrl.u32 %v3286, 7
        %v3288 = vsub.s32 6, %v3287
        %v3289 = vrot.slane %v1972, %v3288
        %v3294 = vlaneseq
        %v3295 = vshrl.u32 %v3294, 7
        %v3296 = vsub.s32 2, %v3295
        %v3297 = vrot.slane %v3277, %v3296
        %v3298 = vlaneseq
        %v3299 = vshrl.u32 %v3298, 7
        %v3300 = vsub.s32 2, %v3299
        %v3301 = vrot.slane %v3281, %v3300
        %v3302 = vlaneseq
        %v3303 = vshrl.u32 %v3302, 7
        %v3304 = vsub.s32 2, %v3303
        %v3305 = vrot.slane %v3285, %v3304
        %v3306 = vlaneseq
        %v3307 = vshrl.u32 %v3306, 7
        %v3308 = vsub.s32 2, %v3307
        %v3309 = vrot.slane %v3289, %v3308
        %v3310 = vadd.f32 %v3270, %v3297
        %v3311 = vadd.f32 %v3271, %v3301
        %v3312 = vadd.f32 %v3272, %v3305
        %v3313 = vadd.f32 %v3273, %v3309
        %vm3314 = vcmp.ge.f32.partialorder %v3310, 0.0
        %vm3315 = vcmp.ge.f32.partialorder %v3311, 0.0
        %vm3316 = vcmp.ge.f32.partialorder %v3312, 0.0
        %vm3317 = vcmp.ge.f32.partialorder %v3313, 0.0
        %v3318 = vlaneseq
        %v3319 = vshrl.u32 %v3318, 7
        %v3320 = vsub.s32 3, %v3319
        %v3321 = vrot.slane %v1971, %v3320
        %v3322 = vlaneseq
        %v3323 = vshrl.u32 %v3322, 7
        %v3324 = vsub.s32 7, %v3323
        %v3325 = vrot.slane %v1971, %v3324
        %v3326 = vlaneseq
        %v3327 = vshrl.u32 %v3326, 7
        %v3328 = vsub.s32 3, %v3327
        %v3329 = vrot.slane %v1972, %v3328
        %v3330 = vlaneseq
        %v3331 = vshrl.u32 %v3330, 7
        %v3332 = vsub.s32 7, %v3331
        %v3333 = vrot.slane %v1972, %v3332
        %v3338 = vlaneseq
        %v3339 = vshrl.u32 %v3338, 7
        %v3340 = vsub.s32 3, %v3339
        %v3341 = vrot.slane %v3321, %v3340
        %v3342 = vlaneseq
        %v3343 = vshrl.u32 %v3342, 7
        %v3344 = vsub.s32 3, %v3343
        %v3345 = vrot.slane %v3325, %v3344
        %v3346 = vlaneseq
        %v3347 = vshrl.u32 %v3346, 7
        %v3348 = vsub.s32 3, %v3347
        %v3349 = vrot.slane %v3329, %v3348
        %v3350 = vlaneseq
        %v3351 = vshrl.u32 %v3350, 7
        %v3352 = vsub.s32 3, %v3351
        %v3353 = vrot.slane %v3333, %v3352
        %v3354 = vmul.f32 %v3341, %v3310
        %v3355 = vmul.f32 %v3345, %v3311
        %v3356 = vmul.f32 %v3349, %v3312
        %v3357 = vmul.f32 %v3353, %v3313
        %v3358 = vsel %vm3314, %v3310, %v3354
        %v3359 = vsel %vm3315, %v3311, %v3355
        %v3360 = vsel %vm3316, %v3312, %v3356
        %v3361 = vsel %vm3317, %v3313, %v3357
        %v3362 = vld [vmem:[%s3] sm:$0xff]
        %v3363 = vld [vmem:[%s3 + $0x8] sm:$0xff]
        %v3364 = vld [vmem:[%s3 + $0x10] sm:$0xff]
        %v3365 = vld [vmem:[%s3 + $0x18] sm:$0xff]
        %v3366 = vld [vmem:[%s3 + $0x20] sm:$0xff]
        %v3367 = vld [vmem:[%s3 + $0x28] sm:$0xff]
        %v3368 = vld [vmem:[%s3 + $0x30] sm:$0xff]
        %v3369 = vld [vmem:[%s3 + $0x38] sm:$0xff]
        %v3370 = vld [vmem:[%s3 + $0x40] sm:$0xff]
        %v3371 = vld [vmem:[%s3 + $0x48] sm:$0xff]
        %v3372 = vld [vmem:[%s3 + $0x50] sm:$0xff]
        %v3373 = vld [vmem:[%s3 + $0x58] sm:$0xff]
        %v3374 = vld [vmem:[%s3 + $0x60] sm:$0xff]
        %v3375 = vld [vmem:[%s3 + $0x68] sm:$0xff]
        %v3376 = vld [vmem:[%s3 + $0x70] sm:$0xff]
        %v3377 = vld [vmem:[%s3 + $0x78] sm:$0xff]
        %v3378 = vld [vmem:[%s3 + $0x80] sm:$0xff]
        %v3379 = vld [vmem:[%s3 + $0x88] sm:$0xff]
        %v3380 = vld [vmem:[%s3 + $0x90] sm:$0xff]
        %v3381 = vld [vmem:[%s3 + $0x98] sm:$0xff]
        %v3382 = vld [vmem:[%s3 + $0xa0] sm:$0xff]
        %v3383 = vld [vmem:[%s3 + $0xa8] sm:$0xff]
        %v3384 = vld [vmem:[%s3 + $0xb0] sm:$0xff]
        %v3385 = vld [vmem:[%s3 + $0xb8] sm:$0xff]
        %v3386 = vld [vmem:[%s3 + $0xc0] sm:$0xff]
        %v3387 = vld [vmem:[%s3 + $0xc8] sm:$0xff]
        %v3388 = vld [vmem:[%s3 + $0xd0] sm:$0xff]
        %v3389 = vld [vmem:[%s3 + $0xd8] sm:$0xff]
        %v3390 = vld [vmem:[%s3 + $0xe0] sm:$0xff]
        %v3391 = vld [vmem:[%s3 + $0xe8] sm:$0xff]
        %v3392 = vld [vmem:[%s3 + $0xf0] sm:$0xff]
        %v3393 = vld [vmem:[%s3 + $0xf8] sm:$0xff]
        %v3394 = vld [vmem:[%s3 + $0x100] sm:$0xff]
        %v3395 = vld [vmem:[%s3 + $0x108] sm:$0xff]
        %v3396 = vld [vmem:[%s3 + $0x110] sm:$0xff]
        %v3397 = vld [vmem:[%s3 + $0x118] sm:$0xff]
        %v3398 = vld [vmem:[%s3 + $0x120] sm:$0xff]
        %v3399 = vld [vmem:[%s3 + $0x128] sm:$0xff]
        %v3400 = vld [vmem:[%s3 + $0x130] sm:$0xff]
        %v3401 = vld [vmem:[%s3 + $0x138] sm:$0xff]
        %v3402 = vld [vmem:[%s3 + $0x140] sm:$0xff]
        %v3403 = vld [vmem:[%s3 + $0x148] sm:$0xff]
        %v3404 = vld [vmem:[%s3 + $0x150] sm:$0xff]
        %v3405 = vld [vmem:[%s3 + $0x158] sm:$0xff]
        %v3406 = vld [vmem:[%s3 + $0x160] sm:$0xff]
        %v3407 = vld [vmem:[%s3 + $0x168] sm:$0xff]
        %v3408 = vld [vmem:[%s3 + $0x170] sm:$0xff]
        %v3409 = vld [vmem:[%s3 + $0x178] sm:$0xff]
        %v3410 = vld [vmem:[%s3 + $0x180] sm:$0xff]
        %v3411 = vld [vmem:[%s3 + $0x188] sm:$0xff]
        %v3412 = vld [vmem:[%s3 + $0x190] sm:$0xff]
        %v3413 = vld [vmem:[%s3 + $0x198] sm:$0xff]
        %v3414 = vld [vmem:[%s3 + $0x1a0] sm:$0xff]
        %v3415 = vld [vmem:[%s3 + $0x1a8] sm:$0xff]
        %v3416 = vld [vmem:[%s3 + $0x1b0] sm:$0xff]
        %v3417 = vld [vmem:[%s3 + $0x1b8] sm:$0xff]
        %v3418 = vld [vmem:[%s3 + $0x1c0] sm:$0xff]
        %v3419 = vld [vmem:[%s3 + $0x1c8] sm:$0xff]
        %v3420 = vld [vmem:[%s3 + $0x1d0] sm:$0xff]
        %v3421 = vld [vmem:[%s3 + $0x1d8] sm:$0xff]
        %v3422 = vld [vmem:[%s3 + $0x1e0] sm:$0xff]
        %v3423 = vld [vmem:[%s3 + $0x1e8] sm:$0xff]
        %v3424 = vld [vmem:[%s3 + $0x1f0] sm:$0xff]
        %v3425 = vld [vmem:[%s3 + $0x1f8] sm:$0xff]
        %v3426 = vld [vmem:[%s3 + $0x200] sm:$0xff]
        %v3427 = vld [vmem:[%s3 + $0x208] sm:$0xff]
        %v3428 = vld [vmem:[%s3 + $0x210] sm:$0xff]
        %v3429 = vld [vmem:[%s3 + $0x218] sm:$0xff]
        %v3430 = vld [vmem:[%s3 + $0x220] sm:$0xff]
        %v3431 = vld [vmem:[%s3 + $0x228] sm:$0xff]
        %v3432 = vld [vmem:[%s3 + $0x230] sm:$0xff]
        %v3433 = vld [vmem:[%s3 + $0x238] sm:$0xff]
        %v3434 = vld [vmem:[%s3 + $0x240] sm:$0xff]
        %v3435 = vld [vmem:[%s3 + $0x248] sm:$0xff]
        %v3436 = vld [vmem:[%s3 + $0x250] sm:$0xff]
        %v3437 = vld [vmem:[%s3 + $0x258] sm:$0xff]
        %v3438 = vld [vmem:[%s3 + $0x260] sm:$0xff]
        %v3439 = vld [vmem:[%s3 + $0x268] sm:$0xff]
        %v3440 = vld [vmem:[%s3 + $0x270] sm:$0xff]
        %v3441 = vld [vmem:[%s3 + $0x278] sm:$0xff]
        %v3442 = vld [vmem:[%s3 + $0x280] sm:$0xff]
        %v3443 = vld [vmem:[%s3 + $0x288] sm:$0xff]
        %v3444 = vld [vmem:[%s3 + $0x290] sm:$0xff]
        %v3445 = vld [vmem:[%s3 + $0x298] sm:$0xff]
        %v3446 = vld [vmem:[%s3 + $0x2a0] sm:$0xff]
        %v3447 = vld [vmem:[%s3 + $0x2a8] sm:$0xff]
        %v3448 = vld [vmem:[%s3 + $0x2b0] sm:$0xff]
        %v3449 = vld [vmem:[%s3 + $0x2b8] sm:$0xff]
        %v3450 = vld [vmem:[%s3 + $0x2c0] sm:$0xff]
        %v3451 = vld [vmem:[%s3 + $0x2c8] sm:$0xff]
        %v3452 = vld [vmem:[%s3 + $0x2d0] sm:$0xff]
        %v3453 = vld [vmem:[%s3 + $0x2d8] sm:$0xff]
        %v3454 = vld [vmem:[%s3 + $0x2e0] sm:$0xff]
        %v3455 = vld [vmem:[%s3 + $0x2e8] sm:$0xff]
        %v3456 = vld [vmem:[%s3 + $0x2f0] sm:$0xff]
        %v3457 = vld [vmem:[%s3 + $0x2f8] sm:$0xff]
        %v3458 = vld [vmem:[%s3 + $0x300] sm:$0xff]
        %v3459 = vld [vmem:[%s3 + $0x308] sm:$0xff]
        %v3460 = vld [vmem:[%s3 + $0x310] sm:$0xff]
        %v3461 = vld [vmem:[%s3 + $0x318] sm:$0xff]
        %v3462 = vld [vmem:[%s3 + $0x320] sm:$0xff]
        %v3463 = vld [vmem:[%s3 + $0x328] sm:$0xff]
        %v3464 = vld [vmem:[%s3 + $0x330] sm:$0xff]
        %v3465 = vld [vmem:[%s3 + $0x338] sm:$0xff]
        %v3466 = vld [vmem:[%s3 + $0x340] sm:$0xff]
        %v3467 = vld [vmem:[%s3 + $0x348] sm:$0xff]
        %v3468 = vld [vmem:[%s3 + $0x350] sm:$0xff]
        %v3469 = vld [vmem:[%s3 + $0x358] sm:$0xff]
        %v3470 = vld [vmem:[%s3 + $0x360] sm:$0xff]
        %v3471 = vld [vmem:[%s3 + $0x368] sm:$0xff]
        %v3472 = vld [vmem:[%s3 + $0x370] sm:$0xff]
        %v3473 = vld [vmem:[%s3 + $0x378] sm:$0xff]
        %v3474 = vld [vmem:[%s3 + $0x380] sm:$0xff]
        %v3475 = vld [vmem:[%s3 + $0x388] sm:$0xff]
        %v3476 = vld [vmem:[%s3 + $0x390] sm:$0xff]
        %v3477 = vld [vmem:[%s3 + $0x398] sm:$0xff]
        %v3478 = vld [vmem:[%s3 + $0x3a0] sm:$0xff]
        %v3479 = vld [vmem:[%s3 + $0x3a8] sm:$0xff]
        %v3480 = vld [vmem:[%s3 + $0x3b0] sm:$0xff]
        %v3481 = vld [vmem:[%s3 + $0x3b8] sm:$0xff]
        %v3482 = vld [vmem:[%s3 + $0x3c0] sm:$0xff]
        %v3483 = vld [vmem:[%s3 + $0x3c8] sm:$0xff]
        %v3484 = vld [vmem:[%s3 + $0x3d0] sm:$0xff]
        %v3485 = vld [vmem:[%s3 + $0x3d8] sm:$0xff]
        %v3486 = vld [vmem:[%s3 + $0x3e0] sm:$0xff]
        %v3487 = vld [vmem:[%s3 + $0x3e8] sm:$0xff]
        %v3488 = vld [vmem:[%s3 + $0x3f0] sm:$0xff]
        %v3489 = vld [vmem:[%s3 + $0x3f8] sm:$0xff]
        %v3490 = vld [vmem:[%s3 + $0x400] sm:$0xff]
        %v3491 = vld [vmem:[%s3 + $0x408] sm:$0xff]
        %v3492 = vld [vmem:[%s3 + $0x410] sm:$0xff]
        %v3493 = vld [vmem:[%s3 + $0x418] sm:$0xff]
        %v3494 = vld [vmem:[%s3 + $0x420] sm:$0xff]
        %v3495 = vld [vmem:[%s3 + $0x428] sm:$0xff]
        %v3496 = vld [vmem:[%s3 + $0x430] sm:$0xff]
        %v3497 = vld [vmem:[%s3 + $0x438] sm:$0xff]
        %v3498 = vld [vmem:[%s3 + $0x440] sm:$0xff]
        %v3499 = vld [vmem:[%s3 + $0x448] sm:$0xff]
        %v3500 = vld [vmem:[%s3 + $0x450] sm:$0xff]
        %v3501 = vld [vmem:[%s3 + $0x458] sm:$0xff]
        %v3502 = vld [vmem:[%s3 + $0x460] sm:$0xff]
        %v3503 = vld [vmem:[%s3 + $0x468] sm:$0xff]
        %v3504 = vld [vmem:[%s3 + $0x470] sm:$0xff]
        %v3505 = vld [vmem:[%s3 + $0x478] sm:$0xff]
        %v3506 = vld [vmem:[%s3 + $0x480] sm:$0xff]
        %v3507 = vld [vmem:[%s3 + $0x488] sm:$0xff]
        %v3508 = vld [vmem:[%s3 + $0x490] sm:$0xff]
        %v3509 = vld [vmem:[%s3 + $0x498] sm:$0xff]
        %v3510 = vld [vmem:[%s3 + $0x4a0] sm:$0xff]
        %v3511 = vld [vmem:[%s3 + $0x4a8] sm:$0xff]
        %v3512 = vld [vmem:[%s3 + $0x4b0] sm:$0xff]
        %v3513 = vld [vmem:[%s3 + $0x4b8] sm:$0xff]
        %v3514 = vld [vmem:[%s3 + $0x4c0] sm:$0xff]
        %v3515 = vld [vmem:[%s3 + $0x4c8] sm:$0xff]
        %v3516 = vld [vmem:[%s3 + $0x4d0] sm:$0xff]
        %v3517 = vld [vmem:[%s3 + $0x4d8] sm:$0xff]
        %v3518 = vld [vmem:[%s3 + $0x4e0] sm:$0xff]
        %v3519 = vld [vmem:[%s3 + $0x4e8] sm:$0xff]
        %v3520 = vld [vmem:[%s3 + $0x4f0] sm:$0xff]
        %v3521 = vld [vmem:[%s3 + $0x4f8] sm:$0xff]
        %v3522 = vld [vmem:[%s3 + $0x500] sm:$0xff]
        %v3523 = vld [vmem:[%s3 + $0x508] sm:$0xff]
        %v3524 = vld [vmem:[%s3 + $0x510] sm:$0xff]
        %v3525 = vld [vmem:[%s3 + $0x518] sm:$0xff]
        %v3526 = vld [vmem:[%s3 + $0x520] sm:$0xff]
        %v3527 = vld [vmem:[%s3 + $0x528] sm:$0xff]
        %v3528 = vld [vmem:[%s3 + $0x530] sm:$0xff]
        %v3529 = vld [vmem:[%s3 + $0x538] sm:$0xff]
        %v3530 = vld [vmem:[%s3 + $0x540] sm:$0xff]
        %v3531 = vld [vmem:[%s3 + $0x548] sm:$0xff]
        %v3532 = vld [vmem:[%s3 + $0x550] sm:$0xff]
        %v3533 = vld [vmem:[%s3 + $0x558] sm:$0xff]
        %v3534 = vld [vmem:[%s3 + $0x560] sm:$0xff]
        %v3535 = vld [vmem:[%s3 + $0x568] sm:$0xff]
        %v3536 = vld [vmem:[%s3 + $0x570] sm:$0xff]
        %v3537 = vld [vmem:[%s3 + $0x578] sm:$0xff]
        %v3538 = vld [vmem:[%s3 + $0x580] sm:$0xff]
        %v3539 = vld [vmem:[%s3 + $0x588] sm:$0xff]
        %v3540 = vld [vmem:[%s3 + $0x590] sm:$0xff]
        %v3541 = vld [vmem:[%s3 + $0x598] sm:$0xff]
        %v3542 = vld [vmem:[%s3 + $0x5a0] sm:$0xff]
        %v3543 = vld [vmem:[%s3 + $0x5a8] sm:$0xff]
        %v3544 = vld [vmem:[%s3 + $0x5b0] sm:$0xff]
        %v3545 = vld [vmem:[%s3 + $0x5b8] sm:$0xff]
        %v3546 = vld [vmem:[%s3 + $0x5c0] sm:$0xff]
        %v3547 = vld [vmem:[%s3 + $0x5c8] sm:$0xff]
        %v3548 = vld [vmem:[%s3 + $0x5d0] sm:$0xff]
        %v3549 = vld [vmem:[%s3 + $0x5d8] sm:$0xff]
        %v3550 = vld [vmem:[%s3 + $0x5e0] sm:$0xff]
        %v3551 = vld [vmem:[%s3 + $0x5e8] sm:$0xff]
        %v3552 = vld [vmem:[%s3 + $0x5f0] sm:$0xff]
        %v3553 = vld [vmem:[%s3 + $0x5f8] sm:$0xff]
        %v3554 = vld [vmem:[%s3 + $0x600] sm:$0xff]
        %v3555 = vld [vmem:[%s3 + $0x608] sm:$0xff]
        %v3556 = vld [vmem:[%s3 + $0x610] sm:$0xff]
        %v3557 = vld [vmem:[%s3 + $0x618] sm:$0xff]
        %v3558 = vld [vmem:[%s3 + $0x620] sm:$0xff]
        %v3559 = vld [vmem:[%s3 + $0x628] sm:$0xff]
        %v3560 = vld [vmem:[%s3 + $0x630] sm:$0xff]
        %v3561 = vld [vmem:[%s3 + $0x638] sm:$0xff]
        %v3562 = vld [vmem:[%s3 + $0x640] sm:$0xff]
        %v3563 = vld [vmem:[%s3 + $0x648] sm:$0xff]
        %v3564 = vld [vmem:[%s3 + $0x650] sm:$0xff]
        %v3565 = vld [vmem:[%s3 + $0x658] sm:$0xff]
        %v3566 = vld [vmem:[%s3 + $0x660] sm:$0xff]
        %v3567 = vld [vmem:[%s3 + $0x668] sm:$0xff]
        %v3568 = vld [vmem:[%s3 + $0x670] sm:$0xff]
        %v3569 = vld [vmem:[%s3 + $0x678] sm:$0xff]
        %v3570 = vld [vmem:[%s3 + $0x680] sm:$0xff]
        %v3571 = vld [vmem:[%s3 + $0x688] sm:$0xff]
        %v3572 = vld [vmem:[%s3 + $0x690] sm:$0xff]
        %v3573 = vld [vmem:[%s3 + $0x698] sm:$0xff]
        %v3574 = vld [vmem:[%s3 + $0x6a0] sm:$0xff]
        %v3575 = vld [vmem:[%s3 + $0x6a8] sm:$0xff]
        %v3576 = vld [vmem:[%s3 + $0x6b0] sm:$0xff]
        %v3577 = vld [vmem:[%s3 + $0x6b8] sm:$0xff]
        %v3578 = vld [vmem:[%s3 + $0x6c0] sm:$0xff]
        %v3579 = vld [vmem:[%s3 + $0x6c8] sm:$0xff]
        %v3580 = vld [vmem:[%s3 + $0x6d0] sm:$0xff]
        %v3581 = vld [vmem:[%s3 + $0x6d8] sm:$0xff]
        %v3582 = vld [vmem:[%s3 + $0x6e0] sm:$0xff]
        %v3583 = vld [vmem:[%s3 + $0x6e8] sm:$0xff]
        %v3584 = vld [vmem:[%s3 + $0x6f0] sm:$0xff]
        %v3585 = vld [vmem:[%s3 + $0x6f8] sm:$0xff]
        %v3586 = vld [vmem:[%s3 + $0x700] sm:$0xff]
        %v3587 = vld [vmem:[%s3 + $0x708] sm:$0xff]
        %v3588 = vld [vmem:[%s3 + $0x710] sm:$0xff]
        %v3589 = vld [vmem:[%s3 + $0x718] sm:$0xff]
        %v3590 = vld [vmem:[%s3 + $0x720] sm:$0xff]
        %v3591 = vld [vmem:[%s3 + $0x728] sm:$0xff]
        %v3592 = vld [vmem:[%s3 + $0x730] sm:$0xff]
        %v3593 = vld [vmem:[%s3 + $0x738] sm:$0xff]
        %v3594 = vld [vmem:[%s3 + $0x740] sm:$0xff]
        %v3595 = vld [vmem:[%s3 + $0x748] sm:$0xff]
        %v3596 = vld [vmem:[%s3 + $0x750] sm:$0xff]
        %v3597 = vld [vmem:[%s3 + $0x758] sm:$0xff]
        %v3598 = vld [vmem:[%s3 + $0x760] sm:$0xff]
        %v3599 = vld [vmem:[%s3 + $0x768] sm:$0xff]
        %v3600 = vld [vmem:[%s3 + $0x770] sm:$0xff]
        %v3601 = vld [vmem:[%s3 + $0x778] sm:$0xff]
        %v3602 = vld [vmem:[%s3 + $0x780] sm:$0xff]
        %v3603 = vld [vmem:[%s3 + $0x788] sm:$0xff]
        %v3604 = vld [vmem:[%s3 + $0x790] sm:$0xff]
        %v3605 = vld [vmem:[%s3 + $0x798] sm:$0xff]
        %v3606 = vld [vmem:[%s3 + $0x7a0] sm:$0xff]
        %v3607 = vld [vmem:[%s3 + $0x7a8] sm:$0xff]
        %v3608 = vld [vmem:[%s3 + $0x7b0] sm:$0xff]
        %v3609 = vld [vmem:[%s3 + $0x7b8] sm:$0xff]
        %v3610 = vld [vmem:[%s3 + $0x7c0] sm:$0xff]
        %v3611 = vld [vmem:[%s3 + $0x7c8] sm:$0xff]
        %v3612 = vld [vmem:[%s3 + $0x7d0] sm:$0xff]
        %v3613 = vld [vmem:[%s3 + $0x7d8] sm:$0xff]
        %v3614 = vld [vmem:[%s3 + $0x7e0] sm:$0xff]
        %v3615 = vld [vmem:[%s3 + $0x7e8] sm:$0xff]
        %v3616 = vld [vmem:[%s3 + $0x7f0] sm:$0xff]
        %v3617 = vld [vmem:[%s3 + $0x7f8] sm:$0xff]
        %v3618 = vld [vmem:[%s3 + $0x800] sm:$0xff]
        %v3619 = vld [vmem:[%s3 + $0x808] sm:$0xff]
        %v3620 = vld [vmem:[%s3 + $0x810] sm:$0xff]
        %v3621 = vld [vmem:[%s3 + $0x818] sm:$0xff]
        %v3622 = vld [vmem:[%s3 + $0x820] sm:$0xff]
        %v3623 = vld [vmem:[%s3 + $0x828] sm:$0xff]
        %v3624 = vld [vmem:[%s3 + $0x830] sm:$0xff]
        %v3625 = vld [vmem:[%s3 + $0x838] sm:$0xff]
        %v3626 = vld [vmem:[%s3 + $0x840] sm:$0xff]
        %v3627 = vld [vmem:[%s3 + $0x848] sm:$0xff]
        %v3628 = vld [vmem:[%s3 + $0x850] sm:$0xff]
        %v3629 = vld [vmem:[%s3 + $0x858] sm:$0xff]
        %v3630 = vld [vmem:[%s3 + $0x860] sm:$0xff]
        %v3631 = vld [vmem:[%s3 + $0x868] sm:$0xff]
        %v3632 = vld [vmem:[%s3 + $0x870] sm:$0xff]
        %v3633 = vld [vmem:[%s3 + $0x878] sm:$0xff]
        %v3634 = vld [vmem:[%s3 + $0x880] sm:$0xff]
        %v3635 = vld [vmem:[%s3 + $0x888] sm:$0xff]
        %v3636 = vld [vmem:[%s3 + $0x890] sm:$0xff]
        %v3637 = vld [vmem:[%s3 + $0x898] sm:$0xff]
        %v3638 = vld [vmem:[%s3 + $0x8a0] sm:$0xff]
        %v3639 = vld [vmem:[%s3 + $0x8a8] sm:$0xff]
        %v3640 = vld [vmem:[%s3 + $0x8b0] sm:$0xff]
        %v3641 = vld [vmem:[%s3 + $0x8b8] sm:$0xff]
        %v3642 = vld [vmem:[%s3 + $0x8c0] sm:$0xff]
        %v3643 = vld [vmem:[%s3 + $0x8c8] sm:$0xff]
        %v3644 = vld [vmem:[%s3 + $0x8d0] sm:$0xff]
        %v3645 = vld [vmem:[%s3 + $0x8d8] sm:$0xff]
        %v3646 = vld [vmem:[%s3 + $0x8e0] sm:$0xff]
        %v3647 = vld [vmem:[%s3 + $0x8e8] sm:$0xff]
        %v3648 = vld [vmem:[%s3 + $0x8f0] sm:$0xff]
        %v3649 = vld [vmem:[%s3 + $0x8f8] sm:$0xff]
        %v3650 = vld [vmem:[%s3 + $0x900] sm:$0xff]
        %v3651 = vld [vmem:[%s3 + $0x908] sm:$0xff]
        %v3652 = vld [vmem:[%s3 + $0x910] sm:$0xff]
        %v3653 = vld [vmem:[%s3 + $0x918] sm:$0xff]
        %v3654 = vld [vmem:[%s3 + $0x920] sm:$0xff]
        %v3655 = vld [vmem:[%s3 + $0x928] sm:$0xff]
        %v3656 = vld [vmem:[%s3 + $0x930] sm:$0xff]
        %v3657 = vld [vmem:[%s3 + $0x938] sm:$0xff]
        %v3658 = vld [vmem:[%s3 + $0x940] sm:$0xff]
        %v3659 = vld [vmem:[%s3 + $0x948] sm:$0xff]
        %v3660 = vld [vmem:[%s3 + $0x950] sm:$0xff]
        %v3661 = vld [vmem:[%s3 + $0x958] sm:$0xff]
        %v3662 = vld [vmem:[%s3 + $0x960] sm:$0xff]
        %v3663 = vld [vmem:[%s3 + $0x968] sm:$0xff]
        %v3664 = vld [vmem:[%s3 + $0x970] sm:$0xff]
        %v3665 = vld [vmem:[%s3 + $0x978] sm:$0xff]
        %v3666 = vld [vmem:[%s3 + $0x980] sm:$0xff]
        %v3667 = vld [vmem:[%s3 + $0x988] sm:$0xff]
        %v3668 = vld [vmem:[%s3 + $0x990] sm:$0xff]
        %v3669 = vld [vmem:[%s3 + $0x998] sm:$0xff]
        %v3670 = vld [vmem:[%s3 + $0x9a0] sm:$0xff]
        %v3671 = vld [vmem:[%s3 + $0x9a8] sm:$0xff]
        %v3672 = vld [vmem:[%s3 + $0x9b0] sm:$0xff]
        %v3673 = vld [vmem:[%s3 + $0x9b8] sm:$0xff]
        %v3674 = vld [vmem:[%s3 + $0x9c0] sm:$0xff]
        %v3675 = vld [vmem:[%s3 + $0x9c8] sm:$0xff]
        %v3676 = vld [vmem:[%s3 + $0x9d0] sm:$0xff]
        %v3677 = vld [vmem:[%s3 + $0x9d8] sm:$0xff]
        %v3678 = vld [vmem:[%s3 + $0x9e0] sm:$0xff]
        %v3679 = vld [vmem:[%s3 + $0x9e8] sm:$0xff]
        %v3680 = vld [vmem:[%s3 + $0x9f0] sm:$0xff]
        %v3681 = vld [vmem:[%s3 + $0x9f8] sm:$0xff]
        %v3682 = vld [vmem:[%s10 + $0x20] sm:$0xff]
        %v3683 = vld [vmem:[%s10 + $0x28] sm:$0xff]
        %v3684 = vld [vmem:[%s10 + $0x30] sm:$0xf]
        %v3688 = vlaneseq
        %v3689 = vshrl.u32 %v3688, 7
        %v3690 = vsub.s32 0, %v3689
        %v3691 = vrot.slane %v3682, %v3690
        %v3692 = vlaneseq
        %v3693 = vshrl.u32 %v3692, 7
        %v3694 = vsub.s32 4, %v3693
        %v3695 = vrot.slane %v3682, %v3694
        %v3696 = vlaneseq
        %v3697 = vshrl.u32 %v3696, 7
        %v3698 = vsub.s32 0, %v3697
        %v3699 = vrot.slane %v3683, %v3698
        %v3700 = vlaneseq
        %v3701 = vshrl.u32 %v3700, 7
        %v3702 = vsub.s32 4, %v3701
        %v3703 = vrot.slane %v3683, %v3702
        %v3704 = vlaneseq
        %v3705 = vshrl.u32 %v3704, 7
        %v3706 = vsub.s32 0, %v3705
        %v3707 = vrot.slane %v3684, %v3706
        %v3713 = vlaneseq
        %v3714 = vshrl.u32 %v3713, 7
        %v3715 = vsub.s32 0, %v3714
        %v3716 = vrot.slane %v3691, %v3715
        %v3717 = vlaneseq
        %v3718 = vshrl.u32 %v3717, 7
        %v3719 = vsub.s32 0, %v3718
        %v3720 = vrot.slane %v3695, %v3719
        %v3721 = vlaneseq
        %v3722 = vshrl.u32 %v3721, 7
        %v3723 = vsub.s32 0, %v3722
        %v3724 = vrot.slane %v3699, %v3723
        %v3725 = vlaneseq
        %v3726 = vshrl.u32 %v3725, 7
        %v3727 = vsub.s32 0, %v3726
        %v3728 = vrot.slane %v3703, %v3727
        %v3729 = vlaneseq
        %v3730 = vshrl.u32 %v3729, 7
        %v3731 = vsub.s32 0, %v3730
        %v3732 = vrot.slane %v3707, %v3731
        %3733 = vmatprep.subr.mxu0 %v3363
        %3734 = vmatpush1.msra.mxu0 %v3362
        %3735 = vmatprep.subr.mxu0 %v3368
        %3736 = vmatpush1.msra.mxu0 %v3367
        %3737 = vmatprep.subr.mxu0 %v3373
        %3738 = vmatpush1.msra.mxu0 %v3372
        %3739 = vmatprep.subr.mxu0 %v3378
        %3740 = vmatpush1.msra.mxu0 %v3377
        %3741 = vmatprep.subr.mxu0 %v3383
        %3742 = vmatpush1.msra.mxu0 %v3382
        %3743 = vmatprep.subr.mxu0 %v3388
        %3744 = vmatpush1.msra.mxu0 %v3387
        %3745 = vmatprep.subr.mxu0 %v3393
        %3746 = vmatpush1.msra.mxu0 %v3392
        %3747 = vmatprep.subr.mxu0 %v3398
        %3748 = vmatpush1.msra.mxu0 %v3397
        %3749 = vmatprep.subr.mxu0 %v3403
        %3750 = vmatpush1.msra.mxu0 %v3402
        %3751 = vmatprep.subr.mxu0 %v3408
        %3752 = vmatpush1.msra.mxu0 %v3407
        %3753 = vmatprep.subr.mxu0 %v3413
        %3754 = vmatpush1.msra.mxu0 %v3412
        %3755 = vmatprep.subr.mxu0 %v3418
        %3756 = vmatpush1.msra.mxu0 %v3417
        %3757 = vmatprep.subr.mxu0 %v3423
        %3758 = vmatpush1.msra.mxu0 %v3422
        %3759 = vmatprep.subr.mxu0 %v3428
        %3760 = vmatpush1.msra.mxu0 %v3427
        %3761 = vmatprep.subr.mxu0 %v3433
        %3762 = vmatpush1.msra.mxu0 %v3432
        %3763 = vmatprep.subr.mxu0 %v3438
        %3764 = vmatpush1.msra.mxu0 %v3437
        %3765 = vmatprep.subr.mxu0 %v3443
        %3766 = vmatpush1.msra.mxu0 %v3442
        %3767 = vmatprep.subr.mxu0 %v3448
        %3768 = vmatpush1.msra.mxu0 %v3447
        %3769 = vmatprep.subr.mxu0 %v3453
        %3770 = vmatpush1.msra.mxu0 %v3452
        %3771 = vmatprep.subr.mxu0 %v3458
        %3772 = vmatpush1.msra.mxu0 %v3457
        %3773 = vmatprep.subr.mxu0 %v3463
        %3774 = vmatpush1.msra.mxu0 %v3462
        %3775 = vmatprep.subr.mxu0 %v3468
        %3776 = vmatpush1.msra.mxu0 %v3467
        %3777 = vmatprep.subr.mxu0 %v3473
        %3778 = vmatpush1.msra.mxu0 %v3472
        %3779 = vmatprep.subr.mxu0 %v3478
        %3780 = vmatpush1.msra.mxu0 %v3477
        %3781 = vmatprep.subr.mxu0 %v3483
        %3782 = vmatpush1.msra.mxu0 %v3482
        %3783 = vmatprep.subr.mxu0 %v3488
        %3784 = vmatpush1.msra.mxu0 %v3487
        %3785 = vmatprep.subr.mxu0 %v3493
        %3786 = vmatpush1.msra.mxu0 %v3492
        %3787 = vmatprep.subr.mxu0 %v3498
        %3788 = vmatpush1.msra.mxu0 %v3497
        %3789 = vmatprep.subr.mxu0 %v3503
        %3790 = vmatpush1.msra.mxu0 %v3502
        %3791 = vmatprep.subr.mxu0 %v3508
        %3792 = vmatpush1.msra.mxu0 %v3507
        %3793 = vmatprep.subr.mxu0 %v3513
        %3794 = vmatpush1.msra.mxu0 %v3512
        %3795 = vmatprep.subr.mxu0 %v3518
        %3796 = vmatpush1.msra.mxu0 %v3517
        %3797 = vmatprep.mubr.f32.mxu0 %v3359
        %3798 = vmatmul.mubr.f32.gmra.mrb[0].mxu0 %v3358
        %v3799 = vpop.f32.mrb[0].mxu0
        %v3800 = vadd.f32 %v3716, %v3799
        %v3801 = vpop.f32.mrb[0].mxu0
        %v3802 = vadd.f32 %v3720, %v3801
        %3803 = vdwg.mxu0
        %3804 = vmatprep.subr.mxu0 %v3523
        %3805 = vmatpush1.msra.mxu0 %v3522
        %3806 = vmatprep.subr.mxu0 %v3528
        %3807 = vmatpush1.msra.mxu0 %v3527
        %3808 = vmatprep.subr.mxu0 %v3533
        %3809 = vmatpush1.msra.mxu0 %v3532
        %3810 = vmatprep.subr.mxu0 %v3538
        %3811 = vmatpush1.msra.mxu0 %v3537
        %3812 = vmatprep.subr.mxu0 %v3543
        %3813 = vmatpush1.msra.mxu0 %v3542
        %3814 = vmatprep.subr.mxu0 %v3548
        %3815 = vmatpush1.msra.mxu0 %v3547
        %3816 = vmatprep.subr.mxu0 %v3553
        %3817 = vmatpush1.msra.mxu0 %v3552
        %3818 = vmatprep.subr.mxu0 %v3558
        %3819 = vmatpush1.msra.mxu0 %v3557
        %3820 = vmatprep.subr.mxu0 %v3563
        %3821 = vmatpush1.msra.mxu0 %v3562
        %3822 = vmatprep.subr.mxu0 %v3568
        %3823 = vmatpush1.msra.mxu0 %v3567
        %3824 = vmatprep.subr.mxu0 %v3573
        %3825 = vmatpush1.msra.mxu0 %v3572
        %3826 = vmatprep.subr.mxu0 %v3578
        %3827 = vmatpush1.msra.mxu0 %v3577
        %3828 = vmatprep.subr.mxu0 %v3583
        %3829 = vmatpush1.msra.mxu0 %v3582
        %3830 = vmatprep.subr.mxu0 %v3588
        %3831 = vmatpush1.msra.mxu0 %v3587
        %3832 = vmatprep.subr.mxu0 %v3593
        %3833 = vmatpush1.msra.mxu0 %v3592
        %3834 = vmatprep.subr.mxu0 %v3598
        %3835 = vmatpush1.msra.mxu0 %v3597
        %3836 = vmatprep.subr.mxu0 %v3603
        %3837 = vmatpush1.msra.mxu0 %v3602
        %3838 = vmatprep.subr.mxu0 %v3608
        %3839 = vmatpush1.msra.mxu0 %v3607
        %3840 = vmatprep.subr.mxu0 %v3613
        %3841 = vmatpush1.msra.mxu0 %v3612
        %3842 = vmatprep.subr.mxu0 %v3618
        %3843 = vmatpush1.msra.mxu0 %v3617
        %3844 = vmatprep.subr.mxu0 %v3623
        %3845 = vmatpush1.msra.mxu0 %v3622
        %3846 = vmatprep.subr.mxu0 %v3628
        %3847 = vmatpush1.msra.mxu0 %v3627
        %3848 = vmatprep.subr.mxu0 %v3633
        %3849 = vmatpush1.msra.mxu0 %v3632
        %3850 = vmatprep.subr.mxu0 %v3638
        %3851 = vmatpush1.msra.mxu0 %v3637
        %3852 = vmatprep.subr.mxu0 %v3643
        %3853 = vmatpush1.msra.mxu0 %v3642
        %3854 = vmatprep.subr.mxu0 %v3648
        %3855 = vmatpush1.msra.mxu0 %v3647
        %3856 = vmatprep.subr.mxu0 %v3653
        %3857 = vmatpush1.msra.mxu0 %v3652
        %3858 = vmatprep.subr.mxu0 %v3658
        %3859 = vmatpush1.msra.mxu0 %v3657
        %3860 = vmatprep.subr.mxu0 %v3663
        %3861 = vmatpush1.msra.mxu0 %v3662
        %3862 = vmatprep.subr.mxu0 %v3668
        %3863 = vmatpush1.msra.mxu0 %v3667
        %3864 = vmatprep.subr.mxu0 %v3673
        %3865 = vmatpush1.msra.mxu0 %v3672
        %3866 = vmatprep.subr.mxu0 %v3678
        %3867 = vmatpush1.msra.mxu0 %v3677
        %3868 = vmatprep.mubr.f32.mxu0 %v3361
        %3869 = vmatmul.mubr.f32.gmra.mrb[0].mxu0 %v3360
        %v3870 = vpop.f32.mrb[0].mxu0
        %v3871 = vadd.f32 %v3800, %v3870
        %v3872 = vpop.f32.mrb[0].mxu0
        %v3873 = vadd.f32 %v3802, %v3872
        %3874 = vdwg.mxu0
        %3875 = vmatprep.subr.mxu0 %v3365
        %3876 = vmatpush1.msra.mxu0 %v3364
        %3877 = vmatprep.subr.mxu0 %v3370
        %3878 = vmatpush1.msra.mxu0 %v3369
        %3879 = vmatprep.subr.mxu0 %v3375
        %3880 = vmatpush1.msra.mxu0 %v3374
        %3881 = vmatprep.subr.mxu0 %v3380
        %3882 = vmatpush1.msra.mxu0 %v3379
        %3883 = vmatprep.subr.mxu0 %v3385
        %3884 = vmatpush1.msra.mxu0 %v3384
        %3885 = vmatprep.subr.mxu0 %v3390
        %3886 = vmatpush1.msra.mxu0 %v3389
        %3887 = vmatprep.subr.mxu0 %v3395
        %3888 = vmatpush1.msra.mxu0 %v3394
        %3889 = vmatprep.subr.mxu0 %v3400
        %3890 = vmatpush1.msra.mxu0 %v3399
        %3891 = vmatprep.subr.mxu0 %v3405
        %3892 = vmatpush1.msra.mxu0 %v3404
        %3893 = vmatprep.subr.mxu0 %v3410
        %3894 = vmatpush1.msra.mxu0 %v3409
        %3895 = vmatprep.subr.mxu0 %v3415
        %3896 = vmatpush1.msra.mxu0 %v3414
        %3897 = vmatprep.subr.mxu0 %v3420
        %3898 = vmatpush1.msra.mxu0 %v3419
        %3899 = vmatprep.subr.mxu0 %v3425
        %3900 = vmatpush1.msra.mxu0 %v3424
        %3901 = vmatprep.subr.mxu0 %v3430
        %3902 = vmatpush1.msra.mxu0 %v3429
        %3903 = vmatprep.subr.mxu0 %v3435
        %3904 = vmatpush1.msra.mxu0 %v3434
        %3905 = vmatprep.subr.mxu0 %v3440
        %3906 = vmatpush1.msra.mxu0 %v3439
        %3907 = vmatprep.subr.mxu0 %v3445
        %3908 = vmatpush1.msra.mxu0 %v3444
        %3909 = vmatprep.subr.mxu0 %v3450
        %3910 = vmatpush1.msra.mxu0 %v3449
        %3911 = vmatprep.subr.mxu0 %v3455
        %3912 = vmatpush1.msra.mxu0 %v3454
        %3913 = vmatprep.subr.mxu0 %v3460
        %3914 = vmatpush1.msra.mxu0 %v3459
        %3915 = vmatprep.subr.mxu0 %v3465
        %3916 = vmatpush1.msra.mxu0 %v3464
        %3917 = vmatprep.subr.mxu0 %v3470
        %3918 = vmatpush1.msra.mxu0 %v3469
        %3919 = vmatprep.subr.mxu0 %v3475
        %3920 = vmatpush1.msra.mxu0 %v3474
        %3921 = vmatprep.subr.mxu0 %v3480
        %3922 = vmatpush1.msra.mxu0 %v3479
        %3923 = vmatprep.subr.mxu0 %v3485
        %3924 = vmatpush1.msra.mxu0 %v3484
        %3925 = vmatprep.subr.mxu0 %v3490
        %3926 = vmatpush1.msra.mxu0 %v3489
        %3927 = vmatprep.subr.mxu0 %v3495
        %3928 = vmatpush1.msra.mxu0 %v3494
        %3929 = vmatprep.subr.mxu0 %v3500
        %3930 = vmatpush1.msra.mxu0 %v3499
        %3931 = vmatprep.subr.mxu0 %v3505
        %3932 = vmatpush1.msra.mxu0 %v3504
        %3933 = vmatprep.subr.mxu0 %v3510
        %3934 = vmatpush1.msra.mxu0 %v3509
        %3935 = vmatprep.subr.mxu0 %v3515
        %3936 = vmatpush1.msra.mxu0 %v3514
        %3937 = vmatprep.subr.mxu0 %v3520
        %3938 = vmatpush1.msra.mxu0 %v3519
        %3939 = vmatprep.mubr.f32.mxu0 %v3359
        %3940 = vmatmul.mubr.f32.gmra.mrb[0].mxu0 %v3358
        %v3941 = vpop.f32.mrb[0].mxu0
        %v3942 = vadd.f32 %v3724, %v3941
        %v3943 = vpop.f32.mrb[0].mxu0
        %v3944 = vadd.f32 %v3728, %v3943
        %3945 = vdwg.mxu0
        %3946 = vmatprep.subr.mxu0 %v3525
        %3947 = vmatpush1.msra.mxu0 %v3524
        %3948 = vmatprep.subr.mxu0 %v3530
        %3949 = vmatpush1.msra.mxu0 %v3529
        %3950 = vmatprep.subr.mxu0 %v3535
        %3951 = vmatpush1.msra.mxu0 %v3534
        %3952 = vmatprep.subr.mxu0 %v3540
        %3953 = vmatpush1.msra.mxu0 %v3539
        %3954 = vmatprep.subr.mxu0 %v3545
        %3955 = vmatpush1.msra.mxu0 %v3544
        %3956 = vmatprep.subr.mxu0 %v3550
        %3957 = vmatpush1.msra.mxu0 %v3549
        %3958 = vmatprep.subr.mxu0 %v3555
        %3959 = vmatpush1.msra.mxu0 %v3554
        %3960 = vmatprep.subr.mxu0 %v3560
        %3961 = vmatpush1.msra.mxu0 %v3559
        %3962 = vmatprep.subr.mxu0 %v3565
        %3963 = vmatpush1.msra.mxu0 %v3564
        %3964 = vmatprep.subr.mxu0 %v3570
        %3965 = vmatpush1.msra.mxu0 %v3569
        %3966 = vmatprep.subr.mxu0 %v3575
        %3967 = vmatpush1.msra.mxu0 %v3574
        %3968 = vmatprep.subr.mxu0 %v3580
        %3969 = vmatpush1.msra.mxu0 %v3579
        %3970 = vmatprep.subr.mxu0 %v3585
        %3971 = vmatpush1.msra.mxu0 %v3584
        %3972 = vmatprep.subr.mxu0 %v3590
        %3973 = vmatpush1.msra.mxu0 %v3589
        %3974 = vmatprep.subr.mxu0 %v3595
        %3975 = vmatpush1.msra.mxu0 %v3594
        %3976 = vmatprep.subr.mxu0 %v3600
        %3977 = vmatpush1.msra.mxu0 %v3599
        %3978 = vmatprep.subr.mxu0 %v3605
        %3979 = vmatpush1.msra.mxu0 %v3604
        %3980 = vmatprep.subr.mxu0 %v3610
        %3981 = vmatpush1.msra.mxu0 %v3609
        %3982 = vmatprep.subr.mxu0 %v3615
        %3983 = vmatpush1.msra.mxu0 %v3614
        %3984 = vmatprep.subr.mxu0 %v3620
        %3985 = vmatpush1.msra.mxu0 %v3619
        %3986 = vmatprep.subr.mxu0 %v3625
        %3987 = vmatpush1.msra.mxu0 %v3624
        %3988 = vmatprep.subr.mxu0 %v3630
        %3989 = vmatpush1.msra.mxu0 %v3629
        %3990 = vmatprep.subr.mxu0 %v3635
        %3991 = vmatpush1.msra.mxu0 %v3634
        %3992 = vmatprep.subr.mxu0 %v3640
        %3993 = vmatpush1.msra.mxu0 %v3639
        %3994 = vmatprep.subr.mxu0 %v3645
        %3995 = vmatpush1.msra.mxu0 %v3644
        %3996 = vmatprep.subr.mxu0 %v3650
        %3997 = vmatpush1.msra.mxu0 %v3649
        %3998 = vmatprep.subr.mxu0 %v3655
        %3999 = vmatpush1.msra.mxu0 %v3654
        %4000 = vmatprep.subr.mxu0 %v3660
        %4001 = vmatpush1.msra.mxu0 %v3659
        %4002 = vmatprep.subr.mxu0 %v3665
        %4003 = vmatpush1.msra.mxu0 %v3664
        %4004 = vmatprep.subr.mxu0 %v3670
        %4005 = vmatpush1.msra.mxu0 %v3669
        %4006 = vmatprep.subr.mxu0 %v3675
        %4007 = vmatpush1.msra.mxu0 %v3674
        %4008 = vmatprep.subr.mxu0 %v3680
        %4009 = vmatpush1.msra.mxu0 %v3679
        %4010 = vmatprep.mubr.f32.mxu0 %v3361
        %4011 = vmatmul.mubr.f32.gmra.mrb[0].mxu0 %v3360
        %v4012 = vpop.f32.mrb[0].mxu0
        %v4013 = vadd.f32 %v3942, %v4012
        %v4014 = vpop.f32.mrb[0].mxu0
        %v4015 = vadd.f32 %v3944, %v4014
        %4016 = vdwg.mxu0
        %4017 = vmatprep.subr.mxu0 0.0
        %4018 = vmatpush1.msra.mxu0 %v3366
        %4019 = vmatprep.subr.mxu0 0.0
        %4020 = vmatpush1.msra.mxu0 %v3371
        %4021 = vmatprep.subr.mxu0 0.0
        %4022 = vmatpush1.msra.mxu0 %v3376
        %4023 = vmatprep.subr.mxu0 0.0
        %4024 = vmatpush1.msra.mxu0 %v3381
        %4025 = vmatprep.subr.mxu0 0.0
        %4026 = vmatpush1.msra.mxu0 %v3386
        %4027 = vmatprep.subr.mxu0 0.0
        %4028 = vmatpush1.msra.mxu0 %v3391
        %4029 = vmatprep.subr.mxu0 0.0
        %4030 = vmatpush1.msra.mxu0 %v3396
        %4031 = vmatprep.subr.mxu0 0.0
        %4032 = vmatpush1.msra.mxu0 %v3401
        %4033 = vmatprep.subr.mxu0 0.0
        %4034 = vmatpush1.msra.mxu0 %v3406
        %4035 = vmatprep.subr.mxu0 0.0
        %4036 = vmatpush1.msra.mxu0 %v3411
        %4037 = vmatprep.subr.mxu0 0.0
        %4038 = vmatpush1.msra.mxu0 %v3416
        %4039 = vmatprep.subr.mxu0 0.0
        %4040 = vmatpush1.msra.mxu0 %v3421
        %4041 = vmatprep.subr.mxu0 0.0
        %4042 = vmatpush1.msra.mxu0 %v3426
        %4043 = vmatprep.subr.mxu0 0.0
        %4044 = vmatpush1.msra.mxu0 %v3431
        %4045 = vmatprep.subr.mxu0 0.0
        %4046 = vmatpush1.msra.mxu0 %v3436
        %4047 = vmatprep.subr.mxu0 0.0
        %4048 = vmatpush1.msra.mxu0 %v3441
        %4049 = vmatprep.subr.mxu0 0.0
        %4050 = vmatpush1.msra.mxu0 %v3446
        %4051 = vmatprep.subr.mxu0 0.0
        %4052 = vmatpush1.msra.mxu0 %v3451
        %4053 = vmatprep.subr.mxu0 0.0
        %4054 = vmatpush1.msra.mxu0 %v3456
        %4055 = vmatprep.subr.mxu0 0.0
        %4056 = vmatpush1.msra.mxu0 %v3461
        %4057 = vmatprep.subr.mxu0 0.0
        %4058 = vmatpush1.msra.mxu0 %v3466
        %4059 = vmatprep.subr.mxu0 0.0
        %4060 = vmatpush1.msra.mxu0 %v3471
        %4061 = vmatprep.subr.mxu0 0.0
        %4062 = vmatpush1.msra.mxu0 %v3476
        %4063 = vmatprep.subr.mxu0 0.0
        %4064 = vmatpush1.msra.mxu0 %v3481
        %4065 = vmatprep.subr.mxu0 0.0
        %4066 = vmatpush1.msra.mxu0 %v3486
        %4067 = vmatprep.subr.mxu0 0.0
        %4068 = vmatpush1.msra.mxu0 %v3491
        %4069 = vmatprep.subr.mxu0 0.0
        %4070 = vmatpush1.msra.mxu0 %v3496
        %4071 = vmatprep.subr.mxu0 0.0
        %4072 = vmatpush1.msra.mxu0 %v3501
        %4073 = vmatprep.subr.mxu0 0.0
        %4074 = vmatpush1.msra.mxu0 %v3506
        %4075 = vmatprep.subr.mxu0 0.0
        %4076 = vmatpush1.msra.mxu0 %v3511
        %4077 = vmatprep.subr.mxu0 0.0
        %4078 = vmatpush1.msra.mxu0 %v3516
        %4079 = vmatprep.subr.mxu0 0.0
        %4080 = vmatpush1.msra.mxu0 %v3521
        %4081 = vmatprep.mubr.f32.mxu0 %v3359
        %4082 = vmatmul.mubr.f32.gmra.mrb[0].mxu0 %v3358
        %v4083 = vpop.f32.mrb[0].mxu0
        %v4084 = vadd.f32 %v3732, %v4083
        %v4085 = vpop.f32.mrb[0].mxu0
        %4086 = vdwg.mxu0
        %4087 = vmatprep.subr.mxu0 0.0
        %4088 = vmatpush1.msra.mxu0 %v3526
        %4089 = vmatprep.subr.mxu0 0.0
        %4090 = vmatpush1.msra.mxu0 %v3531
        %4091 = vmatprep.subr.mxu0 0.0
        %4092 = vmatpush1.msra.mxu0 %v3536
        %4093 = vmatprep.subr.mxu0 0.0
        %4094 = vmatpush1.msra.mxu0 %v3541
        %4095 = vmatprep.subr.mxu0 0.0
        %4096 = vmatpush1.msra.mxu0 %v3546
        %4097 = vmatprep.subr.mxu0 0.0
        %4098 = vmatpush1.msra.mxu0 %v3551
        %4099 = vmatprep.subr.mxu0 0.0
        %4100 = vmatpush1.msra.mxu0 %v3556
        %4101 = vmatprep.subr.mxu0 0.0
        %4102 = vmatpush1.msra.mxu0 %v3561
        %4103 = vmatprep.subr.mxu0 0.0
        %4104 = vmatpush1.msra.mxu0 %v3566
        %4105 = vmatprep.subr.mxu0 0.0
        %4106 = vmatpush1.msra.mxu0 %v3571
        %4107 = vmatprep.subr.mxu0 0.0
        %4108 = vmatpush1.msra.mxu0 %v3576
        %4109 = vmatprep.subr.mxu0 0.0
        %4110 = vmatpush1.msra.mxu0 %v3581
        %4111 = vmatprep.subr.mxu0 0.0
        %4112 = vmatpush1.msra.mxu0 %v3586
        %4113 = vmatprep.subr.mxu0 0.0
        %4114 = vmatpush1.msra.mxu0 %v3591
        %4115 = vmatprep.subr.mxu0 0.0
        %4116 = vmatpush1.msra.mxu0 %v3596
        %4117 = vmatprep.subr.mxu0 0.0
        %4118 = vmatpush1.msra.mxu0 %v3601
        %4119 = vmatprep.subr.mxu0 0.0
        %4120 = vmatpush1.msra.mxu0 %v3606
        %4121 = vmatprep.subr.mxu0 0.0
        %4122 = vmatpush1.msra.mxu0 %v3611
        %4123 = vmatprep.subr.mxu0 0.0
        %4124 = vmatpush1.msra.mxu0 %v3616
        %4125 = vmatprep.subr.mxu0 0.0
        %4126 = vmatpush1.msra.mxu0 %v3621
        %4127 = vmatprep.subr.mxu0 0.0
        %4128 = vmatpush1.msra.mxu0 %v3626
        %4129 = vmatprep.subr.mxu0 0.0
        %4130 = vmatpush1.msra.mxu0 %v3631
        %4131 = vmatprep.subr.mxu0 0.0
        %4132 = vmatpush1.msra.mxu0 %v3636
        %4133 = vmatprep.subr.mxu0 0.0
        %4134 = vmatpush1.msra.mxu0 %v3641
        %4135 = vmatprep.subr.mxu0 0.0
        %4136 = vmatpush1.msra.mxu0 %v3646
        %4137 = vmatprep.subr.mxu0 0.0
        %4138 = vmatpush1.msra.mxu0 %v3651
        %4139 = vmatprep.subr.mxu0 0.0
        %4140 = vmatpush1.msra.mxu0 %v3656
        %4141 = vmatprep.subr.mxu0 0.0
        %4142 = vmatpush1.msra.mxu0 %v3661
        %4143 = vmatprep.subr.mxu0 0.0
        %4144 = vmatpush1.msra.mxu0 %v3666
        %4145 = vmatprep.subr.mxu0 0.0
        %4146 = vmatpush1.msra.mxu0 %v3671
        %4147 = vmatprep.subr.mxu0 0.0
        %4148 = vmatpush1.msra.mxu0 %v3676
        %4149 = vmatprep.subr.mxu0 0.0
        %4150 = vmatpush1.msra.mxu0 %v3681
        %4151 = vmatprep.mubr.f32.mxu0 %v3361
        %4152 = vmatmul.mubr.f32.gmra.mrb[0].mxu0 %v3360
        %v4153 = vpop.f32.mrb[0].mxu0
        %v4154 = vadd.f32 %v4084, %v4153
        %v4155 = vpop.f32.mrb[0].mxu0
        %4156 = vdwg.mxu0
        %v4157 = vsel %vm753, %v3871, 0.0
        %v4158 = vrot.slane %v4157, 4
        %v4159 = vadd.f32 %v4157, %v4158
        %v4160 = vrot.slane %v4159, 2
        %v4161 = vadd.f32 %v4159, %v4160
        %v4162 = vrot.slane %v4161, 1
        %v4163 = vadd.f32 %v4161, %v4162
        %v4164 = vsel %vm753, %v3873, 0.0
        %v4165 = vrot.slane %v4164, 4
        %v4166 = vadd.f32 %v4164, %v4165
        %v4167 = vrot.slane %v4166, 2
        %v4168 = vadd.f32 %v4166, %v4167
        %v4169 = vrot.slane %v4168, 1
        %v4170 = vadd.f32 %v4168, %v4169
        %v4171 = vsel %vm753, %v4013, 0.0
        %v4172 = vrot.slane %v4171, 4
        %v4173 = vadd.f32 %v4171, %v4172
        %v4174 = vrot.slane %v4173, 2
        %v4175 = vadd.f32 %v4173, %v4174
        %v4176 = vrot.slane %v4175, 1
        %v4177 = vadd.f32 %v4175, %v4176
        %v4178 = vsel %vm753, %v4015, 0.0
        %v4179 = vrot.slane %v4178, 4
        %v4180 = vadd.f32 %v4178, %v4179
        %v4181 = vrot.slane %v4180, 2
        %v4182 = vadd.f32 %v4180, %v4181
        %v4183 = vrot.slane %v4182, 1
        %v4184 = vadd.f32 %v4182, %v4183
        %vm4185 = vcmask 517120
        %v4186 = vsel %vm4185, %v4154, 0.0
        %v4187 = vrot.slane %v4186, 4
        %v4188 = vadd.f32 %v4186, %v4187
        %v4189 = vrot.slane %v4188, 2
        %v4190 = vadd.f32 %v4188, %v4189
        %v4191 = vrot.slane %v4190, 1
        %v4192 = vadd.f32 %v4190, %v4191
        %v4193 = vmul.f32 %v4163, %v783
        %v4194 = vmul.f32 %v4170, %v783
        %v4195 = vmul.f32 %v4177, %v783
        %v4196 = vmul.f32 %v4184, %v783
        %v4197 = vmul.f32 %v4192, %v783
        %v4198 = vld [vmem:[%s6] sm:$0xff]
        %v4199 = vld [vmem:[%s6 + $0x8] sm:$0xff]
        %v4200 = vld [vmem:[%s6 + $0x10] sm:$0xff]
        %v4201 = vld [vmem:[%s6 + $0x18] sm:$0xff]
        %v4202 = vld [vmem:[%s6 + $0x20] sm:$0xff]
        %v4203 = vld [vmem:[%s6 + $0x28] sm:$0xff]
        %v4204 = vld [vmem:[%s6 + $0x30] sm:$0xff]
        %v4205 = vld [vmem:[%s6 + $0x38] sm:$0xff]
        %v4206 = vld [vmem:[%s6 + $0x40] sm:$0xff]
        %v4207 = vld [vmem:[%s6 + $0x48] sm:$0xff]
        %v4208 = vld [vmem:[%s6 + $0x50] sm:$0xff]
        %v4209 = vld [vmem:[%s6 + $0x58] sm:$0xff]
        %v4210 = vld [vmem:[%s6 + $0x60] sm:$0xff]
        %v4211 = vld [vmem:[%s6 + $0x68] sm:$0xff]
        %v4212 = vld [vmem:[%s6 + $0x70] sm:$0xff]
        %v4213 = vld [vmem:[%s6 + $0x78] sm:$0xff]
        %v4214 = vld [vmem:[%s6 + $0x80] sm:$0xff]
        %v4215 = vld [vmem:[%s6 + $0x88] sm:$0xff]
        %v4216 = vld [vmem:[%s6 + $0x90] sm:$0xff]
        %v4217 = vld [vmem:[%s6 + $0x98] sm:$0xff]
        %v4218 = vld [vmem:[%s6 + $0xa0] sm:$0xff]
        %v4219 = vld [vmem:[%s6 + $0xa8] sm:$0xff]
        %v4220 = vld [vmem:[%s6 + $0xb0] sm:$0xff]
        %v4221 = vld [vmem:[%s6 + $0xb8] sm:$0xff]
        %v4222 = vld [vmem:[%s6 + $0xc0] sm:$0xff]
        %v4223 = vld [vmem:[%s6 + $0xc8] sm:$0xff]
        %v4224 = vld [vmem:[%s6 + $0xd0] sm:$0xff]
        %v4225 = vld [vmem:[%s6 + $0xd8] sm:$0xff]
        %v4226 = vld [vmem:[%s6 + $0xe0] sm:$0xff]
        %v4227 = vld [vmem:[%s6 + $0xe8] sm:$0xff]
        %v4228 = vld [vmem:[%s6 + $0xf0] sm:$0xff]
        %v4229 = vld [vmem:[%s6 + $0xf8] sm:$0xff]
        %v4230 = vld [vmem:[%s6 + $0x100] sm:$0xff]
        %v4231 = vld [vmem:[%s6 + $0x108] sm:$0xff]
        %v4232 = vld [vmem:[%s6 + $0x110] sm:$0xff]
        %v4233 = vld [vmem:[%s6 + $0x118] sm:$0xff]
        %v4234 = vld [vmem:[%s6 + $0x120] sm:$0xff]
        %v4235 = vld [vmem:[%s6 + $0x128] sm:$0xff]
        %v4236 = vld [vmem:[%s6 + $0x130] sm:$0xff]
        %v4237 = vld [vmem:[%s6 + $0x138] sm:$0xff]
        %v4238 = vld [vmem:[%s6 + $0x140] sm:$0xff]
        %v4239 = vld [vmem:[%s6 + $0x148] sm:$0xff]
        %v4240 = vld [vmem:[%s6 + $0x150] sm:$0xff]
        %v4241 = vld [vmem:[%s6 + $0x158] sm:$0xff]
        %v4242 = vld [vmem:[%s6 + $0x160] sm:$0xff]
        %v4243 = vld [vmem:[%s6 + $0x168] sm:$0xff]
        %v4244 = vld [vmem:[%s6 + $0x170] sm:$0xff]
        %v4245 = vld [vmem:[%s6 + $0x178] sm:$0xff]
        %v4246 = vld [vmem:[%s6 + $0x180] sm:$0xff]
        %v4247 = vld [vmem:[%s6 + $0x188] sm:$0xff]
        %v4248 = vld [vmem:[%s6 + $0x190] sm:$0xff]
        %v4249 = vld [vmem:[%s6 + $0x198] sm:$0xff]
        %v4250 = vld [vmem:[%s6 + $0x1a0] sm:$0xff]
        %v4251 = vld [vmem:[%s6 + $0x1a8] sm:$0xff]
        %v4252 = vld [vmem:[%s6 + $0x1b0] sm:$0xff]
        %v4253 = vld [vmem:[%s6 + $0x1b8] sm:$0xff]
        %v4254 = vld [vmem:[%s6 + $0x1c0] sm:$0xff]
        %v4255 = vld [vmem:[%s6 + $0x1c8] sm:$0xff]
        %v4256 = vld [vmem:[%s6 + $0x1d0] sm:$0xff]
        %v4257 = vld [vmem:[%s6 + $0x1d8] sm:$0xff]
        %v4258 = vld [vmem:[%s6 + $0x1e0] sm:$0xff]
        %v4259 = vld [vmem:[%s6 + $0x1e8] sm:$0xff]
        %v4260 = vld [vmem:[%s6 + $0x1f0] sm:$0xff]
        %v4261 = vld [vmem:[%s6 + $0x1f8] sm:$0xff]
        %v4262 = vld [vmem:[%s6 + $0x200] sm:$0xff]
        %v4263 = vld [vmem:[%s6 + $0x208] sm:$0xff]
        %v4264 = vld [vmem:[%s6 + $0x210] sm:$0xff]
        %v4265 = vld [vmem:[%s6 + $0x218] sm:$0xff]
        %v4266 = vld [vmem:[%s6 + $0x220] sm:$0xff]
        %v4267 = vld [vmem:[%s6 + $0x228] sm:$0xff]
        %v4268 = vld [vmem:[%s6 + $0x230] sm:$0xff]
        %v4269 = vld [vmem:[%s6 + $0x238] sm:$0xff]
        %v4270 = vld [vmem:[%s6 + $0x240] sm:$0xff]
        %v4271 = vld [vmem:[%s6 + $0x248] sm:$0xff]
        %v4272 = vld [vmem:[%s6 + $0x250] sm:$0xff]
        %v4273 = vld [vmem:[%s6 + $0x258] sm:$0xff]
        %v4274 = vld [vmem:[%s6 + $0x260] sm:$0xff]
        %v4275 = vld [vmem:[%s6 + $0x268] sm:$0xff]
        %v4276 = vld [vmem:[%s6 + $0x270] sm:$0xff]
        %v4277 = vld [vmem:[%s6 + $0x278] sm:$0xff]
        %v4278 = vld [vmem:[%s6 + $0x280] sm:$0xff]
        %v4279 = vld [vmem:[%s6 + $0x288] sm:$0xff]
        %v4280 = vld [vmem:[%s6 + $0x290] sm:$0xff]
        %v4281 = vld [vmem:[%s6 + $0x298] sm:$0xff]
        %v4282 = vld [vmem:[%s6 + $0x2a0] sm:$0xff]
        %v4283 = vld [vmem:[%s6 + $0x2a8] sm:$0xff]
        %v4284 = vld [vmem:[%s6 + $0x2b0] sm:$0xff]
        %v4285 = vld [vmem:[%s6 + $0x2b8] sm:$0xff]
        %v4286 = vld [vmem:[%s6 + $0x2c0] sm:$0xff]
        %v4287 = vld [vmem:[%s6 + $0x2c8] sm:$0xff]
        %v4288 = vld [vmem:[%s6 + $0x2d0] sm:$0xff]
        %v4289 = vld [vmem:[%s6 + $0x2d8] sm:$0xff]
        %v4290 = vld [vmem:[%s6 + $0x2e0] sm:$0xff]
        %v4291 = vld [vmem:[%s6 + $0x2e8] sm:$0xff]
        %v4292 = vld [vmem:[%s6 + $0x2f0] sm:$0xff]
        %v4293 = vld [vmem:[%s6 + $0x2f8] sm:$0xff]
        %v4294 = vld [vmem:[%s6 + $0x300] sm:$0xff]
        %v4295 = vld [vmem:[%s6 + $0x308] sm:$0xff]
        %v4296 = vld [vmem:[%s6 + $0x310] sm:$0xff]
        %v4297 = vld [vmem:[%s6 + $0x318] sm:$0xff]
        %v4298 = vld [vmem:[%s6 + $0x320] sm:$0xff]
        %v4299 = vld [vmem:[%s6 + $0x328] sm:$0xff]
        %v4300 = vld [vmem:[%s6 + $0x330] sm:$0xff]
        %v4301 = vld [vmem:[%s6 + $0x338] sm:$0xff]
        %v4302 = vld [vmem:[%s6 + $0x340] sm:$0xff]
        %v4303 = vld [vmem:[%s6 + $0x348] sm:$0xff]
        %v4304 = vld [vmem:[%s6 + $0x350] sm:$0xff]
        %v4305 = vld [vmem:[%s6 + $0x358] sm:$0xff]
        %v4306 = vld [vmem:[%s6 + $0x360] sm:$0xff]
        %v4307 = vld [vmem:[%s6 + $0x368] sm:$0xff]
        %v4308 = vld [vmem:[%s6 + $0x370] sm:$0xff]
        %v4309 = vld [vmem:[%s6 + $0x378] sm:$0xff]
        %v4310 = vld [vmem:[%s6 + $0x380] sm:$0xff]
        %v4311 = vld [vmem:[%s6 + $0x388] sm:$0xff]
        %v4312 = vld [vmem:[%s6 + $0x390] sm:$0xff]
        %v4313 = vld [vmem:[%s6 + $0x398] sm:$0xff]
        %v4314 = vld [vmem:[%s6 + $0x3a0] sm:$0xff]
        %v4315 = vld [vmem:[%s6 + $0x3a8] sm:$0xff]
        %v4316 = vld [vmem:[%s6 + $0x3b0] sm:$0xff]
        %v4317 = vld [vmem:[%s6 + $0x3b8] sm:$0xff]
        %v4318 = vld [vmem:[%s6 + $0x3c0] sm:$0xff]
        %v4319 = vld [vmem:[%s6 + $0x3c8] sm:$0xff]
        %v4320 = vld [vmem:[%s6 + $0x3d0] sm:$0xff]
        %v4321 = vld [vmem:[%s6 + $0x3d8] sm:$0xff]
        %v4322 = vld [vmem:[%s6 + $0x3e0] sm:$0xff]
        %v4323 = vld [vmem:[%s6 + $0x3e8] sm:$0xff]
        %v4324 = vld [vmem:[%s6 + $0x3f0] sm:$0xff]
        %v4325 = vld [vmem:[%s6 + $0x3f8] sm:$0xff]
        %v4326 = vld [vmem:[%s6 + $0x400] sm:$0xff]
        %v4327 = vld [vmem:[%s6 + $0x408] sm:$0xff]
        %v4328 = vld [vmem:[%s6 + $0x410] sm:$0xff]
        %v4329 = vld [vmem:[%s6 + $0x418] sm:$0xff]
        %v4330 = vld [vmem:[%s6 + $0x420] sm:$0xff]
        %v4331 = vld [vmem:[%s6 + $0x428] sm:$0xff]
        %v4332 = vld [vmem:[%s6 + $0x430] sm:$0xff]
        %v4333 = vld [vmem:[%s6 + $0x438] sm:$0xff]
        %v4334 = vld [vmem:[%s6 + $0x440] sm:$0xff]
        %v4335 = vld [vmem:[%s6 + $0x448] sm:$0xff]
        %v4336 = vld [vmem:[%s6 + $0x450] sm:$0xff]
        %v4337 = vld [vmem:[%s6 + $0x458] sm:$0xff]
        %v4338 = vld [vmem:[%s6 + $0x460] sm:$0xff]
        %v4339 = vld [vmem:[%s6 + $0x468] sm:$0xff]
        %v4340 = vld [vmem:[%s6 + $0x470] sm:$0xff]
        %v4341 = vld [vmem:[%s6 + $0x478] sm:$0xff]
        %v4342 = vld [vmem:[%s6 + $0x480] sm:$0xff]
        %v4343 = vld [vmem:[%s6 + $0x488] sm:$0xff]
        %v4344 = vld [vmem:[%s6 + $0x490] sm:$0xff]
        %v4345 = vld [vmem:[%s6 + $0x498] sm:$0xff]
        %v4346 = vld [vmem:[%s6 + $0x4a0] sm:$0xff]
        %v4347 = vld [vmem:[%s6 + $0x4a8] sm:$0xff]
        %v4348 = vld [vmem:[%s6 + $0x4b0] sm:$0xff]
        %v4349 = vld [vmem:[%s6 + $0x4b8] sm:$0xff]
        %v4350 = vld [vmem:[%s6 + $0x4c0] sm:$0xff]
        %v4351 = vld [vmem:[%s6 + $0x4c8] sm:$0xff]
        %v4352 = vld [vmem:[%s6 + $0x4d0] sm:$0xff]
        %v4353 = vld [vmem:[%s6 + $0x4d8] sm:$0xff]
        %v4354 = vld [vmem:[%s6 + $0x4e0] sm:$0xff]
        %v4355 = vld [vmem:[%s6 + $0x4e8] sm:$0xff]
        %v4356 = vld [vmem:[%s6 + $0x4f0] sm:$0xff]
        %v4357 = vld [vmem:[%s6 + $0x4f8] sm:$0xff]
        %v4358 = vld [vmem:[%s6 + $0x500] sm:$0xff]
        %v4359 = vld [vmem:[%s6 + $0x508] sm:$0xff]
        %v4360 = vld [vmem:[%s6 + $0x510] sm:$0xff]
        %v4361 = vld [vmem:[%s6 + $0x518] sm:$0xff]
        %v4362 = vld [vmem:[%s6 + $0x520] sm:$0xff]
        %v4363 = vld [vmem:[%s6 + $0x528] sm:$0xff]
        %v4364 = vld [vmem:[%s6 + $0x530] sm:$0xff]
        %v4365 = vld [vmem:[%s6 + $0x538] sm:$0xff]
        %v4366 = vld [vmem:[%s6 + $0x540] sm:$0xff]
        %v4367 = vld [vmem:[%s6 + $0x548] sm:$0xff]
        %v4368 = vld [vmem:[%s6 + $0x550] sm:$0xff]
        %v4369 = vld [vmem:[%s6 + $0x558] sm:$0xff]
        %v4370 = vld [vmem:[%s6 + $0x560] sm:$0xff]
        %v4371 = vld [vmem:[%s6 + $0x568] sm:$0xff]
        %v4372 = vld [vmem:[%s6 + $0x570] sm:$0xff]
        %v4373 = vld [vmem:[%s6 + $0x578] sm:$0xff]
        %v4374 = vld [vmem:[%s6 + $0x580] sm:$0xff]
        %v4375 = vld [vmem:[%s6 + $0x588] sm:$0xff]
        %v4376 = vld [vmem:[%s6 + $0x590] sm:$0xff]
        %v4377 = vld [vmem:[%s6 + $0x598] sm:$0xff]
        %v4378 = vld [vmem:[%s6 + $0x5a0] sm:$0xff]
        %v4379 = vld [vmem:[%s6 + $0x5a8] sm:$0xff]
        %v4380 = vld [vmem:[%s6 + $0x5b0] sm:$0xff]
        %v4381 = vld [vmem:[%s6 + $0x5b8] sm:$0xff]
        %v4382 = vld [vmem:[%s6 + $0x5c0] sm:$0xff]
        %v4383 = vld [vmem:[%s6 + $0x5c8] sm:$0xff]
        %v4384 = vld [vmem:[%s6 + $0x5d0] sm:$0xff]
        %v4385 = vld [vmem:[%s6 + $0x5d8] sm:$0xff]
        %v4386 = vld [vmem:[%s6 + $0x5e0] sm:$0xff]
        %v4387 = vld [vmem:[%s6 + $0x5e8] sm:$0xff]
        %v4388 = vld [vmem:[%s6 + $0x5f0] sm:$0xff]
        %v4389 = vld [vmem:[%s6 + $0x5f8] sm:$0xff]
        %v4390 = vld [vmem:[%s6 + $0x600] sm:$0xff]
        %v4391 = vld [vmem:[%s6 + $0x608] sm:$0xff]
        %v4392 = vld [vmem:[%s6 + $0x610] sm:$0xff]
        %v4393 = vld [vmem:[%s6 + $0x618] sm:$0xff]
        %v4394 = vld [vmem:[%s6 + $0x620] sm:$0xff]
        %v4395 = vld [vmem:[%s6 + $0x628] sm:$0xff]
        %v4396 = vld [vmem:[%s6 + $0x630] sm:$0xff]
        %v4397 = vld [vmem:[%s6 + $0x638] sm:$0xff]
        %v4398 = vld [vmem:[%s6 + $0x640] sm:$0xff]
        %v4399 = vld [vmem:[%s6 + $0x648] sm:$0xff]
        %v4400 = vld [vmem:[%s6 + $0x650] sm:$0xff]
        %v4401 = vld [vmem:[%s6 + $0x658] sm:$0xff]
        %v4402 = vld [vmem:[%s6 + $0x660] sm:$0xff]
        %v4403 = vld [vmem:[%s6 + $0x668] sm:$0xff]
        %v4404 = vld [vmem:[%s6 + $0x670] sm:$0xff]
        %v4405 = vld [vmem:[%s6 + $0x678] sm:$0xff]
        %v4406 = vld [vmem:[%s6 + $0x680] sm:$0xff]
        %v4407 = vld [vmem:[%s6 + $0x688] sm:$0xff]
        %v4408 = vld [vmem:[%s6 + $0x690] sm:$0xff]
        %v4409 = vld [vmem:[%s6 + $0x698] sm:$0xff]
        %v4410 = vld [vmem:[%s6 + $0x6a0] sm:$0xff]
        %v4411 = vld [vmem:[%s6 + $0x6a8] sm:$0xff]
        %v4412 = vld [vmem:[%s6 + $0x6b0] sm:$0xff]
        %v4413 = vld [vmem:[%s6 + $0x6b8] sm:$0xff]
        %v4414 = vld [vmem:[%s6 + $0x6c0] sm:$0xff]
        %v4415 = vld [vmem:[%s6 + $0x6c8] sm:$0xff]
        %v4416 = vld [vmem:[%s6 + $0x6d0] sm:$0xff]
        %v4417 = vld [vmem:[%s6 + $0x6d8] sm:$0xff]
        %v4418 = vld [vmem:[%s6 + $0x6e0] sm:$0xff]
        %v4419 = vld [vmem:[%s6 + $0x6e8] sm:$0xff]
        %v4420 = vld [vmem:[%s6 + $0x6f0] sm:$0xff]
        %v4421 = vld [vmem:[%s6 + $0x6f8] sm:$0xff]
        %v4422 = vld [vmem:[%s6 + $0x700] sm:$0xff]
        %v4423 = vld [vmem:[%s6 + $0x708] sm:$0xff]
        %v4424 = vld [vmem:[%s6 + $0x710] sm:$0xff]
        %v4425 = vld [vmem:[%s6 + $0x718] sm:$0xff]
        %v4426 = vld [vmem:[%s6 + $0x720] sm:$0xff]
        %v4427 = vld [vmem:[%s6 + $0x728] sm:$0xff]
        %v4428 = vld [vmem:[%s6 + $0x730] sm:$0xff]
        %v4429 = vld [vmem:[%s6 + $0x738] sm:$0xff]
        %v4430 = vld [vmem:[%s6 + $0x740] sm:$0xff]
        %v4431 = vld [vmem:[%s6 + $0x748] sm:$0xff]
        %v4432 = vld [vmem:[%s6 + $0x750] sm:$0xff]
        %v4433 = vld [vmem:[%s6 + $0x758] sm:$0xff]
        %v4434 = vld [vmem:[%s6 + $0x760] sm:$0xff]
        %v4435 = vld [vmem:[%s6 + $0x768] sm:$0xff]
        %v4436 = vld [vmem:[%s6 + $0x770] sm:$0xff]
        %v4437 = vld [vmem:[%s6 + $0x778] sm:$0xff]
        %v4438 = vld [vmem:[%s6 + $0x780] sm:$0xff]
        %v4439 = vld [vmem:[%s6 + $0x788] sm:$0xff]
        %v4440 = vld [vmem:[%s6 + $0x790] sm:$0xff]
        %v4441 = vld [vmem:[%s6 + $0x798] sm:$0xff]
        %v4442 = vld [vmem:[%s6 + $0x7a0] sm:$0xff]
        %v4443 = vld [vmem:[%s6 + $0x7a8] sm:$0xff]
        %v4444 = vld [vmem:[%s6 + $0x7b0] sm:$0xff]
        %v4445 = vld [vmem:[%s6 + $0x7b8] sm:$0xff]
        %v4446 = vld [vmem:[%s6 + $0x7c0] sm:$0xff]
        %v4447 = vld [vmem:[%s6 + $0x7c8] sm:$0xff]
        %v4448 = vld [vmem:[%s6 + $0x7d0] sm:$0xff]
        %v4449 = vld [vmem:[%s6 + $0x7d8] sm:$0xff]
        %v4450 = vld [vmem:[%s6 + $0x7e0] sm:$0xff]
        %v4451 = vld [vmem:[%s6 + $0x7e8] sm:$0xff]
        %v4452 = vld [vmem:[%s6 + $0x7f0] sm:$0xff]
        %v4453 = vld [vmem:[%s6 + $0x7f8] sm:$0xff]
        %v4454 = vld [vmem:[%s6 + $0x800] sm:$0xff]
        %v4455 = vld [vmem:[%s6 + $0x808] sm:$0xff]
        %v4456 = vld [vmem:[%s6 + $0x810] sm:$0xff]
        %v4457 = vld [vmem:[%s6 + $0x818] sm:$0xff]
        %v4458 = vld [vmem:[%s6 + $0x820] sm:$0xff]
        %v4459 = vld [vmem:[%s6 + $0x828] sm:$0xff]
        %v4460 = vld [vmem:[%s6 + $0x830] sm:$0xff]
        %v4461 = vld [vmem:[%s6 + $0x838] sm:$0xff]
        %v4462 = vld [vmem:[%s6 + $0x840] sm:$0xff]
        %v4463 = vld [vmem:[%s6 + $0x848] sm:$0xff]
        %v4464 = vld [vmem:[%s6 + $0x850] sm:$0xff]
        %v4465 = vld [vmem:[%s6 + $0x858] sm:$0xff]
        %v4466 = vld [vmem:[%s6 + $0x860] sm:$0xff]
        %v4467 = vld [vmem:[%s6 + $0x868] sm:$0xff]
        %v4468 = vld [vmem:[%s6 + $0x870] sm:$0xff]
        %v4469 = vld [vmem:[%s6 + $0x878] sm:$0xff]
        %v4470 = vld [vmem:[%s6 + $0x880] sm:$0xff]
        %v4471 = vld [vmem:[%s6 + $0x888] sm:$0xff]
        %v4472 = vld [vmem:[%s6 + $0x890] sm:$0xff]
        %v4473 = vld [vmem:[%s6 + $0x898] sm:$0xff]
        %v4474 = vld [vmem:[%s6 + $0x8a0] sm:$0xff]
        %v4475 = vld [vmem:[%s6 + $0x8a8] sm:$0xff]
        %v4476 = vld [vmem:[%s6 + $0x8b0] sm:$0xff]
        %v4477 = vld [vmem:[%s6 + $0x8b8] sm:$0xff]
        %v4478 = vld [vmem:[%s6 + $0x8c0] sm:$0xff]
        %v4479 = vld [vmem:[%s6 + $0x8c8] sm:$0xff]
        %v4480 = vld [vmem:[%s6 + $0x8d0] sm:$0xff]
        %v4481 = vld [vmem:[%s6 + $0x8d8] sm:$0xff]
        %v4482 = vld [vmem:[%s6 + $0x8e0] sm:$0xff]
        %v4483 = vld [vmem:[%s6 + $0x8e8] sm:$0xff]
        %v4484 = vld [vmem:[%s6 + $0x8f0] sm:$0xff]
        %v4485 = vld [vmem:[%s6 + $0x8f8] sm:$0xff]
        %v4486 = vld [vmem:[%s6 + $0x900] sm:$0xff]
        %v4487 = vld [vmem:[%s6 + $0x908] sm:$0xff]
        %v4488 = vld [vmem:[%s6 + $0x910] sm:$0xff]
        %v4489 = vld [vmem:[%s6 + $0x918] sm:$0xff]
        %v4490 = vld [vmem:[%s6 + $0x920] sm:$0xff]
        %v4491 = vld [vmem:[%s6 + $0x928] sm:$0xff]
        %v4492 = vld [vmem:[%s6 + $0x930] sm:$0xff]
        %v4493 = vld [vmem:[%s6 + $0x938] sm:$0xff]
        %v4494 = vld [vmem:[%s6 + $0x940] sm:$0xff]
        %v4495 = vld [vmem:[%s6 + $0x948] sm:$0xff]
        %v4496 = vld [vmem:[%s6 + $0x950] sm:$0xff]
        %v4497 = vld [vmem:[%s6 + $0x958] sm:$0xff]
        %v4498 = vld [vmem:[%s6 + $0x960] sm:$0xff]
        %v4499 = vld [vmem:[%s6 + $0x968] sm:$0xff]
        %v4500 = vld [vmem:[%s6 + $0x970] sm:$0xff]
        %v4501 = vld [vmem:[%s6 + $0x978] sm:$0xff]
        %v4502 = vld [vmem:[%s6 + $0x980] sm:$0xff]
        %v4503 = vld [vmem:[%s6 + $0x988] sm:$0xff]
        %v4504 = vld [vmem:[%s6 + $0x990] sm:$0xff]
        %v4505 = vld [vmem:[%s6 + $0x998] sm:$0xff]
        %v4506 = vld [vmem:[%s6 + $0x9a0] sm:$0xff]
        %v4507 = vld [vmem:[%s6 + $0x9a8] sm:$0xff]
        %v4508 = vld [vmem:[%s6 + $0x9b0] sm:$0xff]
        %v4509 = vld [vmem:[%s6 + $0x9b8] sm:$0xff]
        %v4510 = vld [vmem:[%s6 + $0x9c0] sm:$0xff]
        %v4511 = vld [vmem:[%s6 + $0x9c8] sm:$0xff]
        %v4512 = vld [vmem:[%s6 + $0x9d0] sm:$0xff]
        %v4513 = vld [vmem:[%s6 + $0x9d8] sm:$0xff]
        %v4514 = vld [vmem:[%s6 + $0x9e0] sm:$0xff]
        %v4515 = vld [vmem:[%s6 + $0x9e8] sm:$0xff]
        %v4516 = vld [vmem:[%s6 + $0x9f0] sm:$0xff]
        %v4517 = vld [vmem:[%s6 + $0x9f8] sm:$0xff]
        %v4518 = vld [vmem:[%s6 + $0xa00] sm:$0xff]
        %v4519 = vld [vmem:[%s6 + $0xa08] sm:$0xff]
        %v4520 = vld [vmem:[%s6 + $0xa10] sm:$0xff]
        %v4521 = vld [vmem:[%s6 + $0xa18] sm:$0xff]
        %v4522 = vld [vmem:[%s6 + $0xa20] sm:$0xff]
        %v4523 = vld [vmem:[%s6 + $0xa28] sm:$0xff]
        %v4524 = vld [vmem:[%s6 + $0xa30] sm:$0xff]
        %v4525 = vld [vmem:[%s6 + $0xa38] sm:$0xff]
        %v4526 = vld [vmem:[%s6 + $0xa40] sm:$0xff]
        %v4527 = vld [vmem:[%s6 + $0xa48] sm:$0xff]
        %v4528 = vld [vmem:[%s6 + $0xa50] sm:$0xff]
        %v4529 = vld [vmem:[%s6 + $0xa58] sm:$0xff]
        %v4530 = vld [vmem:[%s6 + $0xa60] sm:$0xff]
        %v4531 = vld [vmem:[%s6 + $0xa68] sm:$0xff]
        %v4532 = vld [vmem:[%s6 + $0xa70] sm:$0xff]
        %v4533 = vld [vmem:[%s6 + $0xa78] sm:$0xff]
        %v4534 = vld [vmem:[%s6 + $0xa80] sm:$0xff]
        %v4535 = vld [vmem:[%s6 + $0xa88] sm:$0xff]
        %v4536 = vld [vmem:[%s6 + $0xa90] sm:$0xff]
        %v4537 = vld [vmem:[%s6 + $0xa98] sm:$0xff]
        %v4538 = vld [vmem:[%s6 + $0xaa0] sm:$0xff]
        %v4539 = vld [vmem:[%s6 + $0xaa8] sm:$0xff]
        %v4540 = vld [vmem:[%s6 + $0xab0] sm:$0xff]
        %v4541 = vld [vmem:[%s6 + $0xab8] sm:$0xff]
        %v4542 = vld [vmem:[%s6 + $0xac0] sm:$0xff]
        %v4543 = vld [vmem:[%s6 + $0xac8] sm:$0xff]
        %v4544 = vld [vmem:[%s6 + $0xad0] sm:$0xff]
        %v4545 = vld [vmem:[%s6 + $0xad8] sm:$0xff]
        %v4546 = vld [vmem:[%s6 + $0xae0] sm:$0xff]
        %v4547 = vld [vmem:[%s6 + $0xae8] sm:$0xff]
        %v4548 = vld [vmem:[%s6 + $0xaf0] sm:$0xff]
        %v4549 = vld [vmem:[%s6 + $0xaf8] sm:$0xff]
        %v4550 = vld [vmem:[%s6 + $0xb00] sm:$0xff]
        %v4551 = vld [vmem:[%s6 + $0xb08] sm:$0xff]
        %v4552 = vld [vmem:[%s6 + $0xb10] sm:$0xff]
        %v4553 = vld [vmem:[%s6 + $0xb18] sm:$0xff]
        %v4554 = vld [vmem:[%s6 + $0xb20] sm:$0xff]
        %v4555 = vld [vmem:[%s6 + $0xb28] sm:$0xff]
        %v4556 = vld [vmem:[%s6 + $0xb30] sm:$0xff]
        %v4557 = vld [vmem:[%s6 + $0xb38] sm:$0xff]
        %vm4558 = vcmask 523264
        %v4560 = vsel %vm4558, %v4197, 0
        %4562 = vmatprep.subr.mxu0 %v4199
        %4563 = vmatpush1.msra.mxu0 %v4198
        %4564 = vmatprep.subr.mxu0 %v4204
        %4565 = vmatpush1.msra.mxu0 %v4203
        %4566 = vmatprep.subr.mxu0 %v4209
        %4567 = vmatpush1.msra.mxu0 %v4208
        %4568 = vmatprep.subr.mxu0 %v4214
        %4569 = vmatpush1.msra.mxu0 %v4213
        %4570 = vmatprep.subr.mxu0 %v4219
        %4571 = vmatpush1.msra.mxu0 %v4218
        %4572 = vmatprep.subr.mxu0 %v4224
        %4573 = vmatpush1.msra.mxu0 %v4223
        %4574 = vmatprep.subr.mxu0 %v4229
        %4575 = vmatpush1.msra.mxu0 %v4228
        %4576 = vmatprep.subr.mxu0 %v4234
        %4577 = vmatpush1.msra.mxu0 %v4233
        %4578 = vmatprep.subr.mxu0 %v4239
        %4579 = vmatpush1.msra.mxu0 %v4238
        %4580 = vmatprep.subr.mxu0 %v4244
        %4581 = vmatpush1.msra.mxu0 %v4243
        %4582 = vmatprep.subr.mxu0 %v4249
        %4583 = vmatpush1.msra.mxu0 %v4248
        %4584 = vmatprep.subr.mxu0 %v4254
        %4585 = vmatpush1.msra.mxu0 %v4253
        %4586 = vmatprep.subr.mxu0 %v4259
        %4587 = vmatpush1.msra.mxu0 %v4258
        %4588 = vmatprep.subr.mxu0 %v4264
        %4589 = vmatpush1.msra.mxu0 %v4263
        %4590 = vmatprep.subr.mxu0 %v4269
        %4591 = vmatpush1.msra.mxu0 %v4268
        %4592 = vmatprep.subr.mxu0 %v4274
        %4593 = vmatpush1.msra.mxu0 %v4273
        %4594 = vmatprep.subr.mxu0 %v4279
        %4595 = vmatpush1.msra.mxu0 %v4278
        %4596 = vmatprep.subr.mxu0 %v4284
        %4597 = vmatpush1.msra.mxu0 %v4283
        %4598 = vmatprep.subr.mxu0 %v4289
        %4599 = vmatpush1.msra.mxu0 %v4288
        %4600 = vmatprep.subr.mxu0 %v4294
        %4601 = vmatpush1.msra.mxu0 %v4293
        %4602 = vmatprep.subr.mxu0 %v4299
        %4603 = vmatpush1.msra.mxu0 %v4298
        %4604 = vmatprep.subr.mxu0 %v4304
        %4605 = vmatpush1.msra.mxu0 %v4303
        %4606 = vmatprep.subr.mxu0 %v4309
        %4607 = vmatpush1.msra.mxu0 %v4308
        %4608 = vmatprep.subr.mxu0 %v4314
        %4609 = vmatpush1.msra.mxu0 %v4313
        %4610 = vmatprep.subr.mxu0 %v4319
        %4611 = vmatpush1.msra.mxu0 %v4318
        %4612 = vmatprep.subr.mxu0 %v4324
        %4613 = vmatpush1.msra.mxu0 %v4323
        %4614 = vmatprep.subr.mxu0 %v4329
        %4615 = vmatpush1.msra.mxu0 %v4328
        %4616 = vmatprep.subr.mxu0 %v4334
        %4617 = vmatpush1.msra.mxu0 %v4333
        %4618 = vmatprep.subr.mxu0 %v4339
        %4619 = vmatpush1.msra.mxu0 %v4338
        %4620 = vmatprep.subr.mxu0 %v4344
        %4621 = vmatpush1.msra.mxu0 %v4343
        %4622 = vmatprep.subr.mxu0 %v4349
        %4623 = vmatpush1.msra.mxu0 %v4348
        %4624 = vmatprep.subr.mxu0 %v4354
        %4625 = vmatpush1.msra.mxu0 %v4353
        %4626 = vmatprep.mubr.f32.mxu0 %v4194
        %4627 = vmatmul.mubr.f32.gmra.mrb[0].mxu0 %v4193
        %v4628 = vpop.f32.mrb[0].mxu0
        %v4629 = vadd.f32 0.0, %v4628
        %v4630 = vpop.f32.mrb[0].mxu0
        %v4631 = vadd.f32 0.0, %v4630
        %4632 = vdwg.mxu0
        %4633 = vmatprep.subr.mxu0 %v4359
        %4634 = vmatpush1.msra.mxu0 %v4358
        %4635 = vmatprep.subr.mxu0 %v4364
        %4636 = vmatpush1.msra.mxu0 %v4363
        %4637 = vmatprep.subr.mxu0 %v4369
        %4638 = vmatpush1.msra.mxu0 %v4368
        %4639 = vmatprep.subr.mxu0 %v4374
        %4640 = vmatpush1.msra.mxu0 %v4373
        %4641 = vmatprep.subr.mxu0 %v4379
        %4642 = vmatpush1.msra.mxu0 %v4378
        %4643 = vmatprep.subr.mxu0 %v4384
        %4644 = vmatpush1.msra.mxu0 %v4383
        %4645 = vmatprep.subr.mxu0 %v4389
        %4646 = vmatpush1.msra.mxu0 %v4388
        %4647 = vmatprep.subr.mxu0 %v4394
        %4648 = vmatpush1.msra.mxu0 %v4393
        %4649 = vmatprep.subr.mxu0 %v4399
        %4650 = vmatpush1.msra.mxu0 %v4398
        %4651 = vmatprep.subr.mxu0 %v4404
        %4652 = vmatpush1.msra.mxu0 %v4403
        %4653 = vmatprep.subr.mxu0 %v4409
        %4654 = vmatpush1.msra.mxu0 %v4408
        %4655 = vmatprep.subr.mxu0 %v4414
        %4656 = vmatpush1.msra.mxu0 %v4413
        %4657 = vmatprep.subr.mxu0 %v4419
        %4658 = vmatpush1.msra.mxu0 %v4418
        %4659 = vmatprep.subr.mxu0 %v4424
        %4660 = vmatpush1.msra.mxu0 %v4423
        %4661 = vmatprep.subr.mxu0 %v4429
        %4662 = vmatpush1.msra.mxu0 %v4428
        %4663 = vmatprep.subr.mxu0 %v4434
        %4664 = vmatpush1.msra.mxu0 %v4433
        %4665 = vmatprep.subr.mxu0 %v4439
        %4666 = vmatpush1.msra.mxu0 %v4438
        %4667 = vmatprep.subr.mxu0 %v4444
        %4668 = vmatpush1.msra.mxu0 %v4443
        %4669 = vmatprep.subr.mxu0 %v4449
        %4670 = vmatpush1.msra.mxu0 %v4448
        %4671 = vmatprep.subr.mxu0 %v4454
        %4672 = vmatpush1.msra.mxu0 %v4453
        %4673 = vmatprep.subr.mxu0 %v4459
        %4674 = vmatpush1.msra.mxu0 %v4458
        %4675 = vmatprep.subr.mxu0 %v4464
        %4676 = vmatpush1.msra.mxu0 %v4463
        %4677 = vmatprep.subr.mxu0 %v4469
        %4678 = vmatpush1.msra.mxu0 %v4468
        %4679 = vmatprep.subr.mxu0 %v4474
        %4680 = vmatpush1.msra.mxu0 %v4473
        %4681 = vmatprep.subr.mxu0 %v4479
        %4682 = vmatpush1.msra.mxu0 %v4478
        %4683 = vmatprep.subr.mxu0 %v4484
        %4684 = vmatpush1.msra.mxu0 %v4483
        %4685 = vmatprep.subr.mxu0 %v4489
        %4686 = vmatpush1.msra.mxu0 %v4488
        %4687 = vmatprep.subr.mxu0 %v4494
        %4688 = vmatpush1.msra.mxu0 %v4493
        %4689 = vmatprep.subr.mxu0 %v4499
        %4690 = vmatpush1.msra.mxu0 %v4498
        %4691 = vmatprep.subr.mxu0 %v4504
        %4692 = vmatpush1.msra.mxu0 %v4503
        %4693 = vmatprep.subr.mxu0 %v4509
        %4694 = vmatpush1.msra.mxu0 %v4508
        %4695 = vmatprep.subr.mxu0 %v4514
        %4696 = vmatpush1.msra.mxu0 %v4513
        %4697 = vmatprep.mubr.f32.mxu0 %v4196
        %4698 = vmatmul.mubr.f32.gmra.mrb[0].mxu0 %v4195
        %v4699 = vpop.f32.mrb[0].mxu0
        %v4700 = vadd.f32 %v4629, %v4699
        %v4701 = vpop.f32.mrb[0].mxu0
        %v4702 = vadd.f32 %v4631, %v4701
        %4703 = vdwg.mxu0
        %4704 = vmatprep.subr.mxu0 %v4519
        %4705 = vmatpush1.msra.mxu0 %v4518
        %4706 = vmatprep.subr.mxu0 %v4524
        %4707 = vmatpush1.msra.mxu0 %v4523
        %4708 = vmatprep.subr.mxu0 %v4529
        %4709 = vmatpush1.msra.mxu0 %v4528
        %4710 = vmatprep.subr.mxu0 %v4534
        %4711 = vmatpush1.msra.mxu0 %v4533
        %4712 = vmatprep.subr.mxu0 %v4539
        %4713 = vmatpush1.msra.mxu0 %v4538
        %4714 = vmatprep.subr.mxu0 %v4544
        %4715 = vmatpush1.msra.mxu0 %v4543
        %4716 = vmatprep.subr.mxu0 %v4549
        %4717 = vmatpush1.msra.mxu0 %v4548
        %4718 = vmatprep.subr.mxu0 %v4554
        %4719 = vmatpush1.msra.mxu0 %v4553
        %4720 = vmatprep.subr.mxu0 0.0
        %4721 = vmatpush1.msra.mxu0 0.0
        %4722 = vmatprep.subr.mxu0 0.0
        %4723 = vmatpush1.msra.mxu0 0.0
        %4724 = vmatprep.subr.mxu0 0.0
        %4725 = vmatpush1.msra.mxu0 0.0
        %4726 = vmatprep.subr.mxu0 0.0
        %4727 = vmatpush1.msra.mxu0 0.0
        %4728 = vmatprep.subr.mxu0 0.0
        %4729 = vmatpush1.msra.mxu0 0.0
        %4730 = vmatprep.subr.mxu0 0.0
        %4731 = vmatpush1.msra.mxu0 0.0
        %4732 = vmatprep.subr.mxu0 0.0
        %4733 = vmatpush1.msra.mxu0 0.0
        %4734 = vmatprep.subr.mxu0 0.0
        %4735 = vmatpush1.msra.mxu0 0.0
        %4736 = vmatprep.subr.mxu0 0.0
        %4737 = vmatpush1.msra.mxu0 0.0
        %4738 = vmatprep.subr.mxu0 0.0
        %4739 = vmatpush1.msra.mxu0 0.0
        %4740 = vmatprep.subr.mxu0 0.0
        %4741 = vmatpush1.msra.mxu0 0.0
        %4742 = vmatprep.subr.mxu0 0.0
        %4743 = vmatpush1.msra.mxu0 0.0
        %4744 = vmatprep.subr.mxu0 0.0
        %4745 = vmatpush1.msra.mxu0 0.0
        %4746 = vmatprep.subr.mxu0 0.0
        %4747 = vmatpush1.msra.mxu0 0.0
        %4748 = vmatprep.subr.mxu0 0.0
        %4749 = vmatpush1.msra.mxu0 0.0
        %4750 = vmatprep.subr.mxu0 0.0
        %4751 = vmatpush1.msra.mxu0 0.0
        %4752 = vmatprep.subr.mxu0 0.0
        %4753 = vmatpush1.msra.mxu0 0.0
        %4754 = vmatprep.subr.mxu0 0.0
        %4755 = vmatpush1.msra.mxu0 0.0
        %4756 = vmatprep.subr.mxu0 0.0
        %4757 = vmatpush1.msra.mxu0 0.0
        %4758 = vmatprep.subr.mxu0 0.0
        %4759 = vmatpush1.msra.mxu0 0.0
        %4760 = vmatprep.subr.mxu0 0.0
        %4761 = vmatpush1.msra.mxu0 0.0
        %4762 = vmatprep.subr.mxu0 0.0
        %4763 = vmatpush1.msra.mxu0 0.0
        %4764 = vmatprep.subr.mxu0 0.0
        %4765 = vmatpush1.msra.mxu0 0.0
        %4766 = vmatprep.subr.mxu0 0.0
        %4767 = vmatpush1.msra.mxu0 0.0
        %4768 = vmatprep.mubr.f32.mxu0 0.0
        %4769 = vmatmul.mubr.f32.gmra.mrb[0].mxu0 %v4560
        %v4770 = vpop.f32.mrb[0].mxu0
        %v4771 = vadd.f32 %v4700, %v4770
        %v4772 = vpop.f32.mrb[0].mxu0
        %v4773 = vadd.f32 %v4702, %v4772
        %4774 = vdwg.mxu0
        %4775 = vmatprep.subr.mxu0 %v4201
        %4776 = vmatpush1.msra.mxu0 %v4200
        %4777 = vmatprep.subr.mxu0 %v4206
        %4778 = vmatpush1.msra.mxu0 %v4205
        %4779 = vmatprep.subr.mxu0 %v4211
        %4780 = vmatpush1.msra.mxu0 %v4210
        %4781 = vmatprep.subr.mxu0 %v4216
        %4782 = vmatpush1.msra.mxu0 %v4215
        %4783 = vmatprep.subr.mxu0 %v4221
        %4784 = vmatpush1.msra.mxu0 %v4220
        %4785 = vmatprep.subr.mxu0 %v4226
        %4786 = vmatpush1.msra.mxu0 %v4225
        %4787 = vmatprep.subr.mxu0 %v4231
        %4788 = vmatpush1.msra.mxu0 %v4230
        %4789 = vmatprep.subr.mxu0 %v4236
        %4790 = vmatpush1.msra.mxu0 %v4235
        %4791 = vmatprep.subr.mxu0 %v4241
        %4792 = vmatpush1.msra.mxu0 %v4240
        %4793 = vmatprep.subr.mxu0 %v4246
        %4794 = vmatpush1.msra.mxu0 %v4245
        %4795 = vmatprep.subr.mxu0 %v4251
        %4796 = vmatpush1.msra.mxu0 %v4250
        %4797 = vmatprep.subr.mxu0 %v4256
        %4798 = vmatpush1.msra.mxu0 %v4255
        %4799 = vmatprep.subr.mxu0 %v4261
        %4800 = vmatpush1.msra.mxu0 %v4260
        %4801 = vmatprep.subr.mxu0 %v4266
        %4802 = vmatpush1.msra.mxu0 %v4265
        %4803 = vmatprep.subr.mxu0 %v4271
        %4804 = vmatpush1.msra.mxu0 %v4270
        %4805 = vmatprep.subr.mxu0 %v4276
        %4806 = vmatpush1.msra.mxu0 %v4275
        %4807 = vmatprep.subr.mxu0 %v4281
        %4808 = vmatpush1.msra.mxu0 %v4280
        %4809 = vmatprep.subr.mxu0 %v4286
        %4810 = vmatpush1.msra.mxu0 %v4285
        %4811 = vmatprep.subr.mxu0 %v4291
        %4812 = vmatpush1.msra.mxu0 %v4290
        %4813 = vmatprep.subr.mxu0 %v4296
        %4814 = vmatpush1.msra.mxu0 %v4295
        %4815 = vmatprep.subr.mxu0 %v4301
        %4816 = vmatpush1.msra.mxu0 %v4300
        %4817 = vmatprep.subr.mxu0 %v4306
        %4818 = vmatpush1.msra.mxu0 %v4305
        %4819 = vmatprep.subr.mxu0 %v4311
        %4820 = vmatpush1.msra.mxu0 %v4310
        %4821 = vmatprep.subr.mxu0 %v4316
        %4822 = vmatpush1.msra.mxu0 %v4315
        %4823 = vmatprep.subr.mxu0 %v4321
        %4824 = vmatpush1.msra.mxu0 %v4320
        %4825 = vmatprep.subr.mxu0 %v4326
        %4826 = vmatpush1.msra.mxu0 %v4325
        %4827 = vmatprep.subr.mxu0 %v4331
        %4828 = vmatpush1.msra.mxu0 %v4330
        %4829 = vmatprep.subr.mxu0 %v4336
        %4830 = vmatpush1.msra.mxu0 %v4335
        %4831 = vmatprep.subr.mxu0 %v4341
        %4832 = vmatpush1.msra.mxu0 %v4340
        %4833 = vmatprep.subr.mxu0 %v4346
        %4834 = vmatpush1.msra.mxu0 %v4345
        %4835 = vmatprep.subr.mxu0 %v4351
        %4836 = vmatpush1.msra.mxu0 %v4350
        %4837 = vmatprep.subr.mxu0 %v4356
        %4838 = vmatpush1.msra.mxu0 %v4355
        %4839 = vmatprep.mubr.f32.mxu0 %v4194
        %4840 = vmatmul.mubr.f32.gmra.mrb[0].mxu0 %v4193
        %v4841 = vpop.f32.mrb[0].mxu0
        %v4842 = vadd.f32 0.0, %v4841
        %v4843 = vpop.f32.mrb[0].mxu0
        %v4844 = vadd.f32 0.0, %v4843
        %4845 = vdwg.mxu0
        %4846 = vmatprep.subr.mxu0 %v4361
        %4847 = vmatpush1.msra.mxu0 %v4360
        %4848 = vmatprep.subr.mxu0 %v4366
        %4849 = vmatpush1.msra.mxu0 %v4365
        %4850 = vmatprep.subr.mxu0 %v4371
        %4851 = vmatpush1.msra.mxu0 %v4370
        %4852 = vmatprep.subr.mxu0 %v4376
        %4853 = vmatpush1.msra.mxu0 %v4375
        %4854 = vmatprep.subr.mxu0 %v4381
        %4855 = vmatpush1.msra.mxu0 %v4380
        %4856 = vmatprep.subr.mxu0 %v4386
        %4857 = vmatpush1.msra.mxu0 %v4385
        %4858 = vmatprep.subr.mxu0 %v4391
        %4859 = vmatpush1.msra.mxu0 %v4390
        %4860 = vmatprep.subr.mxu0 %v4396
        %4861 = vmatpush1.msra.mxu0 %v4395
        %4862 = vmatprep.subr.mxu0 %v4401
        %4863 = vmatpush1.msra.mxu0 %v4400
        %4864 = vmatprep.subr.mxu0 %v4406
        %4865 = vmatpush1.msra.mxu0 %v4405
        %4866 = vmatprep.subr.mxu0 %v4411
        %4867 = vmatpush1.msra.mxu0 %v4410
        %4868 = vmatprep.subr.mxu0 %v4416
        %4869 = vmatpush1.msra.mxu0 %v4415
        %4870 = vmatprep.subr.mxu0 %v4421
        %4871 = vmatpush1.msra.mxu0 %v4420
        %4872 = vmatprep.subr.mxu0 %v4426
        %4873 = vmatpush1.msra.mxu0 %v4425
        %4874 = vmatprep.subr.mxu0 %v4431
        %4875 = vmatpush1.msra.mxu0 %v4430
        %4876 = vmatprep.subr.mxu0 %v4436
        %4877 = vmatpush1.msra.mxu0 %v4435
        %4878 = vmatprep.subr.mxu0 %v4441
        %4879 = vmatpush1.msra.mxu0 %v4440
        %4880 = vmatprep.subr.mxu0 %v4446
        %4881 = vmatpush1.msra.mxu0 %v4445
        %4882 = vmatprep.subr.mxu0 %v4451
        %4883 = vmatpush1.msra.mxu0 %v4450
        %4884 = vmatprep.subr.mxu0 %v4456
        %4885 = vmatpush1.msra.mxu0 %v4455
        %4886 = vmatprep.subr.mxu0 %v4461
        %4887 = vmatpush1.msra.mxu0 %v4460
        %4888 = vmatprep.subr.mxu0 %v4466
        %4889 = vmatpush1.msra.mxu0 %v4465
        %4890 = vmatprep.subr.mxu0 %v4471
        %4891 = vmatpush1.msra.mxu0 %v4470
        %4892 = vmatprep.subr.mxu0 %v4476
        %4893 = vmatpush1.msra.mxu0 %v4475
        %4894 = vmatprep.subr.mxu0 %v4481
        %4895 = vmatpush1.msra.mxu0 %v4480
        %4896 = vmatprep.subr.mxu0 %v4486
        %4897 = vmatpush1.msra.mxu0 %v4485
        %4898 = vmatprep.subr.mxu0 %v4491
        %4899 = vmatpush1.msra.mxu0 %v4490
        %4900 = vmatprep.subr.mxu0 %v4496
        %4901 = vmatpush1.msra.mxu0 %v4495
        %4902 = vmatprep.subr.mxu0 %v4501
        %4903 = vmatpush1.msra.mxu0 %v4500
        %4904 = vmatprep.subr.mxu0 %v4506
        %4905 = vmatpush1.msra.mxu0 %v4505
        %4906 = vmatprep.subr.mxu0 %v4511
        %4907 = vmatpush1.msra.mxu0 %v4510
        %4908 = vmatprep.subr.mxu0 %v4516
        %4909 = vmatpush1.msra.mxu0 %v4515
        %4910 = vmatprep.mubr.f32.mxu0 %v4196
        %4911 = vmatmul.mubr.f32.gmra.mrb[0].mxu0 %v4195
        %v4912 = vpop.f32.mrb[0].mxu0
        %v4913 = vadd.f32 %v4842, %v4912
        %v4914 = vpop.f32.mrb[0].mxu0
        %v4915 = vadd.f32 %v4844, %v4914
        %4916 = vdwg.mxu0
        %4917 = vmatprep.subr.mxu0 %v4521
        %4918 = vmatpush1.msra.mxu0 %v4520
        %4919 = vmatprep.subr.mxu0 %v4526
        %4920 = vmatpush1.msra.mxu0 %v4525
        %4921 = vmatprep.subr.mxu0 %v4531
        %4922 = vmatpush1.msra.mxu0 %v4530
        %4923 = vmatprep.subr.mxu0 %v4536
        %4924 = vmatpush1.msra.mxu0 %v4535
        %4925 = vmatprep.subr.mxu0 %v4541
        %4926 = vmatpush1.msra.mxu0 %v4540
        %4927 = vmatprep.subr.mxu0 %v4546
        %4928 = vmatpush1.msra.mxu0 %v4545
        %4929 = vmatprep.subr.mxu0 %v4551
        %4930 = vmatpush1.msra.mxu0 %v4550
        %4931 = vmatprep.subr.mxu0 %v4556
        %4932 = vmatpush1.msra.mxu0 %v4555
        %4933 = vmatprep.subr.mxu0 0.0
        %4934 = vmatpush1.msra.mxu0 0.0
        %4935 = vmatprep.subr.mxu0 0.0
        %4936 = vmatpush1.msra.mxu0 0.0
        %4937 = vmatprep.subr.mxu0 0.0
        %4938 = vmatpush1.msra.mxu0 0.0
        %4939 = vmatprep.subr.mxu0 0.0
        %4940 = vmatpush1.msra.mxu0 0.0
        %4941 = vmatprep.subr.mxu0 0.0
        %4942 = vmatpush1.msra.mxu0 0.0
        %4943 = vmatprep.subr.mxu0 0.0
        %4944 = vmatpush1.msra.mxu0 0.0
        %4945 = vmatprep.subr.mxu0 0.0
        %4946 = vmatpush1.msra.mxu0 0.0
        %4947 = vmatprep.subr.mxu0 0.0
        %4948 = vmatpush1.msra.mxu0 0.0
        %4949 = vmatprep.subr.mxu0 0.0
        %4950 = vmatpush1.msra.mxu0 0.0
        %4951 = vmatprep.subr.mxu0 0.0
        %4952 = vmatpush1.msra.mxu0 0.0
        %4953 = vmatprep.subr.mxu0 0.0
        %4954 = vmatpush1.msra.mxu0 0.0
        %4955 = vmatprep.subr.mxu0 0.0
        %4956 = vmatpush1.msra.mxu0 0.0
        %4957 = vmatprep.subr.mxu0 0.0
        %4958 = vmatpush1.msra.mxu0 0.0
        %4959 = vmatprep.subr.mxu0 0.0
        %4960 = vmatpush1.msra.mxu0 0.0
        %4961 = vmatprep.subr.mxu0 0.0
        %4962 = vmatpush1.msra.mxu0 0.0
        %4963 = vmatprep.subr.mxu0 0.0
        %4964 = vmatpush1.msra.mxu0 0.0
        %4965 = vmatprep.subr.mxu0 0.0
        %4966 = vmatpush1.msra.mxu0 0.0
        %4967 = vmatprep.subr.mxu0 0.0
        %4968 = vmatpush1.msra.mxu0 0.0
        %4969 = vmatprep.subr.mxu0 0.0
        %4970 = vmatpush1.msra.mxu0 0.0
        %4971 = vmatprep.subr.mxu0 0.0
        %4972 = vmatpush1.msra.mxu0 0.0
        %4973 = vmatprep.subr.mxu0 0.0
        %4974 = vmatpush1.msra.mxu0 0.0
        %4975 = vmatprep.subr.mxu0 0.0
        %4976 = vmatpush1.msra.mxu0 0.0
        %4977 = vmatprep.subr.mxu0 0.0
        %4978 = vmatpush1.msra.mxu0 0.0
        %4979 = vmatprep.subr.mxu0 0.0
        %4980 = vmatpush1.msra.mxu0 0.0
        %4981 = vmatprep.mubr.f32.mxu0 0.0
        %4982 = vmatmul.mubr.f32.gmra.mrb[0].mxu0 %v4560
        %v4983 = vpop.f32.mrb[0].mxu0
        %v4984 = vadd.f32 %v4913, %v4983
        %v4985 = vpop.f32.mrb[0].mxu0
        %v4986 = vadd.f32 %v4915, %v4985
        %4987 = vdwg.mxu0
        %4988 = vmatprep.subr.mxu0 0.0
        %4989 = vmatpush1.msra.mxu0 %v4202
        %4990 = vmatprep.subr.mxu0 0.0
        %4991 = vmatpush1.msra.mxu0 %v4207
        %4992 = vmatprep.subr.mxu0 0.0
        %4993 = vmatpush1.msra.mxu0 %v4212
        %4994 = vmatprep.subr.mxu0 0.0
        %4995 = vmatpush1.msra.mxu0 %v4217
        %4996 = vmatprep.subr.mxu0 0.0
        %4997 = vmatpush1.msra.mxu0 %v4222
        %4998 = vmatprep.subr.mxu0 0.0
        %4999 = vmatpush1.msra.mxu0 %v4227
        %5000 = vmatprep.subr.mxu0 0.0
        %5001 = vmatpush1.msra.mxu0 %v4232
        %5002 = vmatprep.subr.mxu0 0.0
        %5003 = vmatpush1.msra.mxu0 %v4237
        %5004 = vmatprep.subr.mxu0 0.0
        %5005 = vmatpush1.msra.mxu0 %v4242
        %5006 = vmatprep.subr.mxu0 0.0
        %5007 = vmatpush1.msra.mxu0 %v4247
        %5008 = vmatprep.subr.mxu0 0.0
        %5009 = vmatpush1.msra.mxu0 %v4252
        %5010 = vmatprep.subr.mxu0 0.0
        %5011 = vmatpush1.msra.mxu0 %v4257
        %5012 = vmatprep.subr.mxu0 0.0
        %5013 = vmatpush1.msra.mxu0 %v4262
        %5014 = vmatprep.subr.mxu0 0.0
        %5015 = vmatpush1.msra.mxu0 %v4267
        %5016 = vmatprep.subr.mxu0 0.0
        %5017 = vmatpush1.msra.mxu0 %v4272
        %5018 = vmatprep.subr.mxu0 0.0
        %5019 = vmatpush1.msra.mxu0 %v4277
        %5020 = vmatprep.subr.mxu0 0.0
        %5021 = vmatpush1.msra.mxu0 %v4282
        %5022 = vmatprep.subr.mxu0 0.0
        %5023 = vmatpush1.msra.mxu0 %v4287
        %5024 = vmatprep.subr.mxu0 0.0
        %5025 = vmatpush1.msra.mxu0 %v4292
        %5026 = vmatprep.subr.mxu0 0.0
        %5027 = vmatpush1.msra.mxu0 %v4297
        %5028 = vmatprep.subr.mxu0 0.0
        %5029 = vmatpush1.msra.mxu0 %v4302
        %5030 = vmatprep.subr.mxu0 0.0
        %5031 = vmatpush1.msra.mxu0 %v4307
        %5032 = vmatprep.subr.mxu0 0.0
        %5033 = vmatpush1.msra.mxu0 %v4312
        %5034 = vmatprep.subr.mxu0 0.0
        %5035 = vmatpush1.msra.mxu0 %v4317
        %5036 = vmatprep.subr.mxu0 0.0
        %5037 = vmatpush1.msra.mxu0 %v4322
        %5038 = vmatprep.subr.mxu0 0.0
        %5039 = vmatpush1.msra.mxu0 %v4327
        %5040 = vmatprep.subr.mxu0 0.0
        %5041 = vmatpush1.msra.mxu0 %v4332
        %5042 = vmatprep.subr.mxu0 0.0
        %5043 = vmatpush1.msra.mxu0 %v4337
        %5044 = vmatprep.subr.mxu0 0.0
        %5045 = vmatpush1.msra.mxu0 %v4342
        %5046 = vmatprep.subr.mxu0 0.0
        %5047 = vmatpush1.msra.mxu0 %v4347
        %5048 = vmatprep.subr.mxu0 0.0
        %5049 = vmatpush1.msra.mxu0 %v4352
        %5050 = vmatprep.subr.mxu0 0.0
        %5051 = vmatpush1.msra.mxu0 %v4357
        %5052 = vmatprep.mubr.f32.mxu0 %v4194
        %5053 = vmatmul.mubr.f32.gmra.mrb[0].mxu0 %v4193
        %v5054 = vpop.f32.mrb[0].mxu0
        %v5055 = vadd.f32 0.0, %v5054
        %v5056 = vpop.f32.mrb[0].mxu0
        %5057 = vdwg.mxu0
        %5058 = vmatprep.subr.mxu0 0.0
        %5059 = vmatpush1.msra.mxu0 %v4362
        %5060 = vmatprep.subr.mxu0 0.0
        %5061 = vmatpush1.msra.mxu0 %v4367
        %5062 = vmatprep.subr.mxu0 0.0
        %5063 = vmatpush1.msra.mxu0 %v4372
        %5064 = vmatprep.subr.mxu0 0.0
        %5065 = vmatpush1.msra.mxu0 %v4377
        %5066 = vmatprep.subr.mxu0 0.0
        %5067 = vmatpush1.msra.mxu0 %v4382
        %5068 = vmatprep.subr.mxu0 0.0
        %5069 = vmatpush1.msra.mxu0 %v4387
        %5070 = vmatprep.subr.mxu0 0.0
        %5071 = vmatpush1.msra.mxu0 %v4392
        %5072 = vmatprep.subr.mxu0 0.0
        %5073 = vmatpush1.msra.mxu0 %v4397
        %5074 = vmatprep.subr.mxu0 0.0
        %5075 = vmatpush1.msra.mxu0 %v4402
        %5076 = vmatprep.subr.mxu0 0.0
        %5077 = vmatpush1.msra.mxu0 %v4407
        %5078 = vmatprep.subr.mxu0 0.0
        %5079 = vmatpush1.msra.mxu0 %v4412
        %5080 = vmatprep.subr.mxu0 0.0
        %5081 = vmatpush1.msra.mxu0 %v4417
        %5082 = vmatprep.subr.mxu0 0.0
        %5083 = vmatpush1.msra.mxu0 %v4422
        %5084 = vmatprep.subr.mxu0 0.0
        %5085 = vmatpush1.msra.mxu0 %v4427
        %5086 = vmatprep.subr.mxu0 0.0
        %5087 = vmatpush1.msra.mxu0 %v4432
        %5088 = vmatprep.subr.mxu0 0.0
        %5089 = vmatpush1.msra.mxu0 %v4437
        %5090 = vmatprep.subr.mxu0 0.0
        %5091 = vmatpush1.msra.mxu0 %v4442
        %5092 = vmatprep.subr.mxu0 0.0
        %5093 = vmatpush1.msra.mxu0 %v4447
        %5094 = vmatprep.subr.mxu0 0.0
        %5095 = vmatpush1.msra.mxu0 %v4452
        %5096 = vmatprep.subr.mxu0 0.0
        %5097 = vmatpush1.msra.mxu0 %v4457
        %5098 = vmatprep.subr.mxu0 0.0
        %5099 = vmatpush1.msra.mxu0 %v4462
        %5100 = vmatprep.subr.mxu0 0.0
        %5101 = vmatpush1.msra.mxu0 %v4467
        %5102 = vmatprep.subr.mxu0 0.0
        %5103 = vmatpush1.msra.mxu0 %v4472
        %5104 = vmatprep.subr.mxu0 0.0
        %5105 = vmatpush1.msra.mxu0 %v4477
        %5106 = vmatprep.subr.mxu0 0.0
        %5107 = vmatpush1.msra.mxu0 %v4482
        %5108 = vmatprep.subr.mxu0 0.0
        %5109 = vmatpush1.msra.mxu0 %v4487
        %5110 = vmatprep.subr.mxu0 0.0
        %5111 = vmatpush1.msra.mxu0 %v4492
        %5112 = vmatprep.subr.mxu0 0.0
        %5113 = vmatpush1.msra.mxu0 %v4497
        %5114 = vmatprep.subr.mxu0 0.0
        %5115 = vmatpush1.msra.mxu0 %v4502
        %5116 = vmatprep.subr.mxu0 0.0
        %5117 = vmatpush1.msra.mxu0 %v4507
        %5118 = vmatprep.subr.mxu0 0.0
        %5119 = vmatpush1.msra.mxu0 %v4512
        %5120 = vmatprep.subr.mxu0 0.0
        %5121 = vmatpush1.msra.mxu0 %v4517
        %5122 = vmatprep.mubr.f32.mxu0 %v4196
        %5123 = vmatmul.mubr.f32.gmra.mrb[0].mxu0 %v4195
        %v5124 = vpop.f32.mrb[0].mxu0
        %v5125 = vadd.f32 %v5055, %v5124
        %v5126 = vpop.f32.mrb[0].mxu0
        %5127 = vdwg.mxu0
        %5128 = vmatprep.subr.mxu0 0.0
        %5129 = vmatpush1.msra.mxu0 %v4522
        %5130 = vmatprep.subr.mxu0 0.0
        %5131 = vmatpush1.msra.mxu0 %v4527
        %5132 = vmatprep.subr.mxu0 0.0
        %5133 = vmatpush1.msra.mxu0 %v4532
        %5134 = vmatprep.subr.mxu0 0.0
        %5135 = vmatpush1.msra.mxu0 %v4537
        %5136 = vmatprep.subr.mxu0 0.0
        %5137 = vmatpush1.msra.mxu0 %v4542
        %5138 = vmatprep.subr.mxu0 0.0
        %5139 = vmatpush1.msra.mxu0 %v4547
        %5140 = vmatprep.subr.mxu0 0.0
        %5141 = vmatpush1.msra.mxu0 %v4552
        %5142 = vmatprep.subr.mxu0 0.0
        %5143 = vmatpush1.msra.mxu0 %v4557
        %5144 = vmatprep.subr.mxu0 0.0
        %5145 = vmatpush1.msra.mxu0 0.0
        %5146 = vmatprep.subr.mxu0 0.0
        %5147 = vmatpush1.msra.mxu0 0.0
        %5148 = vmatprep.subr.mxu0 0.0
        %5149 = vmatpush1.msra.mxu0 0.0
        %5150 = vmatprep.subr.mxu0 0.0
        %5151 = vmatpush1.msra.mxu0 0.0
        %5152 = vmatprep.subr.mxu0 0.0
        %5153 = vmatpush1.msra.mxu0 0.0
        %5154 = vmatprep.subr.mxu0 0.0
        %5155 = vmatpush1.msra.mxu0 0.0
        %5156 = vmatprep.subr.mxu0 0.0
        %5157 = vmatpush1.msra.mxu0 0.0
        %5158 = vmatprep.subr.mxu0 0.0
        %5159 = vmatpush1.msra.mxu0 0.0
        %5160 = vmatprep.subr.mxu0 0.0
        %5161 = vmatpush1.msra.mxu0 0.0
        %5162 = vmatprep.subr.mxu0 0.0
        %5163 = vmatpush1.msra.mxu0 0.0
        %5164 = vmatprep.subr.mxu0 0.0
        %5165 = vmatpush1.msra.mxu0 0.0
        %5166 = vmatprep.subr.mxu0 0.0
        %5167 = vmatpush1.msra.mxu0 0.0
        %5168 = vmatprep.subr.mxu0 0.0
        %5169 = vmatpush1.msra.mxu0 0.0
        %5170 = vmatprep.subr.mxu0 0.0
        %5171 = vmatpush1.msra.mxu0 0.0
        %5172 = vmatprep.subr.mxu0 0.0
        %5173 = vmatpush1.msra.mxu0 0.0
        %5174 = vmatprep.subr.mxu0 0.0
        %5175 = vmatpush1.msra.mxu0 0.0
        %5176 = vmatprep.subr.mxu0 0.0
        %5177 = vmatpush1.msra.mxu0 0.0
        %5178 = vmatprep.subr.mxu0 0.0
        %5179 = vmatpush1.msra.mxu0 0.0
        %5180 = vmatprep.subr.mxu0 0.0
        %5181 = vmatpush1.msra.mxu0 0.0
        %5182 = vmatprep.subr.mxu0 0.0
        %5183 = vmatpush1.msra.mxu0 0.0
        %5184 = vmatprep.subr.mxu0 0.0
        %5185 = vmatpush1.msra.mxu0 0.0
        %5186 = vmatprep.subr.mxu0 0.0
        %5187 = vmatpush1.msra.mxu0 0.0
        %5188 = vmatprep.subr.mxu0 0.0
        %5189 = vmatpush1.msra.mxu0 0.0
        %5190 = vmatprep.subr.mxu0 0.0
        %5191 = vmatpush1.msra.mxu0 0.0
        %5192 = vmatprep.mubr.f32.mxu0 0.0
        %5193 = vmatmul.mubr.f32.gmra.mrb[0].mxu0 %v4560
        %v5194 = vpop.f32.mrb[0].mxu0
        %v5195 = vadd.f32 %v5125, %v5194
        %v5196 = vpop.f32.mrb[0].mxu0
        %5197 = vdwg.mxu0
        %v5198 = vlaneseq
        %v5199 = vshrl.u32 %v5198, 7
        %v5200 = vsub.s32 0, %v5199
        %v5201 = vrot.slane %v4771, %v5200
        %v5202 = vlaneseq
        %v5203 = vshrl.u32 %v5202, 7
        %v5204 = vsub.s32 0, %v5203
        %v5205 = vrot.slane %v4773, %v5204
        %v5206 = vlaneseq
        %v5207 = vshrl.u32 %v5206, 7
        %v5208 = vsub.s32 0, %v5207
        %v5209 = vrot.slane %v4984, %v5208
        %v5210 = vlaneseq
        %v5211 = vshrl.u32 %v5210, 7
        %v5212 = vsub.s32 0, %v5211
        %v5213 = vrot.slane %v4986, %v5212
        %v5214 = vlaneseq
        %v5215 = vshrl.u32 %v5214, 7
        %v5216 = vsub.s32 0, %v5215
        %v5217 = vrot.slane %v5195, %v5216
        %v5218 = vsub.f32 %v3871, %v5201
        %v5219 = vsub.f32 %v3873, %v5205
        %v5220 = vsub.f32 %v4013, %v5209
        %v5221 = vsub.f32 %v4015, %v5213
        %v5222 = vsub.f32 %v4154, %v5217
        %v5223 = vmul.f32 %v5218, %v5218
        %v5224 = vmul.f32 %v5219, %v5219
        %v5225 = vmul.f32 %v5220, %v5220
        %v5226 = vmul.f32 %v5221, %v5221
        %v5227 = vmul.f32 %v5222, %v5222
        %v5228 = vsel %vm753, %v5223, 0.0
        %v5229 = vrot.slane %v5228, 4
        %v5230 = vadd.f32 %v5228, %v5229
        %v5231 = vrot.slane %v5230, 2
        %v5232 = vadd.f32 %v5230, %v5231
        %v5233 = vrot.slane %v5232, 1
        %v5234 = vadd.f32 %v5232, %v5233
        %v5235 = vsel %vm753, %v5224, 0.0
        %v5236 = vrot.slane %v5235, 4
        %v5237 = vadd.f32 %v5235, %v5236
        %v5238 = vrot.slane %v5237, 2
        %v5239 = vadd.f32 %v5237, %v5238
        %v5240 = vrot.slane %v5239, 1
        %v5241 = vadd.f32 %v5239, %v5240
        %v5242 = vsel %vm753, %v5225, 0.0
        %v5243 = vrot.slane %v5242, 4
        %v5244 = vadd.f32 %v5242, %v5243
        %v5245 = vrot.slane %v5244, 2
        %v5246 = vadd.f32 %v5244, %v5245
        %v5247 = vrot.slane %v5246, 1
        %v5248 = vadd.f32 %v5246, %v5247
        %v5249 = vsel %vm753, %v5226, 0.0
        %v5250 = vrot.slane %v5249, 4
        %v5251 = vadd.f32 %v5249, %v5250
        %v5252 = vrot.slane %v5251, 2
        %v5253 = vadd.f32 %v5251, %v5252
        %v5254 = vrot.slane %v5253, 1
        %v5255 = vadd.f32 %v5253, %v5254
        %v5256 = vsel %vm4185, %v5227, 0.0
        %v5257 = vrot.slane %v5256, 4
        %v5258 = vadd.f32 %v5256, %v5257
        %v5259 = vrot.slane %v5258, 2
        %v5260 = vadd.f32 %v5258, %v5259
        %v5261 = vrot.slane %v5260, 1
        %v5262 = vadd.f32 %v5260, %v5261
        %v5263 = vmul.f32 %v5234, %v783
        %v5264 = vmul.f32 %v5241, %v783
        %v5265 = vmul.f32 %v5248, %v783
        %v5266 = vmul.f32 %v5255, %v783
        %v5267 = vmul.f32 %v5262, %v783
        %v5268 = vlaneseq
        %v5269 = vshrl.u32 %v5268, 7
        %v5270 = vsub.s32 1, %v5269
        %v5271 = vrot.slane %v3682, %v5270
        %v5272 = vlaneseq
        %v5273 = vshrl.u32 %v5272, 7
        %v5274 = vsub.s32 5, %v5273
        %v5275 = vrot.slane %v3682, %v5274
        %v5276 = vlaneseq
        %v5277 = vshrl.u32 %v5276, 7
        %v5278 = vsub.s32 1, %v5277
        %v5279 = vrot.slane %v3683, %v5278
        %v5280 = vlaneseq
        %v5281 = vshrl.u32 %v5280, 7
        %v5282 = vsub.s32 5, %v5281
        %v5283 = vrot.slane %v3683, %v5282
        %v5284 = vlaneseq
        %v5285 = vshrl.u32 %v5284, 7
        %v5286 = vsub.s32 1, %v5285
        %v5287 = vrot.slane %v3684, %v5286
        %v5293 = vlaneseq
        %v5294 = vshrl.u32 %v5293, 7
        %v5295 = vsub.s32 1, %v5294
        %v5296 = vrot.slane %v5271, %v5295
        %v5297 = vlaneseq
        %v5298 = vshrl.u32 %v5297, 7
        %v5299 = vsub.s32 1, %v5298
        %v5300 = vrot.slane %v5275, %v5299
        %v5301 = vlaneseq
        %v5302 = vshrl.u32 %v5301, 7
        %v5303 = vsub.s32 1, %v5302
        %v5304 = vrot.slane %v5279, %v5303
        %v5305 = vlaneseq
        %v5306 = vshrl.u32 %v5305, 7
        %v5307 = vsub.s32 1, %v5306
        %v5308 = vrot.slane %v5283, %v5307
        %v5309 = vlaneseq
        %v5310 = vshrl.u32 %v5309, 7
        %v5311 = vsub.s32 1, %v5310
        %v5312 = vrot.slane %v5287, %v5311
        %v5313 = vmul.f32 %v5296, %v5218
        %v5314 = vmul.f32 %v5300, %v5219
        %v5315 = vmul.f32 %v5304, %v5220
        %v5316 = vmul.f32 %v5308, %v5221
        %v5317 = vmul.f32 %v5312, %v5222
        %v5319 = vsel %vm4558, %v5267, 0
        %5321 = vmatprep.subr.mxu0 %v4199
        %5322 = vmatpush1.msra.mxu0 %v4198
        %5323 = vmatprep.subr.mxu0 %v4204
        %5324 = vmatpush1.msra.mxu0 %v4203
        %5325 = vmatprep.subr.mxu0 %v4209
        %5326 = vmatpush1.msra.mxu0 %v4208
        %5327 = vmatprep.subr.mxu0 %v4214
        %5328 = vmatpush1.msra.mxu0 %v4213
        %5329 = vmatprep.subr.mxu0 %v4219
        %5330 = vmatpush1.msra.mxu0 %v4218
        %5331 = vmatprep.subr.mxu0 %v4224
        %5332 = vmatpush1.msra.mxu0 %v4223
        %5333 = vmatprep.subr.mxu0 %v4229
        %5334 = vmatpush1.msra.mxu0 %v4228
        %5335 = vmatprep.subr.mxu0 %v4234
        %5336 = vmatpush1.msra.mxu0 %v4233
        %5337 = vmatprep.subr.mxu0 %v4239
        %5338 = vmatpush1.msra.mxu0 %v4238
        %5339 = vmatprep.subr.mxu0 %v4244
        %5340 = vmatpush1.msra.mxu0 %v4243
        %5341 = vmatprep.subr.mxu0 %v4249
        %5342 = vmatpush1.msra.mxu0 %v4248
        %5343 = vmatprep.subr.mxu0 %v4254
        %5344 = vmatpush1.msra.mxu0 %v4253
        %5345 = vmatprep.subr.mxu0 %v4259
        %5346 = vmatpush1.msra.mxu0 %v4258
        %5347 = vmatprep.subr.mxu0 %v4264
        %5348 = vmatpush1.msra.mxu0 %v4263
        %5349 = vmatprep.subr.mxu0 %v4269
        %5350 = vmatpush1.msra.mxu0 %v4268
        %5351 = vmatprep.subr.mxu0 %v4274
        %5352 = vmatpush1.msra.mxu0 %v4273
        %5353 = vmatprep.subr.mxu0 %v4279
        %5354 = vmatpush1.msra.mxu0 %v4278
        %5355 = vmatprep.subr.mxu0 %v4284
        %5356 = vmatpush1.msra.mxu0 %v4283
        %5357 = vmatprep.subr.mxu0 %v4289
        %5358 = vmatpush1.msra.mxu0 %v4288
        %5359 = vmatprep.subr.mxu0 %v4294
        %5360 = vmatpush1.msra.mxu0 %v4293
        %5361 = vmatprep.subr.mxu0 %v4299
        %5362 = vmatpush1.msra.mxu0 %v4298
        %5363 = vmatprep.subr.mxu0 %v4304
        %5364 = vmatpush1.msra.mxu0 %v4303
        %5365 = vmatprep.subr.mxu0 %v4309
        %5366 = vmatpush1.msra.mxu0 %v4308
        %5367 = vmatprep.subr.mxu0 %v4314
        %5368 = vmatpush1.msra.mxu0 %v4313
        %5369 = vmatprep.subr.mxu0 %v4319
        %5370 = vmatpush1.msra.mxu0 %v4318
        %5371 = vmatprep.subr.mxu0 %v4324
        %5372 = vmatpush1.msra.mxu0 %v4323
        %5373 = vmatprep.subr.mxu0 %v4329
        %5374 = vmatpush1.msra.mxu0 %v4328
        %5375 = vmatprep.subr.mxu0 %v4334
        %5376 = vmatpush1.msra.mxu0 %v4333
        %5377 = vmatprep.subr.mxu0 %v4339
        %5378 = vmatpush1.msra.mxu0 %v4338
        %5379 = vmatprep.subr.mxu0 %v4344
        %5380 = vmatpush1.msra.mxu0 %v4343
        %5381 = vmatprep.subr.mxu0 %v4349
        %5382 = vmatpush1.msra.mxu0 %v4348
        %5383 = vmatprep.subr.mxu0 %v4354
        %5384 = vmatpush1.msra.mxu0 %v4353
        %5385 = vmatprep.mubr.f32.mxu0 %v5264
        %5386 = vmatmul.mubr.f32.gmra.mrb[0].mxu0 %v5263
        %v5387 = vpop.f32.mrb[0].mxu0
        %v5388 = vadd.f32 1e-05, %v5387
        %v5389 = vpop.f32.mrb[0].mxu0
        %v5390 = vadd.f32 1e-05, %v5389
        %5391 = vdwg.mxu0
        %5392 = vmatprep.subr.mxu0 %v4359
        %5393 = vmatpush1.msra.mxu0 %v4358
        %5394 = vmatprep.subr.mxu0 %v4364
        %5395 = vmatpush1.msra.mxu0 %v4363
        %5396 = vmatprep.subr.mxu0 %v4369
        %5397 = vmatpush1.msra.mxu0 %v4368
        %5398 = vmatprep.subr.mxu0 %v4374
        %5399 = vmatpush1.msra.mxu0 %v4373
        %5400 = vmatprep.subr.mxu0 %v4379
        %5401 = vmatpush1.msra.mxu0 %v4378
        %5402 = vmatprep.subr.mxu0 %v4384
        %5403 = vmatpush1.msra.mxu0 %v4383
        %5404 = vmatprep.subr.mxu0 %v4389
        %5405 = vmatpush1.msra.mxu0 %v4388
        %5406 = vmatprep.subr.mxu0 %v4394
        %5407 = vmatpush1.msra.mxu0 %v4393
        %5408 = vmatprep.subr.mxu0 %v4399
        %5409 = vmatpush1.msra.mxu0 %v4398
        %5410 = vmatprep.subr.mxu0 %v4404
        %5411 = vmatpush1.msra.mxu0 %v4403
        %5412 = vmatprep.subr.mxu0 %v4409
        %5413 = vmatpush1.msra.mxu0 %v4408
        %5414 = vmatprep.subr.mxu0 %v4414
        %5415 = vmatpush1.msra.mxu0 %v4413
        %5416 = vmatprep.subr.mxu0 %v4419
        %5417 = vmatpush1.msra.mxu0 %v4418
        %5418 = vmatprep.subr.mxu0 %v4424
        %5419 = vmatpush1.msra.mxu0 %v4423
        %5420 = vmatprep.subr.mxu0 %v4429
        %5421 = vmatpush1.msra.mxu0 %v4428
        %5422 = vmatprep.subr.mxu0 %v4434
        %5423 = vmatpush1.msra.mxu0 %v4433
        %5424 = vmatprep.subr.mxu0 %v4439
        %5425 = vmatpush1.msra.mxu0 %v4438
        %5426 = vmatprep.subr.mxu0 %v4444
        %5427 = vmatpush1.msra.mxu0 %v4443
        %5428 = vmatprep.subr.mxu0 %v4449
        %5429 = vmatpush1.msra.mxu0 %v4448
        %5430 = vmatprep.subr.mxu0 %v4454
        %5431 = vmatpush1.msra.mxu0 %v4453
        %5432 = vmatprep.subr.mxu0 %v4459
        %5433 = vmatpush1.msra.mxu0 %v4458
        %5434 = vmatprep.subr.mxu0 %v4464
        %5435 = vmatpush1.msra.mxu0 %v4463
        %5436 = vmatprep.subr.mxu0 %v4469
        %5437 = vmatpush1.msra.mxu0 %v4468
        %5438 = vmatprep.subr.mxu0 %v4474
        %5439 = vmatpush1.msra.mxu0 %v4473
        %5440 = vmatprep.subr.mxu0 %v4479
        %5441 = vmatpush1.msra.mxu0 %v4478
        %5442 = vmatprep.subr.mxu0 %v4484
        %5443 = vmatpush1.msra.mxu0 %v4483
        %5444 = vmatprep.subr.mxu0 %v4489
        %5445 = vmatpush1.msra.mxu0 %v4488
        %5446 = vmatprep.subr.mxu0 %v4494
        %5447 = vmatpush1.msra.mxu0 %v4493
        %5448 = vmatprep.subr.mxu0 %v4499
        %5449 = vmatpush1.msra.mxu0 %v4498
        %5450 = vmatprep.subr.mxu0 %v4504
        %5451 = vmatpush1.msra.mxu0 %v4503
        %5452 = vmatprep.subr.mxu0 %v4509
        %5453 = vmatpush1.msra.mxu0 %v4508
        %5454 = vmatprep.subr.mxu0 %v4514
        %5455 = vmatpush1.msra.mxu0 %v4513
        %5456 = vmatprep.mubr.f32.mxu0 %v5266
        %5457 = vmatmul.mubr.f32.gmra.mrb[0].mxu0 %v5265
        %v5458 = vpop.f32.mrb[0].mxu0
        %v5459 = vadd.f32 %v5388, %v5458
        %v5460 = vpop.f32.mrb[0].mxu0
        %v5461 = vadd.f32 %v5390, %v5460
        %5462 = vdwg.mxu0
        %5463 = vmatprep.subr.mxu0 %v4519
        %5464 = vmatpush1.msra.mxu0 %v4518
        %5465 = vmatprep.subr.mxu0 %v4524
        %5466 = vmatpush1.msra.mxu0 %v4523
        %5467 = vmatprep.subr.mxu0 %v4529
        %5468 = vmatpush1.msra.mxu0 %v4528
        %5469 = vmatprep.subr.mxu0 %v4534
        %5470 = vmatpush1.msra.mxu0 %v4533
        %5471 = vmatprep.subr.mxu0 %v4539
        %5472 = vmatpush1.msra.mxu0 %v4538
        %5473 = vmatprep.subr.mxu0 %v4544
        %5474 = vmatpush1.msra.mxu0 %v4543
        %5475 = vmatprep.subr.mxu0 %v4549
        %5476 = vmatpush1.msra.mxu0 %v4548
        %5477 = vmatprep.subr.mxu0 %v4554
        %5478 = vmatpush1.msra.mxu0 %v4553
        %5479 = vmatprep.subr.mxu0 0.0
        %5480 = vmatpush1.msra.mxu0 0.0
        %5481 = vmatprep.subr.mxu0 0.0
        %5482 = vmatpush1.msra.mxu0 0.0
        %5483 = vmatprep.subr.mxu0 0.0
        %5484 = vmatpush1.msra.mxu0 0.0
        %5485 = vmatprep.subr.mxu0 0.0
        %5486 = vmatpush1.msra.mxu0 0.0
        %5487 = vmatprep.subr.mxu0 0.0
        %5488 = vmatpush1.msra.mxu0 0.0
        %5489 = vmatprep.subr.mxu0 0.0
        %5490 = vmatpush1.msra.mxu0 0.0
        %5491 = vmatprep.subr.mxu0 0.0
        %5492 = vmatpush1.msra.mxu0 0.0
        %5493 = vmatprep.subr.mxu0 0.0
        %5494 = vmatpush1.msra.mxu0 0.0
        %5495 = vmatprep.subr.mxu0 0.0
        %5496 = vmatpush1.msra.mxu0 0.0
        %5497 = vmatprep.subr.mxu0 0.0
        %5498 = vmatpush1.msra.mxu0 0.0
        %5499 = vmatprep.subr.mxu0 0.0
        %5500 = vmatpush1.msra.mxu0 0.0
        %5501 = vmatprep.subr.mxu0 0.0
        %5502 = vmatpush1.msra.mxu0 0.0
        %5503 = vmatprep.subr.mxu0 0.0
        %5504 = vmatpush1.msra.mxu0 0.0
        %5505 = vmatprep.subr.mxu0 0.0
        %5506 = vmatpush1.msra.mxu0 0.0
        %5507 = vmatprep.subr.mxu0 0.0
        %5508 = vmatpush1.msra.mxu0 0.0
        %5509 = vmatprep.subr.mxu0 0.0
        %5510 = vmatpush1.msra.mxu0 0.0
        %5511 = vmatprep.subr.mxu0 0.0
        %5512 = vmatpush1.msra.mxu0 0.0
        %5513 = vmatprep.subr.mxu0 0.0
        %5514 = vmatpush1.msra.mxu0 0.0
        %5515 = vmatprep.subr.mxu0 0.0
        %5516 = vmatpush1.msra.mxu0 0.0
        %5517 = vmatprep.subr.mxu0 0.0
        %5518 = vmatpush1.msra.mxu0 0.0
        %5519 = vmatprep.subr.mxu0 0.0
        %5520 = vmatpush1.msra.mxu0 0.0
        %5521 = vmatprep.subr.mxu0 0.0
        %5522 = vmatpush1.msra.mxu0 0.0
        %5523 = vmatprep.subr.mxu0 0.0
        %5524 = vmatpush1.msra.mxu0 0.0
        %5525 = vmatprep.subr.mxu0 0.0
        %5526 = vmatpush1.msra.mxu0 0.0
        %5527 = vmatprep.mubr.f32.mxu0 0.0
        %5528 = vmatmul.mubr.f32.gmra.mrb[0].mxu0 %v5319
        %v5529 = vpop.f32.mrb[0].mxu0
        %v5530 = vadd.f32 %v5459, %v5529
        %v5531 = vpop.f32.mrb[0].mxu0
        %v5532 = vadd.f32 %v5461, %v5531
        %5533 = vdwg.mxu0
        %5534 = vmatprep.subr.mxu0 %v4201
        %5535 = vmatpush1.msra.mxu0 %v4200
        %5536 = vmatprep.subr.mxu0 %v4206
        %5537 = vmatpush1.msra.mxu0 %v4205
        %5538 = vmatprep.subr.mxu0 %v4211
        %5539 = vmatpush1.msra.mxu0 %v4210
        %5540 = vmatprep.subr.mxu0 %v4216
        %5541 = vmatpush1.msra.mxu0 %v4215
        %5542 = vmatprep.subr.mxu0 %v4221
        %5543 = vmatpush1.msra.mxu0 %v4220
        %5544 = vmatprep.subr.mxu0 %v4226
        %5545 = vmatpush1.msra.mxu0 %v4225
        %5546 = vmatprep.subr.mxu0 %v4231
        %5547 = vmatpush1.msra.mxu0 %v4230
        %5548 = vmatprep.subr.mxu0 %v4236
        %5549 = vmatpush1.msra.mxu0 %v4235
        %5550 = vmatprep.subr.mxu0 %v4241
        %5551 = vmatpush1.msra.mxu0 %v4240
        %5552 = vmatprep.subr.mxu0 %v4246
        %5553 = vmatpush1.msra.mxu0 %v4245
        %5554 = vmatprep.subr.mxu0 %v4251
        %5555 = vmatpush1.msra.mxu0 %v4250
        %5556 = vmatprep.subr.mxu0 %v4256
        %5557 = vmatpush1.msra.mxu0 %v4255
        %5558 = vmatprep.subr.mxu0 %v4261
        %5559 = vmatpush1.msra.mxu0 %v4260
        %5560 = vmatprep.subr.mxu0 %v4266
        %5561 = vmatpush1.msra.mxu0 %v4265
        %5562 = vmatprep.subr.mxu0 %v4271
        %5563 = vmatpush1.msra.mxu0 %v4270
        %5564 = vmatprep.subr.mxu0 %v4276
        %5565 = vmatpush1.msra.mxu0 %v4275
        %5566 = vmatprep.subr.mxu0 %v4281
        %5567 = vmatpush1.msra.mxu0 %v4280
        %5568 = vmatprep.subr.mxu0 %v4286
        %5569 = vmatpush1.msra.mxu0 %v4285
        %5570 = vmatprep.subr.mxu0 %v4291
        %5571 = vmatpush1.msra.mxu0 %v4290
        %5572 = vmatprep.subr.mxu0 %v4296
        %5573 = vmatpush1.msra.mxu0 %v4295
        %5574 = vmatprep.subr.mxu0 %v4301
        %5575 = vmatpush1.msra.mxu0 %v4300
        %5576 = vmatprep.subr.mxu0 %v4306
        %5577 = vmatpush1.msra.mxu0 %v4305
        %5578 = vmatprep.subr.mxu0 %v4311
        %5579 = vmatpush1.msra.mxu0 %v4310
        %5580 = vmatprep.subr.mxu0 %v4316
        %5581 = vmatpush1.msra.mxu0 %v4315
        %5582 = vmatprep.subr.mxu0 %v4321
        %5583 = vmatpush1.msra.mxu0 %v4320
        %5584 = vmatprep.subr.mxu0 %v4326
        %5585 = vmatpush1.msra.mxu0 %v4325
        %5586 = vmatprep.subr.mxu0 %v4331
        %5587 = vmatpush1.msra.mxu0 %v4330
        %5588 = vmatprep.subr.mxu0 %v4336
        %5589 = vmatpush1.msra.mxu0 %v4335
        %5590 = vmatprep.subr.mxu0 %v4341
        %5591 = vmatpush1.msra.mxu0 %v4340
        %5592 = vmatprep.subr.mxu0 %v4346
        %5593 = vmatpush1.msra.mxu0 %v4345
        %5594 = vmatprep.subr.mxu0 %v4351
        %5595 = vmatpush1.msra.mxu0 %v4350
        %5596 = vmatprep.subr.mxu0 %v4356
        %5597 = vmatpush1.msra.mxu0 %v4355
        %5598 = vmatprep.mubr.f32.mxu0 %v5264
        %5599 = vmatmul.mubr.f32.gmra.mrb[0].mxu0 %v5263
        %v5600 = vpop.f32.mrb[0].mxu0
        %v5601 = vadd.f32 1e-05, %v5600
        %v5602 = vpop.f32.mrb[0].mxu0
        %v5603 = vadd.f32 1e-05, %v5602
        %5604 = vdwg.mxu0
        %5605 = vmatprep.subr.mxu0 %v4361
        %5606 = vmatpush1.msra.mxu0 %v4360
        %5607 = vmatprep.subr.mxu0 %v4366
        %5608 = vmatpush1.msra.mxu0 %v4365
        %5609 = vmatprep.subr.mxu0 %v4371
        %5610 = vmatpush1.msra.mxu0 %v4370
        %5611 = vmatprep.subr.mxu0 %v4376
        %5612 = vmatpush1.msra.mxu0 %v4375
        %5613 = vmatprep.subr.mxu0 %v4381
        %5614 = vmatpush1.msra.mxu0 %v4380
        %5615 = vmatprep.subr.mxu0 %v4386
        %5616 = vmatpush1.msra.mxu0 %v4385
        %5617 = vmatprep.subr.mxu0 %v4391
        %5618 = vmatpush1.msra.mxu0 %v4390
        %5619 = vmatprep.subr.mxu0 %v4396
        %5620 = vmatpush1.msra.mxu0 %v4395
        %5621 = vmatprep.subr.mxu0 %v4401
        %5622 = vmatpush1.msra.mxu0 %v4400
        %5623 = vmatprep.subr.mxu0 %v4406
        %5624 = vmatpush1.msra.mxu0 %v4405
        %5625 = vmatprep.subr.mxu0 %v4411
        %5626 = vmatpush1.msra.mxu0 %v4410
        %5627 = vmatprep.subr.mxu0 %v4416
        %5628 = vmatpush1.msra.mxu0 %v4415
        %5629 = vmatprep.subr.mxu0 %v4421
        %5630 = vmatpush1.msra.mxu0 %v4420
        %5631 = vmatprep.subr.mxu0 %v4426
        %5632 = vmatpush1.msra.mxu0 %v4425
        %5633 = vmatprep.subr.mxu0 %v4431
        %5634 = vmatpush1.msra.mxu0 %v4430
        %5635 = vmatprep.subr.mxu0 %v4436
        %5636 = vmatpush1.msra.mxu0 %v4435
        %5637 = vmatprep.subr.mxu0 %v4441
        %5638 = vmatpush1.msra.mxu0 %v4440
        %5639 = vmatprep.subr.mxu0 %v4446
        %5640 = vmatpush1.msra.mxu0 %v4445
        %5641 = vmatprep.subr.mxu0 %v4451
        %5642 = vmatpush1.msra.mxu0 %v4450
        %5643 = vmatprep.subr.mxu0 %v4456
        %5644 = vmatpush1.msra.mxu0 %v4455
        %5645 = vmatprep.subr.mxu0 %v4461
        %5646 = vmatpush1.msra.mxu0 %v4460
        %5647 = vmatprep.subr.mxu0 %v4466
        %5648 = vmatpush1.msra.mxu0 %v4465
        %5649 = vmatprep.subr.mxu0 %v4471
        %5650 = vmatpush1.msra.mxu0 %v4470
        %5651 = vmatprep.subr.mxu0 %v4476
        %5652 = vmatpush1.msra.mxu0 %v4475
        %5653 = vmatprep.subr.mxu0 %v4481
        %5654 = vmatpush1.msra.mxu0 %v4480
        %5655 = vmatprep.subr.mxu0 %v4486
        %5656 = vmatpush1.msra.mxu0 %v4485
        %5657 = vmatprep.subr.mxu0 %v4491
        %5658 = vmatpush1.msra.mxu0 %v4490
        %5659 = vmatprep.subr.mxu0 %v4496
        %5660 = vmatpush1.msra.mxu0 %v4495
        %5661 = vmatprep.subr.mxu0 %v4501
        %5662 = vmatpush1.msra.mxu0 %v4500
        %5663 = vmatprep.subr.mxu0 %v4506
        %5664 = vmatpush1.msra.mxu0 %v4505
        %5665 = vmatprep.subr.mxu0 %v4511
        %5666 = vmatpush1.msra.mxu0 %v4510
        %5667 = vmatprep.subr.mxu0 %v4516
        %5668 = vmatpush1.msra.mxu0 %v4515
        %5669 = vmatprep.mubr.f32.mxu0 %v5266
        %5670 = vmatmul.mubr.f32.gmra.mrb[0].mxu0 %v5265
        %v5671 = vpop.f32.mrb[0].mxu0
        %v5672 = vadd.f32 %v5601, %v5671
        %v5673 = vpop.f32.mrb[0].mxu0
        %v5674 = vadd.f32 %v5603, %v5673
        %5675 = vdwg.mxu0
        %5676 = vmatprep.subr.mxu0 %v4521
        %5677 = vmatpush1.msra.mxu0 %v4520
        %5678 = vmatprep.subr.mxu0 %v4526
        %5679 = vmatpush1.msra.mxu0 %v4525
        %5680 = vmatprep.subr.mxu0 %v4531
        %5681 = vmatpush1.msra.mxu0 %v4530
        %5682 = vmatprep.subr.mxu0 %v4536
        %5683 = vmatpush1.msra.mxu0 %v4535
        %5684 = vmatprep.subr.mxu0 %v4541
        %5685 = vmatpush1.msra.mxu0 %v4540
        %5686 = vmatprep.subr.mxu0 %v4546
        %5687 = vmatpush1.msra.mxu0 %v4545
        %5688 = vmatprep.subr.mxu0 %v4551
        %5689 = vmatpush1.msra.mxu0 %v4550
        %5690 = vmatprep.subr.mxu0 %v4556
        %5691 = vmatpush1.msra.mxu0 %v4555
        %5692 = vmatprep.subr.mxu0 0.0
        %5693 = vmatpush1.msra.mxu0 0.0
        %5694 = vmatprep.subr.mxu0 0.0
        %5695 = vmatpush1.msra.mxu0 0.0
        %5696 = vmatprep.subr.mxu0 0.0
        %5697 = vmatpush1.msra.mxu0 0.0
        %5698 = vmatprep.subr.mxu0 0.0
        %5699 = vmatpush1.msra.mxu0 0.0
        %5700 = vmatprep.subr.mxu0 0.0
        %5701 = vmatpush1.msra.mxu0 0.0
        %5702 = vmatprep.subr.mxu0 0.0
        %5703 = vmatpush1.msra.mxu0 0.0
        %5704 = vmatprep.subr.mxu0 0.0
        %5705 = vmatpush1.msra.mxu0 0.0
        %5706 = vmatprep.subr.mxu0 0.0
        %5707 = vmatpush1.msra.mxu0 0.0
        %5708 = vmatprep.subr.mxu0 0.0
        %5709 = vmatpush1.msra.mxu0 0.0
        %5710 = vmatprep.subr.mxu0 0.0
        %5711 = vmatpush1.msra.mxu0 0.0
        %5712 = vmatprep.subr.mxu0 0.0
        %5713 = vmatpush1.msra.mxu0 0.0
        %5714 = vmatprep.subr.mxu0 0.0
        %5715 = vmatpush1.msra.mxu0 0.0
        %5716 = vmatprep.subr.mxu0 0.0
        %5717 = vmatpush1.msra.mxu0 0.0
        %5718 = vmatprep.subr.mxu0 0.0
        %5719 = vmatpush1.msra.mxu0 0.0
        %5720 = vmatprep.subr.mxu0 0.0
        %5721 = vmatpush1.msra.mxu0 0.0
        %5722 = vmatprep.subr.mxu0 0.0
        %5723 = vmatpush1.msra.mxu0 0.0
        %5724 = vmatprep.subr.mxu0 0.0
        %5725 = vmatpush1.msra.mxu0 0.0
        %5726 = vmatprep.subr.mxu0 0.0
        %5727 = vmatpush1.msra.mxu0 0.0
        %5728 = vmatprep.subr.mxu0 0.0
        %5729 = vmatpush1.msra.mxu0 0.0
        %5730 = vmatprep.subr.mxu0 0.0
        %5731 = vmatpush1.msra.mxu0 0.0
        %5732 = vmatprep.subr.mxu0 0.0
        %5733 = vmatpush1.msra.mxu0 0.0
        %5734 = vmatprep.subr.mxu0 0.0
        %5735 = vmatpush1.msra.mxu0 0.0
        %5736 = vmatprep.subr.mxu0 0.0
        %5737 = vmatpush1.msra.mxu0 0.0
        %5738 = vmatprep.subr.mxu0 0.0
        %5739 = vmatpush1.msra.mxu0 0.0
        %5740 = vmatprep.mubr.f32.mxu0 0.0
        %5741 = vmatmul.mubr.f32.gmra.mrb[0].mxu0 %v5319
        %v5742 = vpop.f32.mrb[0].mxu0
        %v5743 = vadd.f32 %v5672, %v5742
        %v5744 = vpop.f32.mrb[0].mxu0
        %v5745 = vadd.f32 %v5674, %v5744
        %5746 = vdwg.mxu0
        %5747 = vmatprep.subr.mxu0 0.0
        %5748 = vmatpush1.msra.mxu0 %v4202
        %5749 = vmatprep.subr.mxu0 0.0
        %5750 = vmatpush1.msra.mxu0 %v4207
        %5751 = vmatprep.subr.mxu0 0.0
        %5752 = vmatpush1.msra.mxu0 %v4212
        %5753 = vmatprep.subr.mxu0 0.0
        %5754 = vmatpush1.msra.mxu0 %v4217
        %5755 = vmatprep.subr.mxu0 0.0
        %5756 = vmatpush1.msra.mxu0 %v4222
        %5757 = vmatprep.subr.mxu0 0.0
        %5758 = vmatpush1.msra.mxu0 %v4227
        %5759 = vmatprep.subr.mxu0 0.0
        %5760 = vmatpush1.msra.mxu0 %v4232
        %5761 = vmatprep.subr.mxu0 0.0
        %5762 = vmatpush1.msra.mxu0 %v4237
        %5763 = vmatprep.subr.mxu0 0.0
        %5764 = vmatpush1.msra.mxu0 %v4242
        %5765 = vmatprep.subr.mxu0 0.0
        %5766 = vmatpush1.msra.mxu0 %v4247
        %5767 = vmatprep.subr.mxu0 0.0
        %5768 = vmatpush1.msra.mxu0 %v4252
        %5769 = vmatprep.subr.mxu0 0.0
        %5770 = vmatpush1.msra.mxu0 %v4257
        %5771 = vmatprep.subr.mxu0 0.0
        %5772 = vmatpush1.msra.mxu0 %v4262
        %5773 = vmatprep.subr.mxu0 0.0
        %5774 = vmatpush1.msra.mxu0 %v4267
        %5775 = vmatprep.subr.mxu0 0.0
        %5776 = vmatpush1.msra.mxu0 %v4272
        %5777 = vmatprep.subr.mxu0 0.0
        %5778 = vmatpush1.msra.mxu0 %v4277
        %5779 = vmatprep.subr.mxu0 0.0
        %5780 = vmatpush1.msra.mxu0 %v4282
        %5781 = vmatprep.subr.mxu0 0.0
        %5782 = vmatpush1.msra.mxu0 %v4287
        %5783 = vmatprep.subr.mxu0 0.0
        %5784 = vmatpush1.msra.mxu0 %v4292
        %5785 = vmatprep.subr.mxu0 0.0
        %5786 = vmatpush1.msra.mxu0 %v4297
        %5787 = vmatprep.subr.mxu0 0.0
        %5788 = vmatpush1.msra.mxu0 %v4302
        %5789 = vmatprep.subr.mxu0 0.0
        %5790 = vmatpush1.msra.mxu0 %v4307
        %5791 = vmatprep.subr.mxu0 0.0
        %5792 = vmatpush1.msra.mxu0 %v4312
        %5793 = vmatprep.subr.mxu0 0.0
        %5794 = vmatpush1.msra.mxu0 %v4317
        %5795 = vmatprep.subr.mxu0 0.0
        %5796 = vmatpush1.msra.mxu0 %v4322
        %5797 = vmatprep.subr.mxu0 0.0
        %5798 = vmatpush1.msra.mxu0 %v4327
        %5799 = vmatprep.subr.mxu0 0.0
        %5800 = vmatpush1.msra.mxu0 %v4332
        %5801 = vmatprep.subr.mxu0 0.0
        %5802 = vmatpush1.msra.mxu0 %v4337
        %5803 = vmatprep.subr.mxu0 0.0
        %5804 = vmatpush1.msra.mxu0 %v4342
        %5805 = vmatprep.subr.mxu0 0.0
        %5806 = vmatpush1.msra.mxu0 %v4347
        %5807 = vmatprep.subr.mxu0 0.0
        %5808 = vmatpush1.msra.mxu0 %v4352
        %5809 = vmatprep.subr.mxu0 0.0
        %5810 = vmatpush1.msra.mxu0 %v4357
        %5811 = vmatprep.mubr.f32.mxu0 %v5264
        %5812 = vmatmul.mubr.f32.gmra.mrb[0].mxu0 %v5263
        %v5813 = vpop.f32.mrb[0].mxu0
        %v5814 = vadd.f32 1e-05, %v5813
        %v5815 = vpop.f32.mrb[0].mxu0
        %5816 = vdwg.mxu0
        %5817 = vmatprep.subr.mxu0 0.0
        %5818 = vmatpush1.msra.mxu0 %v4362
        %5819 = vmatprep.subr.mxu0 0.0
        %5820 = vmatpush1.msra.mxu0 %v4367
        %5821 = vmatprep.subr.mxu0 0.0
        %5822 = vmatpush1.msra.mxu0 %v4372
        %5823 = vmatprep.subr.mxu0 0.0
        %5824 = vmatpush1.msra.mxu0 %v4377
        %5825 = vmatprep.subr.mxu0 0.0
        %5826 = vmatpush1.msra.mxu0 %v4382
        %5827 = vmatprep.subr.mxu0 0.0
        %5828 = vmatpush1.msra.mxu0 %v4387
        %5829 = vmatprep.subr.mxu0 0.0
        %5830 = vmatpush1.msra.mxu0 %v4392
        %5831 = vmatprep.subr.mxu0 0.0
        %5832 = vmatpush1.msra.mxu0 %v4397
        %5833 = vmatprep.subr.mxu0 0.0
        %5834 = vmatpush1.msra.mxu0 %v4402
        %5835 = vmatprep.subr.mxu0 0.0
        %5836 = vmatpush1.msra.mxu0 %v4407
        %5837 = vmatprep.subr.mxu0 0.0
        %5838 = vmatpush1.msra.mxu0 %v4412
        %5839 = vmatprep.subr.mxu0 0.0
        %5840 = vmatpush1.msra.mxu0 %v4417
        %5841 = vmatprep.subr.mxu0 0.0
        %5842 = vmatpush1.msra.mxu0 %v4422
        %5843 = vmatprep.subr.mxu0 0.0
        %5844 = vmatpush1.msra.mxu0 %v4427
        %5845 = vmatprep.subr.mxu0 0.0
        %5846 = vmatpush1.msra.mxu0 %v4432
        %5847 = vmatprep.subr.mxu0 0.0
        %5848 = vmatpush1.msra.mxu0 %v4437
        %5849 = vmatprep.subr.mxu0 0.0
        %5850 = vmatpush1.msra.mxu0 %v4442
        %5851 = vmatprep.subr.mxu0 0.0
        %5852 = vmatpush1.msra.mxu0 %v4447
        %5853 = vmatprep.subr.mxu0 0.0
        %5854 = vmatpush1.msra.mxu0 %v4452
        %5855 = vmatprep.subr.mxu0 0.0
        %5856 = vmatpush1.msra.mxu0 %v4457
        %5857 = vmatprep.subr.mxu0 0.0
        %5858 = vmatpush1.msra.mxu0 %v4462
        %5859 = vmatprep.subr.mxu0 0.0
        %5860 = vmatpush1.msra.mxu0 %v4467
        %5861 = vmatprep.subr.mxu0 0.0
        %5862 = vmatpush1.msra.mxu0 %v4472
        %5863 = vmatprep.subr.mxu0 0.0
        %5864 = vmatpush1.msra.mxu0 %v4477
        %5865 = vmatprep.subr.mxu0 0.0
        %5866 = vmatpush1.msra.mxu0 %v4482
        %5867 = vmatprep.subr.mxu0 0.0
        %5868 = vmatpush1.msra.mxu0 %v4487
        %5869 = vmatprep.subr.mxu0 0.0
        %5870 = vmatpush1.msra.mxu0 %v4492
        %5871 = vmatprep.subr.mxu0 0.0
        %5872 = vmatpush1.msra.mxu0 %v4497
        %5873 = vmatprep.subr.mxu0 0.0
        %5874 = vmatpush1.msra.mxu0 %v4502
        %5875 = vmatprep.subr.mxu0 0.0
        %5876 = vmatpush1.msra.mxu0 %v4507
        %5877 = vmatprep.subr.mxu0 0.0
        %5878 = vmatpush1.msra.mxu0 %v4512
        %5879 = vmatprep.subr.mxu0 0.0
        %5880 = vmatpush1.msra.mxu0 %v4517
        %5881 = vmatprep.mubr.f32.mxu0 %v5266
        %5882 = vmatmul.mubr.f32.gmra.mrb[0].mxu0 %v5265
        %v5883 = vpop.f32.mrb[0].mxu0
        %v5884 = vadd.f32 %v5814, %v5883
        %v5885 = vpop.f32.mrb[0].mxu0
        %5886 = vdwg.mxu0
        %5887 = vmatprep.subr.mxu0 0.0
        %5888 = vmatpush1.msra.mxu0 %v4522
        %5889 = vmatprep.subr.mxu0 0.0
        %5890 = vmatpush1.msra.mxu0 %v4527
        %5891 = vmatprep.subr.mxu0 0.0
        %5892 = vmatpush1.msra.mxu0 %v4532
        %5893 = vmatprep.subr.mxu0 0.0
        %5894 = vmatpush1.msra.mxu0 %v4537
        %5895 = vmatprep.subr.mxu0 0.0
        %5896 = vmatpush1.msra.mxu0 %v4542
        %5897 = vmatprep.subr.mxu0 0.0
        %5898 = vmatpush1.msra.mxu0 %v4547
        %5899 = vmatprep.subr.mxu0 0.0
        %5900 = vmatpush1.msra.mxu0 %v4552
        %5901 = vmatprep.subr.mxu0 0.0
        %5902 = vmatpush1.msra.mxu0 %v4557
        %5903 = vmatprep.subr.mxu0 0.0
        %5904 = vmatpush1.msra.mxu0 0.0
        %5905 = vmatprep.subr.mxu0 0.0
        %5906 = vmatpush1.msra.mxu0 0.0
        %5907 = vmatprep.subr.mxu0 0.0
        %5908 = vmatpush1.msra.mxu0 0.0
        %5909 = vmatprep.subr.mxu0 0.0
        %5910 = vmatpush1.msra.mxu0 0.0
        %5911 = vmatprep.subr.mxu0 0.0
        %5912 = vmatpush1.msra.mxu0 0.0
        %5913 = vmatprep.subr.mxu0 0.0
        %5914 = vmatpush1.msra.mxu0 0.0
        %5915 = vmatprep.subr.mxu0 0.0
        %5916 = vmatpush1.msra.mxu0 0.0
        %5917 = vmatprep.subr.mxu0 0.0
        %5918 = vmatpush1.msra.mxu0 0.0
        %5919 = vmatprep.subr.mxu0 0.0
        %5920 = vmatpush1.msra.mxu0 0.0
        %5921 = vmatprep.subr.mxu0 0.0
        %5922 = vmatpush1.msra.mxu0 0.0
        %5923 = vmatprep.subr.mxu0 0.0
        %5924 = vmatpush1.msra.mxu0 0.0
        %5925 = vmatprep.subr.mxu0 0.0
        %5926 = vmatpush1.msra.mxu0 0.0
        %5927 = vmatprep.subr.mxu0 0.0
        %5928 = vmatpush1.msra.mxu0 0.0
        %5929 = vmatprep.subr.mxu0 0.0
        %5930 = vmatpush1.msra.mxu0 0.0
        %5931 = vmatprep.subr.mxu0 0.0
        %5932 = vmatpush1.msra.mxu0 0.0
        %5933 = vmatprep.subr.mxu0 0.0
        %5934 = vmatpush1.msra.mxu0 0.0
        %5935 = vmatprep.subr.mxu0 0.0
        %5936 = vmatpush1.msra.mxu0 0.0
        %5937 = vmatprep.subr.mxu0 0.0
        %5938 = vmatpush1.msra.mxu0 0.0
        %5939 = vmatprep.subr.mxu0 0.0
        %5940 = vmatpush1.msra.mxu0 0.0
        %5941 = vmatprep.subr.mxu0 0.0
        %5942 = vmatpush1.msra.mxu0 0.0
        %5943 = vmatprep.subr.mxu0 0.0
        %5944 = vmatpush1.msra.mxu0 0.0
        %5945 = vmatprep.subr.mxu0 0.0
        %5946 = vmatpush1.msra.mxu0 0.0
        %5947 = vmatprep.subr.mxu0 0.0
        %5948 = vmatpush1.msra.mxu0 0.0
        %5949 = vmatprep.subr.mxu0 0.0
        %5950 = vmatpush1.msra.mxu0 0.0
        %5951 = vmatprep.mubr.f32.mxu0 0.0
        %5952 = vmatmul.mubr.f32.gmra.mrb[0].mxu0 %v5319
        %v5953 = vpop.f32.mrb[0].mxu0
        %v5954 = vadd.f32 %v5884, %v5953
        %v5955 = vpop.f32.mrb[0].mxu0
        %5956 = vdwg.mxu0
        %v5957 = vrsqrt.pop %v5530
        %v5958 = vrsqrt.pop %v5532
        %v5959 = vrsqrt.pop %v5743
        %v5960 = vrsqrt.pop %v5745
        %v5961 = vrsqrt.pop %v5954
        %v5962 = vlaneseq
        %v5963 = vshrl.u32 %v5962, 7
        %v5964 = vsub.s32 0, %v5963
        %v5965 = vrot.slane %v5957, %v5964
        %v5966 = vlaneseq
        %v5967 = vshrl.u32 %v5966, 7
        %v5968 = vsub.s32 0, %v5967
        %v5969 = vrot.slane %v5958, %v5968
        %v5970 = vlaneseq
        %v5971 = vshrl.u32 %v5970, 7
        %v5972 = vsub.s32 0, %v5971
        %v5973 = vrot.slane %v5959, %v5972
        %v5974 = vlaneseq
        %v5975 = vshrl.u32 %v5974, 7
        %v5976 = vsub.s32 0, %v5975
        %v5977 = vrot.slane %v5960, %v5976
        %v5978 = vlaneseq
        %v5979 = vshrl.u32 %v5978, 7
        %v5980 = vsub.s32 0, %v5979
        %v5981 = vrot.slane %v5961, %v5980
        %v5982 = vmul.f32 %v5313, %v5965
        %v5983 = vmul.f32 %v5314, %v5969
        %v5984 = vmul.f32 %v5315, %v5973
        %v5985 = vmul.f32 %v5316, %v5977
        %v5986 = vmul.f32 %v5317, %v5981
        %v5987 = vlaneseq
        %v5988 = vshrl.u32 %v5987, 7
        %v5989 = vsub.s32 2, %v5988
        %v5990 = vrot.slane %v3682, %v5989
        %v5991 = vlaneseq
        %v5992 = vshrl.u32 %v5991, 7
        %v5993 = vsub.s32 6, %v5992
        %v5994 = vrot.slane %v3682, %v5993
        %v5995 = vlaneseq
        %v5996 = vshrl.u32 %v5995, 7
        %v5997 = vsub.s32 2, %v5996
        %v5998 = vrot.slane %v3683, %v5997
        %v5999 = vlaneseq
        %v6000 = vshrl.u32 %v5999, 7
        %v6001 = vsub.s32 6, %v6000
        %v6002 = vrot.slane %v3683, %v6001
        %v6003 = vlaneseq
        %v6004 = vshrl.u32 %v6003, 7
        %v6005 = vsub.s32 2, %v6004
        %v6006 = vrot.slane %v3684, %v6005
        %v6012 = vlaneseq
        %v6013 = vshrl.u32 %v6012, 7
        %v6014 = vsub.s32 2, %v6013
        %v6015 = vrot.slane %v5990, %v6014
        %v6016 = vlaneseq
        %v6017 = vshrl.u32 %v6016, 7
        %v6018 = vsub.s32 2, %v6017
        %v6019 = vrot.slane %v5994, %v6018
        %v6020 = vlaneseq
        %v6021 = vshrl.u32 %v6020, 7
        %v6022 = vsub.s32 2, %v6021
        %v6023 = vrot.slane %v5998, %v6022
        %v6024 = vlaneseq
        %v6025 = vshrl.u32 %v6024, 7
        %v6026 = vsub.s32 2, %v6025
        %v6027 = vrot.slane %v6002, %v6026
        %v6028 = vlaneseq
        %v6029 = vshrl.u32 %v6028, 7
        %v6030 = vsub.s32 2, %v6029
        %v6031 = vrot.slane %v6006, %v6030
        %v6032 = vadd.f32 %v5982, %v6015
        %v6033 = vadd.f32 %v5983, %v6019
        %v6034 = vadd.f32 %v5984, %v6023
        %v6035 = vadd.f32 %v5985, %v6027
        %v6036 = vadd.f32 %v5986, %v6031
        %vm6037 = vcmp.ge.f32.partialorder %v6032, 0.0
        %vm6038 = vcmp.ge.f32.partialorder %v6033, 0.0
        %vm6039 = vcmp.ge.f32.partialorder %v6034, 0.0
        %vm6040 = vcmp.ge.f32.partialorder %v6035, 0.0
        %vm6041 = vcmp.ge.f32.partialorder %v6036, 0.0
        %v6042 = vlaneseq
        %v6043 = vshrl.u32 %v6042, 7
        %v6044 = vsub.s32 3, %v6043
        %v6045 = vrot.slane %v3682, %v6044
        %v6046 = vlaneseq
        %v6047 = vshrl.u32 %v6046, 7
        %v6048 = vsub.s32 7, %v6047
        %v6049 = vrot.slane %v3682, %v6048
        %v6050 = vlaneseq
        %v6051 = vshrl.u32 %v6050, 7
        %v6052 = vsub.s32 3, %v6051
        %v6053 = vrot.slane %v3683, %v6052
        %v6054 = vlaneseq
        %v6055 = vshrl.u32 %v6054, 7
        %v6056 = vsub.s32 7, %v6055
        %v6057 = vrot.slane %v3683, %v6056
        %v6058 = vlaneseq
        %v6059 = vshrl.u32 %v6058, 7
        %v6060 = vsub.s32 3, %v6059
        %v6061 = vrot.slane %v3684, %v6060
        %v6067 = vlaneseq
        %v6068 = vshrl.u32 %v6067, 7
        %v6069 = vsub.s32 3, %v6068
        %v6070 = vrot.slane %v6045, %v6069
        %v6071 = vlaneseq
        %v6072 = vshrl.u32 %v6071, 7
        %v6073 = vsub.s32 3, %v6072
        %v6074 = vrot.slane %v6049, %v6073
        %v6075 = vlaneseq
        %v6076 = vshrl.u32 %v6075, 7
        %v6077 = vsub.s32 3, %v6076
        %v6078 = vrot.slane %v6053, %v6077
        %v6079 = vlaneseq
        %v6080 = vshrl.u32 %v6079, 7
        %v6081 = vsub.s32 3, %v6080
        %v6082 = vrot.slane %v6057, %v6081
        %v6083 = vlaneseq
        %v6084 = vshrl.u32 %v6083, 7
        %v6085 = vsub.s32 3, %v6084
        %v6086 = vrot.slane %v6061, %v6085
        %v6087 = vmul.f32 %v6070, %v6032
        %v6088 = vmul.f32 %v6074, %v6033
        %v6089 = vmul.f32 %v6078, %v6034
        %v6090 = vmul.f32 %v6082, %v6035
        %v6091 = vmul.f32 %v6086, %v6036
        %v6092 = vsel %vm6037, %v6032, %v6087
        %v6093 = vsel %vm6038, %v6033, %v6088
        %v6094 = vsel %vm6039, %v6034, %v6089
        %v6095 = vsel %vm6040, %v6035, %v6090
        %v6096 = vsel %vm6041, %v6036, %v6091
        %v6097 = vld [vmem:[#allocation7] sm:$0xff]
        %v6098 = vld [vmem:[#allocation7 + $0x8] sm:$0xff]
        %v6099 = vld [vmem:[#allocation7 + $0x10] sm:$0xff]
        %v6100 = vld [vmem:[#allocation7 + $0x18] sm:$0xff]
        %v6101 = vld [vmem:[#allocation7 + $0x20] sm:$0xff]
        %v6102 = vld [vmem:[#allocation7 + $0x28] sm:$0xff]
        %v6103 = vld [vmem:[#allocation7 + $0x30] sm:$0xff]
        %v6104 = vld [vmem:[#allocation7 + $0x38] sm:$0xff]
        %v6105 = vld [vmem:[#allocation7 + $0x40] sm:$0xff]
        %v6106 = vld [vmem:[#allocation7 + $0x48] sm:$0xff]
        %v6107 = vld [vmem:[#allocation7 + $0x50] sm:$0xff]
        %v6108 = vld [vmem:[#allocation7 + $0x58] sm:$0xff]
        %v6109 = vld [vmem:[#allocation7 + $0x60] sm:$0xff]
        %v6110 = vld [vmem:[#allocation7 + $0x68] sm:$0xff]
        %v6111 = vld [vmem:[#allocation7 + $0x70] sm:$0xff]
        %v6112 = vld [vmem:[#allocation7 + $0x78] sm:$0xff]
        %v6113 = vld [vmem:[#allocation7 + $0x80] sm:$0xff]
        %v6114 = vld [vmem:[#allocation7 + $0x88] sm:$0xff]
        %v6115 = vld [vmem:[#allocation7 + $0x90] sm:$0xff]
        %v6116 = vld [vmem:[#allocation7 + $0x98] sm:$0xff]
        %v6117 = vld [vmem:[#allocation7 + $0xa0] sm:$0xff]
        %v6118 = vld [vmem:[#allocation7 + $0xa8] sm:$0xff]
        %v6119 = vld [vmem:[#allocation7 + $0xb0] sm:$0xff]
        %v6120 = vld [vmem:[#allocation7 + $0xb8] sm:$0xff]
        %v6121 = vld [vmem:[#allocation7 + $0xc0] sm:$0xff]
        %v6122 = vld [vmem:[#allocation7 + $0xc8] sm:$0xff]
        %v6123 = vld [vmem:[#allocation7 + $0xd0] sm:$0xff]
        %v6124 = vld [vmem:[#allocation7 + $0xd8] sm:$0xff]
        %v6125 = vld [vmem:[#allocation7 + $0xe0] sm:$0xff]
        %v6126 = vld [vmem:[#allocation7 + $0xe8] sm:$0xff]
        %v6127 = vld [vmem:[#allocation7 + $0xf0] sm:$0xff]
        %v6128 = vld [vmem:[#allocation7 + $0xf8] sm:$0xff]
        %v6129 = vld [vmem:[#allocation7 + $0x100] sm:$0xff]
        %v6130 = vld [vmem:[#allocation7 + $0x108] sm:$0xff]
        %v6131 = vld [vmem:[#allocation7 + $0x110] sm:$0xff]
        %v6132 = vld [vmem:[#allocation7 + $0x118] sm:$0xff]
        %v6133 = vld [vmem:[#allocation7 + $0x120] sm:$0xff]
        %v6134 = vld [vmem:[#allocation7 + $0x128] sm:$0xff]
        %v6135 = vld [vmem:[#allocation7 + $0x130] sm:$0xff]
        %v6136 = vld [vmem:[#allocation7 + $0x138] sm:$0xff]
        %v6137 = vld [vmem:[#allocation7 + $0x140] sm:$0xff]
        %v6138 = vld [vmem:[#allocation7 + $0x148] sm:$0xff]
        %v6139 = vld [vmem:[#allocation7 + $0x150] sm:$0xff]
        %v6140 = vld [vmem:[#allocation7 + $0x158] sm:$0xff]
        %v6141 = vld [vmem:[#allocation7 + $0x160] sm:$0xff]
        %v6142 = vld [vmem:[#allocation7 + $0x168] sm:$0xff]
        %v6143 = vld [vmem:[#allocation7 + $0x170] sm:$0xff]
        %v6144 = vld [vmem:[#allocation7 + $0x178] sm:$0xff]
        %v6145 = vld [vmem:[#allocation7 + $0x180] sm:$0xff]
        %v6146 = vld [vmem:[#allocation7 + $0x188] sm:$0xff]
        %v6147 = vld [vmem:[#allocation7 + $0x190] sm:$0xff]
        %v6148 = vld [vmem:[#allocation7 + $0x198] sm:$0xff]
        %v6149 = vld [vmem:[#allocation7 + $0x1a0] sm:$0xff]
        %v6150 = vld [vmem:[#allocation7 + $0x1a8] sm:$0xff]
        %v6151 = vld [vmem:[#allocation7 + $0x1b0] sm:$0xff]
        %v6152 = vld [vmem:[#allocation7 + $0x1b8] sm:$0xff]
        %v6153 = vld [vmem:[#allocation7 + $0x1c0] sm:$0xff]
        %v6154 = vld [vmem:[#allocation7 + $0x1c8] sm:$0xff]
        %v6155 = vld [vmem:[#allocation7 + $0x1d0] sm:$0xff]
        %v6156 = vld [vmem:[#allocation7 + $0x1d8] sm:$0xff]
        %v6157 = vld [vmem:[#allocation7 + $0x1e0] sm:$0xff]
        %v6158 = vld [vmem:[#allocation7 + $0x1e8] sm:$0xff]
        %v6159 = vld [vmem:[#allocation7 + $0x1f0] sm:$0xff]
        %v6160 = vld [vmem:[#allocation7 + $0x1f8] sm:$0xff]
        %v6161 = vld [vmem:[#allocation7 + $0x200] sm:$0xff]
        %v6162 = vld [vmem:[#allocation7 + $0x208] sm:$0xff]
        %v6163 = vld [vmem:[#allocation7 + $0x210] sm:$0xff]
        %v6164 = vld [vmem:[#allocation7 + $0x218] sm:$0xff]
        %v6165 = vld [vmem:[#allocation7 + $0x220] sm:$0xff]
        %v6166 = vld [vmem:[#allocation7 + $0x228] sm:$0xff]
        %v6167 = vld [vmem:[#allocation7 + $0x230] sm:$0xff]
        %v6168 = vld [vmem:[#allocation7 + $0x238] sm:$0xff]
        %v6169 = vld [vmem:[#allocation7 + $0x240] sm:$0xff]
        %v6170 = vld [vmem:[#allocation7 + $0x248] sm:$0xff]
        %v6171 = vld [vmem:[#allocation7 + $0x250] sm:$0xff]
        %v6172 = vld [vmem:[#allocation7 + $0x258] sm:$0xff]
        %v6173 = vld [vmem:[#allocation7 + $0x260] sm:$0xff]
        %v6174 = vld [vmem:[#allocation7 + $0x268] sm:$0xff]
        %v6175 = vld [vmem:[#allocation7 + $0x270] sm:$0xff]
        %v6176 = vld [vmem:[#allocation7 + $0x278] sm:$0xff]
        %v6177 = vld [vmem:[#allocation7 + $0x280] sm:$0xff]
        %v6178 = vld [vmem:[#allocation7 + $0x288] sm:$0xff]
        %v6179 = vld [vmem:[#allocation7 + $0x290] sm:$0xff]
        %v6180 = vld [vmem:[#allocation7 + $0x298] sm:$0xff]
        %v6181 = vld [vmem:[#allocation7 + $0x2a0] sm:$0xff]
        %v6182 = vld [vmem:[#allocation7 + $0x2a8] sm:$0xff]
        %v6183 = vld [vmem:[#allocation7 + $0x2b0] sm:$0xff]
        %v6184 = vld [vmem:[#allocation7 + $0x2b8] sm:$0xff]
        %v6185 = vld [vmem:[#allocation7 + $0x2c0] sm:$0xff]
        %v6186 = vld [vmem:[#allocation7 + $0x2c8] sm:$0xff]
        %v6187 = vld [vmem:[#allocation7 + $0x2d0] sm:$0xff]
        %v6188 = vld [vmem:[#allocation7 + $0x2d8] sm:$0xff]
        %v6189 = vld [vmem:[#allocation7 + $0x2e0] sm:$0xff]
        %v6190 = vld [vmem:[#allocation7 + $0x2e8] sm:$0xff]
        %v6191 = vld [vmem:[#allocation7 + $0x2f0] sm:$0xff]
        %v6192 = vld [vmem:[#allocation7 + $0x2f8] sm:$0xff]
        %v6193 = vld [vmem:[#allocation7 + $0x300] sm:$0xff]
        %v6194 = vld [vmem:[#allocation7 + $0x308] sm:$0xff]
        %v6195 = vld [vmem:[#allocation7 + $0x310] sm:$0xff]
        %v6196 = vld [vmem:[#allocation7 + $0x318] sm:$0xff]
        %v6197 = vld [vmem:[#allocation7 + $0x320] sm:$0xff]
        %v6198 = vld [vmem:[#allocation7 + $0x328] sm:$0xff]
        %v6199 = vld [vmem:[#allocation7 + $0x330] sm:$0xff]
        %v6200 = vld [vmem:[#allocation7 + $0x338] sm:$0xff]
        %v6201 = vld [vmem:[#allocation7 + $0x340] sm:$0xff]
        %v6202 = vld [vmem:[#allocation7 + $0x348] sm:$0xff]
        %v6203 = vld [vmem:[#allocation7 + $0x350] sm:$0xff]
        %v6204 = vld [vmem:[#allocation7 + $0x358] sm:$0xff]
        %v6205 = vld [vmem:[#allocation7 + $0x360] sm:$0xff]
        %v6206 = vld [vmem:[#allocation7 + $0x368] sm:$0xff]
        %v6207 = vld [vmem:[#allocation7 + $0x370] sm:$0xff]
        %v6208 = vld [vmem:[#allocation7 + $0x378] sm:$0xff]
        %v6209 = vld [vmem:[#allocation7 + $0x380] sm:$0xff]
        %v6210 = vld [vmem:[#allocation7 + $0x388] sm:$0xff]
        %v6211 = vld [vmem:[#allocation7 + $0x390] sm:$0xff]
        %v6212 = vld [vmem:[#allocation7 + $0x398] sm:$0xff]
        %v6213 = vld [vmem:[#allocation7 + $0x3a0] sm:$0xff]
        %v6214 = vld [vmem:[#allocation7 + $0x3a8] sm:$0xff]
        %v6215 = vld [vmem:[#allocation7 + $0x3b0] sm:$0xff]
        %v6216 = vld [vmem:[#allocation7 + $0x3b8] sm:$0xff]
        %v6217 = vld [vmem:[#allocation7 + $0x3c0] sm:$0xff]
        %v6218 = vld [vmem:[#allocation7 + $0x3c8] sm:$0xff]
        %v6219 = vld [vmem:[#allocation7 + $0x3d0] sm:$0xff]
        %v6220 = vld [vmem:[#allocation7 + $0x3d8] sm:$0xff]
        %v6221 = vld [vmem:[#allocation7 + $0x3e0] sm:$0xff]
        %v6222 = vld [vmem:[#allocation7 + $0x3e8] sm:$0xff]
        %v6223 = vld [vmem:[#allocation7 + $0x3f0] sm:$0xff]
        %v6224 = vld [vmem:[#allocation7 + $0x3f8] sm:$0xff]
        %v6225 = vld [vmem:[#allocation7 + $0x400] sm:$0xff]
        %v6226 = vld [vmem:[#allocation7 + $0x408] sm:$0xff]
        %v6227 = vld [vmem:[#allocation7 + $0x410] sm:$0xff]
        %v6228 = vld [vmem:[#allocation7 + $0x418] sm:$0xff]
        %v6229 = vld [vmem:[#allocation7 + $0x420] sm:$0xff]
        %v6230 = vld [vmem:[#allocation7 + $0x428] sm:$0xff]
        %v6231 = vld [vmem:[#allocation7 + $0x430] sm:$0xff]
        %v6232 = vld [vmem:[#allocation7 + $0x438] sm:$0xff]
        %v6233 = vld [vmem:[#allocation7 + $0x440] sm:$0xff]
        %v6234 = vld [vmem:[#allocation7 + $0x448] sm:$0xff]
        %v6235 = vld [vmem:[#allocation7 + $0x450] sm:$0xff]
        %v6236 = vld [vmem:[#allocation7 + $0x458] sm:$0xff]
        %v6237 = vld [vmem:[#allocation7 + $0x460] sm:$0xff]
        %v6238 = vld [vmem:[#allocation7 + $0x468] sm:$0xff]
        %v6239 = vld [vmem:[#allocation7 + $0x470] sm:$0xff]
        %v6240 = vld [vmem:[#allocation7 + $0x478] sm:$0xff]
        %v6241 = vld [vmem:[%s10 + $0x34] sm:$0xff]
        %v6243 = vlaneseq
        %v6244 = vshrl.u32 %v6243, 7
        %v6245 = vsub.s32 0, %v6244
        %v6246 = vrot.slane %v6241, %v6245
        %v6247 = vlaneseq
        %v6248 = vshrl.u32 %v6247, 7
        %v6249 = vsub.s32 4, %v6248
        %v6250 = vrot.slane %v6241, %v6249
        %v6253 = vlaneseq
        %v6254 = vshrl.u32 %v6253, 7
        %v6255 = vsub.s32 0, %v6254
        %v6256 = vrot.slane %v6246, %v6255
        %v6257 = vlaneseq
        %v6258 = vshrl.u32 %v6257, 7
        %v6259 = vsub.s32 0, %v6258
        %v6260 = vrot.slane %v6250, %v6259
        %v6262 = vsel %vm4558, %v6096, 0
        %6264 = vmatprep.subr.mxu0 %v6098
        %6265 = vmatpush1.msra.mxu0 %v6097
        %6266 = vmatprep.subr.mxu0 %v6100
        %6267 = vmatpush1.msra.mxu0 %v6099
        %6268 = vmatprep.subr.mxu0 %v6102
        %6269 = vmatpush1.msra.mxu0 %v6101
        %6270 = vmatprep.subr.mxu0 %v6104
        %6271 = vmatpush1.msra.mxu0 %v6103
        %6272 = vmatprep.subr.mxu0 %v6106
        %6273 = vmatpush1.msra.mxu0 %v6105
        %6274 = vmatprep.subr.mxu0 %v6108
        %6275 = vmatpush1.msra.mxu0 %v6107
        %6276 = vmatprep.subr.mxu0 %v6110
        %6277 = vmatpush1.msra.mxu0 %v6109
        %6278 = vmatprep.subr.mxu0 %v6112
        %6279 = vmatpush1.msra.mxu0 %v6111
        %6280 = vmatprep.subr.mxu0 %v6114
        %6281 = vmatpush1.msra.mxu0 %v6113
        %6282 = vmatprep.subr.mxu0 %v6116
        %6283 = vmatpush1.msra.mxu0 %v6115
        %6284 = vmatprep.subr.mxu0 %v6118
        %6285 = vmatpush1.msra.mxu0 %v6117
        %6286 = vmatprep.subr.mxu0 %v6120
        %6287 = vmatpush1.msra.mxu0 %v6119
        %6288 = vmatprep.subr.mxu0 %v6122
        %6289 = vmatpush1.msra.mxu0 %v6121
        %6290 = vmatprep.subr.mxu0 %v6124
        %6291 = vmatpush1.msra.mxu0 %v6123
        %6292 = vmatprep.subr.mxu0 %v6126
        %6293 = vmatpush1.msra.mxu0 %v6125
        %6294 = vmatprep.subr.mxu0 %v6128
        %6295 = vmatpush1.msra.mxu0 %v6127
        %6296 = vmatprep.subr.mxu0 %v6130
        %6297 = vmatpush1.msra.mxu0 %v6129
        %6298 = vmatprep.subr.mxu0 %v6132
        %6299 = vmatpush1.msra.mxu0 %v6131
        %6300 = vmatprep.subr.mxu0 %v6134
        %6301 = vmatpush1.msra.mxu0 %v6133
        %6302 = vmatprep.subr.mxu0 %v6136
        %6303 = vmatpush1.msra.mxu0 %v6135
        %6304 = vmatprep.subr.mxu0 %v6138
        %6305 = vmatpush1.msra.mxu0 %v6137
        %6306 = vmatprep.subr.mxu0 %v6140
        %6307 = vmatpush1.msra.mxu0 %v6139
        %6308 = vmatprep.subr.mxu0 %v6142
        %6309 = vmatpush1.msra.mxu0 %v6141
        %6310 = vmatprep.subr.mxu0 %v6144
        %6311 = vmatpush1.msra.mxu0 %v6143
        %6312 = vmatprep.subr.mxu0 %v6146
        %6313 = vmatpush1.msra.mxu0 %v6145
        %6314 = vmatprep.subr.mxu0 %v6148
        %6315 = vmatpush1.msra.mxu0 %v6147
        %6316 = vmatprep.subr.mxu0 %v6150
        %6317 = vmatpush1.msra.mxu0 %v6149
        %6318 = vmatprep.subr.mxu0 %v6152
        %6319 = vmatpush1.msra.mxu0 %v6151
        %6320 = vmatprep.subr.mxu0 %v6154
        %6321 = vmatpush1.msra.mxu0 %v6153
        %6322 = vmatprep.subr.mxu0 %v6156
        %6323 = vmatpush1.msra.mxu0 %v6155
        %6324 = vmatprep.subr.mxu0 %v6158
        %6325 = vmatpush1.msra.mxu0 %v6157
        %6326 = vmatprep.subr.mxu0 %v6160
        %6327 = vmatpush1.msra.mxu0 %v6159
        %6328 = vmatprep.mubr.f32.mxu0 %v6093
        %6329 = vmatmul.mubr.f32.gmra.mrb[0].mxu0 %v6092
        %v6330 = vpop.f32.mrb[0].mxu0
        %v6331 = vadd.f32 %v6256, %v6330
        %v6332 = vpop.f32.mrb[0].mxu0
        %v6333 = vadd.f32 %v6260, %v6332
        %6334 = vdwg.mxu0
        %6335 = vmatprep.subr.mxu0 %v6162
        %6336 = vmatpush1.msra.mxu0 %v6161
        %6337 = vmatprep.subr.mxu0 %v6164
        %6338 = vmatpush1.msra.mxu0 %v6163
        %6339 = vmatprep.subr.mxu0 %v6166
        %6340 = vmatpush1.msra.mxu0 %v6165
        %6341 = vmatprep.subr.mxu0 %v6168
        %6342 = vmatpush1.msra.mxu0 %v6167
        %6343 = vmatprep.subr.mxu0 %v6170
        %6344 = vmatpush1.msra.mxu0 %v6169
        %6345 = vmatprep.subr.mxu0 %v6172
        %6346 = vmatpush1.msra.mxu0 %v6171
        %6347 = vmatprep.subr.mxu0 %v6174
        %6348 = vmatpush1.msra.mxu0 %v6173
        %6349 = vmatprep.subr.mxu0 %v6176
        %6350 = vmatpush1.msra.mxu0 %v6175
        %6351 = vmatprep.subr.mxu0 %v6178
        %6352 = vmatpush1.msra.mxu0 %v6177
        %6353 = vmatprep.subr.mxu0 %v6180
        %6354 = vmatpush1.msra.mxu0 %v6179
        %6355 = vmatprep.subr.mxu0 %v6182
        %6356 = vmatpush1.msra.mxu0 %v6181
        %6357 = vmatprep.subr.mxu0 %v6184
        %6358 = vmatpush1.msra.mxu0 %v6183
        %6359 = vmatprep.subr.mxu0 %v6186
        %6360 = vmatpush1.msra.mxu0 %v6185
        %6361 = vmatprep.subr.mxu0 %v6188
        %6362 = vmatpush1.msra.mxu0 %v6187
        %6363 = vmatprep.subr.mxu0 %v6190
        %6364 = vmatpush1.msra.mxu0 %v6189
        %6365 = vmatprep.subr.mxu0 %v6192
        %6366 = vmatpush1.msra.mxu0 %v6191
        %6367 = vmatprep.subr.mxu0 %v6194
        %6368 = vmatpush1.msra.mxu0 %v6193
        %6369 = vmatprep.subr.mxu0 %v6196
        %6370 = vmatpush1.msra.mxu0 %v6195
        %6371 = vmatprep.subr.mxu0 %v6198
        %6372 = vmatpush1.msra.mxu0 %v6197
        %6373 = vmatprep.subr.mxu0 %v6200
        %6374 = vmatpush1.msra.mxu0 %v6199
        %6375 = vmatprep.subr.mxu0 %v6202
        %6376 = vmatpush1.msra.mxu0 %v6201
        %6377 = vmatprep.subr.mxu0 %v6204
        %6378 = vmatpush1.msra.mxu0 %v6203
        %6379 = vmatprep.subr.mxu0 %v6206
        %6380 = vmatpush1.msra.mxu0 %v6205
        %6381 = vmatprep.subr.mxu0 %v6208
        %6382 = vmatpush1.msra.mxu0 %v6207
        %6383 = vmatprep.subr.mxu0 %v6210
        %6384 = vmatpush1.msra.mxu0 %v6209
        %6385 = vmatprep.subr.mxu0 %v6212
        %6386 = vmatpush1.msra.mxu0 %v6211
        %6387 = vmatprep.subr.mxu0 %v6214
        %6388 = vmatpush1.msra.mxu0 %v6213
        %6389 = vmatprep.subr.mxu0 %v6216
        %6390 = vmatpush1.msra.mxu0 %v6215
        %6391 = vmatprep.subr.mxu0 %v6218
        %6392 = vmatpush1.msra.mxu0 %v6217
        %6393 = vmatprep.subr.mxu0 %v6220
        %6394 = vmatpush1.msra.mxu0 %v6219
        %6395 = vmatprep.subr.mxu0 %v6222
        %6396 = vmatpush1.msra.mxu0 %v6221
        %6397 = vmatprep.subr.mxu0 %v6224
        %6398 = vmatpush1.msra.mxu0 %v6223
        %6399 = vmatprep.mubr.f32.mxu0 %v6095
        %6400 = vmatmul.mubr.f32.gmra.mrb[0].mxu0 %v6094
        %v6401 = vpop.f32.mrb[0].mxu0
        %v6402 = vadd.f32 %v6331, %v6401
        %v6403 = vpop.f32.mrb[0].mxu0
        %v6404 = vadd.f32 %v6333, %v6403
        %6405 = vdwg.mxu0
        %6406 = vmatprep.subr.mxu0 %v6226
        %6407 = vmatpush1.msra.mxu0 %v6225
        %6408 = vmatprep.subr.mxu0 %v6228
        %6409 = vmatpush1.msra.mxu0 %v6227
        %6410 = vmatprep.subr.mxu0 %v6230
        %6411 = vmatpush1.msra.mxu0 %v6229
        %6412 = vmatprep.subr.mxu0 %v6232
        %6413 = vmatpush1.msra.mxu0 %v6231
        %6414 = vmatprep.subr.mxu0 %v6234
        %6415 = vmatpush1.msra.mxu0 %v6233
        %6416 = vmatprep.subr.mxu0 %v6236
        %6417 = vmatpush1.msra.mxu0 %v6235
        %6418 = vmatprep.subr.mxu0 %v6238
        %6419 = vmatpush1.msra.mxu0 %v6237
        %6420 = vmatprep.subr.mxu0 %v6240
        %6421 = vmatpush1.msra.mxu0 %v6239
        %6422 = vmatprep.subr.mxu0 0.0
        %6423 = vmatpush1.msra.mxu0 0.0
        %6424 = vmatprep.subr.mxu0 0.0
        %6425 = vmatpush1.msra.mxu0 0.0
        %6426 = vmatprep.subr.mxu0 0.0
        %6427 = vmatpush1.msra.mxu0 0.0
        %6428 = vmatprep.subr.mxu0 0.0
        %6429 = vmatpush1.msra.mxu0 0.0
        %6430 = vmatprep.subr.mxu0 0.0
        %6431 = vmatpush1.msra.mxu0 0.0
        %6432 = vmatprep.subr.mxu0 0.0
        %6433 = vmatpush1.msra.mxu0 0.0
        %6434 = vmatprep.subr.mxu0 0.0
        %6435 = vmatpush1.msra.mxu0 0.0
        %6436 = vmatprep.subr.mxu0 0.0
        %6437 = vmatpush1.msra.mxu0 0.0
        %6438 = vmatprep.subr.mxu0 0.0
        %6439 = vmatpush1.msra.mxu0 0.0
        %6440 = vmatprep.subr.mxu0 0.0
        %6441 = vmatpush1.msra.mxu0 0.0
        %6442 = vmatprep.subr.mxu0 0.0
        %6443 = vmatpush1.msra.mxu0 0.0
        %6444 = vmatprep.subr.mxu0 0.0
        %6445 = vmatpush1.msra.mxu0 0.0
        %6446 = vmatprep.subr.mxu0 0.0
        %6447 = vmatpush1.msra.mxu0 0.0
        %6448 = vmatprep.subr.mxu0 0.0
        %6449 = vmatpush1.msra.mxu0 0.0
        %6450 = vmatprep.subr.mxu0 0.0
        %6451 = vmatpush1.msra.mxu0 0.0
        %6452 = vmatprep.subr.mxu0 0.0
        %6453 = vmatpush1.msra.mxu0 0.0
        %6454 = vmatprep.subr.mxu0 0.0
        %6455 = vmatpush1.msra.mxu0 0.0
        %6456 = vmatprep.subr.mxu0 0.0
        %6457 = vmatpush1.msra.mxu0 0.0
        %6458 = vmatprep.subr.mxu0 0.0
        %6459 = vmatpush1.msra.mxu0 0.0
        %6460 = vmatprep.subr.mxu0 0.0
        %6461 = vmatpush1.msra.mxu0 0.0
        %6462 = vmatprep.subr.mxu0 0.0
        %6463 = vmatpush1.msra.mxu0 0.0
        %6464 = vmatprep.subr.mxu0 0.0
        %6465 = vmatpush1.msra.mxu0 0.0
        %6466 = vmatprep.subr.mxu0 0.0
        %6467 = vmatpush1.msra.mxu0 0.0
        %6468 = vmatprep.subr.mxu0 0.0
        %6469 = vmatpush1.msra.mxu0 0.0
        %6470 = vmatprep.mubr.f32.mxu0 0.0
        %6471 = vmatmul.mubr.f32.gmra.mrb[0].mxu0 %v6262
        %v6472 = vpop.f32.mrb[0].mxu0
        %v6473 = vadd.f32 %v6402, %v6472
        %v6474 = vpop.f32.mrb[0].mxu0
        %v6475 = vadd.f32 %v6404, %v6474
        %6476 = vdwg.mxu0
        %v6477 = vsel %vm753, %v6473, 0.0
        %v6478 = vrot.slane %v6477, 4
        %v6479 = vadd.f32 %v6477, %v6478
        %v6480 = vrot.slane %v6479, 2
        %v6481 = vadd.f32 %v6479, %v6480
        %v6482 = vrot.slane %v6481, 1
        %v6483 = vadd.f32 %v6481, %v6482
        %v6484 = vsel %vm753, %v6475, 0.0
        %v6485 = vrot.slane %v6484, 4
        %v6486 = vadd.f32 %v6484, %v6485
        %v6487 = vrot.slane %v6486, 2
        %v6488 = vadd.f32 %v6486, %v6487
        %v6489 = vrot.slane %v6488, 1
        %v6490 = vadd.f32 %v6488, %v6489
        %v6491 = vmul.f32 %v6483, %v783
        %v6492 = vmul.f32 %v6490, %v783
        %v6493 = vsub.f32 %v6473, %v6491
        %v6494 = vsub.f32 %v6475, %v6492
        %v6495 = vmul.f32 %v6493, %v6493
        %v6496 = vmul.f32 %v6494, %v6494
        %v6497 = vsel %vm753, %v6495, 0.0
        %v6498 = vrot.slane %v6497, 4
        %v6499 = vadd.f32 %v6497, %v6498
        %v6500 = vrot.slane %v6499, 2
        %v6501 = vadd.f32 %v6499, %v6500
        %v6502 = vrot.slane %v6501, 1
        %v6503 = vadd.f32 %v6501, %v6502
        %v6504 = vsel %vm753, %v6496, 0.0
        %v6505 = vrot.slane %v6504, 4
        %v6506 = vadd.f32 %v6504, %v6505
        %v6507 = vrot.slane %v6506, 2
        %v6508 = vadd.f32 %v6506, %v6507
        %v6509 = vrot.slane %v6508, 1
        %v6510 = vadd.f32 %v6508, %v6509
        %v6511 = vmul.f32 %v6503, %v783
        %v6512 = vmul.f32 %v6510, %v783
        %v6513 = vlaneseq
        %v6514 = vshrl.u32 %v6513, 7
        %v6515 = vsub.s32 1, %v6514
        %v6516 = vrot.slane %v6241, %v6515
        %v6517 = vlaneseq
        %v6518 = vshrl.u32 %v6517, 7
        %v6519 = vsub.s32 5, %v6518
        %v6520 = vrot.slane %v6241, %v6519
        %v6523 = vlaneseq
        %v6524 = vshrl.u32 %v6523, 7
        %v6525 = vsub.s32 1, %v6524
        %v6526 = vrot.slane %v6516, %v6525
        %v6527 = vlaneseq
        %v6528 = vshrl.u32 %v6527, 7
        %v6529 = vsub.s32 1, %v6528
        %v6530 = vrot.slane %v6520, %v6529
        %v6531 = vmul.f32 %v6526, %v6493
        %v6532 = vmul.f32 %v6530, %v6494
        %v6533 = vadd.f32 %v6511, 1e-05
        %v6534 = vadd.f32 %v6512, 1e-05
        %v6535 = vrsqrt.pop %v6533
        %v6536 = vrsqrt.pop %v6534
        %v6537 = vmul.f32 %v6531, %v6535
        %v6538 = vmul.f32 %v6532, %v6536
        %v6539 = vlaneseq
        %v6540 = vshrl.u32 %v6539, 7
        %v6541 = vsub.s32 2, %v6540
        %v6542 = vrot.slane %v6241, %v6541
        %v6543 = vlaneseq
        %v6544 = vshrl.u32 %v6543, 7
        %v6545 = vsub.s32 6, %v6544
        %v6546 = vrot.slane %v6241, %v6545
        %v6549 = vlaneseq
        %v6550 = vshrl.u32 %v6549, 7
        %v6551 = vsub.s32 2, %v6550
        %v6552 = vrot.slane %v6542, %v6551
        %v6553 = vlaneseq
        %v6554 = vshrl.u32 %v6553, 7
        %v6555 = vsub.s32 2, %v6554
        %v6556 = vrot.slane %v6546, %v6555
        %v6557 = vadd.f32 %v6537, %v6552
        %v6558 = vadd.f32 %v6538, %v6556
        %vm6559 = vcmp.ge.f32.partialorder %v6557, 0.0
        %vm6560 = vcmp.ge.f32.partialorder %v6558, 0.0
        %v6561 = vlaneseq
        %v6562 = vshrl.u32 %v6561, 7
        %v6563 = vsub.s32 3, %v6562
        %v6564 = vrot.slane %v6241, %v6563
        %v6565 = vlaneseq
        %v6566 = vshrl.u32 %v6565, 7
        %v6567 = vsub.s32 7, %v6566
        %v6568 = vrot.slane %v6241, %v6567
        %v6571 = vlaneseq
        %v6572 = vshrl.u32 %v6571, 7
        %v6573 = vsub.s32 3, %v6572
        %v6574 = vrot.slane %v6564, %v6573
        %v6575 = vlaneseq
        %v6576 = vshrl.u32 %v6575, 7
        %v6577 = vsub.s32 3, %v6576
        %v6578 = vrot.slane %v6568, %v6577
        %v6579 = vmul.f32 %v6574, %v6557
        %v6580 = vmul.f32 %v6578, %v6558
        %v6581 = vsel %vm6559, %v6557, %v6579
        %v6582 = vsel %vm6560, %v6558, %v6580
        %v6583 = vld [vmem:[%s8] sm:$0xff]
        %v6584 = vld [vmem:[%s8 + $0x8] sm:$0xff]
        %v6585 = vld [vmem:[%s8 + $0x10] sm:$0xff]
        %v6586 = vld [vmem:[%s8 + $0x18] sm:$0xff]
        %v6587 = vld [vmem:[%s8 + $0x20] sm:$0xff]
        %v6588 = vld [vmem:[%s8 + $0x28] sm:$0xff]
        %v6589 = vld [vmem:[%s8 + $0x30] sm:$0xff]
        %v6590 = vld [vmem:[%s8 + $0x38] sm:$0xff]
        %v6591 = vld [vmem:[%s8 + $0x40] sm:$0xff]
        %v6592 = vld [vmem:[%s8 + $0x48] sm:$0xff]
        %v6593 = vld [vmem:[%s8 + $0x50] sm:$0xff]
        %v6594 = vld [vmem:[%s8 + $0x58] sm:$0xff]
        %v6595 = vld [vmem:[%s8 + $0x60] sm:$0xff]
        %v6596 = vld [vmem:[%s8 + $0x68] sm:$0xff]
        %v6597 = vld [vmem:[%s8 + $0x70] sm:$0xff]
        %v6598 = vld [vmem:[%s8 + $0x78] sm:$0xff]
        %v6599 = vld [vmem:[%s8 + $0x80] sm:$0xff]
        %v6600 = vld [vmem:[%s8 + $0x88] sm:$0xff]
        %v6601 = vld [vmem:[%s8 + $0x90] sm:$0xff]
        %v6602 = vld [vmem:[%s8 + $0x98] sm:$0xff]
        %v6603 = vld [vmem:[%s8 + $0xa0] sm:$0xff]
        %v6604 = vld [vmem:[%s8 + $0xa8] sm:$0xff]
        %v6605 = vld [vmem:[%s8 + $0xb0] sm:$0xff]
        %v6606 = vld [vmem:[%s8 + $0xb8] sm:$0xff]
        %v6607 = vld [vmem:[%s8 + $0xc0] sm:$0xff]
        %v6608 = vld [vmem:[%s8 + $0xc8] sm:$0xff]
        %v6609 = vld [vmem:[%s8 + $0xd0] sm:$0xff]
        %v6610 = vld [vmem:[%s8 + $0xd8] sm:$0xff]
        %v6611 = vld [vmem:[%s8 + $0xe0] sm:$0xff]
        %v6612 = vld [vmem:[%s8 + $0xe8] sm:$0xff]
        %v6613 = vld [vmem:[%s8 + $0xf0] sm:$0xff]
        %v6614 = vld [vmem:[%s8 + $0xf8] sm:$0xff]
        %v6615 = vld [vmem:[%s10 + $0x3c] sm:$0xf]
        %v6616 = vlaneseq
        %v6617 = vshrl.u32 %v6616, 7
        %v6618 = vsub.s32 0, %v6617
        %v6619 = vrot.slane %v6615, %v6618
        %6620 = vmatprep.subr.mxu0 0.0
        %6621 = vmatpush1.msra.mxu0 %v6583
        %6622 = vmatprep.subr.mxu0 0.0
        %6623 = vmatpush1.msra.mxu0 %v6584
        %6624 = vmatprep.subr.mxu0 0.0
        %6625 = vmatpush1.msra.mxu0 %v6585
        %6626 = vmatprep.subr.mxu0 0.0
        %6627 = vmatpush1.msra.mxu0 %v6586
        %6628 = vmatprep.subr.mxu0 0.0
        %6629 = vmatpush1.msra.mxu0 %v6587
        %6630 = vmatprep.subr.mxu0 0.0
        %6631 = vmatpush1.msra.mxu0 %v6588
        %6632 = vmatprep.subr.mxu0 0.0
        %6633 = vmatpush1.msra.mxu0 %v6589
        %6634 = vmatprep.subr.mxu0 0.0
        %6635 = vmatpush1.msra.mxu0 %v6590
        %6636 = vmatprep.subr.mxu0 0.0
        %6637 = vmatpush1.msra.mxu0 %v6591
        %6638 = vmatprep.subr.mxu0 0.0
        %6639 = vmatpush1.msra.mxu0 %v6592
        %6640 = vmatprep.subr.mxu0 0.0
        %6641 = vmatpush1.msra.mxu0 %v6593
        %6642 = vmatprep.subr.mxu0 0.0
        %6643 = vmatpush1.msra.mxu0 %v6594
        %6644 = vmatprep.subr.mxu0 0.0
        %6645 = vmatpush1.msra.mxu0 %v6595
        %6646 = vmatprep.subr.mxu0 0.0
        %6647 = vmatpush1.msra.mxu0 %v6596
        %6648 = vmatprep.subr.mxu0 0.0
        %6649 = vmatpush1.msra.mxu0 %v6597
        %6650 = vmatprep.subr.mxu0 0.0
        %6651 = vmatpush1.msra.mxu0 %v6598
        %6652 = vmatprep.subr.mxu0 0.0
        %6653 = vmatpush1.msra.mxu0 %v6599
        %6654 = vmatprep.subr.mxu0 0.0
        %6655 = vmatpush1.msra.mxu0 %v6600
        %6656 = vmatprep.subr.mxu0 0.0
        %6657 = vmatpush1.msra.mxu0 %v6601
        %6658 = vmatprep.subr.mxu0 0.0
        %6659 = vmatpush1.msra.mxu0 %v6602
        %6660 = vmatprep.subr.mxu0 0.0
        %6661 = vmatpush1.msra.mxu0 %v6603
        %6662 = vmatprep.subr.mxu0 0.0
        %6663 = vmatpush1.msra.mxu0 %v6604
        %6664 = vmatprep.subr.mxu0 0.0
        %6665 = vmatpush1.msra.mxu0 %v6605
        %6666 = vmatprep.subr.mxu0 0.0
        %6667 = vmatpush1.msra.mxu0 %v6606
        %6668 = vmatprep.subr.mxu0 0.0
        %6669 = vmatpush1.msra.mxu0 %v6607
        %6670 = vmatprep.subr.mxu0 0.0
        %6671 = vmatpush1.msra.mxu0 %v6608
        %6672 = vmatprep.subr.mxu0 0.0
        %6673 = vmatpush1.msra.mxu0 %v6609
        %6674 = vmatprep.subr.mxu0 0.0
        %6675 = vmatpush1.msra.mxu0 %v6610
        %6676 = vmatprep.subr.mxu0 0.0
        %6677 = vmatpush1.msra.mxu0 %v6611
        %6678 = vmatprep.subr.mxu0 0.0
        %6679 = vmatpush1.msra.mxu0 %v6612
        %6680 = vmatprep.subr.mxu0 0.0
        %6681 = vmatpush1.msra.mxu0 %v6613
        %6682 = vmatprep.subr.mxu0 0.0
        %6683 = vmatpush1.msra.mxu0 %v6614
        %6684 = vmatprep.mubr.f32.mxu0 %v6582
        %6685 = vmatmul.mubr.f32.gmra.mrb[0].mxu0 %v6581
        %v6686 = vpop.f32.mrb[0].mxu0
        %v6687 = vadd.f32 %v6619, %v6686
        %v6688 = vpop.f32.mrb[0].mxu0
        %6689 = vdwg.mxu0
        %v6690 = vsel %vm4185, %v6687, 0.0
        %v6691 = vrot.slane %v6690, 4
        %v6692 = vadd.f32 %v6690, %v6691
        %v6693 = vrot.slane %v6692, 2
        %v6694 = vadd.f32 %v6692, %v6693
        %v6695 = vrot.slane %v6694, 1
        %v6696 = vadd.f32 %v6694, %v6695
        %v6697 = vmul.f32 %v6696, %v783
        %v6698 = vsub.f32 %v6687, %v6697
        %v6699 = vmul.f32 %v6698, %v6698
        %v6700 = vsel %vm4185, %v6699, 0.0
        %v6701 = vrot.slane %v6700, 4
        %v6702 = vadd.f32 %v6700, %v6701
        %v6703 = vrot.slane %v6702, 2
        %v6704 = vadd.f32 %v6702, %v6703
        %v6705 = vrot.slane %v6704, 1
        %v6706 = vadd.f32 %v6704, %v6705
        %v6707 = vmul.f32 %v6706, %v783
        %v6708 = vlaneseq
        %v6709 = vshrl.u32 %v6708, 7
        %v6710 = vsub.s32 1, %v6709
        %v6711 = vrot.slane %v6615, %v6710
        %v6712 = vmul.f32 %v6711, %v6698
        %v6713 = vadd.f32 %v6707, 1e-05
        %v6714 = vrsqrt.pop %v6713
        %v6715 = vmul.f32 %v6712, %v6714
        %v6716 = vlaneseq
        %v6717 = vshrl.u32 %v6716, 7
        %v6718 = vsub.s32 2, %v6717
        %v6719 = vrot.slane %v6615, %v6718
        %v6720 = vadd.f32 %v6715, %v6719
        %vm6721 = vcmp.ge.f32.partialorder %v6720, 0.0
        %v6722 = vlaneseq
        %v6723 = vshrl.u32 %v6722, 7
        %v6724 = vsub.s32 3, %v6723
        %v6725 = vrot.slane %v6615, %v6724
        %v6726 = vmul.f32 %v6725, %v6720
        %v6727 = vsel %vm6721, %v6720, %v6726
        %v6728 = vld [vmem:[%s9] sm:$0xff]
        %v6729 = vld [vmem:[%s9 + $0x8] sm:$0xff]
        %v6730 = vld [vmem:[%s9 + $0x10] sm:$0xff]
        %v6731 = vld [vmem:[%s9 + $0x18] sm:$0xff]
        %v6732 = vld [vmem:[%s9 + $0x20] sm:$0xff]
        %v6733 = vld [vmem:[%s9 + $0x28] sm:$0xff]
        %v6734 = vld [vmem:[%s9 + $0x30] sm:$0xff]
        %v6735 = vld [vmem:[%s9 + $0x38] sm:$0xff]
        %v6736 = vld [vmem:[%s10 + $0x40] sm:$0x1]
        %v6737 = vlaneseq
        %v6738 = vshrl.u32 %v6737, 7
        %v6739 = vsub.s32 0, %v6738
        %v6740 = vrot.slane %v6736, %v6739
        %v6742 = vsel %vm4558, %v6727, 0
        %6744 = vmatprep.subr.mxu0 0.0
        %6745 = vmatpush1.msra.mxu0 %v6728
        %6746 = vmatprep.subr.mxu0 0.0
        %6747 = vmatpush1.msra.mxu0 %v6729
        %6748 = vmatprep.subr.mxu0 0.0
        %6749 = vmatpush1.msra.mxu0 %v6730
        %6750 = vmatprep.subr.mxu0 0.0
        %6751 = vmatpush1.msra.mxu0 %v6731
        %6752 = vmatprep.subr.mxu0 0.0
        %6753 = vmatpush1.msra.mxu0 %v6732
        %6754 = vmatprep.subr.mxu0 0.0
        %6755 = vmatpush1.msra.mxu0 %v6733
        %6756 = vmatprep.subr.mxu0 0.0
        %6757 = vmatpush1.msra.mxu0 %v6734
        %6758 = vmatprep.subr.mxu0 0.0
        %6759 = vmatpush1.msra.mxu0 %v6735
        %6760 = vmatprep.subr.mxu0 0.0
        %6761 = vmatpush1.msra.mxu0 0.0
        %6762 = vmatprep.subr.mxu0 0.0
        %6763 = vmatpush1.msra.mxu0 0.0
        %6764 = vmatprep.subr.mxu0 0.0
        %6765 = vmatpush1.msra.mxu0 0.0
        %6766 = vmatprep.subr.mxu0 0.0
        %6767 = vmatpush1.msra.mxu0 0.0
        %6768 = vmatprep.subr.mxu0 0.0
        %6769 = vmatpush1.msra.mxu0 0.0
        %6770 = vmatprep.subr.mxu0 0.0
        %6771 = vmatpush1.msra.mxu0 0.0
        %6772 = vmatprep.subr.mxu0 0.0
        %6773 = vmatpush1.msra.mxu0 0.0
        %6774 = vmatprep.subr.mxu0 0.0
        %6775 = vmatpush1.msra.mxu0 0.0
        %6776 = vmatprep.subr.mxu0 0.0
        %6777 = vmatpush1.msra.mxu0 0.0
        %6778 = vmatprep.subr.mxu0 0.0
        %6779 = vmatpush1.msra.mxu0 0.0
        %6780 = vmatprep.subr.mxu0 0.0
        %6781 = vmatpush1.msra.mxu0 0.0
        %6782 = vmatprep.subr.mxu0 0.0
        %6783 = vmatpush1.msra.mxu0 0.0
        %6784 = vmatprep.subr.mxu0 0.0
        %6785 = vmatpush1.msra.mxu0 0.0
        %6786 = vmatprep.subr.mxu0 0.0
        %6787 = vmatpush1.msra.mxu0 0.0
        %6788 = vmatprep.subr.mxu0 0.0
        %6789 = vmatpush1.msra.mxu0 0.0
        %6790 = vmatprep.subr.mxu0 0.0
        %6791 = vmatpush1.msra.mxu0 0.0
        %6792 = vmatprep.subr.mxu0 0.0
        %6793 = vmatpush1.msra.mxu0 0.0
        %6794 = vmatprep.subr.mxu0 0.0
        %6795 = vmatpush1.msra.mxu0 0.0
        %6796 = vmatprep.subr.mxu0 0.0
        %6797 = vmatpush1.msra.mxu0 0.0
        %6798 = vmatprep.subr.mxu0 0.0
        %6799 = vmatpush1.msra.mxu0 0.0
        %6800 = vmatprep.subr.mxu0 0.0
        %6801 = vmatpush1.msra.mxu0 0.0
        %6802 = vmatprep.subr.mxu0 0.0
        %6803 = vmatpush1.msra.mxu0 0.0
        %6804 = vmatprep.subr.mxu0 0.0
        %6805 = vmatpush1.msra.mxu0 0.0
        %6806 = vmatprep.subr.mxu0 0.0
        %6807 = vmatpush1.msra.mxu0 0.0
        %6808 = vmatprep.mubr.f32.mxu0 0.0
        %6809 = vmatmul.mubr.f32.gmra.mrb[0].mxu0 %v6742
        %v6810 = vpop.f32.mrb[0].mxu0
        %v6811 = vadd.f32 %v6740, %v6810
        %v6812 = vpop.f32.mrb[0].mxu0
        %6813 = vdwg.mxu0
        %v6814 = vsel %vm753, %v6811, -inf
        %6815 = vmax.xlane.f32.xlu0 %v6814
        %v6816 = vpop.xlane.xlu0 %6815
        %v6817 = vsub.f32 %v6811, %v6816
        %v6818 = vmul.f32 %v6817, 1.442695
        %v6819 = vpow.pop %v6818
        %v6820 = vsel %vm753, %v6819, 0.0
        %6821 = vadd.xlane.f32.xlu0 %v6820
        %v6822 = vpop.xlane.xlu0 %6821
        %v6823 = vrcp.pop %v6822
        %v6824 = vmul.f32 %v6819, %v6823
        %6825 = vst [vmem:[%s443] sm:$0x3] %v6824
        %p6826 = scmp.lt.s32.totalorder %s25, 1
        %s6827 = scalar_select %p6826, %s25, 1
        %s6828 = smul.addr %s6827, 2
        %s6829 = scalar_lea.vmem %s11, %s6828
        // Predicated region
        $region81: #{pairsets_forward.1} parent=63 // pred_check
          %p6830 = pneg %p279
        $region82: #{pairsets_forward.1} parent=63 // pred_check_branch
          %6832 = sbr.rel (%p6830) target = $region84
        $region83: #{pairsets_forward.1} parent=63 // pred_region
          _
        $region84: #{pairsets_forward.1} parent=63 // pred_fallthru
          _
      $region64: #{pairsets_forward.1} parent=5 // pred_fallthru
        _
      %p6833 = scmp.le.s32.totalorder 2, %s20
      // Predicated region
      $region85: #{pairsets_forward.1} parent=5 // pred_check
        %p6834 = pneg %p6833
      $region86: #{pairsets_forward.1} parent=5 // pred_check_branch
        %6836 = sbr.rel (%p6834) target = $region88
      $region87: #{pairsets_forward.1} parent=5 // pred_region
        %s6837 = ssub.s32 %s20, 2
        // Predicated region
        $region89: #{pairsets_forward.1} parent=87 // pred_check
          %p6838 = pneg %p285
        $region90: #{pairsets_forward.1} parent=87 // pred_check_branch
          %6840 = sbr.rel (%p6838) target = $region92
        $region91: #{pairsets_forward.1} parent=87 // pred_region
          %p6841 = scmp.lt.s32.totalorder %s26, 1
          %s6842 = scalar_select %p6841, %s26, 1
          %s6843 = smul.addr %s6842, 2
          %s6844 = scalar_lea.vmem %s11, %s6843
        $region92: #{pairsets_forward.1} parent=87 // pred_fallthru
          _
      $region88: #{pairsets_forward.1} parent=5 // pred_fallthru
        _
    $region6: #{pairsets_forward.1} parent=1 // loop_footer
      %s24 = sadd.s32 1, %s20
    $region7: #{pairsets_forward.1} parent=1 // loop_footer_branch
      %19 = sbr.rel target = $region3
    $region8: #{pairsets_forward.1} parent=1 // loop_exit
      _
    %6845 = vsyncpa [#allocation3], 1
    %s6846 = scalar_lea.sflag [#allocation3], 1
    %6847 = vsyncpa %s6846, 1
    %6848 = vsyncpa [#allocation5], 1
    %6849 = vsyncpa [#allocation8], 1

</llo_original>
